<compile_context>
chip_gen: v7x
topology: tpu7x:2x2x1
jax: 0.10.0
libtpu: 0.0.40
codegen_flags: <defaults>
</compile_context>

<pallas_src>
import numpy as np
import jax
import jax.numpy as jnp
from jax import lax
from jax.experimental import pallas as pl
from jax.experimental.pallas import tpu as pltpu


# ------------------------------------------------------------------ kernel ---
def mrnn_kernel(
    images_ref, holds_ref, hv0_ref, hm0_ref, snc_ref,
    w_vis_r, w_vis_h_r, b_vis_r,
    w_h2h_r,
    w_h2o_r, b_h2o_r,
    w_stri_v_r, w_stri_h_r, w_stri_snc_r, b_stri_r,
    w_gpe_s_r, w_gpe_h_r, b_gpe_r,
    w_gpi_es_r, w_gpi_h_r, b_gpi_r,
    w_thal_gm_r, w_thal_h_r, b_thal_r,
    w_mot_r, w_mot_h_r, b_mot_r,
    w_h2hd_r,
    w_h2od_r, b_h2od_r,
    out_ref,
):
    L, Np, _ = images_ref.shape

    def retanh(x):
        return jnp.tanh(jnp.maximum(x, 0.0))

    def mm(a, w):
        return jnp.dot(a, w, preferred_element_type=jnp.float32)

    def bias(ref):  # pre-broadcast once; avoids a broadcast_in_dim per iteration
        return jnp.broadcast_to(ref[...], (Np, ref.shape[1]))

    # ---- loop-invariant loads / folds (done once, before the recurrence) -----
    w_vis, w_vis_h = w_vis_r[...], w_vis_h_r[...]
    w_h2h, w_h2o = w_h2h_r[...], w_h2o_r[...]
    w_stri_v, w_stri_h = w_stri_v_r[...], w_stri_h_r[...]
    w_gpe_s, w_gpe_h = w_gpe_s_r[...], w_gpe_h_r[...]
    w_gpi_es, w_gpi_h = w_gpi_es_r[...], w_gpi_h_r[...]
    w_thal_gm, w_thal_h = w_thal_gm_r[...], w_thal_h_r[...]
    w_mot, w_mot_h = w_mot_r[...], w_mot_h_r[...]
    w_h2hd, w_h2od = w_h2hd_r[...], w_h2od_r[...]

    b_vis = bias(b_vis_r)          # i2h_b + h2h_b, folded in the wrapper
    b_h2o = bias(b_h2o_r)
    b_gpe = bias(b_gpe_r)
    b_gpi = bias(b_gpi_r)
    b_thal = bias(b_thal_r)
    b_mot = bias(b_mot_r)          # i2hd_b + h2hd_b, folded in the wrapper
    b_h2od = bias(b_h2od_r)

    # time-invariant striatum term: snc @ W_snc + stri_b
    snc_term = mm(snc_ref[...], w_stri_snc_r[...]) + b_stri_r[...]      # (Np, 50)

    def step(t, carry):
        hv, hm, prev_m, prev_v = carry
        image = images_ref[t]      # (Np, F-1)
        hold = holds_ref[t]        # (Np, 1)

        # --- visual RNN (fused [image|prev_m] matmul, folded i2h+h2h bias) ----
        x_vis = jnp.concatenate([image, prev_m], axis=1)
        hv = retanh(mm(x_vis, w_vis) + hold * w_vis_h + mm(hv, w_h2h) + b_vis)
        out_v = retanh(mm(hv, w_h2o) + b_h2o)

        # --- basal-ganglia path ------------------------------------------------
        out_stri = retanh(mm(out_v, w_stri_v) + hold * w_stri_h + snc_term)
        out_gpe = retanh(mm(out_stri, w_gpe_s) + hold * w_gpe_h + b_gpe)
        x_gpi = jnp.concatenate([out_gpe, out_stri], axis=1)
        out_gpi = retanh(mm(x_gpi, w_gpi_es) + hold * w_gpi_h + b_gpi)
        x_thal = jnp.concatenate([out_gpi, prev_m], axis=1)
        out_thal = retanh(mm(x_thal, w_thal_gm) + hold * w_thal_h + b_thal)

        # --- motor RNN (fused [thal|prev_v] matmul, folded i2hd+h2hd bias) -----
        x_mot = jnp.concatenate([out_thal, prev_v], axis=1)
        hm = retanh(mm(x_mot, w_mot) + hold * w_mot_h + mm(hm, w_h2hd) + b_mot)
        out_m = mm(hm, w_h2od) + b_h2od   # NOTE: no retanh (matches torch)

        out_ref[t] = out_m
        return (hv, hm, out_m, out_v)

    init = (hv0_ref[...], hm0_ref[...],
            jnp.zeros((Np, 50), jnp.float32),     # outputs_m[:, i-1, :] at i=0
            jnp.zeros((Np, 100), jnp.float32))    # outputs_v[:, i-1, :] at i=0
    # Fully unroll short sequences so the LLO scheduler sees the whole chain.
    lax.fori_loop(0, L, step, init, unroll=(L <= 16))


# ----------------------------------------------------------------- wrapper ---
def millies_rnn_forward(data, params, hv0, hm0, snc):
    """data: (N, L, input_size) float32.  Returns outputs_m: (N, L, 50)."""
    N, L, F = data.shape
    f_img = F - 1

    # Pad the batch to a multiple of 8 sublanes (rows are independent; padded
    # rows are discarded after the kernel).
    Np = ((N + 7) // 8) * 8
    pad = Np - N
    data_p = jnp.pad(data, ((0, pad), (0, 0), (0, 0)))
    hv0_p = jnp.pad(hv0, ((0, pad), (0, 0)))
    hm0_p = jnp.pad(hm0, ((0, pad), (0, 0)))
    snc_p = jnp.pad(snc, ((0, pad), (0, 0)))

    images_tm = jnp.transpose(data_p[:, :, :-1], (1, 0, 2))   # (L, Np, F-1)
    holds_tm = jnp.transpose(data_p[:, :, -1:], (1, 0, 2))    # (L, Np, 1)

    p = params
    # Pre-concatenated weight-row blocks (rows sliced in the torch concat order).
    w_vis, w_vis_h = p["i2h_w"][:f_img + 50], p["i2h_w"][f_img + 50:]
    b_vis = p["i2h_b"] + p["h2h_b"]                           # folded bias
    w_stri_v = p["stri_w"][:100]
    w_stri_h = p["stri_w"][100:101]
    w_stri_snc = p["stri_w"][101:]
    w_gpe_s, w_gpe_h = p["gpe_w"][:50], p["gpe_w"][50:]
    w_gpi_es, w_gpi_h = p["gpi_w"][:100], p["gpi_w"][100:]
    w_thal_gm, w_thal_h = p["thal_w"][:100], p["thal_w"][100:]
    w_mot, w_mot_h = p["i2hd_w"][:150], p["i2hd_w"][150:]
    b_mot = p["i2hd_b"] + p["h2hd_b"]                         # folded bias

    inputs = [
        images_tm, holds_tm, hv0_p, hm0_p, snc_p,
        w_vis, w_vis_h, b_vis,
        p["h2h_w"],
        p["h2o_w"], p["h2o_b"],
        w_stri_v, w_stri_h, w_stri_snc, p["stri_b"],
        w_gpe_s, w_gpe_h, p["gpe_b"],
        w_gpi_es, w_gpi_h, p["gpi_b"],
        w_thal_gm, w_thal_h, p["thal_b"],
        w_mot, w_mot_h, b_mot,
        p["h2hd_w"],
        p["h2od_w"], p["h2od_b"],
    ]

    def full_spec(shape):
        nd = len(shape)
        return pl.BlockSpec(shape, lambda i, _n=nd: (0,) * _n)

    out = pl.pallas_call(
        mrnn_kernel,
        out_shape=jax.ShapeDtypeStruct((L, Np, 50), jnp.float32),
        grid=(1,),                                 # single shot: time loop is in-kernel
        in_specs=[full_spec(x.shape) for x in inputs],
        out_specs=pl.BlockSpec((L, Np, 50), lambda i: (0, 0, 0)),
        compiler_params=pltpu.CompilerParams(dimension_semantics=("arbitrary",)),
    )(*inputs)

    return jnp.transpose(out, (1, 0, 2))[:N]       # back to (N, L, 50)


# -------------------------------------------------------------- parameters ---
def init_params(key, input_size):
    """Deterministic Linear params, stored as W:(in,out), b:(1,out)."""
    shapes = {
        "i2h":  (input_size + 50, 100),
        "h2h":  (100, 100),
        "h2o":  (100, 100),
        "stri": (151, 50),
        "gpe":  (51, 50),
        "gpi":  (101, 50),
        "thal": (101, 50),
        "i2hd": (151, 150),
        "h2hd": (150, 150),
        "h2od": (150, 50),
    }
    params = {}
    keys = jax.random.split(key, 2 * len(shapes))
    for i, (name, (fan_in, fan_out)) in enumerate(shapes.items()):
        bound = 1.0 / np.sqrt(fan_in)
        params[name + "_w"] = jax.random.uniform(
            keys[2 * i], (fan_in, fan_out), jnp.float32, -bound, bound)
        params[name + "_b"] = jax.random.uniform(
            keys[2 * i + 1], (1, fan_out), jnp.float32, -bound, bound)
    return params


# ---------------------------------------------------------- pure-JAX check ---
def reference_forward(data, params, hv0, hm0, snc):
    N, L, _ = data.shape
    images = data[:, :, :-1]
    holds = data[:, :, -1:]
    retanh = lambda x: jnp.tanh(jnp.maximum(x, 0.0))
    prev_m = jnp.zeros((N, 50), jnp.float32)
    prev_v = jnp.zeros((N, 100), jnp.float32)
    hv, hm = hv0, hm0
    outs = []
    for i in range(L):
        image, hold = images[:, i, :], holds[:, i, :]
        inp_vis = jnp.concatenate([image, prev_m, hold], 1) @ params["i2h_w"] + params["i2h_b"]
        hv = hv @ params["h2h_w"] + params["h2h_b"]
        hv = retanh(inp_vis + hv)
        out_v = retanh(hv @ params["h2o_w"] + params["h2o_b"])
        out_stri = retanh(jnp.concatenate([out_v, hold, snc], 1) @ params["stri_w"] + params["stri_b"])
        out_gpe = retanh(jnp.concatenate([out_stri, hold], 1) @ params["gpe_w"] + params["gpe_b"])
        out_gpi = retanh(jnp.concatenate([out_gpe, out_stri, hold], 1) @ params["gpi_w"] + params["gpi_b"])
        out_thal = retanh(jnp.concatenate([out_gpi, prev_m, hold], 1) @ params["thal_w"] + params["thal_b"])
        inp_mot = jnp.concatenate([out_thal, prev_v, hold], 1) @ params["i2hd_w"] + params["i2hd_b"]
        hm = hm @ params["h2hd_w"] + params["h2hd_b"]
        hm = retanh(inp_mot + hm)
        out_m = hm @ params["h2od_w"] + params["h2od_b"]
        outs.append(out_m)
        prev_m, prev_v = out_m, out_v
    return jnp.stack(outs, axis=1)


# -------------------------------------------------------------------- main ---
if __name__ == "__main__":
    # module config: MilliesRNN(input_size=16, hidden_size=100, output_size=50, bidirc=True)
    batch, trial_len, input_size, dopamine = 2, 8, 16, 1.0

    root = jax.random.PRNGKey(0)
    k_data, k_par, k_hv, k_hm, k_snc = jax.random.split(root, 5)

    data = jax.random.normal(k_data, (batch, trial_len, input_size), jnp.float32)
    params = init_params(k_par, input_size)

    # init_hidden (kaiming uniform) and init_snc (normal around dopamine), deterministic here
    hv0 = jax.random.uniform(k_hv, (batch, 100), jnp.float32,
                             -np.sqrt(6.0 / 100), np.sqrt(6.0 / 100))
    hm0 = jax.random.uniform(k_hm, (batch, 150), jnp.float32,
                             -np.sqrt(6.0 / 150), np.sqrt(6.0 / 150))
    snc = dopamine + jax.random.normal(k_snc, (batch, 50), jnp.float32)

    fwd = jax.jit(millies_rnn_forward)
    out = jax.block_until_ready(fwd(data, params, hv0, hm0, snc))
    ref = jax.block_until_ready(reference_forward(data, params, hv0, hm0, snc))

    assert out.shape == (batch, trial_len, 50)
    np.testing.assert_allclose(np.asarray(out), np.asarray(ref), rtol=1e-5, atol=1e-5)
    print("KERNEL_OK")
</pallas_src>

<mosaic_0001>
module attributes {stable_mosaic.version = 11 : i64} {
  func.func @mrnn_kernel(%arg0: i32, %arg1: memref<8x8x15xf32, #tpu.memory_space<vmem>>, %arg2: memref<8x8x1xf32, #tpu.memory_space<vmem>>, %arg3: memref<8x100xf32, #tpu.memory_space<vmem>>, %arg4: memref<8x150xf32, #tpu.memory_space<vmem>>, %arg5: memref<8x50xf32, #tpu.memory_space<vmem>>, %arg6: memref<65x100xf32, #tpu.memory_space<vmem>>, %arg7: memref<1x100xf32, #tpu.memory_space<vmem>>, %arg8: memref<1x100xf32, #tpu.memory_space<vmem>>, %arg9: memref<100x100xf32, #tpu.memory_space<vmem>>, %arg10: memref<100x100xf32, #tpu.memory_space<vmem>>, %arg11: memref<1x100xf32, #tpu.memory_space<vmem>>, %arg12: memref<100x50xf32, #tpu.memory_space<vmem>>, %arg13: memref<1x50xf32, #tpu.memory_space<vmem>>, %arg14: memref<50x50xf32, #tpu.memory_space<vmem>>, %arg15: memref<1x50xf32, #tpu.memory_space<vmem>>, %arg16: memref<50x50xf32, #tpu.memory_space<vmem>>, %arg17: memref<1x50xf32, #tpu.memory_space<vmem>>, %arg18: memref<1x50xf32, #tpu.memory_space<vmem>>, %arg19: memref<100x50xf32, #tpu.memory_space<vmem>>, %arg20: memref<1x50xf32, #tpu.memory_space<vmem>>, %arg21: memref<1x50xf32, #tpu.memory_space<vmem>>, %arg22: memref<100x50xf32, #tpu.memory_space<vmem>>, %arg23: memref<1x50xf32, #tpu.memory_space<vmem>>, %arg24: memref<1x50xf32, #tpu.memory_space<vmem>>, %arg25: memref<150x150xf32, #tpu.memory_space<vmem>>, %arg26: memref<1x150xf32, #tpu.memory_space<vmem>>, %arg27: memref<1x150xf32, #tpu.memory_space<vmem>>, %arg28: memref<150x150xf32, #tpu.memory_space<vmem>>, %arg29: memref<150x50xf32, #tpu.memory_space<vmem>>, %arg30: memref<1x50xf32, #tpu.memory_space<vmem>>, %arg31: memref<8x8x50xf32, #tpu.memory_space<vmem>>) attributes {dimension_semantics = [#tpu.dimension_semantics<arbitrary>], iteration_bounds = array<i64: 1>, scalar_prefetch = 0 : i64, scratch_operands = 0 : i64, tpu.core_type = #tpu.core_type<tc>, window_params = [{pipeline_mode = #tpu.pipeline_mode<synchronous>, transform_indices = @transform_0, window_bounds = array<i64: 8, 8, 15>}, {pipeline_mode = #tpu.pipeline_mode<synchronous>, transform_indices = @transform_1, window_bounds = array<i64: 8, 8, 1>}, {pipeline_mode = #tpu.pipeline_mode<synchronous>, transform_indices = @transform_2, window_bounds = array<i64: 8, 100>}, {pipeline_mode = #tpu.pipeline_mode<synchronous>, transform_indices = @transform_3, window_bounds = array<i64: 8, 150>}, {pipeline_mode = #tpu.pipeline_mode<synchronous>, transform_indices = @transform_4, window_bounds = array<i64: 8, 50>}, {pipeline_mode = #tpu.pipeline_mode<synchronous>, transform_indices = @transform_5, window_bounds = array<i64: 65, 100>}, {pipeline_mode = #tpu.pipeline_mode<synchronous>, transform_indices = @transform_6, window_bounds = array<i64: 1, 100>}, {pipeline_mode = #tpu.pipeline_mode<synchronous>, transform_indices = @transform_7, window_bounds = array<i64: 1, 100>}, {pipeline_mode = #tpu.pipeline_mode<synchronous>, transform_indices = @transform_8, window_bounds = array<i64: 100, 100>}, {pipeline_mode = #tpu.pipeline_mode<synchronous>, transform_indices = @transform_9, window_bounds = array<i64: 100, 100>}, {pipeline_mode = #tpu.pipeline_mode<synchronous>, transform_indices = @transform_10, window_bounds = array<i64: 1, 100>}, {pipeline_mode = #tpu.pipeline_mode<synchronous>, transform_indices = @transform_11, window_bounds = array<i64: 100, 50>}, {pipeline_mode = #tpu.pipeline_mode<synchronous>, transform_indices = @transform_12, window_bounds = array<i64: 1, 50>}, {pipeline_mode = #tpu.pipeline_mode<synchronous>, transform_indices = @transform_13, window_bounds = array<i64: 50, 50>}, {pipeline_mode = #tpu.pipeline_mode<synchronous>, transform_indices = @transform_14, window_bounds = array<i64: 1, 50>}, {pipeline_mode = #tpu.pipeline_mode<synchronous>, transform_indices = @transform_15, window_bounds = array<i64: 50, 50>}, {pipeline_mode = #tpu.pipeline_mode<synchronous>, transform_indices = @transform_16, window_bounds = array<i64: 1, 50>}, {pipeline_mode = #tpu.pipeline_mode<synchronous>, transform_indices = @transform_17, window_bounds = array<i64: 1, 50>}, {pipeline_mode = #tpu.pipeline_mode<synchronous>, transform_indices = @transform_18, window_bounds = array<i64: 100, 50>}, {pipeline_mode = #tpu.pipeline_mode<synchronous>, transform_indices = @transform_19, window_bounds = array<i64: 1, 50>}, {pipeline_mode = #tpu.pipeline_mode<synchronous>, transform_indices = @transform_20, window_bounds = array<i64: 1, 50>}, {pipeline_mode = #tpu.pipeline_mode<synchronous>, transform_indices = @transform_21, window_bounds = array<i64: 100, 50>}, {pipeline_mode = #tpu.pipeline_mode<synchronous>, transform_indices = @transform_22, window_bounds = array<i64: 1, 50>}, {pipeline_mode = #tpu.pipeline_mode<synchronous>, transform_indices = @transform_23, window_bounds = array<i64: 1, 50>}, {pipeline_mode = #tpu.pipeline_mode<synchronous>, transform_indices = @transform_24, window_bounds = array<i64: 150, 150>}, {pipeline_mode = #tpu.pipeline_mode<synchronous>, transform_indices = @transform_25, window_bounds = array<i64: 1, 150>}, {pipeline_mode = #tpu.pipeline_mode<synchronous>, transform_indices = @transform_26, window_bounds = array<i64: 1, 150>}, {pipeline_mode = #tpu.pipeline_mode<synchronous>, transform_indices = @transform_27, window_bounds = array<i64: 150, 150>}, {pipeline_mode = #tpu.pipeline_mode<synchronous>, transform_indices = @transform_28, window_bounds = array<i64: 150, 50>}, {pipeline_mode = #tpu.pipeline_mode<synchronous>, transform_indices = @transform_29, window_bounds = array<i64: 1, 50>}, {pipeline_mode = #tpu.pipeline_mode<synchronous>, transform_indices = @transform_30, window_bounds = array<i64: 8, 8, 50>}]} {
    %c0 = arith.constant 0 : index
    %c0_0 = arith.constant 0 : index
    %0 = vector.load %arg6[%c0, %c0_0] : memref<65x100xf32, #tpu.memory_space<vmem>>, vector<65x100xf32>
    %c0_1 = arith.constant 0 : index
    %c0_2 = arith.constant 0 : index
    %1 = vector.load %arg7[%c0_1, %c0_2] : memref<1x100xf32, #tpu.memory_space<vmem>>, vector<1x100xf32>
    %c0_3 = arith.constant 0 : index
    %c0_4 = arith.constant 0 : index
    %2 = vector.load %arg9[%c0_3, %c0_4] : memref<100x100xf32, #tpu.memory_space<vmem>>, vector<100x100xf32>
    %c0_5 = arith.constant 0 : index
    %c0_6 = arith.constant 0 : index
    %3 = vector.load %arg10[%c0_5, %c0_6] : memref<100x100xf32, #tpu.memory_space<vmem>>, vector<100x100xf32>
    %c0_7 = arith.constant 0 : index
    %c0_8 = arith.constant 0 : index
    %4 = vector.load %arg12[%c0_7, %c0_8] : memref<100x50xf32, #tpu.memory_space<vmem>>, vector<100x50xf32>
    %c0_9 = arith.constant 0 : index
    %c0_10 = arith.constant 0 : index
    %5 = vector.load %arg13[%c0_9, %c0_10] : memref<1x50xf32, #tpu.memory_space<vmem>>, vector<1x50xf32>
    %c0_11 = arith.constant 0 : index
    %c0_12 = arith.constant 0 : index
    %6 = vector.load %arg16[%c0_11, %c0_12] : memref<50x50xf32, #tpu.memory_space<vmem>>, vector<50x50xf32>
    %c0_13 = arith.constant 0 : index
    %c0_14 = arith.constant 0 : index
    %7 = vector.load %arg17[%c0_13, %c0_14] : memref<1x50xf32, #tpu.memory_space<vmem>>, vector<1x50xf32>
    %c0_15 = arith.constant 0 : index
    %c0_16 = arith.constant 0 : index
    %8 = vector.load %arg19[%c0_15, %c0_16] : memref<100x50xf32, #tpu.memory_space<vmem>>, vector<100x50xf32>
    %c0_17 = arith.constant 0 : index
    %c0_18 = arith.constant 0 : index
    %9 = vector.load %arg20[%c0_17, %c0_18] : memref<1x50xf32, #tpu.memory_space<vmem>>, vector<1x50xf32>
    %c0_19 = arith.constant 0 : index
    %c0_20 = arith.constant 0 : index
    %10 = vector.load %arg22[%c0_19, %c0_20] : memref<100x50xf32, #tpu.memory_space<vmem>>, vector<100x50xf32>
    %c0_21 = arith.constant 0 : index
    %c0_22 = arith.constant 0 : index
    %11 = vector.load %arg23[%c0_21, %c0_22] : memref<1x50xf32, #tpu.memory_space<vmem>>, vector<1x50xf32>
    %c0_23 = arith.constant 0 : index
    %c0_24 = arith.constant 0 : index
    %12 = vector.load %arg25[%c0_23, %c0_24] : memref<150x150xf32, #tpu.memory_space<vmem>>, vector<150x150xf32>
    %c0_25 = arith.constant 0 : index
    %c0_26 = arith.constant 0 : index
    %13 = vector.load %arg26[%c0_25, %c0_26] : memref<1x150xf32, #tpu.memory_space<vmem>>, vector<1x150xf32>
    %c0_27 = arith.constant 0 : index
    %c0_28 = arith.constant 0 : index
    %14 = vector.load %arg28[%c0_27, %c0_28] : memref<150x150xf32, #tpu.memory_space<vmem>>, vector<150x150xf32>
    %c0_29 = arith.constant 0 : index
    %c0_30 = arith.constant 0 : index
    %15 = vector.load %arg29[%c0_29, %c0_30] : memref<150x50xf32, #tpu.memory_space<vmem>>, vector<150x50xf32>
    %c0_31 = arith.constant 0 : index
    %c0_32 = arith.constant 0 : index
    %16 = vector.load %arg8[%c0_31, %c0_32] : memref<1x100xf32, #tpu.memory_space<vmem>>, vector<1x100xf32>
    %17 = vector.shape_cast %16 : vector<1x100xf32> to vector<1x100xf32>
    %18 = vector.broadcast %17 : vector<1x100xf32> to vector<8x100xf32>
    %c0_33 = arith.constant 0 : index
    %c0_34 = arith.constant 0 : index
    %19 = vector.load %arg11[%c0_33, %c0_34] : memref<1x100xf32, #tpu.memory_space<vmem>>, vector<1x100xf32>
    %20 = vector.shape_cast %19 : vector<1x100xf32> to vector<1x100xf32>
    %21 = vector.broadcast %20 : vector<1x100xf32> to vector<8x100xf32>
    %c0_35 = arith.constant 0 : index
    %c0_36 = arith.constant 0 : index
    %22 = vector.load %arg18[%c0_35, %c0_36] : memref<1x50xf32, #tpu.memory_space<vmem>>, vector<1x50xf32>
    %23 = vector.shape_cast %22 : vector<1x50xf32> to vector<1x50xf32>
    %24 = vector.broadcast %23 : vector<1x50xf32> to vector<8x50xf32>
    %c0_37 = arith.constant 0 : index
    %c0_38 = arith.constant 0 : index
    %25 = vector.load %arg21[%c0_37, %c0_38] : memref<1x50xf32, #tpu.memory_space<vmem>>, vector<1x50xf32>
    %26 = vector.shape_cast %25 : vector<1x50xf32> to vector<1x50xf32>
    %27 = vector.broadcast %26 : vector<1x50xf32> to vector<8x50xf32>
    %c0_39 = arith.constant 0 : index
    %c0_40 = arith.constant 0 : index
    %28 = vector.load %arg24[%c0_39, %c0_40] : memref<1x50xf32, #tpu.memory_space<vmem>>, vector<1x50xf32>
    %29 = vector.shape_cast %28 : vector<1x50xf32> to vector<1x50xf32>
    %30 = vector.broadcast %29 : vector<1x50xf32> to vector<8x50xf32>
    %c0_41 = arith.constant 0 : index
    %c0_42 = arith.constant 0 : index
    %31 = vector.load %arg27[%c0_41, %c0_42] : memref<1x150xf32, #tpu.memory_space<vmem>>, vector<1x150xf32>
    %32 = vector.shape_cast %31 : vector<1x150xf32> to vector<1x150xf32>
    %33 = vector.broadcast %32 : vector<1x150xf32> to vector<8x150xf32>
    %c0_43 = arith.constant 0 : index
    %c0_44 = arith.constant 0 : index
    %34 = vector.load %arg30[%c0_43, %c0_44] : memref<1x50xf32, #tpu.memory_space<vmem>>, vector<1x50xf32>
    %35 = vector.shape_cast %34 : vector<1x50xf32> to vector<1x50xf32>
    %36 = vector.broadcast %35 : vector<1x50xf32> to vector<8x50xf32>
    %c0_45 = arith.constant 0 : index
    %c0_46 = arith.constant 0 : index
    %37 = vector.load %arg5[%c0_45, %c0_46] : memref<8x50xf32, #tpu.memory_space<vmem>>, vector<8x50xf32>
    %c0_47 = arith.constant 0 : index
    %c0_48 = arith.constant 0 : index
    %38 = vector.load %arg14[%c0_47, %c0_48] : memref<50x50xf32, #tpu.memory_space<vmem>>, vector<50x50xf32>
    %cst = arith.constant dense<0.000000e+00> : vector<8x50xf32>
    %39 = tpu.matmul %37, %38, %cst {dimension_numbers = #tpu.dot_dimension_numbers<[1], [0], [0], [1], [0, 0, 1, 1], [], []>} : vector<8x50xf32>, vector<50x50xf32>, vector<8x50xf32> -> vector<8x50xf32>
    %c0_49 = arith.constant 0 : index
    %c0_50 = arith.constant 0 : index
    %40 = vector.load %arg15[%c0_49, %c0_50] : memref<1x50xf32, #tpu.memory_space<vmem>>, vector<1x50xf32>
    %41 = vector.broadcast %40 : vector<1x50xf32> to vector<8x50xf32>
    %42 = arith.addf %39, %41 : vector<8x50xf32>
    %c0_51 = arith.constant 0 : index
    %c0_52 = arith.constant 0 : index
    %43 = vector.load %arg3[%c0_51, %c0_52] : memref<8x100xf32, #tpu.memory_space<vmem>>, vector<8x100xf32>
    %c0_53 = arith.constant 0 : index
    %c0_54 = arith.constant 0 : index
    %44 = vector.load %arg4[%c0_53, %c0_54] : memref<8x150xf32, #tpu.memory_space<vmem>>, vector<8x150xf32>
    %cst_55 = arith.constant 0.000000e+00 : f32
    %45 = vector.broadcast %cst_55 : f32 to vector<8x50xf32>
    %cst_56 = arith.constant 0.000000e+00 : f32
    %46 = vector.broadcast %cst_56 : f32 to vector<8x100xf32>
    %c0_i32 = arith.constant 0 : i32
    %47 = arith.index_cast %c0_i32 : i32 to index
    %c0_57 = arith.constant 0 : index
    %c0_58 = arith.constant 0 : index
    %48 = vector.load %arg1[%47, %c0_57, %c0_58] : memref<8x8x15xf32, #tpu.memory_space<vmem>>, vector<1x8x15xf32>
    %49 = vector.shape_cast %48 : vector<1x8x15xf32> to vector<8x15xf32>
    %50 = arith.index_cast %c0_i32 : i32 to index
    %c0_59 = arith.constant 0 : index
    %c0_60 = arith.constant 0 : index
    %51 = vector.load %arg2[%50, %c0_59, %c0_60] : memref<8x8x1xf32, #tpu.memory_space<vmem>>, vector<1x8x1xf32>
    %52 = vector.shape_cast %51 : vector<1x8x1xf32> to vector<8x1xf32>
    %53 = tpu.concatenate %49, %45 in 1 : vector<8x15xf32>, vector<8x50xf32> -> vector<8x65xf32>
    %cst_61 = arith.constant dense<0.000000e+00> : vector<8x100xf32>
    %54 = tpu.matmul %53, %0, %cst_61 {dimension_numbers = #tpu.dot_dimension_numbers<[1], [0], [0], [1], [0, 0, 1, 1], [], []>} : vector<8x65xf32>, vector<65x100xf32>, vector<8x100xf32> -> vector<8x100xf32>
    %55 = vector.broadcast %52 : vector<8x1xf32> to vector<8x100xf32>
    %56 = vector.broadcast %1 : vector<1x100xf32> to vector<8x100xf32>
    %57 = arith.mulf %55, %56 : vector<8x100xf32>
    %58 = arith.addf %54, %57 : vector<8x100xf32>
    %cst_62 = arith.constant dense<0.000000e+00> : vector<8x100xf32>
    %59 = tpu.matmul %43, %2, %cst_62 {dimension_numbers = #tpu.dot_dimension_numbers<[1], [0], [0], [1], [0, 0, 1, 1], [], []>} : vector<8x100xf32>, vector<100x100xf32>, vector<8x100xf32> -> vector<8x100xf32>
    %60 = arith.addf %58, %59 : vector<8x100xf32>
    %61 = arith.addf %60, %18 : vector<8x100xf32>
    %cst_63 = arith.constant 0.000000e+00 : f32
    %62 = vector.broadcast %cst_63 : f32 to vector<8x100xf32>
    %63 = arith.maximumf %61, %62 : vector<8x100xf32>
    %64 = math.tanh %63 : vector<8x100xf32>
    %cst_64 = arith.constant dense<0.000000e+00> : vector<8x100xf32>
    %65 = tpu.matmul %64, %3, %cst_64 {dimension_numbers = #tpu.dot_dimension_numbers<[1], [0], [0], [1], [0, 0, 1, 1], [], []>} : vector<8x100xf32>, vector<100x100xf32>, vector<8x100xf32> -> vector<8x100xf32>
    %66 = arith.addf %65, %21 : vector<8x100xf32>
    %cst_65 = arith.constant 0.000000e+00 : f32
    %67 = vector.broadcast %cst_65 : f32 to vector<8x100xf32>
    %68 = arith.maximumf %66, %67 : vector<8x100xf32>
    %69 = math.tanh %68 : vector<8x100xf32>
    %cst_66 = arith.constant dense<0.000000e+00> : vector<8x50xf32>
    %70 = tpu.matmul %69, %4, %cst_66 {dimension_numbers = #tpu.dot_dimension_numbers<[1], [0], [0], [1], [0, 0, 1, 1], [], []>} : vector<8x100xf32>, vector<100x50xf32>, vector<8x50xf32> -> vector<8x50xf32>
    %71 = vector.broadcast %52 : vector<8x1xf32> to vector<8x50xf32>
    %72 = vector.broadcast %5 : vector<1x50xf32> to vector<8x50xf32>
    %73 = arith.mulf %71, %72 : vector<8x50xf32>
    %74 = arith.addf %70, %73 : vector<8x50xf32>
    %75 = arith.addf %74, %42 : vector<8x50xf32>
    %cst_67 = arith.constant 0.000000e+00 : f32
    %76 = vector.broadcast %cst_67 : f32 to vector<8x50xf32>
    %77 = arith.maximumf %75, %76 : vector<8x50xf32>
    %78 = math.tanh %77 : vector<8x50xf32>
    %cst_68 = arith.constant dense<0.000000e+00> : vector<8x50xf32>
    %79 = tpu.matmul %78, %6, %cst_68 {dimension_numbers = #tpu.dot_dimension_numbers<[1], [0], [0], [1], [0, 0, 1, 1], [], []>} : vector<8x50xf32>, vector<50x50xf32>, vector<8x50xf32> -> vector<8x50xf32>
    %80 = vector.broadcast %52 : vector<8x1xf32> to vector<8x50xf32>
    %81 = vector.broadcast %7 : vector<1x50xf32> to vector<8x50xf32>
    %82 = arith.mulf %80, %81 : vector<8x50xf32>
    %83 = arith.addf %79, %82 : vector<8x50xf32>
    %84 = arith.addf %83, %24 : vector<8x50xf32>
    %cst_69 = arith.constant 0.000000e+00 : f32
    %85 = vector.broadcast %cst_69 : f32 to vector<8x50xf32>
    %86 = arith.maximumf %84, %85 : vector<8x50xf32>
    %87 = math.tanh %86 : vector<8x50xf32>
    %88 = tpu.concatenate %87, %78 in 1 : vector<8x50xf32>, vector<8x50xf32> -> vector<8x100xf32>
    %cst_70 = arith.constant dense<0.000000e+00> : vector<8x50xf32>
    %89 = tpu.matmul %88, %8, %cst_70 {dimension_numbers = #tpu.dot_dimension_numbers<[1], [0], [0], [1], [0, 0, 1, 1], [], []>} : vector<8x100xf32>, vector<100x50xf32>, vector<8x50xf32> -> vector<8x50xf32>
    %90 = vector.broadcast %52 : vector<8x1xf32> to vector<8x50xf32>
    %91 = vector.broadcast %9 : vector<1x50xf32> to vector<8x50xf32>
    %92 = arith.mulf %90, %91 : vector<8x50xf32>
    %93 = arith.addf %89, %92 : vector<8x50xf32>
    %94 = arith.addf %93, %27 : vector<8x50xf32>
    %cst_71 = arith.constant 0.000000e+00 : f32
    %95 = vector.broadcast %cst_71 : f32 to vector<8x50xf32>
    %96 = arith.maximumf %94, %95 : vector<8x50xf32>
    %97 = math.tanh %96 : vector<8x50xf32>
    %98 = tpu.concatenate %97, %45 in 1 : vector<8x50xf32>, vector<8x50xf32> -> vector<8x100xf32>
    %cst_72 = arith.constant dense<0.000000e+00> : vector<8x50xf32>
    %99 = tpu.matmul %98, %10, %cst_72 {dimension_numbers = #tpu.dot_dimension_numbers<[1], [0], [0], [1], [0, 0, 1, 1], [], []>} : vector<8x100xf32>, vector<100x50xf32>, vector<8x50xf32> -> vector<8x50xf32>
    %100 = vector.broadcast %52 : vector<8x1xf32> to vector<8x50xf32>
    %101 = vector.broadcast %11 : vector<1x50xf32> to vector<8x50xf32>
    %102 = arith.mulf %100, %101 : vector<8x50xf32>
    %103 = arith.addf %99, %102 : vector<8x50xf32>
    %104 = arith.addf %103, %30 : vector<8x50xf32>
    %cst_73 = arith.constant 0.000000e+00 : f32
    %105 = vector.broadcast %cst_73 : f32 to vector<8x50xf32>
    %106 = arith.maximumf %104, %105 : vector<8x50xf32>
    %107 = math.tanh %106 : vector<8x50xf32>
    %108 = tpu.concatenate %107, %46 in 1 : vector<8x50xf32>, vector<8x100xf32> -> vector<8x150xf32>
    %cst_74 = arith.constant dense<0.000000e+00> : vector<8x150xf32>
    %109 = tpu.matmul %108, %12, %cst_74 {dimension_numbers = #tpu.dot_dimension_numbers<[1], [0], [0], [1], [0, 0, 1, 1], [], []>} : vector<8x150xf32>, vector<150x150xf32>, vector<8x150xf32> -> vector<8x150xf32>
    %110 = vector.broadcast %52 : vector<8x1xf32> to vector<8x150xf32>
    %111 = vector.broadcast %13 : vector<1x150xf32> to vector<8x150xf32>
    %112 = arith.mulf %110, %111 : vector<8x150xf32>
    %113 = arith.addf %109, %112 : vector<8x150xf32>
    %cst_75 = arith.constant dense<0.000000e+00> : vector<8x150xf32>
    %114 = tpu.matmul %44, %14, %cst_75 {dimension_numbers = #tpu.dot_dimension_numbers<[1], [0], [0], [1], [0, 0, 1, 1], [], []>} : vector<8x150xf32>, vector<150x150xf32>, vector<8x150xf32> -> vector<8x150xf32>
    %115 = arith.addf %113, %114 : vector<8x150xf32>
    %116 = arith.addf %115, %33 : vector<8x150xf32>
    %cst_76 = arith.constant 0.000000e+00 : f32
    %117 = vector.broadcast %cst_76 : f32 to vector<8x150xf32>
    %118 = arith.maximumf %116, %117 : vector<8x150xf32>
    %119 = math.tanh %118 : vector<8x150xf32>
    %cst_77 = arith.constant dense<0.000000e+00> : vector<8x50xf32>
    %120 = tpu.matmul %119, %15, %cst_77 {dimension_numbers = #tpu.dot_dimension_numbers<[1], [0], [0], [1], [0, 0, 1, 1], [], []>} : vector<8x150xf32>, vector<150x50xf32>, vector<8x50xf32> -> vector<8x50xf32>
    %121 = arith.addf %120, %36 : vector<8x50xf32>
    %122 = arith.index_cast %c0_i32 : i32 to index
    %c0_78 = arith.constant 0 : index
    %c0_79 = arith.constant 0 : index
    %123 = vector.load %arg31[%122, %c0_78, %c0_79] : memref<8x8x50xf32, #tpu.memory_space<vmem>>, vector<1x8x50xf32>
    %124 = vector.shape_cast %123 : vector<1x8x50xf32> to vector<8x50xf32>
    %125 = vector.shape_cast %121 : vector<8x50xf32> to vector<1x8x50xf32>
    tpu.vector_store %arg31[%122, %c0_78, %c0_79], %125 {strides = array<i32>} : memref<8x8x50xf32, #tpu.memory_space<vmem>>, vector<1x8x50xf32>,
    %c1_i32 = arith.constant 1 : i32
    %126 = arith.index_cast %c1_i32 : i32 to index
    %c0_80 = arith.constant 0 : index
    %c0_81 = arith.constant 0 : index
    %127 = vector.load %arg1[%126, %c0_80, %c0_81] : memref<8x8x15xf32, #tpu.memory_space<vmem>>, vector<1x8x15xf32>
    %128 = vector.shape_cast %127 : vector<1x8x15xf32> to vector<8x15xf32>
    %129 = arith.index_cast %c1_i32 : i32 to index
    %c0_82 = arith.constant 0 : index
    %c0_83 = arith.constant 0 : index
    %130 = vector.load %arg2[%129, %c0_82, %c0_83] : memref<8x8x1xf32, #tpu.memory_space<vmem>>, vector<1x8x1xf32>
    %131 = vector.shape_cast %130 : vector<1x8x1xf32> to vector<8x1xf32>
    %132 = tpu.concatenate %128, %121 in 1 : vector<8x15xf32>, vector<8x50xf32> -> vector<8x65xf32>
    %cst_84 = arith.constant dense<0.000000e+00> : vector<8x100xf32>
    %133 = tpu.matmul %132, %0, %cst_84 {dimension_numbers = #tpu.dot_dimension_numbers<[1], [0], [0], [1], [0, 0, 1, 1], [], []>} : vector<8x65xf32>, vector<65x100xf32>, vector<8x100xf32> -> vector<8x100xf32>
    %134 = vector.broadcast %131 : vector<8x1xf32> to vector<8x100xf32>
    %135 = vector.broadcast %1 : vector<1x100xf32> to vector<8x100xf32>
    %136 = arith.mulf %134, %135 : vector<8x100xf32>
    %137 = arith.addf %133, %136 : vector<8x100xf32>
    %cst_85 = arith.constant dense<0.000000e+00> : vector<8x100xf32>
    %138 = tpu.matmul %64, %2, %cst_85 {dimension_numbers = #tpu.dot_dimension_numbers<[1], [0], [0], [1], [0, 0, 1, 1], [], []>} : vector<8x100xf32>, vector<100x100xf32>, vector<8x100xf32> -> vector<8x100xf32>
    %139 = arith.addf %137, %138 : vector<8x100xf32>
    %140 = arith.addf %139, %18 : vector<8x100xf32>
    %cst_86 = arith.constant 0.000000e+00 : f32
    %141 = vector.broadcast %cst_86 : f32 to vector<8x100xf32>
    %142 = arith.maximumf %140, %141 : vector<8x100xf32>
    %143 = math.tanh %142 : vector<8x100xf32>
    %cst_87 = arith.constant dense<0.000000e+00> : vector<8x100xf32>
    %144 = tpu.matmul %143, %3, %cst_87 {dimension_numbers = #tpu.dot_dimension_numbers<[1], [0], [0], [1], [0, 0, 1, 1], [], []>} : vector<8x100xf32>, vector<100x100xf32>, vector<8x100xf32> -> vector<8x100xf32>
    %145 = arith.addf %144, %21 : vector<8x100xf32>
    %cst_88 = arith.constant 0.000000e+00 : f32
    %146 = vector.broadcast %cst_88 : f32 to vector<8x100xf32>
    %147 = arith.maximumf %145, %146 : vector<8x100xf32>
    %148 = math.tanh %147 : vector<8x100xf32>
    %cst_89 = arith.constant dense<0.000000e+00> : vector<8x50xf32>
    %149 = tpu.matmul %148, %4, %cst_89 {dimension_numbers = #tpu.dot_dimension_numbers<[1], [0], [0], [1], [0, 0, 1, 1], [], []>} : vector<8x100xf32>, vector<100x50xf32>, vector<8x50xf32> -> vector<8x50xf32>
    %150 = vector.broadcast %131 : vector<8x1xf32> to vector<8x50xf32>
    %151 = vector.broadcast %5 : vector<1x50xf32> to vector<8x50xf32>
    %152 = arith.mulf %150, %151 : vector<8x50xf32>
    %153 = arith.addf %149, %152 : vector<8x50xf32>
    %154 = arith.addf %153, %42 : vector<8x50xf32>
    %cst_90 = arith.constant 0.000000e+00 : f32
    %155 = vector.broadcast %cst_90 : f32 to vector<8x50xf32>
    %156 = arith.maximumf %154, %155 : vector<8x50xf32>
    %157 = math.tanh %156 : vector<8x50xf32>
    %cst_91 = arith.constant dense<0.000000e+00> : vector<8x50xf32>
    %158 = tpu.matmul %157, %6, %cst_91 {dimension_numbers = #tpu.dot_dimension_numbers<[1], [0], [0], [1], [0, 0, 1, 1], [], []>} : vector<8x50xf32>, vector<50x50xf32>, vector<8x50xf32> -> vector<8x50xf32>
    %159 = vector.broadcast %131 : vector<8x1xf32> to vector<8x50xf32>
    %160 = vector.broadcast %7 : vector<1x50xf32> to vector<8x50xf32>
    %161 = arith.mulf %159, %160 : vector<8x50xf32>
    %162 = arith.addf %158, %161 : vector<8x50xf32>
    %163 = arith.addf %162, %24 : vector<8x50xf32>
    %cst_92 = arith.constant 0.000000e+00 : f32
    %164 = vector.broadcast %cst_92 : f32 to vector<8x50xf32>
    %165 = arith.maximumf %163, %164 : vector<8x50xf32>
    %166 = math.tanh %165 : vector<8x50xf32>
    %167 = tpu.concatenate %166, %157 in 1 : vector<8x50xf32>, vector<8x50xf32> -> vector<8x100xf32>
    %cst_93 = arith.constant dense<0.000000e+00> : vector<8x50xf32>
    %168 = tpu.matmul %167, %8, %cst_93 {dimension_numbers = #tpu.dot_dimension_numbers<[1], [0], [0], [1], [0, 0, 1, 1], [], []>} : vector<8x100xf32>, vector<100x50xf32>, vector<8x50xf32> -> vector<8x50xf32>
    %169 = vector.broadcast %131 : vector<8x1xf32> to vector<8x50xf32>
    %170 = vector.broadcast %9 : vector<1x50xf32> to vector<8x50xf32>
    %171 = arith.mulf %169, %170 : vector<8x50xf32>
    %172 = arith.addf %168, %171 : vector<8x50xf32>
    %173 = arith.addf %172, %27 : vector<8x50xf32>
    %cst_94 = arith.constant 0.000000e+00 : f32
    %174 = vector.broadcast %cst_94 : f32 to vector<8x50xf32>
    %175 = arith.maximumf %173, %174 : vector<8x50xf32>
    %176 = math.tanh %175 : vector<8x50xf32>
    %177 = tpu.concatenate %176, %121 in 1 : vector<8x50xf32>, vector<8x50xf32> -> vector<8x100xf32>
    %cst_95 = arith.constant dense<0.000000e+00> : vector<8x50xf32>
    %178 = tpu.matmul %177, %10, %cst_95 {dimension_numbers = #tpu.dot_dimension_numbers<[1], [0], [0], [1], [0, 0, 1, 1], [], []>} : vector<8x100xf32>, vector<100x50xf32>, vector<8x50xf32> -> vector<8x50xf32>
    %179 = vector.broadcast %131 : vector<8x1xf32> to vector<8x50xf32>
    %180 = vector.broadcast %11 : vector<1x50xf32> to vector<8x50xf32>
    %181 = arith.mulf %179, %180 : vector<8x50xf32>
    %182 = arith.addf %178, %181 : vector<8x50xf32>
    %183 = arith.addf %182, %30 : vector<8x50xf32>
    %cst_96 = arith.constant 0.000000e+00 : f32
    %184 = vector.broadcast %cst_96 : f32 to vector<8x50xf32>
    %185 = arith.maximumf %183, %184 : vector<8x50xf32>
    %186 = math.tanh %185 : vector<8x50xf32>
    %187 = tpu.concatenate %186, %69 in 1 : vector<8x50xf32>, vector<8x100xf32> -> vector<8x150xf32>
    %cst_97 = arith.constant dense<0.000000e+00> : vector<8x150xf32>
    %188 = tpu.matmul %187, %12, %cst_97 {dimension_numbers = #tpu.dot_dimension_numbers<[1], [0], [0], [1], [0, 0, 1, 1], [], []>} : vector<8x150xf32>, vector<150x150xf32>, vector<8x150xf32> -> vector<8x150xf32>
    %189 = vector.broadcast %131 : vector<8x1xf32> to vector<8x150xf32>
    %190 = vector.broadcast %13 : vector<1x150xf32> to vector<8x150xf32>
    %191 = arith.mulf %189, %190 : vector<8x150xf32>
    %192 = arith.addf %188, %191 : vector<8x150xf32>
    %cst_98 = arith.constant dense<0.000000e+00> : vector<8x150xf32>
    %193 = tpu.matmul %119, %14, %cst_98 {dimension_numbers = #tpu.dot_dimension_numbers<[1], [0], [0], [1], [0, 0, 1, 1], [], []>} : vector<8x150xf32>, vector<150x150xf32>, vector<8x150xf32> -> vector<8x150xf32>
    %194 = arith.addf %192, %193 : vector<8x150xf32>
    %195 = arith.addf %194, %33 : vector<8x150xf32>
    %cst_99 = arith.constant 0.000000e+00 : f32
    %196 = vector.broadcast %cst_99 : f32 to vector<8x150xf32>
    %197 = arith.maximumf %195, %196 : vector<8x150xf32>
    %198 = math.tanh %197 : vector<8x150xf32>
    %cst_100 = arith.constant dense<0.000000e+00> : vector<8x50xf32>
    %199 = tpu.matmul %198, %15, %cst_100 {dimension_numbers = #tpu.dot_dimension_numbers<[1], [0], [0], [1], [0, 0, 1, 1], [], []>} : vector<8x150xf32>, vector<150x50xf32>, vector<8x50xf32> -> vector<8x50xf32>
    %200 = arith.addf %199, %36 : vector<8x50xf32>
    %201 = arith.index_cast %c1_i32 : i32 to index
    %c0_101 = arith.constant 0 : index
    %c0_102 = arith.constant 0 : index
    %202 = vector.load %arg31[%201, %c0_101, %c0_102] : memref<8x8x50xf32, #tpu.memory_space<vmem>>, vector<1x8x50xf32>
    %203 = vector.shape_cast %202 : vector<1x8x50xf32> to vector<8x50xf32>
    %204 = vector.shape_cast %200 : vector<8x50xf32> to vector<1x8x50xf32>
    tpu.vector_store %arg31[%201, %c0_101, %c0_102], %204 {strides = array<i32>} : memref<8x8x50xf32, #tpu.memory_space<vmem>>, vector<1x8x50xf32>,
    %c2_i32 = arith.constant 2 : i32
    %205 = arith.index_cast %c2_i32 : i32 to index
    %c0_103 = arith.constant 0 : index
    %c0_104 = arith.constant 0 : index
    %206 = vector.load %arg1[%205, %c0_103, %c0_104] : memref<8x8x15xf32, #tpu.memory_space<vmem>>, vector<1x8x15xf32>
    %207 = vector.shape_cast %206 : vector<1x8x15xf32> to vector<8x15xf32>
    %208 = arith.index_cast %c2_i32 : i32 to index
    %c0_105 = arith.constant 0 : index
    %c0_106 = arith.constant 0 : index
    %209 = vector.load %arg2[%208, %c0_105, %c0_106] : memref<8x8x1xf32, #tpu.memory_space<vmem>>, vector<1x8x1xf32>
    %210 = vector.shape_cast %209 : vector<1x8x1xf32> to vector<8x1xf32>
    %211 = tpu.concatenate %207, %200 in 1 : vector<8x15xf32>, vector<8x50xf32> -> vector<8x65xf32>
    %cst_107 = arith.constant dense<0.000000e+00> : vector<8x100xf32>
    %212 = tpu.matmul %211, %0, %cst_107 {dimension_numbers = #tpu.dot_dimension_numbers<[1], [0], [0], [1], [0, 0, 1, 1], [], []>} : vector<8x65xf32>, vector<65x100xf32>, vector<8x100xf32> -> vector<8x100xf32>
    %213 = vector.broadcast %210 : vector<8x1xf32> to vector<8x100xf32>
    %214 = vector.broadcast %1 : vector<1x100xf32> to vector<8x100xf32>
    %215 = arith.mulf %213, %214 : vector<8x100xf32>
    %216 = arith.addf %212, %215 : vector<8x100xf32>
    %cst_108 = arith.constant dense<0.000000e+00> : vector<8x100xf32>
    %217 = tpu.matmul %143, %2, %cst_108 {dimension_numbers = #tpu.dot_dimension_numbers<[1], [0], [0], [1], [0, 0, 1, 1], [], []>} : vector<8x100xf32>, vector<100x100xf32>, vector<8x100xf32> -> vector<8x100xf32>
    %218 = arith.addf %216, %217 : vector<8x100xf32>
    %219 = arith.addf %218, %18 : vector<8x100xf32>
    %cst_109 = arith.constant 0.000000e+00 : f32
    %220 = vector.broadcast %cst_109 : f32 to vector<8x100xf32>
    %221 = arith.maximumf %219, %220 : vector<8x100xf32>
    %222 = math.tanh %221 : vector<8x100xf32>
    %cst_110 = arith.constant dense<0.000000e+00> : vector<8x100xf32>
    %223 = tpu.matmul %222, %3, %cst_110 {dimension_numbers = #tpu.dot_dimension_numbers<[1], [0], [0], [1], [0, 0, 1, 1], [], []>} : vector<8x100xf32>, vector<100x100xf32>, vector<8x100xf32> -> vector<8x100xf32>
    %224 = arith.addf %223, %21 : vector<8x100xf32>
    %cst_111 = arith.constant 0.000000e+00 : f32
    %225 = vector.broadcast %cst_111 : f32 to vector<8x100xf32>
    %226 = arith.maximumf %224, %225 : vector<8x100xf32>
    %227 = math.tanh %226 : vector<8x100xf32>
    %cst_112 = arith.constant dense<0.000000e+00> : vector<8x50xf32>
    %228 = tpu.matmul %227, %4, %cst_112 {dimension_numbers = #tpu.dot_dimension_numbers<[1], [0], [0], [1], [0, 0, 1, 1], [], []>} : vector<8x100xf32>, vector<100x50xf32>, vector<8x50xf32> -> vector<8x50xf32>
    %229 = vector.broadcast %210 : vector<8x1xf32> to vector<8x50xf32>
    %230 = vector.broadcast %5 : vector<1x50xf32> to vector<8x50xf32>
    %231 = arith.mulf %229, %230 : vector<8x50xf32>
    %232 = arith.addf %228, %231 : vector<8x50xf32>
    %233 = arith.addf %232, %42 : vector<8x50xf32>
    %cst_113 = arith.constant 0.000000e+00 : f32
    %234 = vector.broadcast %cst_113 : f32 to vector<8x50xf32>
    %235 = arith.maximumf %233, %234 : vector<8x50xf32>
    %236 = math.tanh %235 : vector<8x50xf32>
    %cst_114 = arith.constant dense<0.000000e+00> : vector<8x50xf32>
    %237 = tpu.matmul %236, %6, %cst_114 {dimension_numbers = #tpu.dot_dimension_numbers<[1], [0], [0], [1], [0, 0, 1, 1], [], []>} : vector<8x50xf32>, vector<50x50xf32>, vector<8x50xf32> -> vector<8x50xf32>
    %238 = vector.broadcast %210 : vector<8x1xf32> to vector<8x50xf32>
    %239 = vector.broadcast %7 : vector<1x50xf32> to vector<8x50xf32>
    %240 = arith.mulf %238, %239 : vector<8x50xf32>
    %241 = arith.addf %237, %240 : vector<8x50xf32>
    %242 = arith.addf %241, %24 : vector<8x50xf32>
    %cst_115 = arith.constant 0.000000e+00 : f32
    %243 = vector.broadcast %cst_115 : f32 to vector<8x50xf32>
    %244 = arith.maximumf %242, %243 : vector<8x50xf32>
    %245 = math.tanh %244 : vector<8x50xf32>
    %246 = tpu.concatenate %245, %236 in 1 : vector<8x50xf32>, vector<8x50xf32> -> vector<8x100xf32>
    %cst_116 = arith.constant dense<0.000000e+00> : vector<8x50xf32>
    %247 = tpu.matmul %246, %8, %cst_116 {dimension_numbers = #tpu.dot_dimension_numbers<[1], [0], [0], [1], [0, 0, 1, 1], [], []>} : vector<8x100xf32>, vector<100x50xf32>, vector<8x50xf32> -> vector<8x50xf32>
    %248 = vector.broadcast %210 : vector<8x1xf32> to vector<8x50xf32>
    %249 = vector.broadcast %9 : vector<1x50xf32> to vector<8x50xf32>
    %250 = arith.mulf %248, %249 : vector<8x50xf32>
    %251 = arith.addf %247, %250 : vector<8x50xf32>
    %252 = arith.addf %251, %27 : vector<8x50xf32>
    %cst_117 = arith.constant 0.000000e+00 : f32
    %253 = vector.broadcast %cst_117 : f32 to vector<8x50xf32>
    %254 = arith.maximumf %252, %253 : vector<8x50xf32>
    %255 = math.tanh %254 : vector<8x50xf32>
    %256 = tpu.concatenate %255, %200 in 1 : vector<8x50xf32>, vector<8x50xf32> -> vector<8x100xf32>
    %cst_118 = arith.constant dense<0.000000e+00> : vector<8x50xf32>
    %257 = tpu.matmul %256, %10, %cst_118 {dimension_numbers = #tpu.dot_dimension_numbers<[1], [0], [0], [1], [0, 0, 1, 1], [], []>} : vector<8x100xf32>, vector<100x50xf32>, vector<8x50xf32> -> vector<8x50xf32>
    %258 = vector.broadcast %210 : vector<8x1xf32> to vector<8x50xf32>
    %259 = vector.broadcast %11 : vector<1x50xf32> to vector<8x50xf32>
    %260 = arith.mulf %258, %259 : vector<8x50xf32>
    %261 = arith.addf %257, %260 : vector<8x50xf32>
    %262 = arith.addf %261, %30 : vector<8x50xf32>
    %cst_119 = arith.constant 0.000000e+00 : f32
    %263 = vector.broadcast %cst_119 : f32 to vector<8x50xf32>
    %264 = arith.maximumf %262, %263 : vector<8x50xf32>
    %265 = math.tanh %264 : vector<8x50xf32>
    %266 = tpu.concatenate %265, %148 in 1 : vector<8x50xf32>, vector<8x100xf32> -> vector<8x150xf32>
    %cst_120 = arith.constant dense<0.000000e+00> : vector<8x150xf32>
    %267 = tpu.matmul %266, %12, %cst_120 {dimension_numbers = #tpu.dot_dimension_numbers<[1], [0], [0], [1], [0, 0, 1, 1], [], []>} : vector<8x150xf32>, vector<150x150xf32>, vector<8x150xf32> -> vector<8x150xf32>
    %268 = vector.broadcast %210 : vector<8x1xf32> to vector<8x150xf32>
    %269 = vector.broadcast %13 : vector<1x150xf32> to vector<8x150xf32>
    %270 = arith.mulf %268, %269 : vector<8x150xf32>
    %271 = arith.addf %267, %270 : vector<8x150xf32>
    %cst_121 = arith.constant dense<0.000000e+00> : vector<8x150xf32>
    %272 = tpu.matmul %198, %14, %cst_121 {dimension_numbers = #tpu.dot_dimension_numbers<[1], [0], [0], [1], [0, 0, 1, 1], [], []>} : vector<8x150xf32>, vector<150x150xf32>, vector<8x150xf32> -> vector<8x150xf32>
    %273 = arith.addf %271, %272 : vector<8x150xf32>
    %274 = arith.addf %273, %33 : vector<8x150xf32>
    %cst_122 = arith.constant 0.000000e+00 : f32
    %275 = vector.broadcast %cst_122 : f32 to vector<8x150xf32>
    %276 = arith.maximumf %274, %275 : vector<8x150xf32>
    %277 = math.tanh %276 : vector<8x150xf32>
    %cst_123 = arith.constant dense<0.000000e+00> : vector<8x50xf32>
    %278 = tpu.matmul %277, %15, %cst_123 {dimension_numbers = #tpu.dot_dimension_numbers<[1], [0], [0], [1], [0, 0, 1, 1], [], []>} : vector<8x150xf32>, vector<150x50xf32>, vector<8x50xf32> -> vector<8x50xf32>
    %279 = arith.addf %278, %36 : vector<8x50xf32>
    %280 = arith.index_cast %c2_i32 : i32 to index
    %c0_124 = arith.constant 0 : index
    %c0_125 = arith.constant 0 : index
    %281 = vector.load %arg31[%280, %c0_124, %c0_125] : memref<8x8x50xf32, #tpu.memory_space<vmem>>, vector<1x8x50xf32>
    %282 = vector.shape_cast %281 : vector<1x8x50xf32> to vector<8x50xf32>
    %283 = vector.shape_cast %279 : vector<8x50xf32> to vector<1x8x50xf32>
    tpu.vector_store %arg31[%280, %c0_124, %c0_125], %283 {strides = array<i32>} : memref<8x8x50xf32, #tpu.memory_space<vmem>>, vector<1x8x50xf32>,
    %c3_i32 = arith.constant 3 : i32
    %284 = arith.index_cast %c3_i32 : i32 to index
    %c0_126 = arith.constant 0 : index
    %c0_127 = arith.constant 0 : index
    %285 = vector.load %arg1[%284, %c0_126, %c0_127] : memref<8x8x15xf32, #tpu.memory_space<vmem>>, vector<1x8x15xf32>
    %286 = vector.shape_cast %285 : vector<1x8x15xf32> to vector<8x15xf32>
    %287 = arith.index_cast %c3_i32 : i32 to index
    %c0_128 = arith.constant 0 : index
    %c0_129 = arith.constant 0 : index
    %288 = vector.load %arg2[%287, %c0_128, %c0_129] : memref<8x8x1xf32, #tpu.memory_space<vmem>>, vector<1x8x1xf32>
    %289 = vector.shape_cast %288 : vector<1x8x1xf32> to vector<8x1xf32>
    %290 = tpu.concatenate %286, %279 in 1 : vector<8x15xf32>, vector<8x50xf32> -> vector<8x65xf32>
    %cst_130 = arith.constant dense<0.000000e+00> : vector<8x100xf32>
    %291 = tpu.matmul %290, %0, %cst_130 {dimension_numbers = #tpu.dot_dimension_numbers<[1], [0], [0], [1], [0, 0, 1, 1], [], []>} : vector<8x65xf32>, vector<65x100xf32>, vector<8x100xf32> -> vector<8x100xf32>
    %292 = vector.broadcast %289 : vector<8x1xf32> to vector<8x100xf32>
    %293 = vector.broadcast %1 : vector<1x100xf32> to vector<8x100xf32>
    %294 = arith.mulf %292, %293 : vector<8x100xf32>
    %295 = arith.addf %291, %294 : vector<8x100xf32>
    %cst_131 = arith.constant dense<0.000000e+00> : vector<8x100xf32>
    %296 = tpu.matmul %222, %2, %cst_131 {dimension_numbers = #tpu.dot_dimension_numbers<[1], [0], [0], [1], [0, 0, 1, 1], [], []>} : vector<8x100xf32>, vector<100x100xf32>, vector<8x100xf32> -> vector<8x100xf32>
    %297 = arith.addf %295, %296 : vector<8x100xf32>
    %298 = arith.addf %297, %18 : vector<8x100xf32>
    %cst_132 = arith.constant 0.000000e+00 : f32
    %299 = vector.broadcast %cst_132 : f32 to vector<8x100xf32>
    %300 = arith.maximumf %298, %299 : vector<8x100xf32>
    %301 = math.tanh %300 : vector<8x100xf32>
    %cst_133 = arith.constant dense<0.000000e+00> : vector<8x100xf32>
    %302 = tpu.matmul %301, %3, %cst_133 {dimension_numbers = #tpu.dot_dimension_numbers<[1], [0], [0], [1], [0, 0, 1, 1], [], []>} : vector<8x100xf32>, vector<100x100xf32>, vector<8x100xf32> -> vector<8x100xf32>
    %303 = arith.addf %302, %21 : vector<8x100xf32>
    %cst_134 = arith.constant 0.000000e+00 : f32
    %304 = vector.broadcast %cst_134 : f32 to vector<8x100xf32>
    %305 = arith.maximumf %303, %304 : vector<8x100xf32>
    %306 = math.tanh %305 : vector<8x100xf32>
    %cst_135 = arith.constant dense<0.000000e+00> : vector<8x50xf32>
    %307 = tpu.matmul %306, %4, %cst_135 {dimension_numbers = #tpu.dot_dimension_numbers<[1], [0], [0], [1], [0, 0, 1, 1], [], []>} : vector<8x100xf32>, vector<100x50xf32>, vector<8x50xf32> -> vector<8x50xf32>
    %308 = vector.broadcast %289 : vector<8x1xf32> to vector<8x50xf32>
    %309 = vector.broadcast %5 : vector<1x50xf32> to vector<8x50xf32>
    %310 = arith.mulf %308, %309 : vector<8x50xf32>
    %311 = arith.addf %307, %310 : vector<8x50xf32>
    %312 = arith.addf %311, %42 : vector<8x50xf32>
    %cst_136 = arith.constant 0.000000e+00 : f32
    %313 = vector.broadcast %cst_136 : f32 to vector<8x50xf32>
    %314 = arith.maximumf %312, %313 : vector<8x50xf32>
    %315 = math.tanh %314 : vector<8x50xf32>
    %cst_137 = arith.constant dense<0.000000e+00> : vector<8x50xf32>
    %316 = tpu.matmul %315, %6, %cst_137 {dimension_numbers = #tpu.dot_dimension_numbers<[1], [0], [0], [1], [0, 0, 1, 1], [], []>} : vector<8x50xf32>, vector<50x50xf32>, vector<8x50xf32> -> vector<8x50xf32>
    %317 = vector.broadcast %289 : vector<8x1xf32> to vector<8x50xf32>
    %318 = vector.broadcast %7 : vector<1x50xf32> to vector<8x50xf32>
    %319 = arith.mulf %317, %318 : vector<8x50xf32>
    %320 = arith.addf %316, %319 : vector<8x50xf32>
    %321 = arith.addf %320, %24 : vector<8x50xf32>
    %cst_138 = arith.constant 0.000000e+00 : f32
    %322 = vector.broadcast %cst_138 : f32 to vector<8x50xf32>
    %323 = arith.maximumf %321, %322 : vector<8x50xf32>
    %324 = math.tanh %323 : vector<8x50xf32>
    %325 = tpu.concatenate %324, %315 in 1 : vector<8x50xf32>, vector<8x50xf32> -> vector<8x100xf32>
    %cst_139 = arith.constant dense<0.000000e+00> : vector<8x50xf32>
    %326 = tpu.matmul %325, %8, %cst_139 {dimension_numbers = #tpu.dot_dimension_numbers<[1], [0], [0], [1], [0, 0, 1, 1], [], []>} : vector<8x100xf32>, vector<100x50xf32>, vector<8x50xf32> -> vector<8x50xf32>
    %327 = vector.broadcast %289 : vector<8x1xf32> to vector<8x50xf32>
    %328 = vector.broadcast %9 : vector<1x50xf32> to vector<8x50xf32>
    %329 = arith.mulf %327, %328 : vector<8x50xf32>
    %330 = arith.addf %326, %329 : vector<8x50xf32>
    %331 = arith.addf %330, %27 : vector<8x50xf32>
    %cst_140 = arith.constant 0.000000e+00 : f32
    %332 = vector.broadcast %cst_140 : f32 to vector<8x50xf32>
    %333 = arith.maximumf %331, %332 : vector<8x50xf32>
    %334 = math.tanh %333 : vector<8x50xf32>
    %335 = tpu.concatenate %334, %279 in 1 : vector<8x50xf32>, vector<8x50xf32> -> vector<8x100xf32>
    %cst_141 = arith.constant dense<0.000000e+00> : vector<8x50xf32>
    %336 = tpu.matmul %335, %10, %cst_141 {dimension_numbers = #tpu.dot_dimension_numbers<[1], [0], [0], [1], [0, 0, 1, 1], [], []>} : vector<8x100xf32>, vector<100x50xf32>, vector<8x50xf32> -> vector<8x50xf32>
    %337 = vector.broadcast %289 : vector<8x1xf32> to vector<8x50xf32>
    %338 = vector.broadcast %11 : vector<1x50xf32> to vector<8x50xf32>
    %339 = arith.mulf %337, %338 : vector<8x50xf32>
    %340 = arith.addf %336, %339 : vector<8x50xf32>
    %341 = arith.addf %340, %30 : vector<8x50xf32>
    %cst_142 = arith.constant 0.000000e+00 : f32
    %342 = vector.broadcast %cst_142 : f32 to vector<8x50xf32>
    %343 = arith.maximumf %341, %342 : vector<8x50xf32>
    %344 = math.tanh %343 : vector<8x50xf32>
    %345 = tpu.concatenate %344, %227 in 1 : vector<8x50xf32>, vector<8x100xf32> -> vector<8x150xf32>
    %cst_143 = arith.constant dense<0.000000e+00> : vector<8x150xf32>
    %346 = tpu.matmul %345, %12, %cst_143 {dimension_numbers = #tpu.dot_dimension_numbers<[1], [0], [0], [1], [0, 0, 1, 1], [], []>} : vector<8x150xf32>, vector<150x150xf32>, vector<8x150xf32> -> vector<8x150xf32>
    %347 = vector.broadcast %289 : vector<8x1xf32> to vector<8x150xf32>
    %348 = vector.broadcast %13 : vector<1x150xf32> to vector<8x150xf32>
    %349 = arith.mulf %347, %348 : vector<8x150xf32>
    %350 = arith.addf %346, %349 : vector<8x150xf32>
    %cst_144 = arith.constant dense<0.000000e+00> : vector<8x150xf32>
    %351 = tpu.matmul %277, %14, %cst_144 {dimension_numbers = #tpu.dot_dimension_numbers<[1], [0], [0], [1], [0, 0, 1, 1], [], []>} : vector<8x150xf32>, vector<150x150xf32>, vector<8x150xf32> -> vector<8x150xf32>
    %352 = arith.addf %350, %351 : vector<8x150xf32>
    %353 = arith.addf %352, %33 : vector<8x150xf32>
    %cst_145 = arith.constant 0.000000e+00 : f32
    %354 = vector.broadcast %cst_145 : f32 to vector<8x150xf32>
    %355 = arith.maximumf %353, %354 : vector<8x150xf32>
    %356 = math.tanh %355 : vector<8x150xf32>
    %cst_146 = arith.constant dense<0.000000e+00> : vector<8x50xf32>
    %357 = tpu.matmul %356, %15, %cst_146 {dimension_numbers = #tpu.dot_dimension_numbers<[1], [0], [0], [1], [0, 0, 1, 1], [], []>} : vector<8x150xf32>, vector<150x50xf32>, vector<8x50xf32> -> vector<8x50xf32>
    %358 = arith.addf %357, %36 : vector<8x50xf32>
    %359 = arith.index_cast %c3_i32 : i32 to index
    %c0_147 = arith.constant 0 : index
    %c0_148 = arith.constant 0 : index
    %360 = vector.load %arg31[%359, %c0_147, %c0_148] : memref<8x8x50xf32, #tpu.memory_space<vmem>>, vector<1x8x50xf32>
    %361 = vector.shape_cast %360 : vector<1x8x50xf32> to vector<8x50xf32>
    %362 = vector.shape_cast %358 : vector<8x50xf32> to vector<1x8x50xf32>
    tpu.vector_store %arg31[%359, %c0_147, %c0_148], %362 {strides = array<i32>} : memref<8x8x50xf32, #tpu.memory_space<vmem>>, vector<1x8x50xf32>,
    %c4_i32 = arith.constant 4 : i32
    %363 = arith.index_cast %c4_i32 : i32 to index
    %c0_149 = arith.constant 0 : index
    %c0_150 = arith.constant 0 : index
    %364 = vector.load %arg1[%363, %c0_149, %c0_150] : memref<8x8x15xf32, #tpu.memory_space<vmem>>, vector<1x8x15xf32>
    %365 = vector.shape_cast %364 : vector<1x8x15xf32> to vector<8x15xf32>
    %366 = arith.index_cast %c4_i32 : i32 to index
    %c0_151 = arith.constant 0 : index
    %c0_152 = arith.constant 0 : index
    %367 = vector.load %arg2[%366, %c0_151, %c0_152] : memref<8x8x1xf32, #tpu.memory_space<vmem>>, vector<1x8x1xf32>
    %368 = vector.shape_cast %367 : vector<1x8x1xf32> to vector<8x1xf32>
    %369 = tpu.concatenate %365, %358 in 1 : vector<8x15xf32>, vector<8x50xf32> -> vector<8x65xf32>
    %cst_153 = arith.constant dense<0.000000e+00> : vector<8x100xf32>
    %370 = tpu.matmul %369, %0, %cst_153 {dimension_numbers = #tpu.dot_dimension_numbers<[1], [0], [0], [1], [0, 0, 1, 1], [], []>} : vector<8x65xf32>, vector<65x100xf32>, vector<8x100xf32> -> vector<8x100xf32>
    %371 = vector.broadcast %368 : vector<8x1xf32> to vector<8x100xf32>
    %372 = vector.broadcast %1 : vector<1x100xf32> to vector<8x100xf32>
    %373 = arith.mulf %371, %372 : vector<8x100xf32>
    %374 = arith.addf %370, %373 : vector<8x100xf32>
    %cst_154 = arith.constant dense<0.000000e+00> : vector<8x100xf32>
    %375 = tpu.matmul %301, %2, %cst_154 {dimension_numbers = #tpu.dot_dimension_numbers<[1], [0], [0], [1], [0, 0, 1, 1], [], []>} : vector<8x100xf32>, vector<100x100xf32>, vector<8x100xf32> -> vector<8x100xf32>
    %376 = arith.addf %374, %375 : vector<8x100xf32>
    %377 = arith.addf %376, %18 : vector<8x100xf32>
    %cst_155 = arith.constant 0.000000e+00 : f32
    %378 = vector.broadcast %cst_155 : f32 to vector<8x100xf32>
    %379 = arith.maximumf %377, %378 : vector<8x100xf32>
    %380 = math.tanh %379 : vector<8x100xf32>
    %cst_156 = arith.constant dense<0.000000e+00> : vector<8x100xf32>
    %381 = tpu.matmul %380, %3, %cst_156 {dimension_numbers = #tpu.dot_dimension_numbers<[1], [0], [0], [1], [0, 0, 1, 1], [], []>} : vector<8x100xf32>, vector<100x100xf32>, vector<8x100xf32> -> vector<8x100xf32>
    %382 = arith.addf %381, %21 : vector<8x100xf32>
    %cst_157 = arith.constant 0.000000e+00 : f32
    %383 = vector.broadcast %cst_157 : f32 to vector<8x100xf32>
    %384 = arith.maximumf %382, %383 : vector<8x100xf32>
    %385 = math.tanh %384 : vector<8x100xf32>
    %cst_158 = arith.constant dense<0.000000e+00> : vector<8x50xf32>
    %386 = tpu.matmul %385, %4, %cst_158 {dimension_numbers = #tpu.dot_dimension_numbers<[1], [0], [0], [1], [0, 0, 1, 1], [], []>} : vector<8x100xf32>, vector<100x50xf32>, vector<8x50xf32> -> vector<8x50xf32>
    %387 = vector.broadcast %368 : vector<8x1xf32> to vector<8x50xf32>
    %388 = vector.broadcast %5 : vector<1x50xf32> to vector<8x50xf32>
    %389 = arith.mulf %387, %388 : vector<8x50xf32>
    %390 = arith.addf %386, %389 : vector<8x50xf32>
    %391 = arith.addf %390, %42 : vector<8x50xf32>
    %cst_159 = arith.constant 0.000000e+00 : f32
    %392 = vector.broadcast %cst_159 : f32 to vector<8x50xf32>
    %393 = arith.maximumf %391, %392 : vector<8x50xf32>
    %394 = math.tanh %393 : vector<8x50xf32>
    %cst_160 = arith.constant dense<0.000000e+00> : vector<8x50xf32>
    %395 = tpu.matmul %394, %6, %cst_160 {dimension_numbers = #tpu.dot_dimension_numbers<[1], [0], [0], [1], [0, 0, 1, 1], [], []>} : vector<8x50xf32>, vector<50x50xf32>, vector<8x50xf32> -> vector<8x50xf32>
    %396 = vector.broadcast %368 : vector<8x1xf32> to vector<8x50xf32>
    %397 = vector.broadcast %7 : vector<1x50xf32> to vector<8x50xf32>
    %398 = arith.mulf %396, %397 : vector<8x50xf32>
    %399 = arith.addf %395, %398 : vector<8x50xf32>
    %400 = arith.addf %399, %24 : vector<8x50xf32>
    %cst_161 = arith.constant 0.000000e+00 : f32
    %401 = vector.broadcast %cst_161 : f32 to vector<8x50xf32>
    %402 = arith.maximumf %400, %401 : vector<8x50xf32>
    %403 = math.tanh %402 : vector<8x50xf32>
    %404 = tpu.concatenate %403, %394 in 1 : vector<8x50xf32>, vector<8x50xf32> -> vector<8x100xf32>
    %cst_162 = arith.constant dense<0.000000e+00> : vector<8x50xf32>
    %405 = tpu.matmul %404, %8, %cst_162 {dimension_numbers = #tpu.dot_dimension_numbers<[1], [0], [0], [1], [0, 0, 1, 1], [], []>} : vector<8x100xf32>, vector<100x50xf32>, vector<8x50xf32> -> vector<8x50xf32>
    %406 = vector.broadcast %368 : vector<8x1xf32> to vector<8x50xf32>
    %407 = vector.broadcast %9 : vector<1x50xf32> to vector<8x50xf32>
    %408 = arith.mulf %406, %407 : vector<8x50xf32>
    %409 = arith.addf %405, %408 : vector<8x50xf32>
    %410 = arith.addf %409, %27 : vector<8x50xf32>
    %cst_163 = arith.constant 0.000000e+00 : f32
    %411 = vector.broadcast %cst_163 : f32 to vector<8x50xf32>
    %412 = arith.maximumf %410, %411 : vector<8x50xf32>
    %413 = math.tanh %412 : vector<8x50xf32>
    %414 = tpu.concatenate %413, %358 in 1 : vector<8x50xf32>, vector<8x50xf32> -> vector<8x100xf32>
    %cst_164 = arith.constant dense<0.000000e+00> : vector<8x50xf32>
    %415 = tpu.matmul %414, %10, %cst_164 {dimension_numbers = #tpu.dot_dimension_numbers<[1], [0], [0], [1], [0, 0, 1, 1], [], []>} : vector<8x100xf32>, vector<100x50xf32>, vector<8x50xf32> -> vector<8x50xf32>
    %416 = vector.broadcast %368 : vector<8x1xf32> to vector<8x50xf32>
    %417 = vector.broadcast %11 : vector<1x50xf32> to vector<8x50xf32>
    %418 = arith.mulf %416, %417 : vector<8x50xf32>
    %419 = arith.addf %415, %418 : vector<8x50xf32>
    %420 = arith.addf %419, %30 : vector<8x50xf32>
    %cst_165 = arith.constant 0.000000e+00 : f32
    %421 = vector.broadcast %cst_165 : f32 to vector<8x50xf32>
    %422 = arith.maximumf %420, %421 : vector<8x50xf32>
    %423 = math.tanh %422 : vector<8x50xf32>
    %424 = tpu.concatenate %423, %306 in 1 : vector<8x50xf32>, vector<8x100xf32> -> vector<8x150xf32>
    %cst_166 = arith.constant dense<0.000000e+00> : vector<8x150xf32>
    %425 = tpu.matmul %424, %12, %cst_166 {dimension_numbers = #tpu.dot_dimension_numbers<[1], [0], [0], [1], [0, 0, 1, 1], [], []>} : vector<8x150xf32>, vector<150x150xf32>, vector<8x150xf32> -> vector<8x150xf32>
    %426 = vector.broadcast %368 : vector<8x1xf32> to vector<8x150xf32>
    %427 = vector.broadcast %13 : vector<1x150xf32> to vector<8x150xf32>
    %428 = arith.mulf %426, %427 : vector<8x150xf32>
    %429 = arith.addf %425, %428 : vector<8x150xf32>
    %cst_167 = arith.constant dense<0.000000e+00> : vector<8x150xf32>
    %430 = tpu.matmul %356, %14, %cst_167 {dimension_numbers = #tpu.dot_dimension_numbers<[1], [0], [0], [1], [0, 0, 1, 1], [], []>} : vector<8x150xf32>, vector<150x150xf32>, vector<8x150xf32> -> vector<8x150xf32>
    %431 = arith.addf %429, %430 : vector<8x150xf32>
    %432 = arith.addf %431, %33 : vector<8x150xf32>
    %cst_168 = arith.constant 0.000000e+00 : f32
    %433 = vector.broadcast %cst_168 : f32 to vector<8x150xf32>
    %434 = arith.maximumf %432, %433 : vector<8x150xf32>
    %435 = math.tanh %434 : vector<8x150xf32>
    %cst_169 = arith.constant dense<0.000000e+00> : vector<8x50xf32>
    %436 = tpu.matmul %435, %15, %cst_169 {dimension_numbers = #tpu.dot_dimension_numbers<[1], [0], [0], [1], [0, 0, 1, 1], [], []>} : vector<8x150xf32>, vector<150x50xf32>, vector<8x50xf32> -> vector<8x50xf32>
    %437 = arith.addf %436, %36 : vector<8x50xf32>
    %438 = arith.index_cast %c4_i32 : i32 to index
    %c0_170 = arith.constant 0 : index
    %c0_171 = arith.constant 0 : index
    %439 = vector.load %arg31[%438, %c0_170, %c0_171] : memref<8x8x50xf32, #tpu.memory_space<vmem>>, vector<1x8x50xf32>
    %440 = vector.shape_cast %439 : vector<1x8x50xf32> to vector<8x50xf32>
    %441 = vector.shape_cast %437 : vector<8x50xf32> to vector<1x8x50xf32>
    tpu.vector_store %arg31[%438, %c0_170, %c0_171], %441 {strides = array<i32>} : memref<8x8x50xf32, #tpu.memory_space<vmem>>, vector<1x8x50xf32>,
    %c5_i32 = arith.constant 5 : i32
    %442 = arith.index_cast %c5_i32 : i32 to index
    %c0_172 = arith.constant 0 : index
    %c0_173 = arith.constant 0 : index
    %443 = vector.load %arg1[%442, %c0_172, %c0_173] : memref<8x8x15xf32, #tpu.memory_space<vmem>>, vector<1x8x15xf32>
    %444 = vector.shape_cast %443 : vector<1x8x15xf32> to vector<8x15xf32>
    %445 = arith.index_cast %c5_i32 : i32 to index
    %c0_174 = arith.constant 0 : index
    %c0_175 = arith.constant 0 : index
    %446 = vector.load %arg2[%445, %c0_174, %c0_175] : memref<8x8x1xf32, #tpu.memory_space<vmem>>, vector<1x8x1xf32>
    %447 = vector.shape_cast %446 : vector<1x8x1xf32> to vector<8x1xf32>
    %448 = tpu.concatenate %444, %437 in 1 : vector<8x15xf32>, vector<8x50xf32> -> vector<8x65xf32>
    %cst_176 = arith.constant dense<0.000000e+00> : vector<8x100xf32>
    %449 = tpu.matmul %448, %0, %cst_176 {dimension_numbers = #tpu.dot_dimension_numbers<[1], [0], [0], [1], [0, 0, 1, 1], [], []>} : vector<8x65xf32>, vector<65x100xf32>, vector<8x100xf32> -> vector<8x100xf32>
    %450 = vector.broadcast %447 : vector<8x1xf32> to vector<8x100xf32>
    %451 = vector.broadcast %1 : vector<1x100xf32> to vector<8x100xf32>
    %452 = arith.mulf %450, %451 : vector<8x100xf32>
    %453 = arith.addf %449, %452 : vector<8x100xf32>
    %cst_177 = arith.constant dense<0.000000e+00> : vector<8x100xf32>
    %454 = tpu.matmul %380, %2, %cst_177 {dimension_numbers = #tpu.dot_dimension_numbers<[1], [0], [0], [1], [0, 0, 1, 1], [], []>} : vector<8x100xf32>, vector<100x100xf32>, vector<8x100xf32> -> vector<8x100xf32>
    %455 = arith.addf %453, %454 : vector<8x100xf32>
    %456 = arith.addf %455, %18 : vector<8x100xf32>
    %cst_178 = arith.constant 0.000000e+00 : f32
    %457 = vector.broadcast %cst_178 : f32 to vector<8x100xf32>
    %458 = arith.maximumf %456, %457 : vector<8x100xf32>
    %459 = math.tanh %458 : vector<8x100xf32>
    %cst_179 = arith.constant dense<0.000000e+00> : vector<8x100xf32>
    %460 = tpu.matmul %459, %3, %cst_179 {dimension_numbers = #tpu.dot_dimension_numbers<[1], [0], [0], [1], [0, 0, 1, 1], [], []>} : vector<8x100xf32>, vector<100x100xf32>, vector<8x100xf32> -> vector<8x100xf32>
    %461 = arith.addf %460, %21 : vector<8x100xf32>
    %cst_180 = arith.constant 0.000000e+00 : f32
    %462 = vector.broadcast %cst_180 : f32 to vector<8x100xf32>
    %463 = arith.maximumf %461, %462 : vector<8x100xf32>
    %464 = math.tanh %463 : vector<8x100xf32>
    %cst_181 = arith.constant dense<0.000000e+00> : vector<8x50xf32>
    %465 = tpu.matmul %464, %4, %cst_181 {dimension_numbers = #tpu.dot_dimension_numbers<[1], [0], [0], [1], [0, 0, 1, 1], [], []>} : vector<8x100xf32>, vector<100x50xf32>, vector<8x50xf32> -> vector<8x50xf32>
    %466 = vector.broadcast %447 : vector<8x1xf32> to vector<8x50xf32>
    %467 = vector.broadcast %5 : vector<1x50xf32> to vector<8x50xf32>
    %468 = arith.mulf %466, %467 : vector<8x50xf32>
    %469 = arith.addf %465, %468 : vector<8x50xf32>
    %470 = arith.addf %469, %42 : vector<8x50xf32>
    %cst_182 = arith.constant 0.000000e+00 : f32
    %471 = vector.broadcast %cst_182 : f32 to vector<8x50xf32>
    %472 = arith.maximumf %470, %471 : vector<8x50xf32>
    %473 = math.tanh %472 : vector<8x50xf32>
    %cst_183 = arith.constant dense<0.000000e+00> : vector<8x50xf32>
    %474 = tpu.matmul %473, %6, %cst_183 {dimension_numbers = #tpu.dot_dimension_numbers<[1], [0], [0], [1], [0, 0, 1, 1], [], []>} : vector<8x50xf32>, vector<50x50xf32>, vector<8x50xf32> -> vector<8x50xf32>
    %475 = vector.broadcast %447 : vector<8x1xf32> to vector<8x50xf32>
    %476 = vector.broadcast %7 : vector<1x50xf32> to vector<8x50xf32>
    %477 = arith.mulf %475, %476 : vector<8x50xf32>
    %478 = arith.addf %474, %477 : vector<8x50xf32>
    %479 = arith.addf %478, %24 : vector<8x50xf32>
    %cst_184 = arith.constant 0.000000e+00 : f32
    %480 = vector.broadcast %cst_184 : f32 to vector<8x50xf32>
    %481 = arith.maximumf %479, %480 : vector<8x50xf32>
    %482 = math.tanh %481 : vector<8x50xf32>
    %483 = tpu.concatenate %482, %473 in 1 : vector<8x50xf32>, vector<8x50xf32> -> vector<8x100xf32>
    %cst_185 = arith.constant dense<0.000000e+00> : vector<8x50xf32>
    %484 = tpu.matmul %483, %8, %cst_185 {dimension_numbers = #tpu.dot_dimension_numbers<[1], [0], [0], [1], [0, 0, 1, 1], [], []>} : vector<8x100xf32>, vector<100x50xf32>, vector<8x50xf32> -> vector<8x50xf32>
    %485 = vector.broadcast %447 : vector<8x1xf32> to vector<8x50xf32>
    %486 = vector.broadcast %9 : vector<1x50xf32> to vector<8x50xf32>
    %487 = arith.mulf %485, %486 : vector<8x50xf32>
    %488 = arith.addf %484, %487 : vector<8x50xf32>
    %489 = arith.addf %488, %27 : vector<8x50xf32>
    %cst_186 = arith.constant 0.000000e+00 : f32
    %490 = vector.broadcast %cst_186 : f32 to vector<8x50xf32>
    %491 = arith.maximumf %489, %490 : vector<8x50xf32>
    %492 = math.tanh %491 : vector<8x50xf32>
    %493 = tpu.concatenate %492, %437 in 1 : vector<8x50xf32>, vector<8x50xf32> -> vector<8x100xf32>
    %cst_187 = arith.constant dense<0.000000e+00> : vector<8x50xf32>
    %494 = tpu.matmul %493, %10, %cst_187 {dimension_numbers = #tpu.dot_dimension_numbers<[1], [0], [0], [1], [0, 0, 1, 1], [], []>} : vector<8x100xf32>, vector<100x50xf32>, vector<8x50xf32> -> vector<8x50xf32>
    %495 = vector.broadcast %447 : vector<8x1xf32> to vector<8x50xf32>
    %496 = vector.broadcast %11 : vector<1x50xf32> to vector<8x50xf32>
    %497 = arith.mulf %495, %496 : vector<8x50xf32>
    %498 = arith.addf %494, %497 : vector<8x50xf32>
    %499 = arith.addf %498, %30 : vector<8x50xf32>
    %cst_188 = arith.constant 0.000000e+00 : f32
    %500 = vector.broadcast %cst_188 : f32 to vector<8x50xf32>
    %501 = arith.maximumf %499, %500 : vector<8x50xf32>
    %502 = math.tanh %501 : vector<8x50xf32>
    %503 = tpu.concatenate %502, %385 in 1 : vector<8x50xf32>, vector<8x100xf32> -> vector<8x150xf32>
    %cst_189 = arith.constant dense<0.000000e+00> : vector<8x150xf32>
    %504 = tpu.matmul %503, %12, %cst_189 {dimension_numbers = #tpu.dot_dimension_numbers<[1], [0], [0], [1], [0, 0, 1, 1], [], []>} : vector<8x150xf32>, vector<150x150xf32>, vector<8x150xf32> -> vector<8x150xf32>
    %505 = vector.broadcast %447 : vector<8x1xf32> to vector<8x150xf32>
    %506 = vector.broadcast %13 : vector<1x150xf32> to vector<8x150xf32>
    %507 = arith.mulf %505, %506 : vector<8x150xf32>
    %508 = arith.addf %504, %507 : vector<8x150xf32>
    %cst_190 = arith.constant dense<0.000000e+00> : vector<8x150xf32>
    %509 = tpu.matmul %435, %14, %cst_190 {dimension_numbers = #tpu.dot_dimension_numbers<[1], [0], [0], [1], [0, 0, 1, 1], [], []>} : vector<8x150xf32>, vector<150x150xf32>, vector<8x150xf32> -> vector<8x150xf32>
    %510 = arith.addf %508, %509 : vector<8x150xf32>
    %511 = arith.addf %510, %33 : vector<8x150xf32>
    %cst_191 = arith.constant 0.000000e+00 : f32
    %512 = vector.broadcast %cst_191 : f32 to vector<8x150xf32>
    %513 = arith.maximumf %511, %512 : vector<8x150xf32>
    %514 = math.tanh %513 : vector<8x150xf32>
    %cst_192 = arith.constant dense<0.000000e+00> : vector<8x50xf32>
    %515 = tpu.matmul %514, %15, %cst_192 {dimension_numbers = #tpu.dot_dimension_numbers<[1], [0], [0], [1], [0, 0, 1, 1], [], []>} : vector<8x150xf32>, vector<150x50xf32>, vector<8x50xf32> -> vector<8x50xf32>
    %516 = arith.addf %515, %36 : vector<8x50xf32>
    %517 = arith.index_cast %c5_i32 : i32 to index
    %c0_193 = arith.constant 0 : index
    %c0_194 = arith.constant 0 : index
    %518 = vector.load %arg31[%517, %c0_193, %c0_194] : memref<8x8x50xf32, #tpu.memory_space<vmem>>, vector<1x8x50xf32>
    %519 = vector.shape_cast %518 : vector<1x8x50xf32> to vector<8x50xf32>
    %520 = vector.shape_cast %516 : vector<8x50xf32> to vector<1x8x50xf32>
    tpu.vector_store %arg31[%517, %c0_193, %c0_194], %520 {strides = array<i32>} : memref<8x8x50xf32, #tpu.memory_space<vmem>>, vector<1x8x50xf32>,
    %c6_i32 = arith.constant 6 : i32
    %521 = arith.index_cast %c6_i32 : i32 to index
    %c0_195 = arith.constant 0 : index
    %c0_196 = arith.constant 0 : index
    %522 = vector.load %arg1[%521, %c0_195, %c0_196] : memref<8x8x15xf32, #tpu.memory_space<vmem>>, vector<1x8x15xf32>
    %523 = vector.shape_cast %522 : vector<1x8x15xf32> to vector<8x15xf32>
    %524 = arith.index_cast %c6_i32 : i32 to index
    %c0_197 = arith.constant 0 : index
    %c0_198 = arith.constant 0 : index
    %525 = vector.load %arg2[%524, %c0_197, %c0_198] : memref<8x8x1xf32, #tpu.memory_space<vmem>>, vector<1x8x1xf32>
    %526 = vector.shape_cast %525 : vector<1x8x1xf32> to vector<8x1xf32>
    %527 = tpu.concatenate %523, %516 in 1 : vector<8x15xf32>, vector<8x50xf32> -> vector<8x65xf32>
    %cst_199 = arith.constant dense<0.000000e+00> : vector<8x100xf32>
    %528 = tpu.matmul %527, %0, %cst_199 {dimension_numbers = #tpu.dot_dimension_numbers<[1], [0], [0], [1], [0, 0, 1, 1], [], []>} : vector<8x65xf32>, vector<65x100xf32>, vector<8x100xf32> -> vector<8x100xf32>
    %529 = vector.broadcast %526 : vector<8x1xf32> to vector<8x100xf32>
    %530 = vector.broadcast %1 : vector<1x100xf32> to vector<8x100xf32>
    %531 = arith.mulf %529, %530 : vector<8x100xf32>
    %532 = arith.addf %528, %531 : vector<8x100xf32>
    %cst_200 = arith.constant dense<0.000000e+00> : vector<8x100xf32>
    %533 = tpu.matmul %459, %2, %cst_200 {dimension_numbers = #tpu.dot_dimension_numbers<[1], [0], [0], [1], [0, 0, 1, 1], [], []>} : vector<8x100xf32>, vector<100x100xf32>, vector<8x100xf32> -> vector<8x100xf32>
    %534 = arith.addf %532, %533 : vector<8x100xf32>
    %535 = arith.addf %534, %18 : vector<8x100xf32>
    %cst_201 = arith.constant 0.000000e+00 : f32
    %536 = vector.broadcast %cst_201 : f32 to vector<8x100xf32>
    %537 = arith.maximumf %535, %536 : vector<8x100xf32>
    %538 = math.tanh %537 : vector<8x100xf32>
    %cst_202 = arith.constant dense<0.000000e+00> : vector<8x100xf32>
    %539 = tpu.matmul %538, %3, %cst_202 {dimension_numbers = #tpu.dot_dimension_numbers<[1], [0], [0], [1], [0, 0, 1, 1], [], []>} : vector<8x100xf32>, vector<100x100xf32>, vector<8x100xf32> -> vector<8x100xf32>
    %540 = arith.addf %539, %21 : vector<8x100xf32>
    %cst_203 = arith.constant 0.000000e+00 : f32
    %541 = vector.broadcast %cst_203 : f32 to vector<8x100xf32>
    %542 = arith.maximumf %540, %541 : vector<8x100xf32>
    %543 = math.tanh %542 : vector<8x100xf32>
    %cst_204 = arith.constant dense<0.000000e+00> : vector<8x50xf32>
    %544 = tpu.matmul %543, %4, %cst_204 {dimension_numbers = #tpu.dot_dimension_numbers<[1], [0], [0], [1], [0, 0, 1, 1], [], []>} : vector<8x100xf32>, vector<100x50xf32>, vector<8x50xf32> -> vector<8x50xf32>
    %545 = vector.broadcast %526 : vector<8x1xf32> to vector<8x50xf32>
    %546 = vector.broadcast %5 : vector<1x50xf32> to vector<8x50xf32>
    %547 = arith.mulf %545, %546 : vector<8x50xf32>
    %548 = arith.addf %544, %547 : vector<8x50xf32>
    %549 = arith.addf %548, %42 : vector<8x50xf32>
    %cst_205 = arith.constant 0.000000e+00 : f32
    %550 = vector.broadcast %cst_205 : f32 to vector<8x50xf32>
    %551 = arith.maximumf %549, %550 : vector<8x50xf32>
    %552 = math.tanh %551 : vector<8x50xf32>
    %cst_206 = arith.constant dense<0.000000e+00> : vector<8x50xf32>
    %553 = tpu.matmul %552, %6, %cst_206 {dimension_numbers = #tpu.dot_dimension_numbers<[1], [0], [0], [1], [0, 0, 1, 1], [], []>} : vector<8x50xf32>, vector<50x50xf32>, vector<8x50xf32> -> vector<8x50xf32>
    %554 = vector.broadcast %526 : vector<8x1xf32> to vector<8x50xf32>
    %555 = vector.broadcast %7 : vector<1x50xf32> to vector<8x50xf32>
    %556 = arith.mulf %554, %555 : vector<8x50xf32>
    %557 = arith.addf %553, %556 : vector<8x50xf32>
    %558 = arith.addf %557, %24 : vector<8x50xf32>
    %cst_207 = arith.constant 0.000000e+00 : f32
    %559 = vector.broadcast %cst_207 : f32 to vector<8x50xf32>
    %560 = arith.maximumf %558, %559 : vector<8x50xf32>
    %561 = math.tanh %560 : vector<8x50xf32>
    %562 = tpu.concatenate %561, %552 in 1 : vector<8x50xf32>, vector<8x50xf32> -> vector<8x100xf32>
    %cst_208 = arith.constant dense<0.000000e+00> : vector<8x50xf32>
    %563 = tpu.matmul %562, %8, %cst_208 {dimension_numbers = #tpu.dot_dimension_numbers<[1], [0], [0], [1], [0, 0, 1, 1], [], []>} : vector<8x100xf32>, vector<100x50xf32>, vector<8x50xf32> -> vector<8x50xf32>
    %564 = vector.broadcast %526 : vector<8x1xf32> to vector<8x50xf32>
    %565 = vector.broadcast %9 : vector<1x50xf32> to vector<8x50xf32>
    %566 = arith.mulf %564, %565 : vector<8x50xf32>
    %567 = arith.addf %563, %566 : vector<8x50xf32>
    %568 = arith.addf %567, %27 : vector<8x50xf32>
    %cst_209 = arith.constant 0.000000e+00 : f32
    %569 = vector.broadcast %cst_209 : f32 to vector<8x50xf32>
    %570 = arith.maximumf %568, %569 : vector<8x50xf32>
    %571 = math.tanh %570 : vector<8x50xf32>
    %572 = tpu.concatenate %571, %516 in 1 : vector<8x50xf32>, vector<8x50xf32> -> vector<8x100xf32>
    %cst_210 = arith.constant dense<0.000000e+00> : vector<8x50xf32>
    %573 = tpu.matmul %572, %10, %cst_210 {dimension_numbers = #tpu.dot_dimension_numbers<[1], [0], [0], [1], [0, 0, 1, 1], [], []>} : vector<8x100xf32>, vector<100x50xf32>, vector<8x50xf32> -> vector<8x50xf32>
    %574 = vector.broadcast %526 : vector<8x1xf32> to vector<8x50xf32>
    %575 = vector.broadcast %11 : vector<1x50xf32> to vector<8x50xf32>
    %576 = arith.mulf %574, %575 : vector<8x50xf32>
    %577 = arith.addf %573, %576 : vector<8x50xf32>
    %578 = arith.addf %577, %30 : vector<8x50xf32>
    %cst_211 = arith.constant 0.000000e+00 : f32
    %579 = vector.broadcast %cst_211 : f32 to vector<8x50xf32>
    %580 = arith.maximumf %578, %579 : vector<8x50xf32>
    %581 = math.tanh %580 : vector<8x50xf32>
    %582 = tpu.concatenate %581, %464 in 1 : vector<8x50xf32>, vector<8x100xf32> -> vector<8x150xf32>
    %cst_212 = arith.constant dense<0.000000e+00> : vector<8x150xf32>
    %583 = tpu.matmul %582, %12, %cst_212 {dimension_numbers = #tpu.dot_dimension_numbers<[1], [0], [0], [1], [0, 0, 1, 1], [], []>} : vector<8x150xf32>, vector<150x150xf32>, vector<8x150xf32> -> vector<8x150xf32>
    %584 = vector.broadcast %526 : vector<8x1xf32> to vector<8x150xf32>
    %585 = vector.broadcast %13 : vector<1x150xf32> to vector<8x150xf32>
    %586 = arith.mulf %584, %585 : vector<8x150xf32>
    %587 = arith.addf %583, %586 : vector<8x150xf32>
    %cst_213 = arith.constant dense<0.000000e+00> : vector<8x150xf32>
    %588 = tpu.matmul %514, %14, %cst_213 {dimension_numbers = #tpu.dot_dimension_numbers<[1], [0], [0], [1], [0, 0, 1, 1], [], []>} : vector<8x150xf32>, vector<150x150xf32>, vector<8x150xf32> -> vector<8x150xf32>
    %589 = arith.addf %587, %588 : vector<8x150xf32>
    %590 = arith.addf %589, %33 : vector<8x150xf32>
    %cst_214 = arith.constant 0.000000e+00 : f32
    %591 = vector.broadcast %cst_214 : f32 to vector<8x150xf32>
    %592 = arith.maximumf %590, %591 : vector<8x150xf32>
    %593 = math.tanh %592 : vector<8x150xf32>
    %cst_215 = arith.constant dense<0.000000e+00> : vector<8x50xf32>
    %594 = tpu.matmul %593, %15, %cst_215 {dimension_numbers = #tpu.dot_dimension_numbers<[1], [0], [0], [1], [0, 0, 1, 1], [], []>} : vector<8x150xf32>, vector<150x50xf32>, vector<8x50xf32> -> vector<8x50xf32>
    %595 = arith.addf %594, %36 : vector<8x50xf32>
    %596 = arith.index_cast %c6_i32 : i32 to index
    %c0_216 = arith.constant 0 : index
    %c0_217 = arith.constant 0 : index
    %597 = vector.load %arg31[%596, %c0_216, %c0_217] : memref<8x8x50xf32, #tpu.memory_space<vmem>>, vector<1x8x50xf32>
    %598 = vector.shape_cast %597 : vector<1x8x50xf32> to vector<8x50xf32>
    %599 = vector.shape_cast %595 : vector<8x50xf32> to vector<1x8x50xf32>
    tpu.vector_store %arg31[%596, %c0_216, %c0_217], %599 {strides = array<i32>} : memref<8x8x50xf32, #tpu.memory_space<vmem>>, vector<1x8x50xf32>,
    %c7_i32 = arith.constant 7 : i32
    %600 = arith.index_cast %c7_i32 : i32 to index
    %c0_218 = arith.constant 0 : index
    %c0_219 = arith.constant 0 : index
    %601 = vector.load %arg1[%600, %c0_218, %c0_219] : memref<8x8x15xf32, #tpu.memory_space<vmem>>, vector<1x8x15xf32>
    %602 = vector.shape_cast %601 : vector<1x8x15xf32> to vector<8x15xf32>
    %603 = arith.index_cast %c7_i32 : i32 to index
    %c0_220 = arith.constant 0 : index
    %c0_221 = arith.constant 0 : index
    %604 = vector.load %arg2[%603, %c0_220, %c0_221] : memref<8x8x1xf32, #tpu.memory_space<vmem>>, vector<1x8x1xf32>
    %605 = vector.shape_cast %604 : vector<1x8x1xf32> to vector<8x1xf32>
    %606 = tpu.concatenate %602, %595 in 1 : vector<8x15xf32>, vector<8x50xf32> -> vector<8x65xf32>
    %cst_222 = arith.constant dense<0.000000e+00> : vector<8x100xf32>
    %607 = tpu.matmul %606, %0, %cst_222 {dimension_numbers = #tpu.dot_dimension_numbers<[1], [0], [0], [1], [0, 0, 1, 1], [], []>} : vector<8x65xf32>, vector<65x100xf32>, vector<8x100xf32> -> vector<8x100xf32>
    %608 = vector.broadcast %605 : vector<8x1xf32> to vector<8x100xf32>
    %609 = vector.broadcast %1 : vector<1x100xf32> to vector<8x100xf32>
    %610 = arith.mulf %608, %609 : vector<8x100xf32>
    %611 = arith.addf %607, %610 : vector<8x100xf32>
    %cst_223 = arith.constant dense<0.000000e+00> : vector<8x100xf32>
    %612 = tpu.matmul %538, %2, %cst_223 {dimension_numbers = #tpu.dot_dimension_numbers<[1], [0], [0], [1], [0, 0, 1, 1], [], []>} : vector<8x100xf32>, vector<100x100xf32>, vector<8x100xf32> -> vector<8x100xf32>
    %613 = arith.addf %611, %612 : vector<8x100xf32>
    %614 = arith.addf %613, %18 : vector<8x100xf32>
    %cst_224 = arith.constant 0.000000e+00 : f32
    %615 = vector.broadcast %cst_224 : f32 to vector<8x100xf32>
    %616 = arith.maximumf %614, %615 : vector<8x100xf32>
    %617 = math.tanh %616 : vector<8x100xf32>
    %cst_225 = arith.constant dense<0.000000e+00> : vector<8x100xf32>
    %618 = tpu.matmul %617, %3, %cst_225 {dimension_numbers = #tpu.dot_dimension_numbers<[1], [0], [0], [1], [0, 0, 1, 1], [], []>} : vector<8x100xf32>, vector<100x100xf32>, vector<8x100xf32> -> vector<8x100xf32>
    %619 = arith.addf %618, %21 : vector<8x100xf32>
    %cst_226 = arith.constant 0.000000e+00 : f32
    %620 = vector.broadcast %cst_226 : f32 to vector<8x100xf32>
    %621 = arith.maximumf %619, %620 : vector<8x100xf32>
    %622 = math.tanh %621 : vector<8x100xf32>
    %cst_227 = arith.constant dense<0.000000e+00> : vector<8x50xf32>
    %623 = tpu.matmul %622, %4, %cst_227 {dimension_numbers = #tpu.dot_dimension_numbers<[1], [0], [0], [1], [0, 0, 1, 1], [], []>} : vector<8x100xf32>, vector<100x50xf32>, vector<8x50xf32> -> vector<8x50xf32>
    %624 = vector.broadcast %605 : vector<8x1xf32> to vector<8x50xf32>
    %625 = vector.broadcast %5 : vector<1x50xf32> to vector<8x50xf32>
    %626 = arith.mulf %624, %625 : vector<8x50xf32>
    %627 = arith.addf %623, %626 : vector<8x50xf32>
    %628 = arith.addf %627, %42 : vector<8x50xf32>
    %cst_228 = arith.constant 0.000000e+00 : f32
    %629 = vector.broadcast %cst_228 : f32 to vector<8x50xf32>
    %630 = arith.maximumf %628, %629 : vector<8x50xf32>
    %631 = math.tanh %630 : vector<8x50xf32>
    %cst_229 = arith.constant dense<0.000000e+00> : vector<8x50xf32>
    %632 = tpu.matmul %631, %6, %cst_229 {dimension_numbers = #tpu.dot_dimension_numbers<[1], [0], [0], [1], [0, 0, 1, 1], [], []>} : vector<8x50xf32>, vector<50x50xf32>, vector<8x50xf32> -> vector<8x50xf32>
    %633 = vector.broadcast %605 : vector<8x1xf32> to vector<8x50xf32>
    %634 = vector.broadcast %7 : vector<1x50xf32> to vector<8x50xf32>
    %635 = arith.mulf %633, %634 : vector<8x50xf32>
    %636 = arith.addf %632, %635 : vector<8x50xf32>
    %637 = arith.addf %636, %24 : vector<8x50xf32>
    %cst_230 = arith.constant 0.000000e+00 : f32
    %638 = vector.broadcast %cst_230 : f32 to vector<8x50xf32>
    %639 = arith.maximumf %637, %638 : vector<8x50xf32>
    %640 = math.tanh %639 : vector<8x50xf32>
    %641 = tpu.concatenate %640, %631 in 1 : vector<8x50xf32>, vector<8x50xf32> -> vector<8x100xf32>
    %cst_231 = arith.constant dense<0.000000e+00> : vector<8x50xf32>
    %642 = tpu.matmul %641, %8, %cst_231 {dimension_numbers = #tpu.dot_dimension_numbers<[1], [0], [0], [1], [0, 0, 1, 1], [], []>} : vector<8x100xf32>, vector<100x50xf32>, vector<8x50xf32> -> vector<8x50xf32>
    %643 = vector.broadcast %605 : vector<8x1xf32> to vector<8x50xf32>
    %644 = vector.broadcast %9 : vector<1x50xf32> to vector<8x50xf32>
    %645 = arith.mulf %643, %644 : vector<8x50xf32>
    %646 = arith.addf %642, %645 : vector<8x50xf32>
    %647 = arith.addf %646, %27 : vector<8x50xf32>
    %cst_232 = arith.constant 0.000000e+00 : f32
    %648 = vector.broadcast %cst_232 : f32 to vector<8x50xf32>
    %649 = arith.maximumf %647, %648 : vector<8x50xf32>
    %650 = math.tanh %649 : vector<8x50xf32>
    %651 = tpu.concatenate %650, %595 in 1 : vector<8x50xf32>, vector<8x50xf32> -> vector<8x100xf32>
    %cst_233 = arith.constant dense<0.000000e+00> : vector<8x50xf32>
    %652 = tpu.matmul %651, %10, %cst_233 {dimension_numbers = #tpu.dot_dimension_numbers<[1], [0], [0], [1], [0, 0, 1, 1], [], []>} : vector<8x100xf32>, vector<100x50xf32>, vector<8x50xf32> -> vector<8x50xf32>
    %653 = vector.broadcast %605 : vector<8x1xf32> to vector<8x50xf32>
    %654 = vector.broadcast %11 : vector<1x50xf32> to vector<8x50xf32>
    %655 = arith.mulf %653, %654 : vector<8x50xf32>
    %656 = arith.addf %652, %655 : vector<8x50xf32>
    %657 = arith.addf %656, %30 : vector<8x50xf32>
    %cst_234 = arith.constant 0.000000e+00 : f32
    %658 = vector.broadcast %cst_234 : f32 to vector<8x50xf32>
    %659 = arith.maximumf %657, %658 : vector<8x50xf32>
    %660 = math.tanh %659 : vector<8x50xf32>
    %661 = tpu.concatenate %660, %543 in 1 : vector<8x50xf32>, vector<8x100xf32> -> vector<8x150xf32>
    %cst_235 = arith.constant dense<0.000000e+00> : vector<8x150xf32>
    %662 = tpu.matmul %661, %12, %cst_235 {dimension_numbers = #tpu.dot_dimension_numbers<[1], [0], [0], [1], [0, 0, 1, 1], [], []>} : vector<8x150xf32>, vector<150x150xf32>, vector<8x150xf32> -> vector<8x150xf32>
    %663 = vector.broadcast %605 : vector<8x1xf32> to vector<8x150xf32>
    %664 = vector.broadcast %13 : vector<1x150xf32> to vector<8x150xf32>
    %665 = arith.mulf %663, %664 : vector<8x150xf32>
    %666 = arith.addf %662, %665 : vector<8x150xf32>
    %cst_236 = arith.constant dense<0.000000e+00> : vector<8x150xf32>
    %667 = tpu.matmul %593, %14, %cst_236 {dimension_numbers = #tpu.dot_dimension_numbers<[1], [0], [0], [1], [0, 0, 1, 1], [], []>} : vector<8x150xf32>, vector<150x150xf32>, vector<8x150xf32> -> vector<8x150xf32>
    %668 = arith.addf %666, %667 : vector<8x150xf32>
    %669 = arith.addf %668, %33 : vector<8x150xf32>
    %cst_237 = arith.constant 0.000000e+00 : f32
    %670 = vector.broadcast %cst_237 : f32 to vector<8x150xf32>
    %671 = arith.maximumf %669, %670 : vector<8x150xf32>
    %672 = math.tanh %671 : vector<8x150xf32>
    %cst_238 = arith.constant dense<0.000000e+00> : vector<8x50xf32>
    %673 = tpu.matmul %672, %15, %cst_238 {dimension_numbers = #tpu.dot_dimension_numbers<[1], [0], [0], [1], [0, 0, 1, 1], [], []>} : vector<8x150xf32>, vector<150x50xf32>, vector<8x50xf32> -> vector<8x50xf32>
    %674 = arith.addf %673, %36 : vector<8x50xf32>
    %675 = arith.index_cast %c7_i32 : i32 to index
    %c0_239 = arith.constant 0 : index
    %c0_240 = arith.constant 0 : index
    %676 = vector.load %arg31[%675, %c0_239, %c0_240] : memref<8x8x50xf32, #tpu.memory_space<vmem>>, vector<1x8x50xf32>
    %677 = vector.shape_cast %676 : vector<1x8x50xf32> to vector<8x50xf32>
    %678 = vector.shape_cast %674 : vector<8x50xf32> to vector<1x8x50xf32>
    tpu.vector_store %arg31[%675, %c0_239, %c0_240], %678 {strides = array<i32>} : memref<8x8x50xf32, #tpu.memory_space<vmem>>, vector<1x8x50xf32>,
    %c8_i32 = arith.constant 8 : i32
    return
  }
  func.func @transform_0(%arg0: i32) -> (i32, i32, i32) {
    %c0_i32 = arith.constant 0 : i32
    %c0_i32_0 = arith.constant 0 : i32
    %c0_i32_1 = arith.constant 0 : i32
    %c0_i32_2 = arith.constant 0 : i32
    return %c0_i32, %c0_i32_0, %c0_i32_1 : i32, i32, i32
  }
  func.func @transform_1(%arg0: i32) -> (i32, i32, i32) {
    %c0_i32 = arith.constant 0 : i32
    %c0_i32_0 = arith.constant 0 : i32
    %c0_i32_1 = arith.constant 0 : i32
    %c0_i32_2 = arith.constant 0 : i32
    return %c0_i32, %c0_i32_0, %c0_i32_1 : i32, i32, i32
  }
  func.func @transform_2(%arg0: i32) -> (i32, i32) {
    %c0_i32 = arith.constant 0 : i32
    %c0_i32_0 = arith.constant 0 : i32
    %c0_i32_1 = arith.constant 0 : i32
    return %c0_i32, %c0_i32_0 : i32, i32
  }
  func.func @transform_3(%arg0: i32) -> (i32, i32) {
    %c0_i32 = arith.constant 0 : i32
    %c0_i32_0 = arith.constant 0 : i32
    %c0_i32_1 = arith.constant 0 : i32
    return %c0_i32, %c0_i32_0 : i32, i32
  }
  func.func @transform_4(%arg0: i32) -> (i32, i32) {
    %c0_i32 = arith.constant 0 : i32
    %c0_i32_0 = arith.constant 0 : i32
    %c0_i32_1 = arith.constant 0 : i32
    return %c0_i32, %c0_i32_0 : i32, i32
  }
  func.func @transform_5(%arg0: i32) -> (i32, i32) {
    %c0_i32 = arith.constant 0 : i32
    %c0_i32_0 = arith.constant 0 : i32
    %c0_i32_1 = arith.constant 0 : i32
    return %c0_i32, %c0_i32_0 : i32, i32
  }
  func.func @transform_6(%arg0: i32) -> (i32, i32) {
    %c0_i32 = arith.constant 0 : i32
    %c0_i32_0 = arith.constant 0 : i32
    %c0_i32_1 = arith.constant 0 : i32
    return %c0_i32, %c0_i32_0 : i32, i32
  }
  func.func @transform_7(%arg0: i32) -> (i32, i32) {
    %c0_i32 = arith.constant 0 : i32
    %c0_i32_0 = arith.constant 0 : i32
    %c0_i32_1 = arith.constant 0 : i32
    return %c0_i32, %c0_i32_0 : i32, i32
  }
  func.func @transform_8(%arg0: i32) -> (i32, i32) {
    %c0_i32 = arith.constant 0 : i32
    %c0_i32_0 = arith.constant 0 : i32
    %c0_i32_1 = arith.constant 0 : i32
    return %c0_i32, %c0_i32_0 : i32, i32
  }
  func.func @transform_9(%arg0: i32) -> (i32, i32) {
    %c0_i32 = arith.constant 0 : i32
    %c0_i32_0 = arith.constant 0 : i32
    %c0_i32_1 = arith.constant 0 : i32
    return %c0_i32, %c0_i32_0 : i32, i32
  }
  func.func @transform_10(%arg0: i32) -> (i32, i32) {
    %c0_i32 = arith.constant 0 : i32
    %c0_i32_0 = arith.constant 0 : i32
    %c0_i32_1 = arith.constant 0 : i32
    return %c0_i32, %c0_i32_0 : i32, i32
  }
  func.func @transform_11(%arg0: i32) -> (i32, i32) {
    %c0_i32 = arith.constant 0 : i32
    %c0_i32_0 = arith.constant 0 : i32
    %c0_i32_1 = arith.constant 0 : i32
    return %c0_i32, %c0_i32_0 : i32, i32
  }
  func.func @transform_12(%arg0: i32) -> (i32, i32) {
    %c0_i32 = arith.constant 0 : i32
    %c0_i32_0 = arith.constant 0 : i32
    %c0_i32_1 = arith.constant 0 : i32
    return %c0_i32, %c0_i32_0 : i32, i32
  }
  func.func @transform_13(%arg0: i32) -> (i32, i32) {
    %c0_i32 = arith.constant 0 : i32
    %c0_i32_0 = arith.constant 0 : i32
    %c0_i32_1 = arith.constant 0 : i32
    return %c0_i32, %c0_i32_0 : i32, i32
  }
  func.func @transform_14(%arg0: i32) -> (i32, i32) {
    %c0_i32 = arith.constant 0 : i32
    %c0_i32_0 = arith.constant 0 : i32
    %c0_i32_1 = arith.constant 0 : i32
    return %c0_i32, %c0_i32_0 : i32, i32
  }
  func.func @transform_15(%arg0: i32) -> (i32, i32) {
    %c0_i32 = arith.constant 0 : i32
    %c0_i32_0 = arith.constant 0 : i32
    %c0_i32_1 = arith.constant 0 : i32
    return %c0_i32, %c0_i32_0 : i32, i32
  }
  func.func @transform_16(%arg0: i32) -> (i32, i32) {
    %c0_i32 = arith.constant 0 : i32
    %c0_i32_0 = arith.constant 0 : i32
    %c0_i32_1 = arith.constant 0 : i32
    return %c0_i32, %c0_i32_0 : i32, i32
  }
  func.func @transform_17(%arg0: i32) -> (i32, i32) {
    %c0_i32 = arith.constant 0 : i32
    %c0_i32_0 = arith.constant 0 : i32
    %c0_i32_1 = arith.constant 0 : i32
    return %c0_i32, %c0_i32_0 : i32, i32
  }
  func.func @transform_18(%arg0: i32) -> (i32, i32) {
    %c0_i32 = arith.constant 0 : i32
    %c0_i32_0 = arith.constant 0 : i32
    %c0_i32_1 = arith.constant 0 : i32
    return %c0_i32, %c0_i32_0 : i32, i32
  }
  func.func @transform_19(%arg0: i32) -> (i32, i32) {
    %c0_i32 = arith.constant 0 : i32
    %c0_i32_0 = arith.constant 0 : i32
    %c0_i32_1 = arith.constant 0 : i32
    return %c0_i32, %c0_i32_0 : i32, i32
  }
  func.func @transform_20(%arg0: i32) -> (i32, i32) {
    %c0_i32 = arith.constant 0 : i32
    %c0_i32_0 = arith.constant 0 : i32
    %c0_i32_1 = arith.constant 0 : i32
    return %c0_i32, %c0_i32_0 : i32, i32
  }
  func.func @transform_21(%arg0: i32) -> (i32, i32) {
    %c0_i32 = arith.constant 0 : i32
    %c0_i32_0 = arith.constant 0 : i32
    %c0_i32_1 = arith.constant 0 : i32
    return %c0_i32, %c0_i32_0 : i32, i32
  }
  func.func @transform_22(%arg0: i32) -> (i32, i32) {
    %c0_i32 = arith.constant 0 : i32
    %c0_i32_0 = arith.constant 0 : i32
    %c0_i32_1 = arith.constant 0 : i32
    return %c0_i32, %c0_i32_0 : i32, i32
  }
  func.func @transform_23(%arg0: i32) -> (i32, i32) {
    %c0_i32 = arith.constant 0 : i32
    %c0_i32_0 = arith.constant 0 : i32
    %c0_i32_1 = arith.constant 0 : i32
    return %c0_i32, %c0_i32_0 : i32, i32
  }
  func.func @transform_24(%arg0: i32) -> (i32, i32) {
    %c0_i32 = arith.constant 0 : i32
    %c0_i32_0 = arith.constant 0 : i32
    %c0_i32_1 = arith.constant 0 : i32
    return %c0_i32, %c0_i32_0 : i32, i32
  }
  func.func @transform_25(%arg0: i32) -> (i32, i32) {
    %c0_i32 = arith.constant 0 : i32
    %c0_i32_0 = arith.constant 0 : i32
    %c0_i32_1 = arith.constant 0 : i32
    return %c0_i32, %c0_i32_0 : i32, i32
  }
  func.func @transform_26(%arg0: i32) -> (i32, i32) {
    %c0_i32 = arith.constant 0 : i32
    %c0_i32_0 = arith.constant 0 : i32
    %c0_i32_1 = arith.constant 0 : i32
    return %c0_i32, %c0_i32_0 : i32, i32
  }
  func.func @transform_27(%arg0: i32) -> (i32, i32) {
    %c0_i32 = arith.constant 0 : i32
    %c0_i32_0 = arith.constant 0 : i32
    %c0_i32_1 = arith.constant 0 : i32
    return %c0_i32, %c0_i32_0 : i32, i32
  }
  func.func @transform_28(%arg0: i32) -> (i32, i32) {
    %c0_i32 = arith.constant 0 : i32
    %c0_i32_0 = arith.constant 0 : i32
    %c0_i32_1 = arith.constant 0 : i32
    return %c0_i32, %c0_i32_0 : i32, i32
  }
  func.func @transform_29(%arg0: i32) -> (i32, i32) {
    %c0_i32 = arith.constant 0 : i32
    %c0_i32_0 = arith.constant 0 : i32
    %c0_i32_1 = arith.constant 0 : i32
    return %c0_i32, %c0_i32_0 : i32, i32
  }
  func.func @transform_30(%arg0: i32) -> (i32, i32, i32) {
    %c0_i32 = arith.constant 0 : i32
    %c0_i32_0 = arith.constant 0 : i32
    %c0_i32_1 = arith.constant 0 : i32
    %c0_i32_2 = arith.constant 0 : i32
    return %c0_i32, %c0_i32_0, %c0_i32_1 : i32, i32, i32
  }
}

</mosaic_0001>

<llo_original>
// kernel: millies_rnn_forward.1
$region0: #{millies_rnn_forward.1}
  #allocation0 [shape = 'u32[]', space=smem, size = 0x4, offset = 0x4, fixed_abs, tag = 'smem constant byte address 0x4 - core index']
  #allocation1 [shape = 'u32[144,128]{1,0:T(1,128)}', space=vmem, size = 0x12000, scoped, tag = 'internal scratch']
  %s0 = inlined_call_operand.smem [shape: u32[31], index: -1, kind: input, shape index: {}]
  %s1 = sld [smem:[%s0]]
  %s2 = scalar_lea.smem %s0, 1
  %s3 = sld [smem:[%s2]]
  %s4 = scalar_lea.smem %s0, 2
  %s5 = sld [smem:[%s4]]
  %s6 = scalar_lea.smem %s0, 3
  %s7 = sld [smem:[%s6]]
  %s8 = scalar_lea.smem %s0, 4
  %s9 = sld [smem:[%s8]]
  %s10 = scalar_lea.smem %s0, 5
  %s11 = sld [smem:[%s10]]
  %s12 = scalar_lea.smem %s0, 6
  %s13 = sld [smem:[%s12]]
  %s14 = scalar_lea.smem %s0, 7
  %s15 = sld [smem:[%s14]]
  %s16 = scalar_lea.smem %s0, 8
  %s17 = sld [smem:[%s16]]
  %s18 = scalar_lea.smem %s0, 9
  %s19 = sld [smem:[%s18]]
  %s20 = scalar_lea.smem %s0, 10
  %s21 = sld [smem:[%s20]]
  %s22 = scalar_lea.smem %s0, 11
  %s23 = sld [smem:[%s22]]
  %s24 = scalar_lea.smem %s0, 12
  %s25 = sld [smem:[%s24]]
  %s26 = scalar_lea.smem %s0, 13
  %s27 = sld [smem:[%s26]]
  %s28 = scalar_lea.smem %s0, 14
  %s29 = sld [smem:[%s28]]
  %s30 = scalar_lea.smem %s0, 15
  %s31 = sld [smem:[%s30]]
  %s32 = scalar_lea.smem %s0, 16
  %s33 = sld [smem:[%s32]]
  %s34 = scalar_lea.smem %s0, 17
  %s35 = sld [smem:[%s34]]
  %s36 = scalar_lea.smem %s0, 18
  %s37 = sld [smem:[%s36]]
  %s38 = scalar_lea.smem %s0, 19
  %s39 = sld [smem:[%s38]]
  %s40 = scalar_lea.smem %s0, 20
  %s41 = sld [smem:[%s40]]
  %s42 = scalar_lea.smem %s0, 21
  %s43 = sld [smem:[%s42]]
  %s44 = scalar_lea.smem %s0, 22
  %s45 = sld [smem:[%s44]]
  %s46 = scalar_lea.smem %s0, 23
  %s47 = sld [smem:[%s46]]
  %s48 = scalar_lea.smem %s0, 24
  %s49 = sld [smem:[%s48]]
  %s50 = scalar_lea.smem %s0, 25
  %s51 = sld [smem:[%s50]]
  %s52 = scalar_lea.smem %s0, 26
  %s53 = sld [smem:[%s52]]
  %s54 = scalar_lea.smem %s0, 27
  %s55 = sld [smem:[%s54]]
  %s56 = scalar_lea.smem %s0, 28
  %s57 = sld [smem:[%s56]]
  %s58 = scalar_lea.smem %s0, 29
  %s59 = sld [smem:[%s58]]
  %s60 = scalar_lea.smem %s0, 30
  %s61 = sld [smem:[%s60]]
  %s62 = sld [smem:[#allocation0]]
  $region130: #{millies_rnn_forward.1} parent=0
    _
  %s64 = ssub.s32 1, %s62
  %s65 = scalar_select 0, %s64, %s62
  // Predicated region
  $region2: #{millies_rnn_forward.1} parent=0 // pred_check
    _
  $region3: #{millies_rnn_forward.1} parent=0 // pred_check_branch
    %67 = sbr.rel (0) target = $region5
  $region4: #{millies_rnn_forward.1} parent=0 // pred_region
    _
  $region5: #{millies_rnn_forward.1} parent=0 // pred_fallthru
    _
  // Predicated region
  $region6: #{millies_rnn_forward.1} parent=0 // pred_check
    _
  $region7: #{millies_rnn_forward.1} parent=0 // pred_check_branch
    %69 = sbr.rel (0) target = $region9
  $region8: #{millies_rnn_forward.1} parent=0 // pred_region
    _
  $region9: #{millies_rnn_forward.1} parent=0 // pred_fallthru
    _
  // Predicated region
  $region10: #{millies_rnn_forward.1} parent=0 // pred_check
    _
  $region11: #{millies_rnn_forward.1} parent=0 // pred_check_branch
    %71 = sbr.rel (0) target = $region13
  $region12: #{millies_rnn_forward.1} parent=0 // pred_region
    _
  $region13: #{millies_rnn_forward.1} parent=0 // pred_fallthru
    _
  // Predicated region
  $region14: #{millies_rnn_forward.1} parent=0 // pred_check
    _
  $region15: #{millies_rnn_forward.1} parent=0 // pred_check_branch
    %73 = sbr.rel (0) target = $region17
  $region16: #{millies_rnn_forward.1} parent=0 // pred_region
    _
  $region17: #{millies_rnn_forward.1} parent=0 // pred_fallthru
    _
  // Predicated region
  $region18: #{millies_rnn_forward.1} parent=0 // pred_check
    _
  $region19: #{millies_rnn_forward.1} parent=0 // pred_check_branch
    %75 = sbr.rel (0) target = $region21
  $region20: #{millies_rnn_forward.1} parent=0 // pred_region
    _
  $region21: #{millies_rnn_forward.1} parent=0 // pred_fallthru
    _
  // Predicated region
  $region22: #{millies_rnn_forward.1} parent=0 // pred_check
    _
  $region23: #{millies_rnn_forward.1} parent=0 // pred_check_branch
    %77 = sbr.rel (0) target = $region25
  $region24: #{millies_rnn_forward.1} parent=0 // pred_region
    _
  $region25: #{millies_rnn_forward.1} parent=0 // pred_fallthru
    _
  // Predicated region
  $region26: #{millies_rnn_forward.1} parent=0 // pred_check
    _
  $region27: #{millies_rnn_forward.1} parent=0 // pred_check_branch
    %79 = sbr.rel (0) target = $region29
  $region28: #{millies_rnn_forward.1} parent=0 // pred_region
    _
  $region29: #{millies_rnn_forward.1} parent=0 // pred_fallthru
    _
  // Predicated region
  $region30: #{millies_rnn_forward.1} parent=0 // pred_check
    _
  $region31: #{millies_rnn_forward.1} parent=0 // pred_check_branch
    %81 = sbr.rel (0) target = $region33
  $region32: #{millies_rnn_forward.1} parent=0 // pred_region
    _
  $region33: #{millies_rnn_forward.1} parent=0 // pred_fallthru
    _
  // Predicated region
  $region34: #{millies_rnn_forward.1} parent=0 // pred_check
    _
  $region35: #{millies_rnn_forward.1} parent=0 // pred_check_branch
    %83 = sbr.rel (0) target = $region37
  $region36: #{millies_rnn_forward.1} parent=0 // pred_region
    _
  $region37: #{millies_rnn_forward.1} parent=0 // pred_fallthru
    _
  // Predicated region
  $region38: #{millies_rnn_forward.1} parent=0 // pred_check
    _
  $region39: #{millies_rnn_forward.1} parent=0 // pred_check_branch
    %85 = sbr.rel (0) target = $region41
  $region40: #{millies_rnn_forward.1} parent=0 // pred_region
    _
  $region41: #{millies_rnn_forward.1} parent=0 // pred_fallthru
    _
  // Predicated region
  $region42: #{millies_rnn_forward.1} parent=0 // pred_check
    _
  $region43: #{millies_rnn_forward.1} parent=0 // pred_check_branch
    %87 = sbr.rel (0) target = $region45
  $region44: #{millies_rnn_forward.1} parent=0 // pred_region
    _
  $region45: #{millies_rnn_forward.1} parent=0 // pred_fallthru
    _
  // Predicated region
  $region46: #{millies_rnn_forward.1} parent=0 // pred_check
    _
  $region47: #{millies_rnn_forward.1} parent=0 // pred_check_branch
    %89 = sbr.rel (0) target = $region49
  $region48: #{millies_rnn_forward.1} parent=0 // pred_region
    _
  $region49: #{millies_rnn_forward.1} parent=0 // pred_fallthru
    _
  // Predicated region
  $region50: #{millies_rnn_forward.1} parent=0 // pred_check
    _
  $region51: #{millies_rnn_forward.1} parent=0 // pred_check_branch
    %91 = sbr.rel (0) target = $region53
  $region52: #{millies_rnn_forward.1} parent=0 // pred_region
    _
  $region53: #{millies_rnn_forward.1} parent=0 // pred_fallthru
    _
  // Predicated region
  $region54: #{millies_rnn_forward.1} parent=0 // pred_check
    _
  $region55: #{millies_rnn_forward.1} parent=0 // pred_check_branch
    %93 = sbr.rel (0) target = $region57
  $region56: #{millies_rnn_forward.1} parent=0 // pred_region
    _
  $region57: #{millies_rnn_forward.1} parent=0 // pred_fallthru
    _
  // Predicated region
  $region58: #{millies_rnn_forward.1} parent=0 // pred_check
    _
  $region59: #{millies_rnn_forward.1} parent=0 // pred_check_branch
    %95 = sbr.rel (0) target = $region61
  $region60: #{millies_rnn_forward.1} parent=0 // pred_region
    _
  $region61: #{millies_rnn_forward.1} parent=0 // pred_fallthru
    _
  // Predicated region
  $region62: #{millies_rnn_forward.1} parent=0 // pred_check
    _
  $region63: #{millies_rnn_forward.1} parent=0 // pred_check_branch
    %97 = sbr.rel (0) target = $region65
  $region64: #{millies_rnn_forward.1} parent=0 // pred_region
    _
  $region65: #{millies_rnn_forward.1} parent=0 // pred_fallthru
    _
  // Predicated region
  $region66: #{millies_rnn_forward.1} parent=0 // pred_check
    _
  $region67: #{millies_rnn_forward.1} parent=0 // pred_check_branch
    %99 = sbr.rel (0) target = $region69
  $region68: #{millies_rnn_forward.1} parent=0 // pred_region
    _
  $region69: #{millies_rnn_forward.1} parent=0 // pred_fallthru
    _
  // Predicated region
  $region70: #{millies_rnn_forward.1} parent=0 // pred_check
    _
  $region71: #{millies_rnn_forward.1} parent=0 // pred_check_branch
    %101 = sbr.rel (0) target = $region73
  $region72: #{millies_rnn_forward.1} parent=0 // pred_region
    _
  $region73: #{millies_rnn_forward.1} parent=0 // pred_fallthru
    _
  // Predicated region
  $region74: #{millies_rnn_forward.1} parent=0 // pred_check
    _
  $region75: #{millies_rnn_forward.1} parent=0 // pred_check_branch
    %103 = sbr.rel (0) target = $region77
  $region76: #{millies_rnn_forward.1} parent=0 // pred_region
    _
  $region77: #{millies_rnn_forward.1} parent=0 // pred_fallthru
    _
  // Predicated region
  $region78: #{millies_rnn_forward.1} parent=0 // pred_check
    _
  $region79: #{millies_rnn_forward.1} parent=0 // pred_check_branch
    %105 = sbr.rel (0) target = $region81
  $region80: #{millies_rnn_forward.1} parent=0 // pred_region
    _
  $region81: #{millies_rnn_forward.1} parent=0 // pred_fallthru
    _
  // Predicated region
  $region82: #{millies_rnn_forward.1} parent=0 // pred_check
    _
  $region83: #{millies_rnn_forward.1} parent=0 // pred_check_branch
    %107 = sbr.rel (0) target = $region85
  $region84: #{millies_rnn_forward.1} parent=0 // pred_region
    _
  $region85: #{millies_rnn_forward.1} parent=0 // pred_fallthru
    _
  // Predicated region
  $region86: #{millies_rnn_forward.1} parent=0 // pred_check
    _
  $region87: #{millies_rnn_forward.1} parent=0 // pred_check_branch
    %109 = sbr.rel (0) target = $region89
  $region88: #{millies_rnn_forward.1} parent=0 // pred_region
    _
  $region89: #{millies_rnn_forward.1} parent=0 // pred_fallthru
    _
  // Predicated region
  $region90: #{millies_rnn_forward.1} parent=0 // pred_check
    _
  $region91: #{millies_rnn_forward.1} parent=0 // pred_check_branch
    %111 = sbr.rel (0) target = $region93
  $region92: #{millies_rnn_forward.1} parent=0 // pred_region
    _
  $region93: #{millies_rnn_forward.1} parent=0 // pred_fallthru
    _
  // Predicated region
  $region94: #{millies_rnn_forward.1} parent=0 // pred_check
    _
  $region95: #{millies_rnn_forward.1} parent=0 // pred_check_branch
    %113 = sbr.rel (0) target = $region97
  $region96: #{millies_rnn_forward.1} parent=0 // pred_region
    _
  $region97: #{millies_rnn_forward.1} parent=0 // pred_fallthru
    _
  // Predicated region
  $region98: #{millies_rnn_forward.1} parent=0 // pred_check
    _
  $region99: #{millies_rnn_forward.1} parent=0 // pred_check_branch
    %115 = sbr.rel (0) target = $region101
  $region100: #{millies_rnn_forward.1} parent=0 // pred_region
    _
  $region101: #{millies_rnn_forward.1} parent=0 // pred_fallthru
    _
  // Predicated region
  $region102: #{millies_rnn_forward.1} parent=0 // pred_check
    _
  $region103: #{millies_rnn_forward.1} parent=0 // pred_check_branch
    %117 = sbr.rel (0) target = $region105
  $region104: #{millies_rnn_forward.1} parent=0 // pred_region
    _
  $region105: #{millies_rnn_forward.1} parent=0 // pred_fallthru
    _
  // Predicated region
  $region106: #{millies_rnn_forward.1} parent=0 // pred_check
    _
  $region107: #{millies_rnn_forward.1} parent=0 // pred_check_branch
    %119 = sbr.rel (0) target = $region109
  $region108: #{millies_rnn_forward.1} parent=0 // pred_region
    _
  $region109: #{millies_rnn_forward.1} parent=0 // pred_fallthru
    _
  // Predicated region
  $region110: #{millies_rnn_forward.1} parent=0 // pred_check
    _
  $region111: #{millies_rnn_forward.1} parent=0 // pred_check_branch
    %121 = sbr.rel (0) target = $region113
  $region112: #{millies_rnn_forward.1} parent=0 // pred_region
    _
  $region113: #{millies_rnn_forward.1} parent=0 // pred_fallthru
    _
  // Predicated region
  $region114: #{millies_rnn_forward.1} parent=0 // pred_check
    _
  $region115: #{millies_rnn_forward.1} parent=0 // pred_check_branch
    %123 = sbr.rel (0) target = $region117
  $region116: #{millies_rnn_forward.1} parent=0 // pred_region
    _
  $region117: #{millies_rnn_forward.1} parent=0 // pred_fallthru
    _
  // Predicated region
  $region118: #{millies_rnn_forward.1} parent=0 // pred_check
    _
  $region119: #{millies_rnn_forward.1} parent=0 // pred_check_branch
    %125 = sbr.rel (0) target = $region121
  $region120: #{millies_rnn_forward.1} parent=0 // pred_region
    _
  $region121: #{millies_rnn_forward.1} parent=0 // pred_fallthru
    _
  %v126 = vld [vmem:[%s11] sm:$0xff]
  %v127 = vld [vmem:[%s11 + $0x8] sm:$0xff]
  %v128 = vld [vmem:[%s11 + $0x10] sm:$0xff]
  %v129 = vld [vmem:[%s11 + $0x18] sm:$0xff]
  %v130 = vld [vmem:[%s11 + $0x20] sm:$0xff]
  %v131 = vld [vmem:[%s11 + $0x28] sm:$0xff]
  %v132 = vld [vmem:[%s11 + $0x30] sm:$0xff]
  %v133 = vld [vmem:[%s11 + $0x38] sm:$0xff]
  %v134 = vld [vmem:[%s11 + $0x40] sm:$0x1]
  %v135 = vld [vmem:[%s13] sm:$0x1]
  %v136 = vld [vmem:[%s17] sm:$0xff]
  %v137 = vld [vmem:[%s17 + $0x8] sm:$0xff]
  %v138 = vld [vmem:[%s17 + $0x10] sm:$0xff]
  %v139 = vld [vmem:[%s17 + $0x18] sm:$0xff]
  %v140 = vld [vmem:[%s17 + $0x20] sm:$0xff]
  %v141 = vld [vmem:[%s17 + $0x28] sm:$0xff]
  %v142 = vld [vmem:[%s17 + $0x30] sm:$0xff]
  %v143 = vld [vmem:[%s17 + $0x38] sm:$0xff]
  %v144 = vld [vmem:[%s17 + $0x40] sm:$0xff]
  %v145 = vld [vmem:[%s17 + $0x48] sm:$0xff]
  %v146 = vld [vmem:[%s17 + $0x50] sm:$0xff]
  %v147 = vld [vmem:[%s17 + $0x58] sm:$0xff]
  %v148 = vld [vmem:[%s17 + $0x60] sm:$0xf]
  %v149 = vld [vmem:[%s19] sm:$0xff]
  %v150 = vld [vmem:[%s19 + $0x8] sm:$0xff]
  %v151 = vld [vmem:[%s19 + $0x10] sm:$0xff]
  %v152 = vld [vmem:[%s19 + $0x18] sm:$0xff]
  %v153 = vld [vmem:[%s19 + $0x20] sm:$0xff]
  %v154 = vld [vmem:[%s19 + $0x28] sm:$0xff]
  %v155 = vld [vmem:[%s19 + $0x30] sm:$0xff]
  %v156 = vld [vmem:[%s19 + $0x38] sm:$0xff]
  %v157 = vld [vmem:[%s19 + $0x40] sm:$0xff]
  %v158 = vld [vmem:[%s19 + $0x48] sm:$0xff]
  %v159 = vld [vmem:[%s19 + $0x50] sm:$0xff]
  %v160 = vld [vmem:[%s19 + $0x58] sm:$0xff]
  %v161 = vld [vmem:[%s19 + $0x60] sm:$0xf]
  %v162 = vld [vmem:[%s23] sm:$0xff]
  %v163 = vld [vmem:[%s23 + $0x8] sm:$0xff]
  %v164 = vld [vmem:[%s23 + $0x10] sm:$0xff]
  %v165 = vld [vmem:[%s23 + $0x18] sm:$0xff]
  %v166 = vld [vmem:[%s23 + $0x20] sm:$0xff]
  %v167 = vld [vmem:[%s23 + $0x28] sm:$0xff]
  %v168 = vld [vmem:[%s23 + $0x30] sm:$0xff]
  %v169 = vld [vmem:[%s23 + $0x38] sm:$0xff]
  %v170 = vld [vmem:[%s23 + $0x40] sm:$0xff]
  %v171 = vld [vmem:[%s23 + $0x48] sm:$0xff]
  %v172 = vld [vmem:[%s23 + $0x50] sm:$0xff]
  %v173 = vld [vmem:[%s23 + $0x58] sm:$0xff]
  %v174 = vld [vmem:[%s23 + $0x60] sm:$0xf]
  %v175 = vld [vmem:[%s25] sm:$0x1]
  %v176 = vld [vmem:[%s31] sm:$0xff]
  %v177 = vld [vmem:[%s31 + $0x8] sm:$0xff]
  %v178 = vld [vmem:[%s31 + $0x10] sm:$0xff]
  %v179 = vld [vmem:[%s31 + $0x18] sm:$0xff]
  %v180 = vld [vmem:[%s31 + $0x20] sm:$0xff]
  %v181 = vld [vmem:[%s31 + $0x28] sm:$0xff]
  %v182 = vld [vmem:[%s31 + $0x30] sm:$0x3]
  %v183 = vld [vmem:[%s33] sm:$0x1]
  %v184 = vld [vmem:[%s37] sm:$0xff]
  %v185 = vld [vmem:[%s37 + $0x8] sm:$0xff]
  %v186 = vld [vmem:[%s37 + $0x10] sm:$0xff]
  %v187 = vld [vmem:[%s37 + $0x18] sm:$0xff]
  %v188 = vld [vmem:[%s37 + $0x20] sm:$0xff]
  %v189 = vld [vmem:[%s37 + $0x28] sm:$0xff]
  %v190 = vld [vmem:[%s37 + $0x30] sm:$0xff]
  %v191 = vld [vmem:[%s37 + $0x38] sm:$0xff]
  %v192 = vld [vmem:[%s37 + $0x40] sm:$0xff]
  %v193 = vld [vmem:[%s37 + $0x48] sm:$0xff]
  %v194 = vld [vmem:[%s37 + $0x50] sm:$0xff]
  %v195 = vld [vmem:[%s37 + $0x58] sm:$0xff]
  %v196 = vld [vmem:[%s37 + $0x60] sm:$0xf]
  %v197 = vld [vmem:[%s39] sm:$0x1]
  %v198 = vld [vmem:[%s43] sm:$0xff]
  %v199 = vld [vmem:[%s43 + $0x8] sm:$0xff]
  %v200 = vld [vmem:[%s43 + $0x10] sm:$0xff]
  %v201 = vld [vmem:[%s43 + $0x18] sm:$0xff]
  %v202 = vld [vmem:[%s43 + $0x20] sm:$0xff]
  %v203 = vld [vmem:[%s43 + $0x28] sm:$0xff]
  %v204 = vld [vmem:[%s43 + $0x30] sm:$0xff]
  %v205 = vld [vmem:[%s43 + $0x38] sm:$0xff]
  %v206 = vld [vmem:[%s43 + $0x40] sm:$0xff]
  %v207 = vld [vmem:[%s43 + $0x48] sm:$0xff]
  %v208 = vld [vmem:[%s43 + $0x50] sm:$0xff]
  %v209 = vld [vmem:[%s43 + $0x58] sm:$0xff]
  %v210 = vld [vmem:[%s43 + $0x60] sm:$0xf]
  %v211 = vld [vmem:[%s45] sm:$0x1]
  %v212 = vld [vmem:[%s49] sm:$0xff]
  %v213 = vld [vmem:[%s49 + $0x8] sm:$0xff]
  %v214 = vld [vmem:[%s49 + $0x10] sm:$0xff]
  %v215 = vld [vmem:[%s49 + $0x18] sm:$0xff]
  %v216 = vld [vmem:[%s49 + $0x20] sm:$0xff]
  %v217 = vld [vmem:[%s49 + $0x28] sm:$0xff]
  %v218 = vld [vmem:[%s49 + $0x30] sm:$0xff]
  %v219 = vld [vmem:[%s49 + $0x38] sm:$0xff]
  %v220 = vld [vmem:[%s49 + $0x40] sm:$0xff]
  %v221 = vld [vmem:[%s49 + $0x48] sm:$0xff]
  %v222 = vld [vmem:[%s49 + $0x50] sm:$0xff]
  %v223 = vld [vmem:[%s49 + $0x58] sm:$0xff]
  %v224 = vld [vmem:[%s49 + $0x60] sm:$0xff]
  %v225 = vld [vmem:[%s49 + $0x68] sm:$0xff]
  %v226 = vld [vmem:[%s49 + $0x70] sm:$0xff]
  %v227 = vld [vmem:[%s49 + $0x78] sm:$0xff]
  %v228 = vld [vmem:[%s49 + $0x80] sm:$0xff]
  %v229 = vld [vmem:[%s49 + $0x88] sm:$0xff]
  %v230 = vld [vmem:[%s49 + $0x90] sm:$0xff]
  %v231 = vld [vmem:[%s49 + $0x98] sm:$0xff]
  %v232 = vld [vmem:[%s49 + $0xa0] sm:$0xff]
  %v233 = vld [vmem:[%s49 + $0xa8] sm:$0xff]
  %v234 = vld [vmem:[%s49 + $0xb0] sm:$0xff]
  %v235 = vld [vmem:[%s49 + $0xb8] sm:$0xff]
  %v236 = vld [vmem:[%s49 + $0xc0] sm:$0xff]
  %v237 = vld [vmem:[%s49 + $0xc8] sm:$0xff]
  %v238 = vld [vmem:[%s49 + $0xd0] sm:$0xff]
  %v239 = vld [vmem:[%s49 + $0xd8] sm:$0xff]
  %v240 = vld [vmem:[%s49 + $0xe0] sm:$0xff]
  %v241 = vld [vmem:[%s49 + $0xe8] sm:$0xff]
  %v242 = vld [vmem:[%s49 + $0xf0] sm:$0xff]
  %v243 = vld [vmem:[%s49 + $0xf8] sm:$0xff]
  %v244 = vld [vmem:[%s49 + $0x100] sm:$0xff]
  %v245 = vld [vmem:[%s49 + $0x108] sm:$0xff]
  %v246 = vld [vmem:[%s49 + $0x110] sm:$0xff]
  %v247 = vld [vmem:[%s49 + $0x118] sm:$0xff]
  %v248 = vld [vmem:[%s49 + $0x120] sm:$0x3f]
  %v249 = vld [vmem:[%s49 + $0x128] sm:$0x3f]
  %v250 = vld [vmem:[%s51] sm:$0x3]
  %v251 = vld [vmem:[%s55] sm:$0xff]
  %v252 = vld [vmem:[%s55 + $0x8] sm:$0xff]
  %v253 = vld [vmem:[%s55 + $0x10] sm:$0xff]
  %v254 = vld [vmem:[%s55 + $0x18] sm:$0xff]
  %v255 = vld [vmem:[%s55 + $0x20] sm:$0xff]
  %v256 = vld [vmem:[%s55 + $0x28] sm:$0xff]
  %v257 = vld [vmem:[%s55 + $0x30] sm:$0xff]
  %v258 = vld [vmem:[%s55 + $0x38] sm:$0xff]
  %v259 = vld [vmem:[%s55 + $0x40] sm:$0xff]
  %v260 = vld [vmem:[%s55 + $0x48] sm:$0xff]
  %v261 = vld [vmem:[%s55 + $0x50] sm:$0xff]
  %v262 = vld [vmem:[%s55 + $0x58] sm:$0xff]
  %v263 = vld [vmem:[%s55 + $0x60] sm:$0xff]
  %v264 = vld [vmem:[%s55 + $0x68] sm:$0xff]
  %v265 = vld [vmem:[%s55 + $0x70] sm:$0xff]
  %v266 = vld [vmem:[%s55 + $0x78] sm:$0xff]
  %v267 = vld [vmem:[%s55 + $0x80] sm:$0xff]
  %v268 = vld [vmem:[%s55 + $0x88] sm:$0xff]
  %v269 = vld [vmem:[%s55 + $0x90] sm:$0xff]
  %v270 = vld [vmem:[%s55 + $0x98] sm:$0xff]
  %v271 = vld [vmem:[%s55 + $0xa0] sm:$0xff]
  %v272 = vld [vmem:[%s55 + $0xa8] sm:$0xff]
  %v273 = vld [vmem:[%s55 + $0xb0] sm:$0xff]
  %v274 = vld [vmem:[%s55 + $0xb8] sm:$0xff]
  %v275 = vld [vmem:[%s55 + $0xc0] sm:$0xff]
  %v276 = vld [vmem:[%s55 + $0xc8] sm:$0xff]
  %v277 = vld [vmem:[%s55 + $0xd0] sm:$0xff]
  %v278 = vld [vmem:[%s55 + $0xd8] sm:$0xff]
  %v279 = vld [vmem:[%s55 + $0xe0] sm:$0xff]
  %v280 = vld [vmem:[%s55 + $0xe8] sm:$0xff]
  %v281 = vld [vmem:[%s55 + $0xf0] sm:$0xff]
  %v282 = vld [vmem:[%s55 + $0xf8] sm:$0xff]
  %v283 = vld [vmem:[%s55 + $0x100] sm:$0xff]
  %v284 = vld [vmem:[%s55 + $0x108] sm:$0xff]
  %v285 = vld [vmem:[%s55 + $0x110] sm:$0xff]
  %v286 = vld [vmem:[%s55 + $0x118] sm:$0xff]
  %v287 = vld [vmem:[%s55 + $0x120] sm:$0x3f]
  %v288 = vld [vmem:[%s55 + $0x128] sm:$0x3f]
  %v289 = vld [vmem:[%s57] sm:$0xff]
  %v290 = vld [vmem:[%s57 + $0x8] sm:$0xff]
  %v291 = vld [vmem:[%s57 + $0x10] sm:$0xff]
  %v292 = vld [vmem:[%s57 + $0x18] sm:$0xff]
  %v293 = vld [vmem:[%s57 + $0x20] sm:$0xff]
  %v294 = vld [vmem:[%s57 + $0x28] sm:$0xff]
  %v295 = vld [vmem:[%s57 + $0x30] sm:$0xff]
  %v296 = vld [vmem:[%s57 + $0x38] sm:$0xff]
  %v297 = vld [vmem:[%s57 + $0x40] sm:$0xff]
  %v298 = vld [vmem:[%s57 + $0x48] sm:$0xff]
  %v299 = vld [vmem:[%s57 + $0x50] sm:$0xff]
  %v300 = vld [vmem:[%s57 + $0x58] sm:$0xff]
  %v301 = vld [vmem:[%s57 + $0x60] sm:$0xff]
  %v302 = vld [vmem:[%s57 + $0x68] sm:$0xff]
  %v303 = vld [vmem:[%s57 + $0x70] sm:$0xff]
  %v304 = vld [vmem:[%s57 + $0x78] sm:$0xff]
  %v305 = vld [vmem:[%s57 + $0x80] sm:$0xff]
  %v306 = vld [vmem:[%s57 + $0x88] sm:$0xff]
  %v307 = vld [vmem:[%s57 + $0x90] sm:$0x3f]
  %v308 = vld [vmem:[%s15] sm:$0x1]
  %v310 = vlaneseq
  %v311 = vshrl.u32 %v310, 7
  %v312 = vsub.s32 0, %v311
  %v313 = vrot.slane %v308, %v312
  %v315 = vld [vmem:[%s21] sm:$0x1]
  %v317 = vlaneseq
  %v318 = vshrl.u32 %v317, 7
  %v319 = vsub.s32 0, %v318
  %v320 = vrot.slane %v315, %v319
  %v322 = vld [vmem:[%s35] sm:$0x1]
  %v324 = vlaneseq
  %v325 = vshrl.u32 %v324, 7
  %v326 = vsub.s32 0, %v325
  %v327 = vrot.slane %v322, %v326
  %v329 = vld [vmem:[%s41] sm:$0x1]
  %v331 = vlaneseq
  %v332 = vshrl.u32 %v331, 7
  %v333 = vsub.s32 0, %v332
  %v334 = vrot.slane %v329, %v333
  %v336 = vld [vmem:[%s47] sm:$0x1]
  %v338 = vlaneseq
  %v339 = vshrl.u32 %v338, 7
  %v340 = vsub.s32 0, %v339
  %v341 = vrot.slane %v336, %v340
  %v343 = vld [vmem:[%s53] sm:$0x3]
  %v345 = vlaneseq
  %v346 = vshrl.u32 %v345, 7
  %v347 = vsub.s32 0, %v346
  %v348 = vrot.slane %v343, %v347
  %v349 = vlaneseq
  %v350 = vshrl.u32 %v349, 7
  %v351 = vsub.s32 1, %v350
  %v352 = vrot.slane %v343, %v351
  %v355 = vld [vmem:[%s59] sm:$0x1]
  %v357 = vlaneseq
  %v358 = vshrl.u32 %v357, 7
  %v359 = vsub.s32 0, %v358
  %v360 = vrot.slane %v355, %v359
  %v362 = vld [vmem:[%s9] sm:$0xff]
  %v363 = vld [vmem:[%s27] sm:$0xff]
  %v364 = vld [vmem:[%s27 + $0x8] sm:$0xff]
  %v365 = vld [vmem:[%s27 + $0x10] sm:$0xff]
  %v366 = vld [vmem:[%s27 + $0x18] sm:$0xff]
  %v367 = vld [vmem:[%s27 + $0x20] sm:$0xff]
  %v368 = vld [vmem:[%s27 + $0x28] sm:$0xff]
  %v369 = vld [vmem:[%s27 + $0x30] sm:$0x3]
  %v370 = vld [vmem:[%s29] sm:$0x1]
  %v372 = vlaneseq
  %v373 = vshrl.u32 %v372, 7
  %v374 = vsub.s32 0, %v373
  %v375 = vrot.slane %v370, %v374
  %vm377 = vcmask 408576
  %v379 = vsel %vm377, %v362, 0
  %vm381 = vcmask 1041408
  %v383 = vsel %vm381, %v369, 0
  %385 = vmatprep.subr.mxu0 0.0
  %386 = vmatpush1.msra.mxu0 %v363
  %387 = vmatprep.subr.mxu0 0.0
  %388 = vmatpush1.msra.mxu0 %v364
  %389 = vmatprep.subr.mxu0 0.0
  %390 = vmatpush1.msra.mxu0 %v365
  %391 = vmatprep.subr.mxu0 0.0
  %392 = vmatpush1.msra.mxu0 %v366
  %393 = vmatprep.subr.mxu0 0.0
  %394 = vmatpush1.msra.mxu0 %v367
  %395 = vmatprep.subr.mxu0 0.0
  %396 = vmatpush1.msra.mxu0 %v368
  %397 = vmatprep.subr.mxu0 0.0
  %398 = vmatpush1.msra.mxu0 %v383
  %399 = vmatprep.subr.mxu0 0.0
  %400 = vmatpush1.msra.mxu0 0.0
  %401 = vmatprep.subr.mxu0 0.0
  %402 = vmatpush1.msra.mxu0 0.0
  %403 = vmatprep.subr.mxu0 0.0
  %404 = vmatpush1.msra.mxu0 0.0
  %405 = vmatprep.subr.mxu0 0.0
  %406 = vmatpush1.msra.mxu0 0.0
  %407 = vmatprep.subr.mxu0 0.0
  %408 = vmatpush1.msra.mxu0 0.0
  %409 = vmatprep.subr.mxu0 0.0
  %410 = vmatpush1.msra.mxu0 0.0
  %411 = vmatprep.subr.mxu0 0.0
  %412 = vmatpush1.msra.mxu0 0.0
  %413 = vmatprep.subr.mxu0 0.0
  %414 = vmatpush1.msra.mxu0 0.0
  %415 = vmatprep.subr.mxu0 0.0
  %416 = vmatpush1.msra.mxu0 0.0
  %417 = vmatprep.subr.mxu0 0.0
  %418 = vmatpush1.msra.mxu0 0.0
  %419 = vmatprep.subr.mxu0 0.0
  %420 = vmatpush1.msra.mxu0 0.0
  %421 = vmatprep.subr.mxu0 0.0
  %422 = vmatpush1.msra.mxu0 0.0
  %423 = vmatprep.subr.mxu0 0.0
  %424 = vmatpush1.msra.mxu0 0.0
  %425 = vmatprep.subr.mxu0 0.0
  %426 = vmatpush1.msra.mxu0 0.0
  %427 = vmatprep.subr.mxu0 0.0
  %428 = vmatpush1.msra.mxu0 0.0
  %429 = vmatprep.subr.mxu0 0.0
  %430 = vmatpush1.msra.mxu0 0.0
  %431 = vmatprep.subr.mxu0 0.0
  %432 = vmatpush1.msra.mxu0 0.0
  %433 = vmatprep.subr.mxu0 0.0
  %434 = vmatpush1.msra.mxu0 0.0
  %435 = vmatprep.subr.mxu0 0.0
  %436 = vmatpush1.msra.mxu0 0.0
  %437 = vmatprep.subr.mxu0 0.0
  %438 = vmatpush1.msra.mxu0 0.0
  %439 = vmatprep.subr.mxu0 0.0
  %440 = vmatpush1.msra.mxu0 0.0
  %441 = vmatprep.subr.mxu0 0.0
  %442 = vmatpush1.msra.mxu0 0.0
  %443 = vmatprep.subr.mxu0 0.0
  %444 = vmatpush1.msra.mxu0 0.0
  %445 = vmatprep.subr.mxu0 0.0
  %446 = vmatpush1.msra.mxu0 0.0
  %447 = vmatprep.subr.mxu0 0.0
  %448 = vmatpush1.msra.mxu0 0.0
  %449 = vmatprep.mubr.f32.mxu0 0.0
  %450 = vmatmul.mubr.f32.gmra.mrb[0].mxu0 %v379
  %v451 = vpop.f32.mrb[0].mxu0
  %v452 = vadd.f32 %v375, %v451
  %v453 = vpop.f32.mrb[0].mxu0
  %454 = vdwg.mxu0
  %v455 = vld [vmem:[%s5] sm:$0xff]
  %v456 = vld [vmem:[%s7] sm:$0xff]
  %v457 = vld [vmem:[%s7 + $0x8] sm:$0xff]
  %v458 = vld [vmem:[%s1] sm:$0xff]
  %v459 = vld [vmem:[%s3] sm:$0xff]
  %vm460 = vcmask 121856
  %v461 = vsel %vm460, %v458, 0.0
  %463 = vset.pattern.permute.xlu0 0
  %464 = vperm.xlu0 %463, %v459
  %v465 = vpop.permute.xlu0 %464
  %v468 = vlaneseq
  %v469 = vshrl.u32 %v468, 7
  %v470 = vsub.s32 0, %v469
  %v471 = vrot.slane %v135, %v470
  %v473 = vmul.f32 %v465, %v471
  %vm474 = vcmask 531456
  %v476 = vsel %vm474, %v461, 0
  %vm478 = vcmask 1040384
  %v480 = vsel %vm478, %v134, 0
  %482 = vmatprep.subr.mxu0 0.0
  %483 = vmatpush1.msra.mxu0 %v126
  %484 = vmatprep.subr.mxu0 0.0
  %485 = vmatpush1.msra.mxu0 %v127
  %486 = vmatprep.subr.mxu0 0.0
  %487 = vmatpush1.msra.mxu0 %v128
  %488 = vmatprep.subr.mxu0 0.0
  %489 = vmatpush1.msra.mxu0 %v129
  %490 = vmatprep.subr.mxu0 0.0
  %491 = vmatpush1.msra.mxu0 %v130
  %492 = vmatprep.subr.mxu0 0.0
  %493 = vmatpush1.msra.mxu0 %v131
  %494 = vmatprep.subr.mxu0 0.0
  %495 = vmatpush1.msra.mxu0 %v132
  %496 = vmatprep.subr.mxu0 0.0
  %497 = vmatpush1.msra.mxu0 %v133
  %498 = vmatprep.subr.mxu0 0.0
  %499 = vmatpush1.msra.mxu0 %v480
  %500 = vmatprep.subr.mxu0 0.0
  %501 = vmatpush1.msra.mxu0 0.0
  %502 = vmatprep.subr.mxu0 0.0
  %503 = vmatpush1.msra.mxu0 0.0
  %504 = vmatprep.subr.mxu0 0.0
  %505 = vmatpush1.msra.mxu0 0.0
  %506 = vmatprep.subr.mxu0 0.0
  %507 = vmatpush1.msra.mxu0 0.0
  %508 = vmatprep.subr.mxu0 0.0
  %509 = vmatpush1.msra.mxu0 0.0
  %510 = vmatprep.subr.mxu0 0.0
  %511 = vmatpush1.msra.mxu0 0.0
  %512 = vmatprep.subr.mxu0 0.0
  %513 = vmatpush1.msra.mxu0 0.0
  %514 = vmatprep.subr.mxu0 0.0
  %515 = vmatpush1.msra.mxu0 0.0
  %516 = vmatprep.subr.mxu0 0.0
  %517 = vmatpush1.msra.mxu0 0.0
  %518 = vmatprep.subr.mxu0 0.0
  %519 = vmatpush1.msra.mxu0 0.0
  %520 = vmatprep.subr.mxu0 0.0
  %521 = vmatpush1.msra.mxu0 0.0
  %522 = vmatprep.subr.mxu0 0.0
  %523 = vmatpush1.msra.mxu0 0.0
  %524 = vmatprep.subr.mxu0 0.0
  %525 = vmatpush1.msra.mxu0 0.0
  %526 = vmatprep.subr.mxu0 0.0
  %527 = vmatpush1.msra.mxu0 0.0
  %528 = vmatprep.subr.mxu0 0.0
  %529 = vmatpush1.msra.mxu0 0.0
  %530 = vmatprep.subr.mxu0 0.0
  %531 = vmatpush1.msra.mxu0 0.0
  %532 = vmatprep.subr.mxu0 0.0
  %533 = vmatpush1.msra.mxu0 0.0
  %534 = vmatprep.subr.mxu0 0.0
  %535 = vmatpush1.msra.mxu0 0.0
  %536 = vmatprep.subr.mxu0 0.0
  %537 = vmatpush1.msra.mxu0 0.0
  %538 = vmatprep.subr.mxu0 0.0
  %539 = vmatpush1.msra.mxu0 0.0
  %540 = vmatprep.subr.mxu0 0.0
  %541 = vmatpush1.msra.mxu0 0.0
  %542 = vmatprep.subr.mxu0 0.0
  %543 = vmatpush1.msra.mxu0 0.0
  %544 = vmatprep.subr.mxu0 0.0
  %545 = vmatpush1.msra.mxu0 0.0
  %546 = vmatprep.mubr.f32.mxu0 0.0
  %547 = vmatmul.mubr.f32.gmra.mrb[0].mxu0 %v476
  %v548 = vpop.f32.mrb[0].mxu0
  %v549 = vadd.f32 %v473, %v548
  %v550 = vpop.f32.mrb[0].mxu0
  %551 = vdwg.mxu0
  %vm552 = vcmask 818176
  %v554 = vsel %vm552, %v455, 0
  %vm556 = vcmask 1043456
  %v558 = vsel %vm556, %v148, 0
  %560 = vmatprep.subr.mxu0 0.0
  %561 = vmatpush1.msra.mxu0 %v136
  %562 = vmatprep.subr.mxu0 0.0
  %563 = vmatpush1.msra.mxu0 %v137
  %564 = vmatprep.subr.mxu0 0.0
  %565 = vmatpush1.msra.mxu0 %v138
  %566 = vmatprep.subr.mxu0 0.0
  %567 = vmatpush1.msra.mxu0 %v139
  %568 = vmatprep.subr.mxu0 0.0
  %569 = vmatpush1.msra.mxu0 %v140
  %570 = vmatprep.subr.mxu0 0.0
  %571 = vmatpush1.msra.mxu0 %v141
  %572 = vmatprep.subr.mxu0 0.0
  %573 = vmatpush1.msra.mxu0 %v142
  %574 = vmatprep.subr.mxu0 0.0
  %575 = vmatpush1.msra.mxu0 %v143
  %576 = vmatprep.subr.mxu0 0.0
  %577 = vmatpush1.msra.mxu0 %v144
  %578 = vmatprep.subr.mxu0 0.0
  %579 = vmatpush1.msra.mxu0 %v145
  %580 = vmatprep.subr.mxu0 0.0
  %581 = vmatpush1.msra.mxu0 %v146
  %582 = vmatprep.subr.mxu0 0.0
  %583 = vmatpush1.msra.mxu0 %v147
  %584 = vmatprep.subr.mxu0 0.0
  %585 = vmatpush1.msra.mxu0 %v558
  %586 = vmatprep.subr.mxu0 0.0
  %587 = vmatpush1.msra.mxu0 0.0
  %588 = vmatprep.subr.mxu0 0.0
  %589 = vmatpush1.msra.mxu0 0.0
  %590 = vmatprep.subr.mxu0 0.0
  %591 = vmatpush1.msra.mxu0 0.0
  %592 = vmatprep.subr.mxu0 0.0
  %593 = vmatpush1.msra.mxu0 0.0
  %594 = vmatprep.subr.mxu0 0.0
  %595 = vmatpush1.msra.mxu0 0.0
  %596 = vmatprep.subr.mxu0 0.0
  %597 = vmatpush1.msra.mxu0 0.0
  %598 = vmatprep.subr.mxu0 0.0
  %599 = vmatpush1.msra.mxu0 0.0
  %600 = vmatprep.subr.mxu0 0.0
  %601 = vmatpush1.msra.mxu0 0.0
  %602 = vmatprep.subr.mxu0 0.0
  %603 = vmatpush1.msra.mxu0 0.0
  %604 = vmatprep.subr.mxu0 0.0
  %605 = vmatpush1.msra.mxu0 0.0
  %606 = vmatprep.subr.mxu0 0.0
  %607 = vmatpush1.msra.mxu0 0.0
  %608 = vmatprep.subr.mxu0 0.0
  %609 = vmatpush1.msra.mxu0 0.0
  %610 = vmatprep.subr.mxu0 0.0
  %611 = vmatpush1.msra.mxu0 0.0
  %612 = vmatprep.subr.mxu0 0.0
  %613 = vmatpush1.msra.mxu0 0.0
  %614 = vmatprep.subr.mxu0 0.0
  %615 = vmatpush1.msra.mxu0 0.0
  %616 = vmatprep.subr.mxu0 0.0
  %617 = vmatpush1.msra.mxu0 0.0
  %618 = vmatprep.subr.mxu0 0.0
  %619 = vmatpush1.msra.mxu0 0.0
  %620 = vmatprep.subr.mxu0 0.0
  %621 = vmatpush1.msra.mxu0 0.0
  %622 = vmatprep.subr.mxu0 0.0
  %623 = vmatpush1.msra.mxu0 0.0
  %624 = vmatprep.mubr.f32.mxu0 0.0
  %625 = vmatmul.mubr.f32.gmra.mrb[0].mxu0 %v554
  %v626 = vpop.f32.mrb[0].mxu0
  %v627 = vadd.f32 0.0, %v626
  %v628 = vpop.f32.mrb[0].mxu0
  %629 = vdwg.mxu0
  %v630 = vadd.f32 %v549, %v627
  %v631 = vadd.f32 %v630, %v313
  %v632 = vmax.f32 %v631, 0.0
  %v633 = vtanh.pop %v632
  %v635 = vsel %vm552, %v633, 0
  %v638 = vsel %vm556, %v161, 0
  %640 = vmatprep.subr.mxu0 0.0
  %641 = vmatpush1.msra.mxu0 %v149
  %642 = vmatprep.subr.mxu0 0.0
  %643 = vmatpush1.msra.mxu0 %v150
  %644 = vmatprep.subr.mxu0 0.0
  %645 = vmatpush1.msra.mxu0 %v151
  %646 = vmatprep.subr.mxu0 0.0
  %647 = vmatpush1.msra.mxu0 %v152
  %648 = vmatprep.subr.mxu0 0.0
  %649 = vmatpush1.msra.mxu0 %v153
  %650 = vmatprep.subr.mxu0 0.0
  %651 = vmatpush1.msra.mxu0 %v154
  %652 = vmatprep.subr.mxu0 0.0
  %653 = vmatpush1.msra.mxu0 %v155
  %654 = vmatprep.subr.mxu0 0.0
  %655 = vmatpush1.msra.mxu0 %v156
  %656 = vmatprep.subr.mxu0 0.0
  %657 = vmatpush1.msra.mxu0 %v157
  %658 = vmatprep.subr.mxu0 0.0
  %659 = vmatpush1.msra.mxu0 %v158
  %660 = vmatprep.subr.mxu0 0.0
  %661 = vmatpush1.msra.mxu0 %v159
  %662 = vmatprep.subr.mxu0 0.0
  %663 = vmatpush1.msra.mxu0 %v160
  %664 = vmatprep.subr.mxu0 0.0
  %665 = vmatpush1.msra.mxu0 %v638
  %666 = vmatprep.subr.mxu0 0.0
  %667 = vmatpush1.msra.mxu0 0.0
  %668 = vmatprep.subr.mxu0 0.0
  %669 = vmatpush1.msra.mxu0 0.0
  %670 = vmatprep.subr.mxu0 0.0
  %671 = vmatpush1.msra.mxu0 0.0
  %672 = vmatprep.subr.mxu0 0.0
  %673 = vmatpush1.msra.mxu0 0.0
  %674 = vmatprep.subr.mxu0 0.0
  %675 = vmatpush1.msra.mxu0 0.0
  %676 = vmatprep.subr.mxu0 0.0
  %677 = vmatpush1.msra.mxu0 0.0
  %678 = vmatprep.subr.mxu0 0.0
  %679 = vmatpush1.msra.mxu0 0.0
  %680 = vmatprep.subr.mxu0 0.0
  %681 = vmatpush1.msra.mxu0 0.0
  %682 = vmatprep.subr.mxu0 0.0
  %683 = vmatpush1.msra.mxu0 0.0
  %684 = vmatprep.subr.mxu0 0.0
  %685 = vmatpush1.msra.mxu0 0.0
  %686 = vmatprep.subr.mxu0 0.0
  %687 = vmatpush1.msra.mxu0 0.0
  %688 = vmatprep.subr.mxu0 0.0
  %689 = vmatpush1.msra.mxu0 0.0
  %690 = vmatprep.subr.mxu0 0.0
  %691 = vmatpush1.msra.mxu0 0.0
  %692 = vmatprep.subr.mxu0 0.0
  %693 = vmatpush1.msra.mxu0 0.0
  %694 = vmatprep.subr.mxu0 0.0
  %695 = vmatpush1.msra.mxu0 0.0
  %696 = vmatprep.subr.mxu0 0.0
  %697 = vmatpush1.msra.mxu0 0.0
  %698 = vmatprep.subr.mxu0 0.0
  %699 = vmatpush1.msra.mxu0 0.0
  %700 = vmatprep.subr.mxu0 0.0
  %701 = vmatpush1.msra.mxu0 0.0
  %702 = vmatprep.subr.mxu0 0.0
  %703 = vmatpush1.msra.mxu0 0.0
  %704 = vmatprep.mubr.f32.mxu0 0.0
  %705 = vmatmul.mubr.f32.gmra.mrb[0].mxu0 %v635
  %v706 = vpop.f32.mrb[0].mxu0
  %v707 = vadd.f32 %v320, %v706
  %v708 = vpop.f32.mrb[0].mxu0
  %709 = vdwg.mxu0
  %v710 = vmax.f32 %v707, 0.0
  %v711 = vtanh.pop %v710
  %v713 = vlaneseq
  %v714 = vshrl.u32 %v713, 7
  %v715 = vsub.s32 0, %v714
  %v716 = vrot.slane %v175, %v715
  %v718 = vmul.f32 %v465, %v716
  %v720 = vsel %vm552, %v711, 0
  %v723 = vsel %vm556, %v174, 0
  %725 = vmatprep.subr.mxu0 0.0
  %726 = vmatpush1.msra.mxu0 %v162
  %727 = vmatprep.subr.mxu0 0.0
  %728 = vmatpush1.msra.mxu0 %v163
  %729 = vmatprep.subr.mxu0 0.0
  %730 = vmatpush1.msra.mxu0 %v164
  %731 = vmatprep.subr.mxu0 0.0
  %732 = vmatpush1.msra.mxu0 %v165
  %733 = vmatprep.subr.mxu0 0.0
  %734 = vmatpush1.msra.mxu0 %v166
  %735 = vmatprep.subr.mxu0 0.0
  %736 = vmatpush1.msra.mxu0 %v167
  %737 = vmatprep.subr.mxu0 0.0
  %738 = vmatpush1.msra.mxu0 %v168
  %739 = vmatprep.subr.mxu0 0.0
  %740 = vmatpush1.msra.mxu0 %v169
  %741 = vmatprep.subr.mxu0 0.0
  %742 = vmatpush1.msra.mxu0 %v170
  %743 = vmatprep.subr.mxu0 0.0
  %744 = vmatpush1.msra.mxu0 %v171
  %745 = vmatprep.subr.mxu0 0.0
  %746 = vmatpush1.msra.mxu0 %v172
  %747 = vmatprep.subr.mxu0 0.0
  %748 = vmatpush1.msra.mxu0 %v173
  %749 = vmatprep.subr.mxu0 0.0
  %750 = vmatpush1.msra.mxu0 %v723
  %751 = vmatprep.subr.mxu0 0.0
  %752 = vmatpush1.msra.mxu0 0.0
  %753 = vmatprep.subr.mxu0 0.0
  %754 = vmatpush1.msra.mxu0 0.0
  %755 = vmatprep.subr.mxu0 0.0
  %756 = vmatpush1.msra.mxu0 0.0
  %757 = vmatprep.subr.mxu0 0.0
  %758 = vmatpush1.msra.mxu0 0.0
  %759 = vmatprep.subr.mxu0 0.0
  %760 = vmatpush1.msra.mxu0 0.0
  %761 = vmatprep.subr.mxu0 0.0
  %762 = vmatpush1.msra.mxu0 0.0
  %763 = vmatprep.subr.mxu0 0.0
  %764 = vmatpush1.msra.mxu0 0.0
  %765 = vmatprep.subr.mxu0 0.0
  %766 = vmatpush1.msra.mxu0 0.0
  %767 = vmatprep.subr.mxu0 0.0
  %768 = vmatpush1.msra.mxu0 0.0
  %769 = vmatprep.subr.mxu0 0.0
  %770 = vmatpush1.msra.mxu0 0.0
  %771 = vmatprep.subr.mxu0 0.0
  %772 = vmatpush1.msra.mxu0 0.0
  %773 = vmatprep.subr.mxu0 0.0
  %774 = vmatpush1.msra.mxu0 0.0
  %775 = vmatprep.subr.mxu0 0.0
  %776 = vmatpush1.msra.mxu0 0.0
  %777 = vmatprep.subr.mxu0 0.0
  %778 = vmatpush1.msra.mxu0 0.0
  %779 = vmatprep.subr.mxu0 0.0
  %780 = vmatpush1.msra.mxu0 0.0
  %781 = vmatprep.subr.mxu0 0.0
  %782 = vmatpush1.msra.mxu0 0.0
  %783 = vmatprep.subr.mxu0 0.0
  %784 = vmatpush1.msra.mxu0 0.0
  %785 = vmatprep.subr.mxu0 0.0
  %786 = vmatpush1.msra.mxu0 0.0
  %787 = vmatprep.subr.mxu0 0.0
  %788 = vmatpush1.msra.mxu0 0.0
  %789 = vmatprep.mubr.f32.mxu0 0.0
  %790 = vmatmul.mubr.f32.gmra.mrb[0].mxu0 %v720
  %v791 = vpop.f32.mrb[0].mxu0
  %v792 = vadd.f32 %v718, %v791
  %v793 = vpop.f32.mrb[0].mxu0
  %794 = vdwg.mxu0
  %v795 = vadd.f32 %v792, %v452
  %v796 = vmax.f32 %v795, 0.0
  %v797 = vtanh.pop %v796
  %v799 = vlaneseq
  %v800 = vshrl.u32 %v799, 7
  %v801 = vsub.s32 0, %v800
  %v802 = vrot.slane %v183, %v801
  %v804 = vmul.f32 %v465, %v802
  %v806 = vsel %vm377, %v797, 0
  %v809 = vsel %vm381, %v182, 0
  %811 = vmatprep.subr.mxu0 0.0
  %812 = vmatpush1.msra.mxu0 %v176
  %813 = vmatprep.subr.mxu0 0.0
  %814 = vmatpush1.msra.mxu0 %v177
  %815 = vmatprep.subr.mxu0 0.0
  %816 = vmatpush1.msra.mxu0 %v178
  %817 = vmatprep.subr.mxu0 0.0
  %818 = vmatpush1.msra.mxu0 %v179
  %819 = vmatprep.subr.mxu0 0.0
  %820 = vmatpush1.msra.mxu0 %v180
  %821 = vmatprep.subr.mxu0 0.0
  %822 = vmatpush1.msra.mxu0 %v181
  %823 = vmatprep.subr.mxu0 0.0
  %824 = vmatpush1.msra.mxu0 %v809
  %825 = vmatprep.subr.mxu0 0.0
  %826 = vmatpush1.msra.mxu0 0.0
  %827 = vmatprep.subr.mxu0 0.0
  %828 = vmatpush1.msra.mxu0 0.0
  %829 = vmatprep.subr.mxu0 0.0
  %830 = vmatpush1.msra.mxu0 0.0
  %831 = vmatprep.subr.mxu0 0.0
  %832 = vmatpush1.msra.mxu0 0.0
  %833 = vmatprep.subr.mxu0 0.0
  %834 = vmatpush1.msra.mxu0 0.0
  %835 = vmatprep.subr.mxu0 0.0
  %836 = vmatpush1.msra.mxu0 0.0
  %837 = vmatprep.subr.mxu0 0.0
  %838 = vmatpush1.msra.mxu0 0.0
  %839 = vmatprep.subr.mxu0 0.0
  %840 = vmatpush1.msra.mxu0 0.0
  %841 = vmatprep.subr.mxu0 0.0
  %842 = vmatpush1.msra.mxu0 0.0
  %843 = vmatprep.subr.mxu0 0.0
  %844 = vmatpush1.msra.mxu0 0.0
  %845 = vmatprep.subr.mxu0 0.0
  %846 = vmatpush1.msra.mxu0 0.0
  %847 = vmatprep.subr.mxu0 0.0
  %848 = vmatpush1.msra.mxu0 0.0
  %849 = vmatprep.subr.mxu0 0.0
  %850 = vmatpush1.msra.mxu0 0.0
  %851 = vmatprep.subr.mxu0 0.0
  %852 = vmatpush1.msra.mxu0 0.0
  %853 = vmatprep.subr.mxu0 0.0
  %854 = vmatpush1.msra.mxu0 0.0
  %855 = vmatprep.subr.mxu0 0.0
  %856 = vmatpush1.msra.mxu0 0.0
  %857 = vmatprep.subr.mxu0 0.0
  %858 = vmatpush1.msra.mxu0 0.0
  %859 = vmatprep.subr.mxu0 0.0
  %860 = vmatpush1.msra.mxu0 0.0
  %861 = vmatprep.subr.mxu0 0.0
  %862 = vmatpush1.msra.mxu0 0.0
  %863 = vmatprep.subr.mxu0 0.0
  %864 = vmatpush1.msra.mxu0 0.0
  %865 = vmatprep.subr.mxu0 0.0
  %866 = vmatpush1.msra.mxu0 0.0
  %867 = vmatprep.subr.mxu0 0.0
  %868 = vmatpush1.msra.mxu0 0.0
  %869 = vmatprep.subr.mxu0 0.0
  %870 = vmatpush1.msra.mxu0 0.0
  %871 = vmatprep.subr.mxu0 0.0
  %872 = vmatpush1.msra.mxu0 0.0
  %873 = vmatprep.subr.mxu0 0.0
  %874 = vmatpush1.msra.mxu0 0.0
  %875 = vmatprep.mubr.f32.mxu0 0.0
  %876 = vmatmul.mubr.f32.gmra.mrb[0].mxu0 %v806
  %v877 = vpop.f32.mrb[0].mxu0
  %v878 = vadd.f32 %v804, %v877
  %v879 = vpop.f32.mrb[0].mxu0
  %880 = vdwg.mxu0
  %v881 = vadd.f32 %v878, %v327
  %v882 = vmax.f32 %v881, 0.0
  %v883 = vtanh.pop %v882
  %884 = vrot.lane.b32.xlu0 %v797, 50
  %v885 = vpop.permute.xlu0 %884
  %v887 = vsel %vm377, %v883, %v885
  %v889 = vlaneseq
  %v890 = vshrl.u32 %v889, 7
  %v891 = vsub.s32 0, %v890
  %v892 = vrot.slane %v197, %v891
  %v894 = vmul.f32 %v465, %v892
  %v896 = vsel %vm552, %v887, 0
  %v899 = vsel %vm556, %v196, 0
  %901 = vmatprep.subr.mxu0 0.0
  %902 = vmatpush1.msra.mxu0 %v184
  %903 = vmatprep.subr.mxu0 0.0
  %904 = vmatpush1.msra.mxu0 %v185
  %905 = vmatprep.subr.mxu0 0.0
  %906 = vmatpush1.msra.mxu0 %v186
  %907 = vmatprep.subr.mxu0 0.0
  %908 = vmatpush1.msra.mxu0 %v187
  %909 = vmatprep.subr.mxu0 0.0
  %910 = vmatpush1.msra.mxu0 %v188
  %911 = vmatprep.subr.mxu0 0.0
  %912 = vmatpush1.msra.mxu0 %v189
  %913 = vmatprep.subr.mxu0 0.0
  %914 = vmatpush1.msra.mxu0 %v190
  %915 = vmatprep.subr.mxu0 0.0
  %916 = vmatpush1.msra.mxu0 %v191
  %917 = vmatprep.subr.mxu0 0.0
  %918 = vmatpush1.msra.mxu0 %v192
  %919 = vmatprep.subr.mxu0 0.0
  %920 = vmatpush1.msra.mxu0 %v193
  %921 = vmatprep.subr.mxu0 0.0
  %922 = vmatpush1.msra.mxu0 %v194
  %923 = vmatprep.subr.mxu0 0.0
  %924 = vmatpush1.msra.mxu0 %v195
  %925 = vmatprep.subr.mxu0 0.0
  %926 = vmatpush1.msra.mxu0 %v899
  %927 = vmatprep.subr.mxu0 0.0
  %928 = vmatpush1.msra.mxu0 0.0
  %929 = vmatprep.subr.mxu0 0.0
  %930 = vmatpush1.msra.mxu0 0.0
  %931 = vmatprep.subr.mxu0 0.0
  %932 = vmatpush1.msra.mxu0 0.0
  %933 = vmatprep.subr.mxu0 0.0
  %934 = vmatpush1.msra.mxu0 0.0
  %935 = vmatprep.subr.mxu0 0.0
  %936 = vmatpush1.msra.mxu0 0.0
  %937 = vmatprep.subr.mxu0 0.0
  %938 = vmatpush1.msra.mxu0 0.0
  %939 = vmatprep.subr.mxu0 0.0
  %940 = vmatpush1.msra.mxu0 0.0
  %941 = vmatprep.subr.mxu0 0.0
  %942 = vmatpush1.msra.mxu0 0.0
  %943 = vmatprep.subr.mxu0 0.0
  %944 = vmatpush1.msra.mxu0 0.0
  %945 = vmatprep.subr.mxu0 0.0
  %946 = vmatpush1.msra.mxu0 0.0
  %947 = vmatprep.subr.mxu0 0.0
  %948 = vmatpush1.msra.mxu0 0.0
  %949 = vmatprep.subr.mxu0 0.0
  %950 = vmatpush1.msra.mxu0 0.0
  %951 = vmatprep.subr.mxu0 0.0
  %952 = vmatpush1.msra.mxu0 0.0
  %953 = vmatprep.subr.mxu0 0.0
  %954 = vmatpush1.msra.mxu0 0.0
  %955 = vmatprep.subr.mxu0 0.0
  %956 = vmatpush1.msra.mxu0 0.0
  %957 = vmatprep.subr.mxu0 0.0
  %958 = vmatpush1.msra.mxu0 0.0
  %959 = vmatprep.subr.mxu0 0.0
  %960 = vmatpush1.msra.mxu0 0.0
  %961 = vmatprep.subr.mxu0 0.0
  %962 = vmatpush1.msra.mxu0 0.0
  %963 = vmatprep.subr.mxu0 0.0
  %964 = vmatpush1.msra.mxu0 0.0
  %965 = vmatprep.mubr.f32.mxu0 0.0
  %966 = vmatmul.mubr.f32.gmra.mrb[0].mxu0 %v896
  %v967 = vpop.f32.mrb[0].mxu0
  %v968 = vadd.f32 %v894, %v967
  %v969 = vpop.f32.mrb[0].mxu0
  %970 = vdwg.mxu0
  %v971 = vadd.f32 %v968, %v334
  %v972 = vmax.f32 %v971, 0.0
  %v973 = vtanh.pop %v972
  %v974 = vsel %vm377, %v973, 0.0
  %v976 = vlaneseq
  %v977 = vshrl.u32 %v976, 7
  %v978 = vsub.s32 0, %v977
  %v979 = vrot.slane %v211, %v978
  %v981 = vmul.f32 %v465, %v979
  %v983 = vsel %vm552, %v974, 0
  %v986 = vsel %vm556, %v210, 0
  %988 = vmatprep.subr.mxu0 0.0
  %989 = vmatpush1.msra.mxu0 %v198
  %990 = vmatprep.subr.mxu0 0.0
  %991 = vmatpush1.msra.mxu0 %v199
  %992 = vmatprep.subr.mxu0 0.0
  %993 = vmatpush1.msra.mxu0 %v200
  %994 = vmatprep.subr.mxu0 0.0
  %995 = vmatpush1.msra.mxu0 %v201
  %996 = vmatprep.subr.mxu0 0.0
  %997 = vmatpush1.msra.mxu0 %v202
  %998 = vmatprep.subr.mxu0 0.0
  %999 = vmatpush1.msra.mxu0 %v203
  %1000 = vmatprep.subr.mxu0 0.0
  %1001 = vmatpush1.msra.mxu0 %v204
  %1002 = vmatprep.subr.mxu0 0.0
  %1003 = vmatpush1.msra.mxu0 %v205
  %1004 = vmatprep.subr.mxu0 0.0
  %1005 = vmatpush1.msra.mxu0 %v206
  %1006 = vmatprep.subr.mxu0 0.0
  %1007 = vmatpush1.msra.mxu0 %v207
  %1008 = vmatprep.subr.mxu0 0.0
  %1009 = vmatpush1.msra.mxu0 %v208
  %1010 = vmatprep.subr.mxu0 0.0
  %1011 = vmatpush1.msra.mxu0 %v209
  %1012 = vmatprep.subr.mxu0 0.0
  %1013 = vmatpush1.msra.mxu0 %v986
  %1014 = vmatprep.subr.mxu0 0.0
  %1015 = vmatpush1.msra.mxu0 0.0
  %1016 = vmatprep.subr.mxu0 0.0
  %1017 = vmatpush1.msra.mxu0 0.0
  %1018 = vmatprep.subr.mxu0 0.0
  %1019 = vmatpush1.msra.mxu0 0.0
  %1020 = vmatprep.subr.mxu0 0.0
  %1021 = vmatpush1.msra.mxu0 0.0
  %1022 = vmatprep.subr.mxu0 0.0
  %1023 = vmatpush1.msra.mxu0 0.0
  %1024 = vmatprep.subr.mxu0 0.0
  %1025 = vmatpush1.msra.mxu0 0.0
  %1026 = vmatprep.subr.mxu0 0.0
  %1027 = vmatpush1.msra.mxu0 0.0
  %1028 = vmatprep.subr.mxu0 0.0
  %1029 = vmatpush1.msra.mxu0 0.0
  %1030 = vmatprep.subr.mxu0 0.0
  %1031 = vmatpush1.msra.mxu0 0.0
  %1032 = vmatprep.subr.mxu0 0.0
  %1033 = vmatpush1.msra.mxu0 0.0
  %1034 = vmatprep.subr.mxu0 0.0
  %1035 = vmatpush1.msra.mxu0 0.0
  %1036 = vmatprep.subr.mxu0 0.0
  %1037 = vmatpush1.msra.mxu0 0.0
  %1038 = vmatprep.subr.mxu0 0.0
  %1039 = vmatpush1.msra.mxu0 0.0
  %1040 = vmatprep.subr.mxu0 0.0
  %1041 = vmatpush1.msra.mxu0 0.0
  %1042 = vmatprep.subr.mxu0 0.0
  %1043 = vmatpush1.msra.mxu0 0.0
  %1044 = vmatprep.subr.mxu0 0.0
  %1045 = vmatpush1.msra.mxu0 0.0
  %1046 = vmatprep.subr.mxu0 0.0
  %1047 = vmatpush1.msra.mxu0 0.0
  %1048 = vmatprep.subr.mxu0 0.0
  %1049 = vmatpush1.msra.mxu0 0.0
  %1050 = vmatprep.subr.mxu0 0.0
  %1051 = vmatpush1.msra.mxu0 0.0
  %1052 = vmatprep.mubr.f32.mxu0 0.0
  %1053 = vmatmul.mubr.f32.gmra.mrb[0].mxu0 %v983
  %v1054 = vpop.f32.mrb[0].mxu0
  %v1055 = vadd.f32 %v981, %v1054
  %v1056 = vpop.f32.mrb[0].mxu0
  %1057 = vdwg.mxu0
  %v1058 = vadd.f32 %v1055, %v341
  %v1059 = vmax.f32 %v1058, 0.0
  %v1060 = vtanh.pop %v1059
  %v1061 = vsel %vm377, %v1060, 0.0
  %v1063 = vlaneseq
  %v1064 = vshrl.u32 %v1063, 7
  %v1065 = vsub.s32 0, %v1064
  %v1066 = vrot.slane %v250, %v1065
  %v1067 = vlaneseq
  %v1068 = vshrl.u32 %v1067, 7
  %v1069 = vsub.s32 1, %v1068
  %v1070 = vrot.slane %v250, %v1069
  %v1073 = vmul.f32 %v465, %v1066
  %v1074 = vmul.f32 %v465, %v1070
  %vm1075 = vcmask 179200
  %v1077 = vsel %vm1075, 0.0, 0
  %vm1079 = vcmask 1045504
  %v1081 = vsel %vm1079, %v248, 0
  %v1084 = vsel %vm1079, %v249, 0
  %1086 = vmatprep.subr.mxu0 %v213
  %1087 = vmatpush1.msra.mxu0 %v212
  %1088 = vmatprep.subr.mxu0 %v215
  %1089 = vmatpush1.msra.mxu0 %v214
  %1090 = vmatprep.subr.mxu0 %v217
  %1091 = vmatpush1.msra.mxu0 %v216
  %1092 = vmatprep.subr.mxu0 %v219
  %1093 = vmatpush1.msra.mxu0 %v218
  %1094 = vmatprep.subr.mxu0 %v221
  %1095 = vmatpush1.msra.mxu0 %v220
  %1096 = vmatprep.subr.mxu0 %v223
  %1097 = vmatpush1.msra.mxu0 %v222
  %1098 = vmatprep.subr.mxu0 %v225
  %1099 = vmatpush1.msra.mxu0 %v224
  %1100 = vmatprep.subr.mxu0 %v227
  %1101 = vmatpush1.msra.mxu0 %v226
  %1102 = vmatprep.subr.mxu0 %v229
  %1103 = vmatpush1.msra.mxu0 %v228
  %1104 = vmatprep.subr.mxu0 %v231
  %1105 = vmatpush1.msra.mxu0 %v230
  %1106 = vmatprep.subr.mxu0 %v233
  %1107 = vmatpush1.msra.mxu0 %v232
  %1108 = vmatprep.subr.mxu0 %v235
  %1109 = vmatpush1.msra.mxu0 %v234
  %1110 = vmatprep.subr.mxu0 %v237
  %1111 = vmatpush1.msra.mxu0 %v236
  %1112 = vmatprep.subr.mxu0 %v239
  %1113 = vmatpush1.msra.mxu0 %v238
  %1114 = vmatprep.subr.mxu0 %v241
  %1115 = vmatpush1.msra.mxu0 %v240
  %1116 = vmatprep.subr.mxu0 %v243
  %1117 = vmatpush1.msra.mxu0 %v242
  %1118 = vmatprep.subr.mxu0 %v245
  %1119 = vmatpush1.msra.mxu0 %v244
  %1120 = vmatprep.subr.mxu0 %v247
  %1121 = vmatpush1.msra.mxu0 %v246
  %1122 = vmatprep.subr.mxu0 %v1084
  %1123 = vmatpush1.msra.mxu0 %v1081
  %1124 = vmatprep.subr.mxu0 0.0
  %1125 = vmatpush1.msra.mxu0 0.0
  %1126 = vmatprep.subr.mxu0 0.0
  %1127 = vmatpush1.msra.mxu0 0.0
  %1128 = vmatprep.subr.mxu0 0.0
  %1129 = vmatpush1.msra.mxu0 0.0
  %1130 = vmatprep.subr.mxu0 0.0
  %1131 = vmatpush1.msra.mxu0 0.0
  %1132 = vmatprep.subr.mxu0 0.0
  %1133 = vmatpush1.msra.mxu0 0.0
  %1134 = vmatprep.subr.mxu0 0.0
  %1135 = vmatpush1.msra.mxu0 0.0
  %1136 = vmatprep.subr.mxu0 0.0
  %1137 = vmatpush1.msra.mxu0 0.0
  %1138 = vmatprep.subr.mxu0 0.0
  %1139 = vmatpush1.msra.mxu0 0.0
  %1140 = vmatprep.subr.mxu0 0.0
  %1141 = vmatpush1.msra.mxu0 0.0
  %1142 = vmatprep.subr.mxu0 0.0
  %1143 = vmatpush1.msra.mxu0 0.0
  %1144 = vmatprep.subr.mxu0 0.0
  %1145 = vmatpush1.msra.mxu0 0.0
  %1146 = vmatprep.subr.mxu0 0.0
  %1147 = vmatpush1.msra.mxu0 0.0
  %1148 = vmatprep.subr.mxu0 0.0
  %1149 = vmatpush1.msra.mxu0 0.0
  %1150 = vmatprep.mubr.f32.mxu0 %v1077
  %1151 = vmatmul.mubr.f32.gmra.mrb[0].mxu0 %v1061
  %v1152 = vpop.f32.mrb[0].mxu0
  %v1153 = vadd.f32 %v1073, %v1152
  %v1154 = vpop.f32.mrb[0].mxu0
  %v1155 = vadd.f32 %v1074, %v1154
  %1156 = vdwg.mxu0
  %v1158 = vsel %vm1075, %v457, 0
  %v1161 = vsel %vm1079, %v287, 0
  %v1164 = vsel %vm1079, %v288, 0
  %1166 = vmatprep.subr.mxu0 %v252
  %1167 = vmatpush1.msra.mxu0 %v251
  %1168 = vmatprep.subr.mxu0 %v254
  %1169 = vmatpush1.msra.mxu0 %v253
  %1170 = vmatprep.subr.mxu0 %v256
  %1171 = vmatpush1.msra.mxu0 %v255
  %1172 = vmatprep.subr.mxu0 %v258
  %1173 = vmatpush1.msra.mxu0 %v257
  %1174 = vmatprep.subr.mxu0 %v260
  %1175 = vmatpush1.msra.mxu0 %v259
  %1176 = vmatprep.subr.mxu0 %v262
  %1177 = vmatpush1.msra.mxu0 %v261
  %1178 = vmatprep.subr.mxu0 %v264
  %1179 = vmatpush1.msra.mxu0 %v263
  %1180 = vmatprep.subr.mxu0 %v266
  %1181 = vmatpush1.msra.mxu0 %v265
  %1182 = vmatprep.subr.mxu0 %v268
  %1183 = vmatpush1.msra.mxu0 %v267
  %1184 = vmatprep.subr.mxu0 %v270
  %1185 = vmatpush1.msra.mxu0 %v269
  %1186 = vmatprep.subr.mxu0 %v272
  %1187 = vmatpush1.msra.mxu0 %v271
  %1188 = vmatprep.subr.mxu0 %v274
  %1189 = vmatpush1.msra.mxu0 %v273
  %1190 = vmatprep.subr.mxu0 %v276
  %1191 = vmatpush1.msra.mxu0 %v275
  %1192 = vmatprep.subr.mxu0 %v278
  %1193 = vmatpush1.msra.mxu0 %v277
  %1194 = vmatprep.subr.mxu0 %v280
  %1195 = vmatpush1.msra.mxu0 %v279
  %1196 = vmatprep.subr.mxu0 %v282
  %1197 = vmatpush1.msra.mxu0 %v281
  %1198 = vmatprep.subr.mxu0 %v284
  %1199 = vmatpush1.msra.mxu0 %v283
  %1200 = vmatprep.subr.mxu0 %v286
  %1201 = vmatpush1.msra.mxu0 %v285
  %1202 = vmatprep.subr.mxu0 %v1164
  %1203 = vmatpush1.msra.mxu0 %v1161
  %1204 = vmatprep.subr.mxu0 0.0
  %1205 = vmatpush1.msra.mxu0 0.0
  %1206 = vmatprep.subr.mxu0 0.0
  %1207 = vmatpush1.msra.mxu0 0.0
  %1208 = vmatprep.subr.mxu0 0.0
  %1209 = vmatpush1.msra.mxu0 0.0
  %1210 = vmatprep.subr.mxu0 0.0
  %1211 = vmatpush1.msra.mxu0 0.0
  %1212 = vmatprep.subr.mxu0 0.0
  %1213 = vmatpush1.msra.mxu0 0.0
  %1214 = vmatprep.subr.mxu0 0.0
  %1215 = vmatpush1.msra.mxu0 0.0
  %1216 = vmatprep.subr.mxu0 0.0
  %1217 = vmatpush1.msra.mxu0 0.0
  %1218 = vmatprep.subr.mxu0 0.0
  %1219 = vmatpush1.msra.mxu0 0.0
  %1220 = vmatprep.subr.mxu0 0.0
  %1221 = vmatpush1.msra.mxu0 0.0
  %1222 = vmatprep.subr.mxu0 0.0
  %1223 = vmatpush1.msra.mxu0 0.0
  %1224 = vmatprep.subr.mxu0 0.0
  %1225 = vmatpush1.msra.mxu0 0.0
  %1226 = vmatprep.subr.mxu0 0.0
  %1227 = vmatpush1.msra.mxu0 0.0
  %1228 = vmatprep.subr.mxu0 0.0
  %1229 = vmatpush1.msra.mxu0 0.0
  %1230 = vmatprep.mubr.f32.mxu0 %v1158
  %1231 = vmatmul.mubr.f32.gmra.mrb[0].mxu0 %v456
  %v1232 = vpop.f32.mrb[0].mxu0
  %v1233 = vadd.f32 0.0, %v1232
  %v1234 = vpop.f32.mrb[0].mxu0
  %v1235 = vadd.f32 0.0, %v1234
  %1236 = vdwg.mxu0
  %v1237 = vadd.f32 %v1153, %v1233
  %v1238 = vadd.f32 %v1155, %v1235
  %v1239 = vadd.f32 %v1237, %v348
  %v1240 = vadd.f32 %v1238, %v352
  %v1241 = vmax.f32 %v1239, 0.0
  %v1242 = vmax.f32 %v1240, 0.0
  %v1243 = vtanh.pop %v1241
  %v1244 = vtanh.pop %v1242
  %v1246 = vsel %vm1075, %v1244, 0
  %v1249 = vsel %vm1079, %v307, 0
  %1251 = vmatprep.subr.mxu0 0.0
  %1252 = vmatpush1.msra.mxu0 %v289
  %1253 = vmatprep.subr.mxu0 0.0
  %1254 = vmatpush1.msra.mxu0 %v290
  %1255 = vmatprep.subr.mxu0 0.0
  %1256 = vmatpush1.msra.mxu0 %v291
  %1257 = vmatprep.subr.mxu0 0.0
  %1258 = vmatpush1.msra.mxu0 %v292
  %1259 = vmatprep.subr.mxu0 0.0
  %1260 = vmatpush1.msra.mxu0 %v293
  %1261 = vmatprep.subr.mxu0 0.0
  %1262 = vmatpush1.msra.mxu0 %v294
  %1263 = vmatprep.subr.mxu0 0.0
  %1264 = vmatpush1.msra.mxu0 %v295
  %1265 = vmatprep.subr.mxu0 0.0
  %1266 = vmatpush1.msra.mxu0 %v296
  %1267 = vmatprep.subr.mxu0 0.0
  %1268 = vmatpush1.msra.mxu0 %v297
  %1269 = vmatprep.subr.mxu0 0.0
  %1270 = vmatpush1.msra.mxu0 %v298
  %1271 = vmatprep.subr.mxu0 0.0
  %1272 = vmatpush1.msra.mxu0 %v299
  %1273 = vmatprep.subr.mxu0 0.0
  %1274 = vmatpush1.msra.mxu0 %v300
  %1275 = vmatprep.subr.mxu0 0.0
  %1276 = vmatpush1.msra.mxu0 %v301
  %1277 = vmatprep.subr.mxu0 0.0
  %1278 = vmatpush1.msra.mxu0 %v302
  %1279 = vmatprep.subr.mxu0 0.0
  %1280 = vmatpush1.msra.mxu0 %v303
  %1281 = vmatprep.subr.mxu0 0.0
  %1282 = vmatpush1.msra.mxu0 %v304
  %1283 = vmatprep.subr.mxu0 0.0
  %1284 = vmatpush1.msra.mxu0 %v305
  %1285 = vmatprep.subr.mxu0 0.0
  %1286 = vmatpush1.msra.mxu0 %v306
  %1287 = vmatprep.subr.mxu0 0.0
  %1288 = vmatpush1.msra.mxu0 %v1249
  %1289 = vmatprep.subr.mxu0 0.0
  %1290 = vmatpush1.msra.mxu0 0.0
  %1291 = vmatprep.subr.mxu0 0.0
  %1292 = vmatpush1.msra.mxu0 0.0
  %1293 = vmatprep.subr.mxu0 0.0
  %1294 = vmatpush1.msra.mxu0 0.0
  %1295 = vmatprep.subr.mxu0 0.0
  %1296 = vmatpush1.msra.mxu0 0.0
  %1297 = vmatprep.subr.mxu0 0.0
  %1298 = vmatpush1.msra.mxu0 0.0
  %1299 = vmatprep.subr.mxu0 0.0
  %1300 = vmatpush1.msra.mxu0 0.0
  %1301 = vmatprep.subr.mxu0 0.0
  %1302 = vmatpush1.msra.mxu0 0.0
  %1303 = vmatprep.subr.mxu0 0.0
  %1304 = vmatpush1.msra.mxu0 0.0
  %1305 = vmatprep.subr.mxu0 0.0
  %1306 = vmatpush1.msra.mxu0 0.0
  %1307 = vmatprep.subr.mxu0 0.0
  %1308 = vmatpush1.msra.mxu0 0.0
  %1309 = vmatprep.subr.mxu0 0.0
  %1310 = vmatpush1.msra.mxu0 0.0
  %1311 = vmatprep.subr.mxu0 0.0
  %1312 = vmatpush1.msra.mxu0 0.0
  %1313 = vmatprep.subr.mxu0 0.0
  %1314 = vmatpush1.msra.mxu0 0.0
  %1315 = vmatprep.mubr.f32.mxu0 %v1246
  %1316 = vmatmul.mubr.f32.gmra.mrb[0].mxu0 %v1243
  %v1317 = vpop.f32.mrb[0].mxu0
  %v1318 = vadd.f32 %v360, %v1317
  %v1319 = vpop.f32.mrb[0].mxu0
  %1320 = vdwg.mxu0
  %1321 = vst.msk [vmem:[%s61] sm:$0xff] %vm377, %v1318
  %s1322 = scalar_lea.vmem %s1, 8
  %v1323 = vld [vmem:[%s1322] sm:$0xff]
  %s1324 = scalar_lea.vmem %s3, 8
  %v1325 = vld [vmem:[%s1324] sm:$0xff]
  %1327 = vrot.lane.b32.xlu0 %v1318, 15
  %v1328 = vpop.permute.xlu0 %1327
  %v1330 = vsel %vm460, %v1323, %v1328
  %1332 = vset.pattern.permute.xlu0 0
  %1333 = vperm.xlu0 %1332, %v1325
  %v1334 = vpop.permute.xlu0 %1333
  %v1336 = vmul.f32 %v1334, %v471
  %v1338 = vsel %vm474, %v1330, 0
  %1340 = vmatprep.subr.mxu0 0.0
  %1341 = vmatpush1.msra.mxu0 %v126
  %1342 = vmatprep.subr.mxu0 0.0
  %1343 = vmatpush1.msra.mxu0 %v127
  %1344 = vmatprep.subr.mxu0 0.0
  %1345 = vmatpush1.msra.mxu0 %v128
  %1346 = vmatprep.subr.mxu0 0.0
  %1347 = vmatpush1.msra.mxu0 %v129
  %1348 = vmatprep.subr.mxu0 0.0
  %1349 = vmatpush1.msra.mxu0 %v130
  %1350 = vmatprep.subr.mxu0 0.0
  %1351 = vmatpush1.msra.mxu0 %v131
  %1352 = vmatprep.subr.mxu0 0.0
  %1353 = vmatpush1.msra.mxu0 %v132
  %1354 = vmatprep.subr.mxu0 0.0
  %1355 = vmatpush1.msra.mxu0 %v133
  %1356 = vmatprep.subr.mxu0 0.0
  %1357 = vmatpush1.msra.mxu0 %v480
  %1358 = vmatprep.subr.mxu0 0.0
  %1359 = vmatpush1.msra.mxu0 0.0
  %1360 = vmatprep.subr.mxu0 0.0
  %1361 = vmatpush1.msra.mxu0 0.0
  %1362 = vmatprep.subr.mxu0 0.0
  %1363 = vmatpush1.msra.mxu0 0.0
  %1364 = vmatprep.subr.mxu0 0.0
  %1365 = vmatpush1.msra.mxu0 0.0
  %1366 = vmatprep.subr.mxu0 0.0
  %1367 = vmatpush1.msra.mxu0 0.0
  %1368 = vmatprep.subr.mxu0 0.0
  %1369 = vmatpush1.msra.mxu0 0.0
  %1370 = vmatprep.subr.mxu0 0.0
  %1371 = vmatpush1.msra.mxu0 0.0
  %1372 = vmatprep.subr.mxu0 0.0
  %1373 = vmatpush1.msra.mxu0 0.0
  %1374 = vmatprep.subr.mxu0 0.0
  %1375 = vmatpush1.msra.mxu0 0.0
  %1376 = vmatprep.subr.mxu0 0.0
  %1377 = vmatpush1.msra.mxu0 0.0
  %1378 = vmatprep.subr.mxu0 0.0
  %1379 = vmatpush1.msra.mxu0 0.0
  %1380 = vmatprep.subr.mxu0 0.0
  %1381 = vmatpush1.msra.mxu0 0.0
  %1382 = vmatprep.subr.mxu0 0.0
  %1383 = vmatpush1.msra.mxu0 0.0
  %1384 = vmatprep.subr.mxu0 0.0
  %1385 = vmatpush1.msra.mxu0 0.0
  %1386 = vmatprep.subr.mxu0 0.0
  %1387 = vmatpush1.msra.mxu0 0.0
  %1388 = vmatprep.subr.mxu0 0.0
  %1389 = vmatpush1.msra.mxu0 0.0
  %1390 = vmatprep.subr.mxu0 0.0
  %1391 = vmatpush1.msra.mxu0 0.0
  %1392 = vmatprep.subr.mxu0 0.0
  %1393 = vmatpush1.msra.mxu0 0.0
  %1394 = vmatprep.subr.mxu0 0.0
  %1395 = vmatpush1.msra.mxu0 0.0
  %1396 = vmatprep.subr.mxu0 0.0
  %1397 = vmatpush1.msra.mxu0 0.0
  %1398 = vmatprep.subr.mxu0 0.0
  %1399 = vmatpush1.msra.mxu0 0.0
  %1400 = vmatprep.subr.mxu0 0.0
  %1401 = vmatpush1.msra.mxu0 0.0
  %1402 = vmatprep.subr.mxu0 0.0
  %1403 = vmatpush1.msra.mxu0 0.0
  %1404 = vmatprep.mubr.f32.mxu0 0.0
  %1405 = vmatmul.mubr.f32.gmra.mrb[0].mxu0 %v1338
  %v1406 = vpop.f32.mrb[0].mxu0
  %v1407 = vadd.f32 %v1336, %v1406
  %v1408 = vpop.f32.mrb[0].mxu0
  %1409 = vdwg.mxu0
  %1410 = vmatprep.subr.mxu0 0.0
  %1411 = vmatpush1.msra.mxu0 %v136
  %1412 = vmatprep.subr.mxu0 0.0
  %1413 = vmatpush1.msra.mxu0 %v137
  %1414 = vmatprep.subr.mxu0 0.0
  %1415 = vmatpush1.msra.mxu0 %v138
  %1416 = vmatprep.subr.mxu0 0.0
  %1417 = vmatpush1.msra.mxu0 %v139
  %1418 = vmatprep.subr.mxu0 0.0
  %1419 = vmatpush1.msra.mxu0 %v140
  %1420 = vmatprep.subr.mxu0 0.0
  %1421 = vmatpush1.msra.mxu0 %v141
  %1422 = vmatprep.subr.mxu0 0.0
  %1423 = vmatpush1.msra.mxu0 %v142
  %1424 = vmatprep.subr.mxu0 0.0
  %1425 = vmatpush1.msra.mxu0 %v143
  %1426 = vmatprep.subr.mxu0 0.0
  %1427 = vmatpush1.msra.mxu0 %v144
  %1428 = vmatprep.subr.mxu0 0.0
  %1429 = vmatpush1.msra.mxu0 %v145
  %1430 = vmatprep.subr.mxu0 0.0
  %1431 = vmatpush1.msra.mxu0 %v146
  %1432 = vmatprep.subr.mxu0 0.0
  %1433 = vmatpush1.msra.mxu0 %v147
  %1434 = vmatprep.subr.mxu0 0.0
  %1435 = vmatpush1.msra.mxu0 %v558
  %1436 = vmatprep.subr.mxu0 0.0
  %1437 = vmatpush1.msra.mxu0 0.0
  %1438 = vmatprep.subr.mxu0 0.0
  %1439 = vmatpush1.msra.mxu0 0.0
  %1440 = vmatprep.subr.mxu0 0.0
  %1441 = vmatpush1.msra.mxu0 0.0
  %1442 = vmatprep.subr.mxu0 0.0
  %1443 = vmatpush1.msra.mxu0 0.0
  %1444 = vmatprep.subr.mxu0 0.0
  %1445 = vmatpush1.msra.mxu0 0.0
  %1446 = vmatprep.subr.mxu0 0.0
  %1447 = vmatpush1.msra.mxu0 0.0
  %1448 = vmatprep.subr.mxu0 0.0
  %1449 = vmatpush1.msra.mxu0 0.0
  %1450 = vmatprep.subr.mxu0 0.0
  %1451 = vmatpush1.msra.mxu0 0.0
  %1452 = vmatprep.subr.mxu0 0.0
  %1453 = vmatpush1.msra.mxu0 0.0
  %1454 = vmatprep.subr.mxu0 0.0
  %1455 = vmatpush1.msra.mxu0 0.0
  %1456 = vmatprep.subr.mxu0 0.0
  %1457 = vmatpush1.msra.mxu0 0.0
  %1458 = vmatprep.subr.mxu0 0.0
  %1459 = vmatpush1.msra.mxu0 0.0
  %1460 = vmatprep.subr.mxu0 0.0
  %1461 = vmatpush1.msra.mxu0 0.0
  %1462 = vmatprep.subr.mxu0 0.0
  %1463 = vmatpush1.msra.mxu0 0.0
  %1464 = vmatprep.subr.mxu0 0.0
  %1465 = vmatpush1.msra.mxu0 0.0
  %1466 = vmatprep.subr.mxu0 0.0
  %1467 = vmatpush1.msra.mxu0 0.0
  %1468 = vmatprep.subr.mxu0 0.0
  %1469 = vmatpush1.msra.mxu0 0.0
  %1470 = vmatprep.subr.mxu0 0.0
  %1471 = vmatpush1.msra.mxu0 0.0
  %1472 = vmatprep.subr.mxu0 0.0
  %1473 = vmatpush1.msra.mxu0 0.0
  %1474 = vmatprep.mubr.f32.mxu0 0.0
  %1475 = vmatmul.mubr.f32.gmra.mrb[0].mxu0 %v635
  %v1476 = vpop.f32.mrb[0].mxu0
  %v1477 = vadd.f32 0.0, %v1476
  %v1478 = vpop.f32.mrb[0].mxu0
  %1479 = vdwg.mxu0
  %v1480 = vadd.f32 %v1407, %v1477
  %v1481 = vadd.f32 %v1480, %v313
  %v1482 = vmax.f32 %v1481, 0.0
  %v1483 = vtanh.pop %v1482
  %v1485 = vsel %vm552, %v1483, 0
  %1487 = vmatprep.subr.mxu0 0.0
  %1488 = vmatpush1.msra.mxu0 %v149
  %1489 = vmatprep.subr.mxu0 0.0
  %1490 = vmatpush1.msra.mxu0 %v150
  %1491 = vmatprep.subr.mxu0 0.0
  %1492 = vmatpush1.msra.mxu0 %v151
  %1493 = vmatprep.subr.mxu0 0.0
  %1494 = vmatpush1.msra.mxu0 %v152
  %1495 = vmatprep.subr.mxu0 0.0
  %1496 = vmatpush1.msra.mxu0 %v153
  %1497 = vmatprep.subr.mxu0 0.0
  %1498 = vmatpush1.msra.mxu0 %v154
  %1499 = vmatprep.subr.mxu0 0.0
  %1500 = vmatpush1.msra.mxu0 %v155
  %1501 = vmatprep.subr.mxu0 0.0
  %1502 = vmatpush1.msra.mxu0 %v156
  %1503 = vmatprep.subr.mxu0 0.0
  %1504 = vmatpush1.msra.mxu0 %v157
  %1505 = vmatprep.subr.mxu0 0.0
  %1506 = vmatpush1.msra.mxu0 %v158
  %1507 = vmatprep.subr.mxu0 0.0
  %1508 = vmatpush1.msra.mxu0 %v159
  %1509 = vmatprep.subr.mxu0 0.0
  %1510 = vmatpush1.msra.mxu0 %v160
  %1511 = vmatprep.subr.mxu0 0.0
  %1512 = vmatpush1.msra.mxu0 %v638
  %1513 = vmatprep.subr.mxu0 0.0
  %1514 = vmatpush1.msra.mxu0 0.0
  %1515 = vmatprep.subr.mxu0 0.0
  %1516 = vmatpush1.msra.mxu0 0.0
  %1517 = vmatprep.subr.mxu0 0.0
  %1518 = vmatpush1.msra.mxu0 0.0
  %1519 = vmatprep.subr.mxu0 0.0
  %1520 = vmatpush1.msra.mxu0 0.0
  %1521 = vmatprep.subr.mxu0 0.0
  %1522 = vmatpush1.msra.mxu0 0.0
  %1523 = vmatprep.subr.mxu0 0.0
  %1524 = vmatpush1.msra.mxu0 0.0
  %1525 = vmatprep.subr.mxu0 0.0
  %1526 = vmatpush1.msra.mxu0 0.0
  %1527 = vmatprep.subr.mxu0 0.0
  %1528 = vmatpush1.msra.mxu0 0.0
  %1529 = vmatprep.subr.mxu0 0.0
  %1530 = vmatpush1.msra.mxu0 0.0
  %1531 = vmatprep.subr.mxu0 0.0
  %1532 = vmatpush1.msra.mxu0 0.0
  %1533 = vmatprep.subr.mxu0 0.0
  %1534 = vmatpush1.msra.mxu0 0.0
  %1535 = vmatprep.subr.mxu0 0.0
  %1536 = vmatpush1.msra.mxu0 0.0
  %1537 = vmatprep.subr.mxu0 0.0
  %1538 = vmatpush1.msra.mxu0 0.0
  %1539 = vmatprep.subr.mxu0 0.0
  %1540 = vmatpush1.msra.mxu0 0.0
  %1541 = vmatprep.subr.mxu0 0.0
  %1542 = vmatpush1.msra.mxu0 0.0
  %1543 = vmatprep.subr.mxu0 0.0
  %1544 = vmatpush1.msra.mxu0 0.0
  %1545 = vmatprep.subr.mxu0 0.0
  %1546 = vmatpush1.msra.mxu0 0.0
  %1547 = vmatprep.subr.mxu0 0.0
  %1548 = vmatpush1.msra.mxu0 0.0
  %1549 = vmatprep.subr.mxu0 0.0
  %1550 = vmatpush1.msra.mxu0 0.0
  %1551 = vmatprep.mubr.f32.mxu0 0.0
  %1552 = vmatmul.mubr.f32.gmra.mrb[0].mxu0 %v1485
  %v1553 = vpop.f32.mrb[0].mxu0
  %v1554 = vadd.f32 %v320, %v1553
  %v1555 = vpop.f32.mrb[0].mxu0
  %1556 = vdwg.mxu0
  %v1557 = vmax.f32 %v1554, 0.0
  %v1558 = vtanh.pop %v1557
  %v1559 = vmul.f32 %v1334, %v716
  %v1561 = vsel %vm552, %v1558, 0
  %1563 = vmatprep.subr.mxu0 0.0
  %1564 = vmatpush1.msra.mxu0 %v162
  %1565 = vmatprep.subr.mxu0 0.0
  %1566 = vmatpush1.msra.mxu0 %v163
  %1567 = vmatprep.subr.mxu0 0.0
  %1568 = vmatpush1.msra.mxu0 %v164
  %1569 = vmatprep.subr.mxu0 0.0
  %1570 = vmatpush1.msra.mxu0 %v165
  %1571 = vmatprep.subr.mxu0 0.0
  %1572 = vmatpush1.msra.mxu0 %v166
  %1573 = vmatprep.subr.mxu0 0.0
  %1574 = vmatpush1.msra.mxu0 %v167
  %1575 = vmatprep.subr.mxu0 0.0
  %1576 = vmatpush1.msra.mxu0 %v168
  %1577 = vmatprep.subr.mxu0 0.0
  %1578 = vmatpush1.msra.mxu0 %v169
  %1579 = vmatprep.subr.mxu0 0.0
  %1580 = vmatpush1.msra.mxu0 %v170
  %1581 = vmatprep.subr.mxu0 0.0
  %1582 = vmatpush1.msra.mxu0 %v171
  %1583 = vmatprep.subr.mxu0 0.0
  %1584 = vmatpush1.msra.mxu0 %v172
  %1585 = vmatprep.subr.mxu0 0.0
  %1586 = vmatpush1.msra.mxu0 %v173
  %1587 = vmatprep.subr.mxu0 0.0
  %1588 = vmatpush1.msra.mxu0 %v723
  %1589 = vmatprep.subr.mxu0 0.0
  %1590 = vmatpush1.msra.mxu0 0.0
  %1591 = vmatprep.subr.mxu0 0.0
  %1592 = vmatpush1.msra.mxu0 0.0
  %1593 = vmatprep.subr.mxu0 0.0
  %1594 = vmatpush1.msra.mxu0 0.0
  %1595 = vmatprep.subr.mxu0 0.0
  %1596 = vmatpush1.msra.mxu0 0.0
  %1597 = vmatprep.subr.mxu0 0.0
  %1598 = vmatpush1.msra.mxu0 0.0
  %1599 = vmatprep.subr.mxu0 0.0
  %1600 = vmatpush1.msra.mxu0 0.0
  %1601 = vmatprep.subr.mxu0 0.0
  %1602 = vmatpush1.msra.mxu0 0.0
  %1603 = vmatprep.subr.mxu0 0.0
  %1604 = vmatpush1.msra.mxu0 0.0
  %1605 = vmatprep.subr.mxu0 0.0
  %1606 = vmatpush1.msra.mxu0 0.0
  %1607 = vmatprep.subr.mxu0 0.0
  %1608 = vmatpush1.msra.mxu0 0.0
  %1609 = vmatprep.subr.mxu0 0.0
  %1610 = vmatpush1.msra.mxu0 0.0
  %1611 = vmatprep.subr.mxu0 0.0
  %1612 = vmatpush1.msra.mxu0 0.0
  %1613 = vmatprep.subr.mxu0 0.0
  %1614 = vmatpush1.msra.mxu0 0.0
  %1615 = vmatprep.subr.mxu0 0.0
  %1616 = vmatpush1.msra.mxu0 0.0
  %1617 = vmatprep.subr.mxu0 0.0
  %1618 = vmatpush1.msra.mxu0 0.0
  %1619 = vmatprep.subr.mxu0 0.0
  %1620 = vmatpush1.msra.mxu0 0.0
  %1621 = vmatprep.subr.mxu0 0.0
  %1622 = vmatpush1.msra.mxu0 0.0
  %1623 = vmatprep.subr.mxu0 0.0
  %1624 = vmatpush1.msra.mxu0 0.0
  %1625 = vmatprep.subr.mxu0 0.0
  %1626 = vmatpush1.msra.mxu0 0.0
  %1627 = vmatprep.mubr.f32.mxu0 0.0
  %1628 = vmatmul.mubr.f32.gmra.mrb[0].mxu0 %v1561
  %v1629 = vpop.f32.mrb[0].mxu0
  %v1630 = vadd.f32 %v1559, %v1629
  %v1631 = vpop.f32.mrb[0].mxu0
  %1632 = vdwg.mxu0
  %v1633 = vadd.f32 %v1630, %v452
  %v1634 = vmax.f32 %v1633, 0.0
  %v1635 = vtanh.pop %v1634
  %v1636 = vmul.f32 %v1334, %v802
  %v1638 = vsel %vm377, %v1635, 0
  %1640 = vmatprep.subr.mxu0 0.0
  %1641 = vmatpush1.msra.mxu0 %v176
  %1642 = vmatprep.subr.mxu0 0.0
  %1643 = vmatpush1.msra.mxu0 %v177
  %1644 = vmatprep.subr.mxu0 0.0
  %1645 = vmatpush1.msra.mxu0 %v178
  %1646 = vmatprep.subr.mxu0 0.0
  %1647 = vmatpush1.msra.mxu0 %v179
  %1648 = vmatprep.subr.mxu0 0.0
  %1649 = vmatpush1.msra.mxu0 %v180
  %1650 = vmatprep.subr.mxu0 0.0
  %1651 = vmatpush1.msra.mxu0 %v181
  %1652 = vmatprep.subr.mxu0 0.0
  %1653 = vmatpush1.msra.mxu0 %v809
  %1654 = vmatprep.subr.mxu0 0.0
  %1655 = vmatpush1.msra.mxu0 0.0
  %1656 = vmatprep.subr.mxu0 0.0
  %1657 = vmatpush1.msra.mxu0 0.0
  %1658 = vmatprep.subr.mxu0 0.0
  %1659 = vmatpush1.msra.mxu0 0.0
  %1660 = vmatprep.subr.mxu0 0.0
  %1661 = vmatpush1.msra.mxu0 0.0
  %1662 = vmatprep.subr.mxu0 0.0
  %1663 = vmatpush1.msra.mxu0 0.0
  %1664 = vmatprep.subr.mxu0 0.0
  %1665 = vmatpush1.msra.mxu0 0.0
  %1666 = vmatprep.subr.mxu0 0.0
  %1667 = vmatpush1.msra.mxu0 0.0
  %1668 = vmatprep.subr.mxu0 0.0
  %1669 = vmatpush1.msra.mxu0 0.0
  %1670 = vmatprep.subr.mxu0 0.0
  %1671 = vmatpush1.msra.mxu0 0.0
  %1672 = vmatprep.subr.mxu0 0.0
  %1673 = vmatpush1.msra.mxu0 0.0
  %1674 = vmatprep.subr.mxu0 0.0
  %1675 = vmatpush1.msra.mxu0 0.0
  %1676 = vmatprep.subr.mxu0 0.0
  %1677 = vmatpush1.msra.mxu0 0.0
  %1678 = vmatprep.subr.mxu0 0.0
  %1679 = vmatpush1.msra.mxu0 0.0
  %1680 = vmatprep.subr.mxu0 0.0
  %1681 = vmatpush1.msra.mxu0 0.0
  %1682 = vmatprep.subr.mxu0 0.0
  %1683 = vmatpush1.msra.mxu0 0.0
  %1684 = vmatprep.subr.mxu0 0.0
  %1685 = vmatpush1.msra.mxu0 0.0
  %1686 = vmatprep.subr.mxu0 0.0
  %1687 = vmatpush1.msra.mxu0 0.0
  %1688 = vmatprep.subr.mxu0 0.0
  %1689 = vmatpush1.msra.mxu0 0.0
  %1690 = vmatprep.subr.mxu0 0.0
  %1691 = vmatpush1.msra.mxu0 0.0
  %1692 = vmatprep.subr.mxu0 0.0
  %1693 = vmatpush1.msra.mxu0 0.0
  %1694 = vmatprep.subr.mxu0 0.0
  %1695 = vmatpush1.msra.mxu0 0.0
  %1696 = vmatprep.subr.mxu0 0.0
  %1697 = vmatpush1.msra.mxu0 0.0
  %1698 = vmatprep.subr.mxu0 0.0
  %1699 = vmatpush1.msra.mxu0 0.0
  %1700 = vmatprep.subr.mxu0 0.0
  %1701 = vmatpush1.msra.mxu0 0.0
  %1702 = vmatprep.subr.mxu0 0.0
  %1703 = vmatpush1.msra.mxu0 0.0
  %1704 = vmatprep.mubr.f32.mxu0 0.0
  %1705 = vmatmul.mubr.f32.gmra.mrb[0].mxu0 %v1638
  %v1706 = vpop.f32.mrb[0].mxu0
  %v1707 = vadd.f32 %v1636, %v1706
  %v1708 = vpop.f32.mrb[0].mxu0
  %1709 = vdwg.mxu0
  %v1710 = vadd.f32 %v1707, %v327
  %v1711 = vmax.f32 %v1710, 0.0
  %v1712 = vtanh.pop %v1711
  %1713 = vrot.lane.b32.xlu0 %v1635, 50
  %v1714 = vpop.permute.xlu0 %1713
  %v1716 = vsel %vm377, %v1712, %v1714
  %v1717 = vmul.f32 %v1334, %v892
  %v1719 = vsel %vm552, %v1716, 0
  %1721 = vmatprep.subr.mxu0 0.0
  %1722 = vmatpush1.msra.mxu0 %v184
  %1723 = vmatprep.subr.mxu0 0.0
  %1724 = vmatpush1.msra.mxu0 %v185
  %1725 = vmatprep.subr.mxu0 0.0
  %1726 = vmatpush1.msra.mxu0 %v186
  %1727 = vmatprep.subr.mxu0 0.0
  %1728 = vmatpush1.msra.mxu0 %v187
  %1729 = vmatprep.subr.mxu0 0.0
  %1730 = vmatpush1.msra.mxu0 %v188
  %1731 = vmatprep.subr.mxu0 0.0
  %1732 = vmatpush1.msra.mxu0 %v189
  %1733 = vmatprep.subr.mxu0 0.0
  %1734 = vmatpush1.msra.mxu0 %v190
  %1735 = vmatprep.subr.mxu0 0.0
  %1736 = vmatpush1.msra.mxu0 %v191
  %1737 = vmatprep.subr.mxu0 0.0
  %1738 = vmatpush1.msra.mxu0 %v192
  %1739 = vmatprep.subr.mxu0 0.0
  %1740 = vmatpush1.msra.mxu0 %v193
  %1741 = vmatprep.subr.mxu0 0.0
  %1742 = vmatpush1.msra.mxu0 %v194
  %1743 = vmatprep.subr.mxu0 0.0
  %1744 = vmatpush1.msra.mxu0 %v195
  %1745 = vmatprep.subr.mxu0 0.0
  %1746 = vmatpush1.msra.mxu0 %v899
  %1747 = vmatprep.subr.mxu0 0.0
  %1748 = vmatpush1.msra.mxu0 0.0
  %1749 = vmatprep.subr.mxu0 0.0
  %1750 = vmatpush1.msra.mxu0 0.0
  %1751 = vmatprep.subr.mxu0 0.0
  %1752 = vmatpush1.msra.mxu0 0.0
  %1753 = vmatprep.subr.mxu0 0.0
  %1754 = vmatpush1.msra.mxu0 0.0
  %1755 = vmatprep.subr.mxu0 0.0
  %1756 = vmatpush1.msra.mxu0 0.0
  %1757 = vmatprep.subr.mxu0 0.0
  %1758 = vmatpush1.msra.mxu0 0.0
  %1759 = vmatprep.subr.mxu0 0.0
  %1760 = vmatpush1.msra.mxu0 0.0
  %1761 = vmatprep.subr.mxu0 0.0
  %1762 = vmatpush1.msra.mxu0 0.0
  %1763 = vmatprep.subr.mxu0 0.0
  %1764 = vmatpush1.msra.mxu0 0.0
  %1765 = vmatprep.subr.mxu0 0.0
  %1766 = vmatpush1.msra.mxu0 0.0
  %1767 = vmatprep.subr.mxu0 0.0
  %1768 = vmatpush1.msra.mxu0 0.0
  %1769 = vmatprep.subr.mxu0 0.0
  %1770 = vmatpush1.msra.mxu0 0.0
  %1771 = vmatprep.subr.mxu0 0.0
  %1772 = vmatpush1.msra.mxu0 0.0
  %1773 = vmatprep.subr.mxu0 0.0
  %1774 = vmatpush1.msra.mxu0 0.0
  %1775 = vmatprep.subr.mxu0 0.0
  %1776 = vmatpush1.msra.mxu0 0.0
  %1777 = vmatprep.subr.mxu0 0.0
  %1778 = vmatpush1.msra.mxu0 0.0
  %1779 = vmatprep.subr.mxu0 0.0
  %1780 = vmatpush1.msra.mxu0 0.0
  %1781 = vmatprep.subr.mxu0 0.0
  %1782 = vmatpush1.msra.mxu0 0.0
  %1783 = vmatprep.subr.mxu0 0.0
  %1784 = vmatpush1.msra.mxu0 0.0
  %1785 = vmatprep.mubr.f32.mxu0 0.0
  %1786 = vmatmul.mubr.f32.gmra.mrb[0].mxu0 %v1719
  %v1787 = vpop.f32.mrb[0].mxu0
  %v1788 = vadd.f32 %v1717, %v1787
  %v1789 = vpop.f32.mrb[0].mxu0
  %1790 = vdwg.mxu0
  %v1791 = vadd.f32 %v1788, %v334
  %v1792 = vmax.f32 %v1791, 0.0
  %v1793 = vtanh.pop %v1792
  %1794 = vrot.lane.b32.xlu0 %v1318, 50
  %v1795 = vpop.permute.xlu0 %1794
  %v1797 = vsel %vm377, %v1793, %v1795
  %v1798 = vmul.f32 %v1334, %v979
  %v1800 = vsel %vm552, %v1797, 0
  %1802 = vmatprep.subr.mxu0 0.0
  %1803 = vmatpush1.msra.mxu0 %v198
  %1804 = vmatprep.subr.mxu0 0.0
  %1805 = vmatpush1.msra.mxu0 %v199
  %1806 = vmatprep.subr.mxu0 0.0
  %1807 = vmatpush1.msra.mxu0 %v200
  %1808 = vmatprep.subr.mxu0 0.0
  %1809 = vmatpush1.msra.mxu0 %v201
  %1810 = vmatprep.subr.mxu0 0.0
  %1811 = vmatpush1.msra.mxu0 %v202
  %1812 = vmatprep.subr.mxu0 0.0
  %1813 = vmatpush1.msra.mxu0 %v203
  %1814 = vmatprep.subr.mxu0 0.0
  %1815 = vmatpush1.msra.mxu0 %v204
  %1816 = vmatprep.subr.mxu0 0.0
  %1817 = vmatpush1.msra.mxu0 %v205
  %1818 = vmatprep.subr.mxu0 0.0
  %1819 = vmatpush1.msra.mxu0 %v206
  %1820 = vmatprep.subr.mxu0 0.0
  %1821 = vmatpush1.msra.mxu0 %v207
  %1822 = vmatprep.subr.mxu0 0.0
  %1823 = vmatpush1.msra.mxu0 %v208
  %1824 = vmatprep.subr.mxu0 0.0
  %1825 = vmatpush1.msra.mxu0 %v209
  %1826 = vmatprep.subr.mxu0 0.0
  %1827 = vmatpush1.msra.mxu0 %v986
  %1828 = vmatprep.subr.mxu0 0.0
  %1829 = vmatpush1.msra.mxu0 0.0
  %1830 = vmatprep.subr.mxu0 0.0
  %1831 = vmatpush1.msra.mxu0 0.0
  %1832 = vmatprep.subr.mxu0 0.0
  %1833 = vmatpush1.msra.mxu0 0.0
  %1834 = vmatprep.subr.mxu0 0.0
  %1835 = vmatpush1.msra.mxu0 0.0
  %1836 = vmatprep.subr.mxu0 0.0
  %1837 = vmatpush1.msra.mxu0 0.0
  %1838 = vmatprep.subr.mxu0 0.0
  %1839 = vmatpush1.msra.mxu0 0.0
  %1840 = vmatprep.subr.mxu0 0.0
  %1841 = vmatpush1.msra.mxu0 0.0
  %1842 = vmatprep.subr.mxu0 0.0
  %1843 = vmatpush1.msra.mxu0 0.0
  %1844 = vmatprep.subr.mxu0 0.0
  %1845 = vmatpush1.msra.mxu0 0.0
  %1846 = vmatprep.subr.mxu0 0.0
  %1847 = vmatpush1.msra.mxu0 0.0
  %1848 = vmatprep.subr.mxu0 0.0
  %1849 = vmatpush1.msra.mxu0 0.0
  %1850 = vmatprep.subr.mxu0 0.0
  %1851 = vmatpush1.msra.mxu0 0.0
  %1852 = vmatprep.subr.mxu0 0.0
  %1853 = vmatpush1.msra.mxu0 0.0
  %1854 = vmatprep.subr.mxu0 0.0
  %1855 = vmatpush1.msra.mxu0 0.0
  %1856 = vmatprep.subr.mxu0 0.0
  %1857 = vmatpush1.msra.mxu0 0.0
  %1858 = vmatprep.subr.mxu0 0.0
  %1859 = vmatpush1.msra.mxu0 0.0
  %1860 = vmatprep.subr.mxu0 0.0
  %1861 = vmatpush1.msra.mxu0 0.0
  %1862 = vmatprep.subr.mxu0 0.0
  %1863 = vmatpush1.msra.mxu0 0.0
  %1864 = vmatprep.subr.mxu0 0.0
  %1865 = vmatpush1.msra.mxu0 0.0
  %1866 = vmatprep.mubr.f32.mxu0 0.0
  %1867 = vmatmul.mubr.f32.gmra.mrb[0].mxu0 %v1800
  %v1868 = vpop.f32.mrb[0].mxu0
  %v1869 = vadd.f32 %v1798, %v1868
  %v1870 = vpop.f32.mrb[0].mxu0
  %1871 = vdwg.mxu0
  %v1872 = vadd.f32 %v1869, %v341
  %v1873 = vmax.f32 %v1872, 0.0
  %v1874 = vtanh.pop %v1873
  %1875 = vrot.lane.b32.xlu0 %v711, 50
  %v1876 = vpop.permute.xlu0 %1875
  %v1878 = vsel %vm377, %v1874, %v1876
  %v1879 = vmul.f32 %v1334, %v1066
  %v1880 = vmul.f32 %v1334, %v1070
  %v1881 = vsel %vm1075, %v1876, 0
  %1883 = vmatprep.subr.mxu0 %v213
  %1884 = vmatpush1.msra.mxu0 %v212
  %1885 = vmatprep.subr.mxu0 %v215
  %1886 = vmatpush1.msra.mxu0 %v214
  %1887 = vmatprep.subr.mxu0 %v217
  %1888 = vmatpush1.msra.mxu0 %v216
  %1889 = vmatprep.subr.mxu0 %v219
  %1890 = vmatpush1.msra.mxu0 %v218
  %1891 = vmatprep.subr.mxu0 %v221
  %1892 = vmatpush1.msra.mxu0 %v220
  %1893 = vmatprep.subr.mxu0 %v223
  %1894 = vmatpush1.msra.mxu0 %v222
  %1895 = vmatprep.subr.mxu0 %v225
  %1896 = vmatpush1.msra.mxu0 %v224
  %1897 = vmatprep.subr.mxu0 %v227
  %1898 = vmatpush1.msra.mxu0 %v226
  %1899 = vmatprep.subr.mxu0 %v229
  %1900 = vmatpush1.msra.mxu0 %v228
  %1901 = vmatprep.subr.mxu0 %v231
  %1902 = vmatpush1.msra.mxu0 %v230
  %1903 = vmatprep.subr.mxu0 %v233
  %1904 = vmatpush1.msra.mxu0 %v232
  %1905 = vmatprep.subr.mxu0 %v235
  %1906 = vmatpush1.msra.mxu0 %v234
  %1907 = vmatprep.subr.mxu0 %v237
  %1908 = vmatpush1.msra.mxu0 %v236
  %1909 = vmatprep.subr.mxu0 %v239
  %1910 = vmatpush1.msra.mxu0 %v238
  %1911 = vmatprep.subr.mxu0 %v241
  %1912 = vmatpush1.msra.mxu0 %v240
  %1913 = vmatprep.subr.mxu0 %v243
  %1914 = vmatpush1.msra.mxu0 %v242
  %1915 = vmatprep.subr.mxu0 %v245
  %1916 = vmatpush1.msra.mxu0 %v244
  %1917 = vmatprep.subr.mxu0 %v247
  %1918 = vmatpush1.msra.mxu0 %v246
  %1919 = vmatprep.subr.mxu0 %v1084
  %1920 = vmatpush1.msra.mxu0 %v1081
  %1921 = vmatprep.subr.mxu0 0.0
  %1922 = vmatpush1.msra.mxu0 0.0
  %1923 = vmatprep.subr.mxu0 0.0
  %1924 = vmatpush1.msra.mxu0 0.0
  %1925 = vmatprep.subr.mxu0 0.0
  %1926 = vmatpush1.msra.mxu0 0.0
  %1927 = vmatprep.subr.mxu0 0.0
  %1928 = vmatpush1.msra.mxu0 0.0
  %1929 = vmatprep.subr.mxu0 0.0
  %1930 = vmatpush1.msra.mxu0 0.0
  %1931 = vmatprep.subr.mxu0 0.0
  %1932 = vmatpush1.msra.mxu0 0.0
  %1933 = vmatprep.subr.mxu0 0.0
  %1934 = vmatpush1.msra.mxu0 0.0
  %1935 = vmatprep.subr.mxu0 0.0
  %1936 = vmatpush1.msra.mxu0 0.0
  %1937 = vmatprep.subr.mxu0 0.0
  %1938 = vmatpush1.msra.mxu0 0.0
  %1939 = vmatprep.subr.mxu0 0.0
  %1940 = vmatpush1.msra.mxu0 0.0
  %1941 = vmatprep.subr.mxu0 0.0
  %1942 = vmatpush1.msra.mxu0 0.0
  %1943 = vmatprep.subr.mxu0 0.0
  %1944 = vmatpush1.msra.mxu0 0.0
  %1945 = vmatprep.subr.mxu0 0.0
  %1946 = vmatpush1.msra.mxu0 0.0
  %1947 = vmatprep.mubr.f32.mxu0 %v1881
  %1948 = vmatmul.mubr.f32.gmra.mrb[0].mxu0 %v1878
  %v1949 = vpop.f32.mrb[0].mxu0
  %v1950 = vadd.f32 %v1879, %v1949
  %v1951 = vpop.f32.mrb[0].mxu0
  %v1952 = vadd.f32 %v1880, %v1951
  %1953 = vdwg.mxu0
  %1954 = vmatprep.subr.mxu0 %v252
  %1955 = vmatpush1.msra.mxu0 %v251
  %1956 = vmatprep.subr.mxu0 %v254
  %1957 = vmatpush1.msra.mxu0 %v253
  %1958 = vmatprep.subr.mxu0 %v256
  %1959 = vmatpush1.msra.mxu0 %v255
  %1960 = vmatprep.subr.mxu0 %v258
  %1961 = vmatpush1.msra.mxu0 %v257
  %1962 = vmatprep.subr.mxu0 %v260
  %1963 = vmatpush1.msra.mxu0 %v259
  %1964 = vmatprep.subr.mxu0 %v262
  %1965 = vmatpush1.msra.mxu0 %v261
  %1966 = vmatprep.subr.mxu0 %v264
  %1967 = vmatpush1.msra.mxu0 %v263
  %1968 = vmatprep.subr.mxu0 %v266
  %1969 = vmatpush1.msra.mxu0 %v265
  %1970 = vmatprep.subr.mxu0 %v268
  %1971 = vmatpush1.msra.mxu0 %v267
  %1972 = vmatprep.subr.mxu0 %v270
  %1973 = vmatpush1.msra.mxu0 %v269
  %1974 = vmatprep.subr.mxu0 %v272
  %1975 = vmatpush1.msra.mxu0 %v271
  %1976 = vmatprep.subr.mxu0 %v274
  %1977 = vmatpush1.msra.mxu0 %v273
  %1978 = vmatprep.subr.mxu0 %v276
  %1979 = vmatpush1.msra.mxu0 %v275
  %1980 = vmatprep.subr.mxu0 %v278
  %1981 = vmatpush1.msra.mxu0 %v277
  %1982 = vmatprep.subr.mxu0 %v280
  %1983 = vmatpush1.msra.mxu0 %v279
  %1984 = vmatprep.subr.mxu0 %v282
  %1985 = vmatpush1.msra.mxu0 %v281
  %1986 = vmatprep.subr.mxu0 %v284
  %1987 = vmatpush1.msra.mxu0 %v283
  %1988 = vmatprep.subr.mxu0 %v286
  %1989 = vmatpush1.msra.mxu0 %v285
  %1990 = vmatprep.subr.mxu0 %v1164
  %1991 = vmatpush1.msra.mxu0 %v1161
  %1992 = vmatprep.subr.mxu0 0.0
  %1993 = vmatpush1.msra.mxu0 0.0
  %1994 = vmatprep.subr.mxu0 0.0
  %1995 = vmatpush1.msra.mxu0 0.0
  %1996 = vmatprep.subr.mxu0 0.0
  %1997 = vmatpush1.msra.mxu0 0.0
  %1998 = vmatprep.subr.mxu0 0.0
  %1999 = vmatpush1.msra.mxu0 0.0
  %2000 = vmatprep.subr.mxu0 0.0
  %2001 = vmatpush1.msra.mxu0 0.0
  %2002 = vmatprep.subr.mxu0 0.0
  %2003 = vmatpush1.msra.mxu0 0.0
  %2004 = vmatprep.subr.mxu0 0.0
  %2005 = vmatpush1.msra.mxu0 0.0
  %2006 = vmatprep.subr.mxu0 0.0
  %2007 = vmatpush1.msra.mxu0 0.0
  %2008 = vmatprep.subr.mxu0 0.0
  %2009 = vmatpush1.msra.mxu0 0.0
  %2010 = vmatprep.subr.mxu0 0.0
  %2011 = vmatpush1.msra.mxu0 0.0
  %2012 = vmatprep.subr.mxu0 0.0
  %2013 = vmatpush1.msra.mxu0 0.0
  %2014 = vmatprep.subr.mxu0 0.0
  %2015 = vmatpush1.msra.mxu0 0.0
  %2016 = vmatprep.subr.mxu0 0.0
  %2017 = vmatpush1.msra.mxu0 0.0
  %2018 = vmatprep.mubr.f32.mxu0 %v1246
  %2019 = vmatmul.mubr.f32.gmra.mrb[0].mxu0 %v1243
  %v2020 = vpop.f32.mrb[0].mxu0
  %v2021 = vadd.f32 0.0, %v2020
  %v2022 = vpop.f32.mrb[0].mxu0
  %v2023 = vadd.f32 0.0, %v2022
  %2024 = vdwg.mxu0
  %v2025 = vadd.f32 %v1950, %v2021
  %v2026 = vadd.f32 %v1952, %v2023
  %v2027 = vadd.f32 %v2025, %v348
  %v2028 = vadd.f32 %v2026, %v352
  %v2029 = vmax.f32 %v2027, 0.0
  %v2030 = vmax.f32 %v2028, 0.0
  %v2031 = vtanh.pop %v2029
  %v2032 = vtanh.pop %v2030
  %v2034 = vsel %vm1075, %v2032, 0
  %2036 = vmatprep.subr.mxu0 0.0
  %2037 = vmatpush1.msra.mxu0 %v289
  %2038 = vmatprep.subr.mxu0 0.0
  %2039 = vmatpush1.msra.mxu0 %v290
  %2040 = vmatprep.subr.mxu0 0.0
  %2041 = vmatpush1.msra.mxu0 %v291
  %2042 = vmatprep.subr.mxu0 0.0
  %2043 = vmatpush1.msra.mxu0 %v292
  %2044 = vmatprep.subr.mxu0 0.0
  %2045 = vmatpush1.msra.mxu0 %v293
  %2046 = vmatprep.subr.mxu0 0.0
  %2047 = vmatpush1.msra.mxu0 %v294
  %2048 = vmatprep.subr.mxu0 0.0
  %2049 = vmatpush1.msra.mxu0 %v295
  %2050 = vmatprep.subr.mxu0 0.0
  %2051 = vmatpush1.msra.mxu0 %v296
  %2052 = vmatprep.subr.mxu0 0.0
  %2053 = vmatpush1.msra.mxu0 %v297
  %2054 = vmatprep.subr.mxu0 0.0
  %2055 = vmatpush1.msra.mxu0 %v298
  %2056 = vmatprep.subr.mxu0 0.0
  %2057 = vmatpush1.msra.mxu0 %v299
  %2058 = vmatprep.subr.mxu0 0.0
  %2059 = vmatpush1.msra.mxu0 %v300
  %2060 = vmatprep.subr.mxu0 0.0
  %2061 = vmatpush1.msra.mxu0 %v301
  %2062 = vmatprep.subr.mxu0 0.0
  %2063 = vmatpush1.msra.mxu0 %v302
  %2064 = vmatprep.subr.mxu0 0.0
  %2065 = vmatpush1.msra.mxu0 %v303
  %2066 = vmatprep.subr.mxu0 0.0
  %2067 = vmatpush1.msra.mxu0 %v304
  %2068 = vmatprep.subr.mxu0 0.0
  %2069 = vmatpush1.msra.mxu0 %v305
  %2070 = vmatprep.subr.mxu0 0.0
  %2071 = vmatpush1.msra.mxu0 %v306
  %2072 = vmatprep.subr.mxu0 0.0
  %2073 = vmatpush1.msra.mxu0 %v1249
  %2074 = vmatprep.subr.mxu0 0.0
  %2075 = vmatpush1.msra.mxu0 0.0
  %2076 = vmatprep.subr.mxu0 0.0
  %2077 = vmatpush1.msra.mxu0 0.0
  %2078 = vmatprep.subr.mxu0 0.0
  %2079 = vmatpush1.msra.mxu0 0.0
  %2080 = vmatprep.subr.mxu0 0.0
  %2081 = vmatpush1.msra.mxu0 0.0
  %2082 = vmatprep.subr.mxu0 0.0
  %2083 = vmatpush1.msra.mxu0 0.0
  %2084 = vmatprep.subr.mxu0 0.0
  %2085 = vmatpush1.msra.mxu0 0.0
  %2086 = vmatprep.subr.mxu0 0.0
  %2087 = vmatpush1.msra.mxu0 0.0
  %2088 = vmatprep.subr.mxu0 0.0
  %2089 = vmatpush1.msra.mxu0 0.0
  %2090 = vmatprep.subr.mxu0 0.0
  %2091 = vmatpush1.msra.mxu0 0.0
  %2092 = vmatprep.subr.mxu0 0.0
  %2093 = vmatpush1.msra.mxu0 0.0
  %2094 = vmatprep.subr.mxu0 0.0
  %2095 = vmatpush1.msra.mxu0 0.0
  %2096 = vmatprep.subr.mxu0 0.0
  %2097 = vmatpush1.msra.mxu0 0.0
  %2098 = vmatprep.subr.mxu0 0.0
  %2099 = vmatpush1.msra.mxu0 0.0
  %2100 = vmatprep.mubr.f32.mxu0 %v2034
  %2101 = vmatmul.mubr.f32.gmra.mrb[0].mxu0 %v2031
  %v2102 = vpop.f32.mrb[0].mxu0
  %v2103 = vadd.f32 %v360, %v2102
  %v2104 = vpop.f32.mrb[0].mxu0
  %2105 = vdwg.mxu0
  %s2106 = scalar_lea.vmem %s61, 8
  %2107 = vst.msk [vmem:[%s2106] sm:$0xff] %vm377, %v2103
  %s2108 = scalar_lea.vmem %s1, 16
  %v2109 = vld [vmem:[%s2108] sm:$0xff]
  %s2110 = scalar_lea.vmem %s3, 16
  %v2111 = vld [vmem:[%s2110] sm:$0xff]
  %2113 = vrot.lane.b32.xlu0 %v2103, 15
  %v2114 = vpop.permute.xlu0 %2113
  %v2116 = vsel %vm460, %v2109, %v2114
  %2118 = vset.pattern.permute.xlu0 0
  %2119 = vperm.xlu0 %2118, %v2111
  %v2120 = vpop.permute.xlu0 %2119
  %v2122 = vmul.f32 %v2120, %v471
  %v2124 = vsel %vm474, %v2116, 0
  %2126 = vmatprep.subr.mxu0 0.0
  %2127 = vmatpush1.msra.mxu0 %v126
  %2128 = vmatprep.subr.mxu0 0.0
  %2129 = vmatpush1.msra.mxu0 %v127
  %2130 = vmatprep.subr.mxu0 0.0
  %2131 = vmatpush1.msra.mxu0 %v128
  %2132 = vmatprep.subr.mxu0 0.0
  %2133 = vmatpush1.msra.mxu0 %v129
  %2134 = vmatprep.subr.mxu0 0.0
  %2135 = vmatpush1.msra.mxu0 %v130
  %2136 = vmatprep.subr.mxu0 0.0
  %2137 = vmatpush1.msra.mxu0 %v131
  %2138 = vmatprep.subr.mxu0 0.0
  %2139 = vmatpush1.msra.mxu0 %v132
  %2140 = vmatprep.subr.mxu0 0.0
  %2141 = vmatpush1.msra.mxu0 %v133
  %2142 = vmatprep.subr.mxu0 0.0
  %2143 = vmatpush1.msra.mxu0 %v480
  %2144 = vmatprep.subr.mxu0 0.0
  %2145 = vmatpush1.msra.mxu0 0.0
  %2146 = vmatprep.subr.mxu0 0.0
  %2147 = vmatpush1.msra.mxu0 0.0
  %2148 = vmatprep.subr.mxu0 0.0
  %2149 = vmatpush1.msra.mxu0 0.0
  %2150 = vmatprep.subr.mxu0 0.0
  %2151 = vmatpush1.msra.mxu0 0.0
  %2152 = vmatprep.subr.mxu0 0.0
  %2153 = vmatpush1.msra.mxu0 0.0
  %2154 = vmatprep.subr.mxu0 0.0
  %2155 = vmatpush1.msra.mxu0 0.0
  %2156 = vmatprep.subr.mxu0 0.0
  %2157 = vmatpush1.msra.mxu0 0.0
  %2158 = vmatprep.subr.mxu0 0.0
  %2159 = vmatpush1.msra.mxu0 0.0
  %2160 = vmatprep.subr.mxu0 0.0
  %2161 = vmatpush1.msra.mxu0 0.0
  %2162 = vmatprep.subr.mxu0 0.0
  %2163 = vmatpush1.msra.mxu0 0.0
  %2164 = vmatprep.subr.mxu0 0.0
  %2165 = vmatpush1.msra.mxu0 0.0
  %2166 = vmatprep.subr.mxu0 0.0
  %2167 = vmatpush1.msra.mxu0 0.0
  %2168 = vmatprep.subr.mxu0 0.0
  %2169 = vmatpush1.msra.mxu0 0.0
  %2170 = vmatprep.subr.mxu0 0.0
  %2171 = vmatpush1.msra.mxu0 0.0
  %2172 = vmatprep.subr.mxu0 0.0
  %2173 = vmatpush1.msra.mxu0 0.0
  %2174 = vmatprep.subr.mxu0 0.0
  %2175 = vmatpush1.msra.mxu0 0.0
  %2176 = vmatprep.subr.mxu0 0.0
  %2177 = vmatpush1.msra.mxu0 0.0
  %2178 = vmatprep.subr.mxu0 0.0
  %2179 = vmatpush1.msra.mxu0 0.0
  %2180 = vmatprep.subr.mxu0 0.0
  %2181 = vmatpush1.msra.mxu0 0.0
  %2182 = vmatprep.subr.mxu0 0.0
  %2183 = vmatpush1.msra.mxu0 0.0
  %2184 = vmatprep.subr.mxu0 0.0
  %2185 = vmatpush1.msra.mxu0 0.0
  %2186 = vmatprep.subr.mxu0 0.0
  %2187 = vmatpush1.msra.mxu0 0.0
  %2188 = vmatprep.subr.mxu0 0.0
  %2189 = vmatpush1.msra.mxu0 0.0
  %2190 = vmatprep.mubr.f32.mxu0 0.0
  %2191 = vmatmul.mubr.f32.gmra.mrb[0].mxu0 %v2124
  %v2192 = vpop.f32.mrb[0].mxu0
  %v2193 = vadd.f32 %v2122, %v2192
  %v2194 = vpop.f32.mrb[0].mxu0
  %2195 = vdwg.mxu0
  %2196 = vmatprep.subr.mxu0 0.0
  %2197 = vmatpush1.msra.mxu0 %v136
  %2198 = vmatprep.subr.mxu0 0.0
  %2199 = vmatpush1.msra.mxu0 %v137
  %2200 = vmatprep.subr.mxu0 0.0
  %2201 = vmatpush1.msra.mxu0 %v138
  %2202 = vmatprep.subr.mxu0 0.0
  %2203 = vmatpush1.msra.mxu0 %v139
  %2204 = vmatprep.subr.mxu0 0.0
  %2205 = vmatpush1.msra.mxu0 %v140
  %2206 = vmatprep.subr.mxu0 0.0
  %2207 = vmatpush1.msra.mxu0 %v141
  %2208 = vmatprep.subr.mxu0 0.0
  %2209 = vmatpush1.msra.mxu0 %v142
  %2210 = vmatprep.subr.mxu0 0.0
  %2211 = vmatpush1.msra.mxu0 %v143
  %2212 = vmatprep.subr.mxu0 0.0
  %2213 = vmatpush1.msra.mxu0 %v144
  %2214 = vmatprep.subr.mxu0 0.0
  %2215 = vmatpush1.msra.mxu0 %v145
  %2216 = vmatprep.subr.mxu0 0.0
  %2217 = vmatpush1.msra.mxu0 %v146
  %2218 = vmatprep.subr.mxu0 0.0
  %2219 = vmatpush1.msra.mxu0 %v147
  %2220 = vmatprep.subr.mxu0 0.0
  %2221 = vmatpush1.msra.mxu0 %v558
  %2222 = vmatprep.subr.mxu0 0.0
  %2223 = vmatpush1.msra.mxu0 0.0
  %2224 = vmatprep.subr.mxu0 0.0
  %2225 = vmatpush1.msra.mxu0 0.0
  %2226 = vmatprep.subr.mxu0 0.0
  %2227 = vmatpush1.msra.mxu0 0.0
  %2228 = vmatprep.subr.mxu0 0.0
  %2229 = vmatpush1.msra.mxu0 0.0
  %2230 = vmatprep.subr.mxu0 0.0
  %2231 = vmatpush1.msra.mxu0 0.0
  %2232 = vmatprep.subr.mxu0 0.0
  %2233 = vmatpush1.msra.mxu0 0.0
  %2234 = vmatprep.subr.mxu0 0.0
  %2235 = vmatpush1.msra.mxu0 0.0
  %2236 = vmatprep.subr.mxu0 0.0
  %2237 = vmatpush1.msra.mxu0 0.0
  %2238 = vmatprep.subr.mxu0 0.0
  %2239 = vmatpush1.msra.mxu0 0.0
  %2240 = vmatprep.subr.mxu0 0.0
  %2241 = vmatpush1.msra.mxu0 0.0
  %2242 = vmatprep.subr.mxu0 0.0
  %2243 = vmatpush1.msra.mxu0 0.0
  %2244 = vmatprep.subr.mxu0 0.0
  %2245 = vmatpush1.msra.mxu0 0.0
  %2246 = vmatprep.subr.mxu0 0.0
  %2247 = vmatpush1.msra.mxu0 0.0
  %2248 = vmatprep.subr.mxu0 0.0
  %2249 = vmatpush1.msra.mxu0 0.0
  %2250 = vmatprep.subr.mxu0 0.0
  %2251 = vmatpush1.msra.mxu0 0.0
  %2252 = vmatprep.subr.mxu0 0.0
  %2253 = vmatpush1.msra.mxu0 0.0
  %2254 = vmatprep.subr.mxu0 0.0
  %2255 = vmatpush1.msra.mxu0 0.0
  %2256 = vmatprep.subr.mxu0 0.0
  %2257 = vmatpush1.msra.mxu0 0.0
  %2258 = vmatprep.subr.mxu0 0.0
  %2259 = vmatpush1.msra.mxu0 0.0
  %2260 = vmatprep.mubr.f32.mxu0 0.0
  %2261 = vmatmul.mubr.f32.gmra.mrb[0].mxu0 %v1485
  %v2262 = vpop.f32.mrb[0].mxu0
  %v2263 = vadd.f32 0.0, %v2262
  %v2264 = vpop.f32.mrb[0].mxu0
  %2265 = vdwg.mxu0
  %v2266 = vadd.f32 %v2193, %v2263
  %v2267 = vadd.f32 %v2266, %v313
  %v2268 = vmax.f32 %v2267, 0.0
  %v2269 = vtanh.pop %v2268
  %v2271 = vsel %vm552, %v2269, 0
  %2273 = vmatprep.subr.mxu0 0.0
  %2274 = vmatpush1.msra.mxu0 %v149
  %2275 = vmatprep.subr.mxu0 0.0
  %2276 = vmatpush1.msra.mxu0 %v150
  %2277 = vmatprep.subr.mxu0 0.0
  %2278 = vmatpush1.msra.mxu0 %v151
  %2279 = vmatprep.subr.mxu0 0.0
  %2280 = vmatpush1.msra.mxu0 %v152
  %2281 = vmatprep.subr.mxu0 0.0
  %2282 = vmatpush1.msra.mxu0 %v153
  %2283 = vmatprep.subr.mxu0 0.0
  %2284 = vmatpush1.msra.mxu0 %v154
  %2285 = vmatprep.subr.mxu0 0.0
  %2286 = vmatpush1.msra.mxu0 %v155
  %2287 = vmatprep.subr.mxu0 0.0
  %2288 = vmatpush1.msra.mxu0 %v156
  %2289 = vmatprep.subr.mxu0 0.0
  %2290 = vmatpush1.msra.mxu0 %v157
  %2291 = vmatprep.subr.mxu0 0.0
  %2292 = vmatpush1.msra.mxu0 %v158
  %2293 = vmatprep.subr.mxu0 0.0
  %2294 = vmatpush1.msra.mxu0 %v159
  %2295 = vmatprep.subr.mxu0 0.0
  %2296 = vmatpush1.msra.mxu0 %v160
  %2297 = vmatprep.subr.mxu0 0.0
  %2298 = vmatpush1.msra.mxu0 %v638
  %2299 = vmatprep.subr.mxu0 0.0
  %2300 = vmatpush1.msra.mxu0 0.0
  %2301 = vmatprep.subr.mxu0 0.0
  %2302 = vmatpush1.msra.mxu0 0.0
  %2303 = vmatprep.subr.mxu0 0.0
  %2304 = vmatpush1.msra.mxu0 0.0
  %2305 = vmatprep.subr.mxu0 0.0
  %2306 = vmatpush1.msra.mxu0 0.0
  %2307 = vmatprep.subr.mxu0 0.0
  %2308 = vmatpush1.msra.mxu0 0.0
  %2309 = vmatprep.subr.mxu0 0.0
  %2310 = vmatpush1.msra.mxu0 0.0
  %2311 = vmatprep.subr.mxu0 0.0
  %2312 = vmatpush1.msra.mxu0 0.0
  %2313 = vmatprep.subr.mxu0 0.0
  %2314 = vmatpush1.msra.mxu0 0.0
  %2315 = vmatprep.subr.mxu0 0.0
  %2316 = vmatpush1.msra.mxu0 0.0
  %2317 = vmatprep.subr.mxu0 0.0
  %2318 = vmatpush1.msra.mxu0 0.0
  %2319 = vmatprep.subr.mxu0 0.0
  %2320 = vmatpush1.msra.mxu0 0.0
  %2321 = vmatprep.subr.mxu0 0.0
  %2322 = vmatpush1.msra.mxu0 0.0
  %2323 = vmatprep.subr.mxu0 0.0
  %2324 = vmatpush1.msra.mxu0 0.0
  %2325 = vmatprep.subr.mxu0 0.0
  %2326 = vmatpush1.msra.mxu0 0.0
  %2327 = vmatprep.subr.mxu0 0.0
  %2328 = vmatpush1.msra.mxu0 0.0
  %2329 = vmatprep.subr.mxu0 0.0
  %2330 = vmatpush1.msra.mxu0 0.0
  %2331 = vmatprep.subr.mxu0 0.0
  %2332 = vmatpush1.msra.mxu0 0.0
  %2333 = vmatprep.subr.mxu0 0.0
  %2334 = vmatpush1.msra.mxu0 0.0
  %2335 = vmatprep.subr.mxu0 0.0
  %2336 = vmatpush1.msra.mxu0 0.0
  %2337 = vmatprep.mubr.f32.mxu0 0.0
  %2338 = vmatmul.mubr.f32.gmra.mrb[0].mxu0 %v2271
  %v2339 = vpop.f32.mrb[0].mxu0
  %v2340 = vadd.f32 %v320, %v2339
  %v2341 = vpop.f32.mrb[0].mxu0
  %2342 = vdwg.mxu0
  %v2343 = vmax.f32 %v2340, 0.0
  %v2344 = vtanh.pop %v2343
  %v2345 = vmul.f32 %v2120, %v716
  %v2347 = vsel %vm552, %v2344, 0
  %2349 = vmatprep.subr.mxu0 0.0
  %2350 = vmatpush1.msra.mxu0 %v162
  %2351 = vmatprep.subr.mxu0 0.0
  %2352 = vmatpush1.msra.mxu0 %v163
  %2353 = vmatprep.subr.mxu0 0.0
  %2354 = vmatpush1.msra.mxu0 %v164
  %2355 = vmatprep.subr.mxu0 0.0
  %2356 = vmatpush1.msra.mxu0 %v165
  %2357 = vmatprep.subr.mxu0 0.0
  %2358 = vmatpush1.msra.mxu0 %v166
  %2359 = vmatprep.subr.mxu0 0.0
  %2360 = vmatpush1.msra.mxu0 %v167
  %2361 = vmatprep.subr.mxu0 0.0
  %2362 = vmatpush1.msra.mxu0 %v168
  %2363 = vmatprep.subr.mxu0 0.0
  %2364 = vmatpush1.msra.mxu0 %v169
  %2365 = vmatprep.subr.mxu0 0.0
  %2366 = vmatpush1.msra.mxu0 %v170
  %2367 = vmatprep.subr.mxu0 0.0
  %2368 = vmatpush1.msra.mxu0 %v171
  %2369 = vmatprep.subr.mxu0 0.0
  %2370 = vmatpush1.msra.mxu0 %v172
  %2371 = vmatprep.subr.mxu0 0.0
  %2372 = vmatpush1.msra.mxu0 %v173
  %2373 = vmatprep.subr.mxu0 0.0
  %2374 = vmatpush1.msra.mxu0 %v723
  %2375 = vmatprep.subr.mxu0 0.0
  %2376 = vmatpush1.msra.mxu0 0.0
  %2377 = vmatprep.subr.mxu0 0.0
  %2378 = vmatpush1.msra.mxu0 0.0
  %2379 = vmatprep.subr.mxu0 0.0
  %2380 = vmatpush1.msra.mxu0 0.0
  %2381 = vmatprep.subr.mxu0 0.0
  %2382 = vmatpush1.msra.mxu0 0.0
  %2383 = vmatprep.subr.mxu0 0.0
  %2384 = vmatpush1.msra.mxu0 0.0
  %2385 = vmatprep.subr.mxu0 0.0
  %2386 = vmatpush1.msra.mxu0 0.0
  %2387 = vmatprep.subr.mxu0 0.0
  %2388 = vmatpush1.msra.mxu0 0.0
  %2389 = vmatprep.subr.mxu0 0.0
  %2390 = vmatpush1.msra.mxu0 0.0
  %2391 = vmatprep.subr.mxu0 0.0
  %2392 = vmatpush1.msra.mxu0 0.0
  %2393 = vmatprep.subr.mxu0 0.0
  %2394 = vmatpush1.msra.mxu0 0.0
  %2395 = vmatprep.subr.mxu0 0.0
  %2396 = vmatpush1.msra.mxu0 0.0
  %2397 = vmatprep.subr.mxu0 0.0
  %2398 = vmatpush1.msra.mxu0 0.0
  %2399 = vmatprep.subr.mxu0 0.0
  %2400 = vmatpush1.msra.mxu0 0.0
  %2401 = vmatprep.subr.mxu0 0.0
  %2402 = vmatpush1.msra.mxu0 0.0
  %2403 = vmatprep.subr.mxu0 0.0
  %2404 = vmatpush1.msra.mxu0 0.0
  %2405 = vmatprep.subr.mxu0 0.0
  %2406 = vmatpush1.msra.mxu0 0.0
  %2407 = vmatprep.subr.mxu0 0.0
  %2408 = vmatpush1.msra.mxu0 0.0
  %2409 = vmatprep.subr.mxu0 0.0
  %2410 = vmatpush1.msra.mxu0 0.0
  %2411 = vmatprep.subr.mxu0 0.0
  %2412 = vmatpush1.msra.mxu0 0.0
  %2413 = vmatprep.mubr.f32.mxu0 0.0
  %2414 = vmatmul.mubr.f32.gmra.mrb[0].mxu0 %v2347
  %v2415 = vpop.f32.mrb[0].mxu0
  %v2416 = vadd.f32 %v2345, %v2415
  %v2417 = vpop.f32.mrb[0].mxu0
  %2418 = vdwg.mxu0
  %v2419 = vadd.f32 %v2416, %v452
  %v2420 = vmax.f32 %v2419, 0.0
  %v2421 = vtanh.pop %v2420
  %v2422 = vmul.f32 %v2120, %v802
  %v2424 = vsel %vm377, %v2421, 0
  %2426 = vmatprep.subr.mxu0 0.0
  %2427 = vmatpush1.msra.mxu0 %v176
  %2428 = vmatprep.subr.mxu0 0.0
  %2429 = vmatpush1.msra.mxu0 %v177
  %2430 = vmatprep.subr.mxu0 0.0
  %2431 = vmatpush1.msra.mxu0 %v178
  %2432 = vmatprep.subr.mxu0 0.0
  %2433 = vmatpush1.msra.mxu0 %v179
  %2434 = vmatprep.subr.mxu0 0.0
  %2435 = vmatpush1.msra.mxu0 %v180
  %2436 = vmatprep.subr.mxu0 0.0
  %2437 = vmatpush1.msra.mxu0 %v181
  %2438 = vmatprep.subr.mxu0 0.0
  %2439 = vmatpush1.msra.mxu0 %v809
  %2440 = vmatprep.subr.mxu0 0.0
  %2441 = vmatpush1.msra.mxu0 0.0
  %2442 = vmatprep.subr.mxu0 0.0
  %2443 = vmatpush1.msra.mxu0 0.0
  %2444 = vmatprep.subr.mxu0 0.0
  %2445 = vmatpush1.msra.mxu0 0.0
  %2446 = vmatprep.subr.mxu0 0.0
  %2447 = vmatpush1.msra.mxu0 0.0
  %2448 = vmatprep.subr.mxu0 0.0
  %2449 = vmatpush1.msra.mxu0 0.0
  %2450 = vmatprep.subr.mxu0 0.0
  %2451 = vmatpush1.msra.mxu0 0.0
  %2452 = vmatprep.subr.mxu0 0.0
  %2453 = vmatpush1.msra.mxu0 0.0
  %2454 = vmatprep.subr.mxu0 0.0
  %2455 = vmatpush1.msra.mxu0 0.0
  %2456 = vmatprep.subr.mxu0 0.0
  %2457 = vmatpush1.msra.mxu0 0.0
  %2458 = vmatprep.subr.mxu0 0.0
  %2459 = vmatpush1.msra.mxu0 0.0
  %2460 = vmatprep.subr.mxu0 0.0
  %2461 = vmatpush1.msra.mxu0 0.0
  %2462 = vmatprep.subr.mxu0 0.0
  %2463 = vmatpush1.msra.mxu0 0.0
  %2464 = vmatprep.subr.mxu0 0.0
  %2465 = vmatpush1.msra.mxu0 0.0
  %2466 = vmatprep.subr.mxu0 0.0
  %2467 = vmatpush1.msra.mxu0 0.0
  %2468 = vmatprep.subr.mxu0 0.0
  %2469 = vmatpush1.msra.mxu0 0.0
  %2470 = vmatprep.subr.mxu0 0.0
  %2471 = vmatpush1.msra.mxu0 0.0
  %2472 = vmatprep.subr.mxu0 0.0
  %2473 = vmatpush1.msra.mxu0 0.0
  %2474 = vmatprep.subr.mxu0 0.0
  %2475 = vmatpush1.msra.mxu0 0.0
  %2476 = vmatprep.subr.mxu0 0.0
  %2477 = vmatpush1.msra.mxu0 0.0
  %2478 = vmatprep.subr.mxu0 0.0
  %2479 = vmatpush1.msra.mxu0 0.0
  %2480 = vmatprep.subr.mxu0 0.0
  %2481 = vmatpush1.msra.mxu0 0.0
  %2482 = vmatprep.subr.mxu0 0.0
  %2483 = vmatpush1.msra.mxu0 0.0
  %2484 = vmatprep.subr.mxu0 0.0
  %2485 = vmatpush1.msra.mxu0 0.0
  %2486 = vmatprep.subr.mxu0 0.0
  %2487 = vmatpush1.msra.mxu0 0.0
  %2488 = vmatprep.subr.mxu0 0.0
  %2489 = vmatpush1.msra.mxu0 0.0
  %2490 = vmatprep.mubr.f32.mxu0 0.0
  %2491 = vmatmul.mubr.f32.gmra.mrb[0].mxu0 %v2424
  %v2492 = vpop.f32.mrb[0].mxu0
  %v2493 = vadd.f32 %v2422, %v2492
  %v2494 = vpop.f32.mrb[0].mxu0
  %2495 = vdwg.mxu0
  %v2496 = vadd.f32 %v2493, %v327
  %v2497 = vmax.f32 %v2496, 0.0
  %v2498 = vtanh.pop %v2497
  %2499 = vrot.lane.b32.xlu0 %v2421, 50
  %v2500 = vpop.permute.xlu0 %2499
  %v2502 = vsel %vm377, %v2498, %v2500
  %v2503 = vmul.f32 %v2120, %v892
  %v2505 = vsel %vm552, %v2502, 0
  %2507 = vmatprep.subr.mxu0 0.0
  %2508 = vmatpush1.msra.mxu0 %v184
  %2509 = vmatprep.subr.mxu0 0.0
  %2510 = vmatpush1.msra.mxu0 %v185
  %2511 = vmatprep.subr.mxu0 0.0
  %2512 = vmatpush1.msra.mxu0 %v186
  %2513 = vmatprep.subr.mxu0 0.0
  %2514 = vmatpush1.msra.mxu0 %v187
  %2515 = vmatprep.subr.mxu0 0.0
  %2516 = vmatpush1.msra.mxu0 %v188
  %2517 = vmatprep.subr.mxu0 0.0
  %2518 = vmatpush1.msra.mxu0 %v189
  %2519 = vmatprep.subr.mxu0 0.0
  %2520 = vmatpush1.msra.mxu0 %v190
  %2521 = vmatprep.subr.mxu0 0.0
  %2522 = vmatpush1.msra.mxu0 %v191
  %2523 = vmatprep.subr.mxu0 0.0
  %2524 = vmatpush1.msra.mxu0 %v192
  %2525 = vmatprep.subr.mxu0 0.0
  %2526 = vmatpush1.msra.mxu0 %v193
  %2527 = vmatprep.subr.mxu0 0.0
  %2528 = vmatpush1.msra.mxu0 %v194
  %2529 = vmatprep.subr.mxu0 0.0
  %2530 = vmatpush1.msra.mxu0 %v195
  %2531 = vmatprep.subr.mxu0 0.0
  %2532 = vmatpush1.msra.mxu0 %v899
  %2533 = vmatprep.subr.mxu0 0.0
  %2534 = vmatpush1.msra.mxu0 0.0
  %2535 = vmatprep.subr.mxu0 0.0
  %2536 = vmatpush1.msra.mxu0 0.0
  %2537 = vmatprep.subr.mxu0 0.0
  %2538 = vmatpush1.msra.mxu0 0.0
  %2539 = vmatprep.subr.mxu0 0.0
  %2540 = vmatpush1.msra.mxu0 0.0
  %2541 = vmatprep.subr.mxu0 0.0
  %2542 = vmatpush1.msra.mxu0 0.0
  %2543 = vmatprep.subr.mxu0 0.0
  %2544 = vmatpush1.msra.mxu0 0.0
  %2545 = vmatprep.subr.mxu0 0.0
  %2546 = vmatpush1.msra.mxu0 0.0
  %2547 = vmatprep.subr.mxu0 0.0
  %2548 = vmatpush1.msra.mxu0 0.0
  %2549 = vmatprep.subr.mxu0 0.0
  %2550 = vmatpush1.msra.mxu0 0.0
  %2551 = vmatprep.subr.mxu0 0.0
  %2552 = vmatpush1.msra.mxu0 0.0
  %2553 = vmatprep.subr.mxu0 0.0
  %2554 = vmatpush1.msra.mxu0 0.0
  %2555 = vmatprep.subr.mxu0 0.0
  %2556 = vmatpush1.msra.mxu0 0.0
  %2557 = vmatprep.subr.mxu0 0.0
  %2558 = vmatpush1.msra.mxu0 0.0
  %2559 = vmatprep.subr.mxu0 0.0
  %2560 = vmatpush1.msra.mxu0 0.0
  %2561 = vmatprep.subr.mxu0 0.0
  %2562 = vmatpush1.msra.mxu0 0.0
  %2563 = vmatprep.subr.mxu0 0.0
  %2564 = vmatpush1.msra.mxu0 0.0
  %2565 = vmatprep.subr.mxu0 0.0
  %2566 = vmatpush1.msra.mxu0 0.0
  %2567 = vmatprep.subr.mxu0 0.0
  %2568 = vmatpush1.msra.mxu0 0.0
  %2569 = vmatprep.subr.mxu0 0.0
  %2570 = vmatpush1.msra.mxu0 0.0
  %2571 = vmatprep.mubr.f32.mxu0 0.0
  %2572 = vmatmul.mubr.f32.gmra.mrb[0].mxu0 %v2505
  %v2573 = vpop.f32.mrb[0].mxu0
  %v2574 = vadd.f32 %v2503, %v2573
  %v2575 = vpop.f32.mrb[0].mxu0
  %2576 = vdwg.mxu0
  %v2577 = vadd.f32 %v2574, %v334
  %v2578 = vmax.f32 %v2577, 0.0
  %v2579 = vtanh.pop %v2578
  %2580 = vrot.lane.b32.xlu0 %v2103, 50
  %v2581 = vpop.permute.xlu0 %2580
  %v2583 = vsel %vm377, %v2579, %v2581
  %v2584 = vmul.f32 %v2120, %v979
  %v2586 = vsel %vm552, %v2583, 0
  %2588 = vmatprep.subr.mxu0 0.0
  %2589 = vmatpush1.msra.mxu0 %v198
  %2590 = vmatprep.subr.mxu0 0.0
  %2591 = vmatpush1.msra.mxu0 %v199
  %2592 = vmatprep.subr.mxu0 0.0
  %2593 = vmatpush1.msra.mxu0 %v200
  %2594 = vmatprep.subr.mxu0 0.0
  %2595 = vmatpush1.msra.mxu0 %v201
  %2596 = vmatprep.subr.mxu0 0.0
  %2597 = vmatpush1.msra.mxu0 %v202
  %2598 = vmatprep.subr.mxu0 0.0
  %2599 = vmatpush1.msra.mxu0 %v203
  %2600 = vmatprep.subr.mxu0 0.0
  %2601 = vmatpush1.msra.mxu0 %v204
  %2602 = vmatprep.subr.mxu0 0.0
  %2603 = vmatpush1.msra.mxu0 %v205
  %2604 = vmatprep.subr.mxu0 0.0
  %2605 = vmatpush1.msra.mxu0 %v206
  %2606 = vmatprep.subr.mxu0 0.0
  %2607 = vmatpush1.msra.mxu0 %v207
  %2608 = vmatprep.subr.mxu0 0.0
  %2609 = vmatpush1.msra.mxu0 %v208
  %2610 = vmatprep.subr.mxu0 0.0
  %2611 = vmatpush1.msra.mxu0 %v209
  %2612 = vmatprep.subr.mxu0 0.0
  %2613 = vmatpush1.msra.mxu0 %v986
  %2614 = vmatprep.subr.mxu0 0.0
  %2615 = vmatpush1.msra.mxu0 0.0
  %2616 = vmatprep.subr.mxu0 0.0
  %2617 = vmatpush1.msra.mxu0 0.0
  %2618 = vmatprep.subr.mxu0 0.0
  %2619 = vmatpush1.msra.mxu0 0.0
  %2620 = vmatprep.subr.mxu0 0.0
  %2621 = vmatpush1.msra.mxu0 0.0
  %2622 = vmatprep.subr.mxu0 0.0
  %2623 = vmatpush1.msra.mxu0 0.0
  %2624 = vmatprep.subr.mxu0 0.0
  %2625 = vmatpush1.msra.mxu0 0.0
  %2626 = vmatprep.subr.mxu0 0.0
  %2627 = vmatpush1.msra.mxu0 0.0
  %2628 = vmatprep.subr.mxu0 0.0
  %2629 = vmatpush1.msra.mxu0 0.0
  %2630 = vmatprep.subr.mxu0 0.0
  %2631 = vmatpush1.msra.mxu0 0.0
  %2632 = vmatprep.subr.mxu0 0.0
  %2633 = vmatpush1.msra.mxu0 0.0
  %2634 = vmatprep.subr.mxu0 0.0
  %2635 = vmatpush1.msra.mxu0 0.0
  %2636 = vmatprep.subr.mxu0 0.0
  %2637 = vmatpush1.msra.mxu0 0.0
  %2638 = vmatprep.subr.mxu0 0.0
  %2639 = vmatpush1.msra.mxu0 0.0
  %2640 = vmatprep.subr.mxu0 0.0
  %2641 = vmatpush1.msra.mxu0 0.0
  %2642 = vmatprep.subr.mxu0 0.0
  %2643 = vmatpush1.msra.mxu0 0.0
  %2644 = vmatprep.subr.mxu0 0.0
  %2645 = vmatpush1.msra.mxu0 0.0
  %2646 = vmatprep.subr.mxu0 0.0
  %2647 = vmatpush1.msra.mxu0 0.0
  %2648 = vmatprep.subr.mxu0 0.0
  %2649 = vmatpush1.msra.mxu0 0.0
  %2650 = vmatprep.subr.mxu0 0.0
  %2651 = vmatpush1.msra.mxu0 0.0
  %2652 = vmatprep.mubr.f32.mxu0 0.0
  %2653 = vmatmul.mubr.f32.gmra.mrb[0].mxu0 %v2586
  %v2654 = vpop.f32.mrb[0].mxu0
  %v2655 = vadd.f32 %v2584, %v2654
  %v2656 = vpop.f32.mrb[0].mxu0
  %2657 = vdwg.mxu0
  %v2658 = vadd.f32 %v2655, %v341
  %v2659 = vmax.f32 %v2658, 0.0
  %v2660 = vtanh.pop %v2659
  %2661 = vrot.lane.b32.xlu0 %v1558, 50
  %v2662 = vpop.permute.xlu0 %2661
  %v2664 = vsel %vm377, %v2660, %v2662
  %v2665 = vmul.f32 %v2120, %v1066
  %v2666 = vmul.f32 %v2120, %v1070
  %v2667 = vsel %vm1075, %v2662, 0
  %2669 = vmatprep.subr.mxu0 %v213
  %2670 = vmatpush1.msra.mxu0 %v212
  %2671 = vmatprep.subr.mxu0 %v215
  %2672 = vmatpush1.msra.mxu0 %v214
  %2673 = vmatprep.subr.mxu0 %v217
  %2674 = vmatpush1.msra.mxu0 %v216
  %2675 = vmatprep.subr.mxu0 %v219
  %2676 = vmatpush1.msra.mxu0 %v218
  %2677 = vmatprep.subr.mxu0 %v221
  %2678 = vmatpush1.msra.mxu0 %v220
  %2679 = vmatprep.subr.mxu0 %v223
  %2680 = vmatpush1.msra.mxu0 %v222
  %2681 = vmatprep.subr.mxu0 %v225
  %2682 = vmatpush1.msra.mxu0 %v224
  %2683 = vmatprep.subr.mxu0 %v227
  %2684 = vmatpush1.msra.mxu0 %v226
  %2685 = vmatprep.subr.mxu0 %v229
  %2686 = vmatpush1.msra.mxu0 %v228
  %2687 = vmatprep.subr.mxu0 %v231
  %2688 = vmatpush1.msra.mxu0 %v230
  %2689 = vmatprep.subr.mxu0 %v233
  %2690 = vmatpush1.msra.mxu0 %v232
  %2691 = vmatprep.subr.mxu0 %v235
  %2692 = vmatpush1.msra.mxu0 %v234
  %2693 = vmatprep.subr.mxu0 %v237
  %2694 = vmatpush1.msra.mxu0 %v236
  %2695 = vmatprep.subr.mxu0 %v239
  %2696 = vmatpush1.msra.mxu0 %v238
  %2697 = vmatprep.subr.mxu0 %v241
  %2698 = vmatpush1.msra.mxu0 %v240
  %2699 = vmatprep.subr.mxu0 %v243
  %2700 = vmatpush1.msra.mxu0 %v242
  %2701 = vmatprep.subr.mxu0 %v245
  %2702 = vmatpush1.msra.mxu0 %v244
  %2703 = vmatprep.subr.mxu0 %v247
  %2704 = vmatpush1.msra.mxu0 %v246
  %2705 = vmatprep.subr.mxu0 %v1084
  %2706 = vmatpush1.msra.mxu0 %v1081
  %2707 = vmatprep.subr.mxu0 0.0
  %2708 = vmatpush1.msra.mxu0 0.0
  %2709 = vmatprep.subr.mxu0 0.0
  %2710 = vmatpush1.msra.mxu0 0.0
  %2711 = vmatprep.subr.mxu0 0.0
  %2712 = vmatpush1.msra.mxu0 0.0
  %2713 = vmatprep.subr.mxu0 0.0
  %2714 = vmatpush1.msra.mxu0 0.0
  %2715 = vmatprep.subr.mxu0 0.0
  %2716 = vmatpush1.msra.mxu0 0.0
  %2717 = vmatprep.subr.mxu0 0.0
  %2718 = vmatpush1.msra.mxu0 0.0
  %2719 = vmatprep.subr.mxu0 0.0
  %2720 = vmatpush1.msra.mxu0 0.0
  %2721 = vmatprep.subr.mxu0 0.0
  %2722 = vmatpush1.msra.mxu0 0.0
  %2723 = vmatprep.subr.mxu0 0.0
  %2724 = vmatpush1.msra.mxu0 0.0
  %2725 = vmatprep.subr.mxu0 0.0
  %2726 = vmatpush1.msra.mxu0 0.0
  %2727 = vmatprep.subr.mxu0 0.0
  %2728 = vmatpush1.msra.mxu0 0.0
  %2729 = vmatprep.subr.mxu0 0.0
  %2730 = vmatpush1.msra.mxu0 0.0
  %2731 = vmatprep.subr.mxu0 0.0
  %2732 = vmatpush1.msra.mxu0 0.0
  %2733 = vmatprep.mubr.f32.mxu0 %v2667
  %2734 = vmatmul.mubr.f32.gmra.mrb[0].mxu0 %v2664
  %v2735 = vpop.f32.mrb[0].mxu0
  %v2736 = vadd.f32 %v2665, %v2735
  %v2737 = vpop.f32.mrb[0].mxu0
  %v2738 = vadd.f32 %v2666, %v2737
  %2739 = vdwg.mxu0
  %2740 = vmatprep.subr.mxu0 %v252
  %2741 = vmatpush1.msra.mxu0 %v251
  %2742 = vmatprep.subr.mxu0 %v254
  %2743 = vmatpush1.msra.mxu0 %v253
  %2744 = vmatprep.subr.mxu0 %v256
  %2745 = vmatpush1.msra.mxu0 %v255
  %2746 = vmatprep.subr.mxu0 %v258
  %2747 = vmatpush1.msra.mxu0 %v257
  %2748 = vmatprep.subr.mxu0 %v260
  %2749 = vmatpush1.msra.mxu0 %v259
  %2750 = vmatprep.subr.mxu0 %v262
  %2751 = vmatpush1.msra.mxu0 %v261
  %2752 = vmatprep.subr.mxu0 %v264
  %2753 = vmatpush1.msra.mxu0 %v263
  %2754 = vmatprep.subr.mxu0 %v266
  %2755 = vmatpush1.msra.mxu0 %v265
  %2756 = vmatprep.subr.mxu0 %v268
  %2757 = vmatpush1.msra.mxu0 %v267
  %2758 = vmatprep.subr.mxu0 %v270
  %2759 = vmatpush1.msra.mxu0 %v269
  %2760 = vmatprep.subr.mxu0 %v272
  %2761 = vmatpush1.msra.mxu0 %v271
  %2762 = vmatprep.subr.mxu0 %v274
  %2763 = vmatpush1.msra.mxu0 %v273
  %2764 = vmatprep.subr.mxu0 %v276
  %2765 = vmatpush1.msra.mxu0 %v275
  %2766 = vmatprep.subr.mxu0 %v278
  %2767 = vmatpush1.msra.mxu0 %v277
  %2768 = vmatprep.subr.mxu0 %v280
  %2769 = vmatpush1.msra.mxu0 %v279
  %2770 = vmatprep.subr.mxu0 %v282
  %2771 = vmatpush1.msra.mxu0 %v281
  %2772 = vmatprep.subr.mxu0 %v284
  %2773 = vmatpush1.msra.mxu0 %v283
  %2774 = vmatprep.subr.mxu0 %v286
  %2775 = vmatpush1.msra.mxu0 %v285
  %2776 = vmatprep.subr.mxu0 %v1164
  %2777 = vmatpush1.msra.mxu0 %v1161
  %2778 = vmatprep.subr.mxu0 0.0
  %2779 = vmatpush1.msra.mxu0 0.0
  %2780 = vmatprep.subr.mxu0 0.0
  %2781 = vmatpush1.msra.mxu0 0.0
  %2782 = vmatprep.subr.mxu0 0.0
  %2783 = vmatpush1.msra.mxu0 0.0
  %2784 = vmatprep.subr.mxu0 0.0
  %2785 = vmatpush1.msra.mxu0 0.0
  %2786 = vmatprep.subr.mxu0 0.0
  %2787 = vmatpush1.msra.mxu0 0.0
  %2788 = vmatprep.subr.mxu0 0.0
  %2789 = vmatpush1.msra.mxu0 0.0
  %2790 = vmatprep.subr.mxu0 0.0
  %2791 = vmatpush1.msra.mxu0 0.0
  %2792 = vmatprep.subr.mxu0 0.0
  %2793 = vmatpush1.msra.mxu0 0.0
  %2794 = vmatprep.subr.mxu0 0.0
  %2795 = vmatpush1.msra.mxu0 0.0
  %2796 = vmatprep.subr.mxu0 0.0
  %2797 = vmatpush1.msra.mxu0 0.0
  %2798 = vmatprep.subr.mxu0 0.0
  %2799 = vmatpush1.msra.mxu0 0.0
  %2800 = vmatprep.subr.mxu0 0.0
  %2801 = vmatpush1.msra.mxu0 0.0
  %2802 = vmatprep.subr.mxu0 0.0
  %2803 = vmatpush1.msra.mxu0 0.0
  %2804 = vmatprep.mubr.f32.mxu0 %v2034
  %2805 = vmatmul.mubr.f32.gmra.mrb[0].mxu0 %v2031
  %v2806 = vpop.f32.mrb[0].mxu0
  %v2807 = vadd.f32 0.0, %v2806
  %v2808 = vpop.f32.mrb[0].mxu0
  %v2809 = vadd.f32 0.0, %v2808
  %2810 = vdwg.mxu0
  %v2811 = vadd.f32 %v2736, %v2807
  %v2812 = vadd.f32 %v2738, %v2809
  %v2813 = vadd.f32 %v2811, %v348
  %v2814 = vadd.f32 %v2812, %v352
  %v2815 = vmax.f32 %v2813, 0.0
  %v2816 = vmax.f32 %v2814, 0.0
  %v2817 = vtanh.pop %v2815
  %v2818 = vtanh.pop %v2816
  %v2820 = vsel %vm1075, %v2818, 0
  %2822 = vmatprep.subr.mxu0 0.0
  %2823 = vmatpush1.msra.mxu0 %v289
  %2824 = vmatprep.subr.mxu0 0.0
  %2825 = vmatpush1.msra.mxu0 %v290
  %2826 = vmatprep.subr.mxu0 0.0
  %2827 = vmatpush1.msra.mxu0 %v291
  %2828 = vmatprep.subr.mxu0 0.0
  %2829 = vmatpush1.msra.mxu0 %v292
  %2830 = vmatprep.subr.mxu0 0.0
  %2831 = vmatpush1.msra.mxu0 %v293
  %2832 = vmatprep.subr.mxu0 0.0
  %2833 = vmatpush1.msra.mxu0 %v294
  %2834 = vmatprep.subr.mxu0 0.0
  %2835 = vmatpush1.msra.mxu0 %v295
  %2836 = vmatprep.subr.mxu0 0.0
  %2837 = vmatpush1.msra.mxu0 %v296
  %2838 = vmatprep.subr.mxu0 0.0
  %2839 = vmatpush1.msra.mxu0 %v297
  %2840 = vmatprep.subr.mxu0 0.0
  %2841 = vmatpush1.msra.mxu0 %v298
  %2842 = vmatprep.subr.mxu0 0.0
  %2843 = vmatpush1.msra.mxu0 %v299
  %2844 = vmatprep.subr.mxu0 0.0
  %2845 = vmatpush1.msra.mxu0 %v300
  %2846 = vmatprep.subr.mxu0 0.0
  %2847 = vmatpush1.msra.mxu0 %v301
  %2848 = vmatprep.subr.mxu0 0.0
  %2849 = vmatpush1.msra.mxu0 %v302
  %2850 = vmatprep.subr.mxu0 0.0
  %2851 = vmatpush1.msra.mxu0 %v303
  %2852 = vmatprep.subr.mxu0 0.0
  %2853 = vmatpush1.msra.mxu0 %v304
  %2854 = vmatprep.subr.mxu0 0.0
  %2855 = vmatpush1.msra.mxu0 %v305
  %2856 = vmatprep.subr.mxu0 0.0
  %2857 = vmatpush1.msra.mxu0 %v306
  %2858 = vmatprep.subr.mxu0 0.0
  %2859 = vmatpush1.msra.mxu0 %v1249
  %2860 = vmatprep.subr.mxu0 0.0
  %2861 = vmatpush1.msra.mxu0 0.0
  %2862 = vmatprep.subr.mxu0 0.0
  %2863 = vmatpush1.msra.mxu0 0.0
  %2864 = vmatprep.subr.mxu0 0.0
  %2865 = vmatpush1.msra.mxu0 0.0
  %2866 = vmatprep.subr.mxu0 0.0
  %2867 = vmatpush1.msra.mxu0 0.0
  %2868 = vmatprep.subr.mxu0 0.0
  %2869 = vmatpush1.msra.mxu0 0.0
  %2870 = vmatprep.subr.mxu0 0.0
  %2871 = vmatpush1.msra.mxu0 0.0
  %2872 = vmatprep.subr.mxu0 0.0
  %2873 = vmatpush1.msra.mxu0 0.0
  %2874 = vmatprep.subr.mxu0 0.0
  %2875 = vmatpush1.msra.mxu0 0.0
  %2876 = vmatprep.subr.mxu0 0.0
  %2877 = vmatpush1.msra.mxu0 0.0
  %2878 = vmatprep.subr.mxu0 0.0
  %2879 = vmatpush1.msra.mxu0 0.0
  %2880 = vmatprep.subr.mxu0 0.0
  %2881 = vmatpush1.msra.mxu0 0.0
  %2882 = vmatprep.subr.mxu0 0.0
  %2883 = vmatpush1.msra.mxu0 0.0
  %2884 = vmatprep.subr.mxu0 0.0
  %2885 = vmatpush1.msra.mxu0 0.0
  %2886 = vmatprep.mubr.f32.mxu0 %v2820
  %2887 = vmatmul.mubr.f32.gmra.mrb[0].mxu0 %v2817
  %v2888 = vpop.f32.mrb[0].mxu0
  %v2889 = vadd.f32 %v360, %v2888
  %v2890 = vpop.f32.mrb[0].mxu0
  %2891 = vdwg.mxu0
  %s2892 = scalar_lea.vmem %s61, 16
  %2893 = vst.msk [vmem:[%s2892] sm:$0xff] %vm377, %v2889
  %s2894 = scalar_lea.vmem %s1, 24
  %v2895 = vld [vmem:[%s2894] sm:$0xff]
  %s2896 = scalar_lea.vmem %s3, 24
  %v2897 = vld [vmem:[%s2896] sm:$0xff]
  %2899 = vrot.lane.b32.xlu0 %v2889, 15
  %v2900 = vpop.permute.xlu0 %2899
  %v2902 = vsel %vm460, %v2895, %v2900
  %2904 = vset.pattern.permute.xlu0 0
  %2905 = vperm.xlu0 %2904, %v2897
  %v2906 = vpop.permute.xlu0 %2905
  %v2908 = vmul.f32 %v2906, %v471
  %v2910 = vsel %vm474, %v2902, 0
  %2912 = vmatprep.subr.mxu0 0.0
  %2913 = vmatpush1.msra.mxu0 %v126
  %2914 = vmatprep.subr.mxu0 0.0
  %2915 = vmatpush1.msra.mxu0 %v127
  %2916 = vmatprep.subr.mxu0 0.0
  %2917 = vmatpush1.msra.mxu0 %v128
  %2918 = vmatprep.subr.mxu0 0.0
  %2919 = vmatpush1.msra.mxu0 %v129
  %2920 = vmatprep.subr.mxu0 0.0
  %2921 = vmatpush1.msra.mxu0 %v130
  %2922 = vmatprep.subr.mxu0 0.0
  %2923 = vmatpush1.msra.mxu0 %v131
  %2924 = vmatprep.subr.mxu0 0.0
  %2925 = vmatpush1.msra.mxu0 %v132
  %2926 = vmatprep.subr.mxu0 0.0
  %2927 = vmatpush1.msra.mxu0 %v133
  %2928 = vmatprep.subr.mxu0 0.0
  %2929 = vmatpush1.msra.mxu0 %v480
  %2930 = vmatprep.subr.mxu0 0.0
  %2931 = vmatpush1.msra.mxu0 0.0
  %2932 = vmatprep.subr.mxu0 0.0
  %2933 = vmatpush1.msra.mxu0 0.0
  %2934 = vmatprep.subr.mxu0 0.0
  %2935 = vmatpush1.msra.mxu0 0.0
  %2936 = vmatprep.subr.mxu0 0.0
  %2937 = vmatpush1.msra.mxu0 0.0
  %2938 = vmatprep.subr.mxu0 0.0
  %2939 = vmatpush1.msra.mxu0 0.0
  %2940 = vmatprep.subr.mxu0 0.0
  %2941 = vmatpush1.msra.mxu0 0.0
  %2942 = vmatprep.subr.mxu0 0.0
  %2943 = vmatpush1.msra.mxu0 0.0
  %2944 = vmatprep.subr.mxu0 0.0
  %2945 = vmatpush1.msra.mxu0 0.0
  %2946 = vmatprep.subr.mxu0 0.0
  %2947 = vmatpush1.msra.mxu0 0.0
  %2948 = vmatprep.subr.mxu0 0.0
  %2949 = vmatpush1.msra.mxu0 0.0
  %2950 = vmatprep.subr.mxu0 0.0
  %2951 = vmatpush1.msra.mxu0 0.0
  %2952 = vmatprep.subr.mxu0 0.0
  %2953 = vmatpush1.msra.mxu0 0.0
  %2954 = vmatprep.subr.mxu0 0.0
  %2955 = vmatpush1.msra.mxu0 0.0
  %2956 = vmatprep.subr.mxu0 0.0
  %2957 = vmatpush1.msra.mxu0 0.0
  %2958 = vmatprep.subr.mxu0 0.0
  %2959 = vmatpush1.msra.mxu0 0.0
  %2960 = vmatprep.subr.mxu0 0.0
  %2961 = vmatpush1.msra.mxu0 0.0
  %2962 = vmatprep.subr.mxu0 0.0
  %2963 = vmatpush1.msra.mxu0 0.0
  %2964 = vmatprep.subr.mxu0 0.0
  %2965 = vmatpush1.msra.mxu0 0.0
  %2966 = vmatprep.subr.mxu0 0.0
  %2967 = vmatpush1.msra.mxu0 0.0
  %2968 = vmatprep.subr.mxu0 0.0
  %2969 = vmatpush1.msra.mxu0 0.0
  %2970 = vmatprep.subr.mxu0 0.0
  %2971 = vmatpush1.msra.mxu0 0.0
  %2972 = vmatprep.subr.mxu0 0.0
  %2973 = vmatpush1.msra.mxu0 0.0
  %2974 = vmatprep.subr.mxu0 0.0
  %2975 = vmatpush1.msra.mxu0 0.0
  %2976 = vmatprep.mubr.f32.mxu0 0.0
  %2977 = vmatmul.mubr.f32.gmra.mrb[0].mxu0 %v2910
  %v2978 = vpop.f32.mrb[0].mxu0
  %v2979 = vadd.f32 %v2908, %v2978
  %v2980 = vpop.f32.mrb[0].mxu0
  %2981 = vdwg.mxu0
  %2982 = vmatprep.subr.mxu0 0.0
  %2983 = vmatpush1.msra.mxu0 %v136
  %2984 = vmatprep.subr.mxu0 0.0
  %2985 = vmatpush1.msra.mxu0 %v137
  %2986 = vmatprep.subr.mxu0 0.0
  %2987 = vmatpush1.msra.mxu0 %v138
  %2988 = vmatprep.subr.mxu0 0.0
  %2989 = vmatpush1.msra.mxu0 %v139
  %2990 = vmatprep.subr.mxu0 0.0
  %2991 = vmatpush1.msra.mxu0 %v140
  %2992 = vmatprep.subr.mxu0 0.0
  %2993 = vmatpush1.msra.mxu0 %v141
  %2994 = vmatprep.subr.mxu0 0.0
  %2995 = vmatpush1.msra.mxu0 %v142
  %2996 = vmatprep.subr.mxu0 0.0
  %2997 = vmatpush1.msra.mxu0 %v143
  %2998 = vmatprep.subr.mxu0 0.0
  %2999 = vmatpush1.msra.mxu0 %v144
  %3000 = vmatprep.subr.mxu0 0.0
  %3001 = vmatpush1.msra.mxu0 %v145
  %3002 = vmatprep.subr.mxu0 0.0
  %3003 = vmatpush1.msra.mxu0 %v146
  %3004 = vmatprep.subr.mxu0 0.0
  %3005 = vmatpush1.msra.mxu0 %v147
  %3006 = vmatprep.subr.mxu0 0.0
  %3007 = vmatpush1.msra.mxu0 %v558
  %3008 = vmatprep.subr.mxu0 0.0
  %3009 = vmatpush1.msra.mxu0 0.0
  %3010 = vmatprep.subr.mxu0 0.0
  %3011 = vmatpush1.msra.mxu0 0.0
  %3012 = vmatprep.subr.mxu0 0.0
  %3013 = vmatpush1.msra.mxu0 0.0
  %3014 = vmatprep.subr.mxu0 0.0
  %3015 = vmatpush1.msra.mxu0 0.0
  %3016 = vmatprep.subr.mxu0 0.0
  %3017 = vmatpush1.msra.mxu0 0.0
  %3018 = vmatprep.subr.mxu0 0.0
  %3019 = vmatpush1.msra.mxu0 0.0
  %3020 = vmatprep.subr.mxu0 0.0
  %3021 = vmatpush1.msra.mxu0 0.0
  %3022 = vmatprep.subr.mxu0 0.0
  %3023 = vmatpush1.msra.mxu0 0.0
  %3024 = vmatprep.subr.mxu0 0.0
  %3025 = vmatpush1.msra.mxu0 0.0
  %3026 = vmatprep.subr.mxu0 0.0
  %3027 = vmatpush1.msra.mxu0 0.0
  %3028 = vmatprep.subr.mxu0 0.0
  %3029 = vmatpush1.msra.mxu0 0.0
  %3030 = vmatprep.subr.mxu0 0.0
  %3031 = vmatpush1.msra.mxu0 0.0
  %3032 = vmatprep.subr.mxu0 0.0
  %3033 = vmatpush1.msra.mxu0 0.0
  %3034 = vmatprep.subr.mxu0 0.0
  %3035 = vmatpush1.msra.mxu0 0.0
  %3036 = vmatprep.subr.mxu0 0.0
  %3037 = vmatpush1.msra.mxu0 0.0
  %3038 = vmatprep.subr.mxu0 0.0
  %3039 = vmatpush1.msra.mxu0 0.0
  %3040 = vmatprep.subr.mxu0 0.0
  %3041 = vmatpush1.msra.mxu0 0.0
  %3042 = vmatprep.subr.mxu0 0.0
  %3043 = vmatpush1.msra.mxu0 0.0
  %3044 = vmatprep.subr.mxu0 0.0
  %3045 = vmatpush1.msra.mxu0 0.0
  %3046 = vmatprep.mubr.f32.mxu0 0.0
  %3047 = vmatmul.mubr.f32.gmra.mrb[0].mxu0 %v2271
  %v3048 = vpop.f32.mrb[0].mxu0
  %v3049 = vadd.f32 0.0, %v3048
  %v3050 = vpop.f32.mrb[0].mxu0
  %3051 = vdwg.mxu0
  %v3052 = vadd.f32 %v2979, %v3049
  %v3053 = vadd.f32 %v3052, %v313
  %v3054 = vmax.f32 %v3053, 0.0
  %v3055 = vtanh.pop %v3054
  %v3057 = vsel %vm552, %v3055, 0
  %3059 = vmatprep.subr.mxu0 0.0
  %3060 = vmatpush1.msra.mxu0 %v149
  %3061 = vmatprep.subr.mxu0 0.0
  %3062 = vmatpush1.msra.mxu0 %v150
  %3063 = vmatprep.subr.mxu0 0.0
  %3064 = vmatpush1.msra.mxu0 %v151
  %3065 = vmatprep.subr.mxu0 0.0
  %3066 = vmatpush1.msra.mxu0 %v152
  %3067 = vmatprep.subr.mxu0 0.0
  %3068 = vmatpush1.msra.mxu0 %v153
  %3069 = vmatprep.subr.mxu0 0.0
  %3070 = vmatpush1.msra.mxu0 %v154
  %3071 = vmatprep.subr.mxu0 0.0
  %3072 = vmatpush1.msra.mxu0 %v155
  %3073 = vmatprep.subr.mxu0 0.0
  %3074 = vmatpush1.msra.mxu0 %v156
  %3075 = vmatprep.subr.mxu0 0.0
  %3076 = vmatpush1.msra.mxu0 %v157
  %3077 = vmatprep.subr.mxu0 0.0
  %3078 = vmatpush1.msra.mxu0 %v158
  %3079 = vmatprep.subr.mxu0 0.0
  %3080 = vmatpush1.msra.mxu0 %v159
  %3081 = vmatprep.subr.mxu0 0.0
  %3082 = vmatpush1.msra.mxu0 %v160
  %3083 = vmatprep.subr.mxu0 0.0
  %3084 = vmatpush1.msra.mxu0 %v638
  %3085 = vmatprep.subr.mxu0 0.0
  %3086 = vmatpush1.msra.mxu0 0.0
  %3087 = vmatprep.subr.mxu0 0.0
  %3088 = vmatpush1.msra.mxu0 0.0
  %3089 = vmatprep.subr.mxu0 0.0
  %3090 = vmatpush1.msra.mxu0 0.0
  %3091 = vmatprep.subr.mxu0 0.0
  %3092 = vmatpush1.msra.mxu0 0.0
  %3093 = vmatprep.subr.mxu0 0.0
  %3094 = vmatpush1.msra.mxu0 0.0
  %3095 = vmatprep.subr.mxu0 0.0
  %3096 = vmatpush1.msra.mxu0 0.0
  %3097 = vmatprep.subr.mxu0 0.0
  %3098 = vmatpush1.msra.mxu0 0.0
  %3099 = vmatprep.subr.mxu0 0.0
  %3100 = vmatpush1.msra.mxu0 0.0
  %3101 = vmatprep.subr.mxu0 0.0
  %3102 = vmatpush1.msra.mxu0 0.0
  %3103 = vmatprep.subr.mxu0 0.0
  %3104 = vmatpush1.msra.mxu0 0.0
  %3105 = vmatprep.subr.mxu0 0.0
  %3106 = vmatpush1.msra.mxu0 0.0
  %3107 = vmatprep.subr.mxu0 0.0
  %3108 = vmatpush1.msra.mxu0 0.0
  %3109 = vmatprep.subr.mxu0 0.0
  %3110 = vmatpush1.msra.mxu0 0.0
  %3111 = vmatprep.subr.mxu0 0.0
  %3112 = vmatpush1.msra.mxu0 0.0
  %3113 = vmatprep.subr.mxu0 0.0
  %3114 = vmatpush1.msra.mxu0 0.0
  %3115 = vmatprep.subr.mxu0 0.0
  %3116 = vmatpush1.msra.mxu0 0.0
  %3117 = vmatprep.subr.mxu0 0.0
  %3118 = vmatpush1.msra.mxu0 0.0
  %3119 = vmatprep.subr.mxu0 0.0
  %3120 = vmatpush1.msra.mxu0 0.0
  %3121 = vmatprep.subr.mxu0 0.0
  %3122 = vmatpush1.msra.mxu0 0.0
  %3123 = vmatprep.mubr.f32.mxu0 0.0
  %3124 = vmatmul.mubr.f32.gmra.mrb[0].mxu0 %v3057
  %v3125 = vpop.f32.mrb[0].mxu0
  %v3126 = vadd.f32 %v320, %v3125
  %v3127 = vpop.f32.mrb[0].mxu0
  %3128 = vdwg.mxu0
  %v3129 = vmax.f32 %v3126, 0.0
  %v3130 = vtanh.pop %v3129
  %v3131 = vmul.f32 %v2906, %v716
  %v3133 = vsel %vm552, %v3130, 0
  %3135 = vmatprep.subr.mxu0 0.0
  %3136 = vmatpush1.msra.mxu0 %v162
  %3137 = vmatprep.subr.mxu0 0.0
  %3138 = vmatpush1.msra.mxu0 %v163
  %3139 = vmatprep.subr.mxu0 0.0
  %3140 = vmatpush1.msra.mxu0 %v164
  %3141 = vmatprep.subr.mxu0 0.0
  %3142 = vmatpush1.msra.mxu0 %v165
  %3143 = vmatprep.subr.mxu0 0.0
  %3144 = vmatpush1.msra.mxu0 %v166
  %3145 = vmatprep.subr.mxu0 0.0
  %3146 = vmatpush1.msra.mxu0 %v167
  %3147 = vmatprep.subr.mxu0 0.0
  %3148 = vmatpush1.msra.mxu0 %v168
  %3149 = vmatprep.subr.mxu0 0.0
  %3150 = vmatpush1.msra.mxu0 %v169
  %3151 = vmatprep.subr.mxu0 0.0
  %3152 = vmatpush1.msra.mxu0 %v170
  %3153 = vmatprep.subr.mxu0 0.0
  %3154 = vmatpush1.msra.mxu0 %v171
  %3155 = vmatprep.subr.mxu0 0.0
  %3156 = vmatpush1.msra.mxu0 %v172
  %3157 = vmatprep.subr.mxu0 0.0
  %3158 = vmatpush1.msra.mxu0 %v173
  %3159 = vmatprep.subr.mxu0 0.0
  %3160 = vmatpush1.msra.mxu0 %v723
  %3161 = vmatprep.subr.mxu0 0.0
  %3162 = vmatpush1.msra.mxu0 0.0
  %3163 = vmatprep.subr.mxu0 0.0
  %3164 = vmatpush1.msra.mxu0 0.0
  %3165 = vmatprep.subr.mxu0 0.0
  %3166 = vmatpush1.msra.mxu0 0.0
  %3167 = vmatprep.subr.mxu0 0.0
  %3168 = vmatpush1.msra.mxu0 0.0
  %3169 = vmatprep.subr.mxu0 0.0
  %3170 = vmatpush1.msra.mxu0 0.0
  %3171 = vmatprep.subr.mxu0 0.0
  %3172 = vmatpush1.msra.mxu0 0.0
  %3173 = vmatprep.subr.mxu0 0.0
  %3174 = vmatpush1.msra.mxu0 0.0
  %3175 = vmatprep.subr.mxu0 0.0
  %3176 = vmatpush1.msra.mxu0 0.0
  %3177 = vmatprep.subr.mxu0 0.0
  %3178 = vmatpush1.msra.mxu0 0.0
  %3179 = vmatprep.subr.mxu0 0.0
  %3180 = vmatpush1.msra.mxu0 0.0
  %3181 = vmatprep.subr.mxu0 0.0
  %3182 = vmatpush1.msra.mxu0 0.0
  %3183 = vmatprep.subr.mxu0 0.0
  %3184 = vmatpush1.msra.mxu0 0.0
  %3185 = vmatprep.subr.mxu0 0.0
  %3186 = vmatpush1.msra.mxu0 0.0
  %3187 = vmatprep.subr.mxu0 0.0
  %3188 = vmatpush1.msra.mxu0 0.0
  %3189 = vmatprep.subr.mxu0 0.0
  %3190 = vmatpush1.msra.mxu0 0.0
  %3191 = vmatprep.subr.mxu0 0.0
  %3192 = vmatpush1.msra.mxu0 0.0
  %3193 = vmatprep.subr.mxu0 0.0
  %3194 = vmatpush1.msra.mxu0 0.0
  %3195 = vmatprep.subr.mxu0 0.0
  %3196 = vmatpush1.msra.mxu0 0.0
  %3197 = vmatprep.subr.mxu0 0.0
  %3198 = vmatpush1.msra.mxu0 0.0
  %3199 = vmatprep.mubr.f32.mxu0 0.0
  %3200 = vmatmul.mubr.f32.gmra.mrb[0].mxu0 %v3133
  %v3201 = vpop.f32.mrb[0].mxu0
  %v3202 = vadd.f32 %v3131, %v3201
  %v3203 = vpop.f32.mrb[0].mxu0
  %3204 = vdwg.mxu0
  %v3205 = vadd.f32 %v3202, %v452
  %v3206 = vmax.f32 %v3205, 0.0
  %v3207 = vtanh.pop %v3206
  %v3208 = vmul.f32 %v2906, %v802
  %v3210 = vsel %vm377, %v3207, 0
  %3212 = vmatprep.subr.mxu0 0.0
  %3213 = vmatpush1.msra.mxu0 %v176
  %3214 = vmatprep.subr.mxu0 0.0
  %3215 = vmatpush1.msra.mxu0 %v177
  %3216 = vmatprep.subr.mxu0 0.0
  %3217 = vmatpush1.msra.mxu0 %v178
  %3218 = vmatprep.subr.mxu0 0.0
  %3219 = vmatpush1.msra.mxu0 %v179
  %3220 = vmatprep.subr.mxu0 0.0
  %3221 = vmatpush1.msra.mxu0 %v180
  %3222 = vmatprep.subr.mxu0 0.0
  %3223 = vmatpush1.msra.mxu0 %v181
  %3224 = vmatprep.subr.mxu0 0.0
  %3225 = vmatpush1.msra.mxu0 %v809
  %3226 = vmatprep.subr.mxu0 0.0
  %3227 = vmatpush1.msra.mxu0 0.0
  %3228 = vmatprep.subr.mxu0 0.0
  %3229 = vmatpush1.msra.mxu0 0.0
  %3230 = vmatprep.subr.mxu0 0.0
  %3231 = vmatpush1.msra.mxu0 0.0
  %3232 = vmatprep.subr.mxu0 0.0
  %3233 = vmatpush1.msra.mxu0 0.0
  %3234 = vmatprep.subr.mxu0 0.0
  %3235 = vmatpush1.msra.mxu0 0.0
  %3236 = vmatprep.subr.mxu0 0.0
  %3237 = vmatpush1.msra.mxu0 0.0
  %3238 = vmatprep.subr.mxu0 0.0
  %3239 = vmatpush1.msra.mxu0 0.0
  %3240 = vmatprep.subr.mxu0 0.0
  %3241 = vmatpush1.msra.mxu0 0.0
  %3242 = vmatprep.subr.mxu0 0.0
  %3243 = vmatpush1.msra.mxu0 0.0
  %3244 = vmatprep.subr.mxu0 0.0
  %3245 = vmatpush1.msra.mxu0 0.0
  %3246 = vmatprep.subr.mxu0 0.0
  %3247 = vmatpush1.msra.mxu0 0.0
  %3248 = vmatprep.subr.mxu0 0.0
  %3249 = vmatpush1.msra.mxu0 0.0
  %3250 = vmatprep.subr.mxu0 0.0
  %3251 = vmatpush1.msra.mxu0 0.0
  %3252 = vmatprep.subr.mxu0 0.0
  %3253 = vmatpush1.msra.mxu0 0.0
  %3254 = vmatprep.subr.mxu0 0.0
  %3255 = vmatpush1.msra.mxu0 0.0
  %3256 = vmatprep.subr.mxu0 0.0
  %3257 = vmatpush1.msra.mxu0 0.0
  %3258 = vmatprep.subr.mxu0 0.0
  %3259 = vmatpush1.msra.mxu0 0.0
  %3260 = vmatprep.subr.mxu0 0.0
  %3261 = vmatpush1.msra.mxu0 0.0
  %3262 = vmatprep.subr.mxu0 0.0
  %3263 = vmatpush1.msra.mxu0 0.0
  %3264 = vmatprep.subr.mxu0 0.0
  %3265 = vmatpush1.msra.mxu0 0.0
  %3266 = vmatprep.subr.mxu0 0.0
  %3267 = vmatpush1.msra.mxu0 0.0
  %3268 = vmatprep.subr.mxu0 0.0
  %3269 = vmatpush1.msra.mxu0 0.0
  %3270 = vmatprep.subr.mxu0 0.0
  %3271 = vmatpush1.msra.mxu0 0.0
  %3272 = vmatprep.subr.mxu0 0.0
  %3273 = vmatpush1.msra.mxu0 0.0
  %3274 = vmatprep.subr.mxu0 0.0
  %3275 = vmatpush1.msra.mxu0 0.0
  %3276 = vmatprep.mubr.f32.mxu0 0.0
  %3277 = vmatmul.mubr.f32.gmra.mrb[0].mxu0 %v3210
  %v3278 = vpop.f32.mrb[0].mxu0
  %v3279 = vadd.f32 %v3208, %v3278
  %v3280 = vpop.f32.mrb[0].mxu0
  %3281 = vdwg.mxu0
  %v3282 = vadd.f32 %v3279, %v327
  %v3283 = vmax.f32 %v3282, 0.0
  %v3284 = vtanh.pop %v3283
  %3285 = vrot.lane.b32.xlu0 %v3207, 50
  %v3286 = vpop.permute.xlu0 %3285
  %v3288 = vsel %vm377, %v3284, %v3286
  %v3289 = vmul.f32 %v2906, %v892
  %v3291 = vsel %vm552, %v3288, 0
  %3293 = vmatprep.subr.mxu0 0.0
  %3294 = vmatpush1.msra.mxu0 %v184
  %3295 = vmatprep.subr.mxu0 0.0
  %3296 = vmatpush1.msra.mxu0 %v185
  %3297 = vmatprep.subr.mxu0 0.0
  %3298 = vmatpush1.msra.mxu0 %v186
  %3299 = vmatprep.subr.mxu0 0.0
  %3300 = vmatpush1.msra.mxu0 %v187
  %3301 = vmatprep.subr.mxu0 0.0
  %3302 = vmatpush1.msra.mxu0 %v188
  %3303 = vmatprep.subr.mxu0 0.0
  %3304 = vmatpush1.msra.mxu0 %v189
  %3305 = vmatprep.subr.mxu0 0.0
  %3306 = vmatpush1.msra.mxu0 %v190
  %3307 = vmatprep.subr.mxu0 0.0
  %3308 = vmatpush1.msra.mxu0 %v191
  %3309 = vmatprep.subr.mxu0 0.0
  %3310 = vmatpush1.msra.mxu0 %v192
  %3311 = vmatprep.subr.mxu0 0.0
  %3312 = vmatpush1.msra.mxu0 %v193
  %3313 = vmatprep.subr.mxu0 0.0
  %3314 = vmatpush1.msra.mxu0 %v194
  %3315 = vmatprep.subr.mxu0 0.0
  %3316 = vmatpush1.msra.mxu0 %v195
  %3317 = vmatprep.subr.mxu0 0.0
  %3318 = vmatpush1.msra.mxu0 %v899
  %3319 = vmatprep.subr.mxu0 0.0
  %3320 = vmatpush1.msra.mxu0 0.0
  %3321 = vmatprep.subr.mxu0 0.0
  %3322 = vmatpush1.msra.mxu0 0.0
  %3323 = vmatprep.subr.mxu0 0.0
  %3324 = vmatpush1.msra.mxu0 0.0
  %3325 = vmatprep.subr.mxu0 0.0
  %3326 = vmatpush1.msra.mxu0 0.0
  %3327 = vmatprep.subr.mxu0 0.0
  %3328 = vmatpush1.msra.mxu0 0.0
  %3329 = vmatprep.subr.mxu0 0.0
  %3330 = vmatpush1.msra.mxu0 0.0
  %3331 = vmatprep.subr.mxu0 0.0
  %3332 = vmatpush1.msra.mxu0 0.0
  %3333 = vmatprep.subr.mxu0 0.0
  %3334 = vmatpush1.msra.mxu0 0.0
  %3335 = vmatprep.subr.mxu0 0.0
  %3336 = vmatpush1.msra.mxu0 0.0
  %3337 = vmatprep.subr.mxu0 0.0
  %3338 = vmatpush1.msra.mxu0 0.0
  %3339 = vmatprep.subr.mxu0 0.0
  %3340 = vmatpush1.msra.mxu0 0.0
  %3341 = vmatprep.subr.mxu0 0.0
  %3342 = vmatpush1.msra.mxu0 0.0
  %3343 = vmatprep.subr.mxu0 0.0
  %3344 = vmatpush1.msra.mxu0 0.0
  %3345 = vmatprep.subr.mxu0 0.0
  %3346 = vmatpush1.msra.mxu0 0.0
  %3347 = vmatprep.subr.mxu0 0.0
  %3348 = vmatpush1.msra.mxu0 0.0
  %3349 = vmatprep.subr.mxu0 0.0
  %3350 = vmatpush1.msra.mxu0 0.0
  %3351 = vmatprep.subr.mxu0 0.0
  %3352 = vmatpush1.msra.mxu0 0.0
  %3353 = vmatprep.subr.mxu0 0.0
  %3354 = vmatpush1.msra.mxu0 0.0
  %3355 = vmatprep.subr.mxu0 0.0
  %3356 = vmatpush1.msra.mxu0 0.0
  %3357 = vmatprep.mubr.f32.mxu0 0.0
  %3358 = vmatmul.mubr.f32.gmra.mrb[0].mxu0 %v3291
  %v3359 = vpop.f32.mrb[0].mxu0
  %v3360 = vadd.f32 %v3289, %v3359
  %v3361 = vpop.f32.mrb[0].mxu0
  %3362 = vdwg.mxu0
  %v3363 = vadd.f32 %v3360, %v334
  %v3364 = vmax.f32 %v3363, 0.0
  %v3365 = vtanh.pop %v3364
  %3366 = vrot.lane.b32.xlu0 %v2889, 50
  %v3367 = vpop.permute.xlu0 %3366
  %v3369 = vsel %vm377, %v3365, %v3367
  %v3370 = vmul.f32 %v2906, %v979
  %v3372 = vsel %vm552, %v3369, 0
  %3374 = vmatprep.subr.mxu0 0.0
  %3375 = vmatpush1.msra.mxu0 %v198
  %3376 = vmatprep.subr.mxu0 0.0
  %3377 = vmatpush1.msra.mxu0 %v199
  %3378 = vmatprep.subr.mxu0 0.0
  %3379 = vmatpush1.msra.mxu0 %v200
  %3380 = vmatprep.subr.mxu0 0.0
  %3381 = vmatpush1.msra.mxu0 %v201
  %3382 = vmatprep.subr.mxu0 0.0
  %3383 = vmatpush1.msra.mxu0 %v202
  %3384 = vmatprep.subr.mxu0 0.0
  %3385 = vmatpush1.msra.mxu0 %v203
  %3386 = vmatprep.subr.mxu0 0.0
  %3387 = vmatpush1.msra.mxu0 %v204
  %3388 = vmatprep.subr.mxu0 0.0
  %3389 = vmatpush1.msra.mxu0 %v205
  %3390 = vmatprep.subr.mxu0 0.0
  %3391 = vmatpush1.msra.mxu0 %v206
  %3392 = vmatprep.subr.mxu0 0.0
  %3393 = vmatpush1.msra.mxu0 %v207
  %3394 = vmatprep.subr.mxu0 0.0
  %3395 = vmatpush1.msra.mxu0 %v208
  %3396 = vmatprep.subr.mxu0 0.0
  %3397 = vmatpush1.msra.mxu0 %v209
  %3398 = vmatprep.subr.mxu0 0.0
  %3399 = vmatpush1.msra.mxu0 %v986
  %3400 = vmatprep.subr.mxu0 0.0
  %3401 = vmatpush1.msra.mxu0 0.0
  %3402 = vmatprep.subr.mxu0 0.0
  %3403 = vmatpush1.msra.mxu0 0.0
  %3404 = vmatprep.subr.mxu0 0.0
  %3405 = vmatpush1.msra.mxu0 0.0
  %3406 = vmatprep.subr.mxu0 0.0
  %3407 = vmatpush1.msra.mxu0 0.0
  %3408 = vmatprep.subr.mxu0 0.0
  %3409 = vmatpush1.msra.mxu0 0.0
  %3410 = vmatprep.subr.mxu0 0.0
  %3411 = vmatpush1.msra.mxu0 0.0
  %3412 = vmatprep.subr.mxu0 0.0
  %3413 = vmatpush1.msra.mxu0 0.0
  %3414 = vmatprep.subr.mxu0 0.0
  %3415 = vmatpush1.msra.mxu0 0.0
  %3416 = vmatprep.subr.mxu0 0.0
  %3417 = vmatpush1.msra.mxu0 0.0
  %3418 = vmatprep.subr.mxu0 0.0
  %3419 = vmatpush1.msra.mxu0 0.0
  %3420 = vmatprep.subr.mxu0 0.0
  %3421 = vmatpush1.msra.mxu0 0.0
  %3422 = vmatprep.subr.mxu0 0.0
  %3423 = vmatpush1.msra.mxu0 0.0
  %3424 = vmatprep.subr.mxu0 0.0
  %3425 = vmatpush1.msra.mxu0 0.0
  %3426 = vmatprep.subr.mxu0 0.0
  %3427 = vmatpush1.msra.mxu0 0.0
  %3428 = vmatprep.subr.mxu0 0.0
  %3429 = vmatpush1.msra.mxu0 0.0
  %3430 = vmatprep.subr.mxu0 0.0
  %3431 = vmatpush1.msra.mxu0 0.0
  %3432 = vmatprep.subr.mxu0 0.0
  %3433 = vmatpush1.msra.mxu0 0.0
  %3434 = vmatprep.subr.mxu0 0.0
  %3435 = vmatpush1.msra.mxu0 0.0
  %3436 = vmatprep.subr.mxu0 0.0
  %3437 = vmatpush1.msra.mxu0 0.0
  %3438 = vmatprep.mubr.f32.mxu0 0.0
  %3439 = vmatmul.mubr.f32.gmra.mrb[0].mxu0 %v3372
  %v3440 = vpop.f32.mrb[0].mxu0
  %v3441 = vadd.f32 %v3370, %v3440
  %v3442 = vpop.f32.mrb[0].mxu0
  %3443 = vdwg.mxu0
  %v3444 = vadd.f32 %v3441, %v341
  %v3445 = vmax.f32 %v3444, 0.0
  %v3446 = vtanh.pop %v3445
  %3447 = vrot.lane.b32.xlu0 %v2344, 50
  %v3448 = vpop.permute.xlu0 %3447
  %v3450 = vsel %vm377, %v3446, %v3448
  %v3451 = vmul.f32 %v2906, %v1066
  %v3452 = vmul.f32 %v2906, %v1070
  %v3453 = vsel %vm1075, %v3448, 0
  %3455 = vmatprep.subr.mxu0 %v213
  %3456 = vmatpush1.msra.mxu0 %v212
  %3457 = vmatprep.subr.mxu0 %v215
  %3458 = vmatpush1.msra.mxu0 %v214
  %3459 = vmatprep.subr.mxu0 %v217
  %3460 = vmatpush1.msra.mxu0 %v216
  %3461 = vmatprep.subr.mxu0 %v219
  %3462 = vmatpush1.msra.mxu0 %v218
  %3463 = vmatprep.subr.mxu0 %v221
  %3464 = vmatpush1.msra.mxu0 %v220
  %3465 = vmatprep.subr.mxu0 %v223
  %3466 = vmatpush1.msra.mxu0 %v222
  %3467 = vmatprep.subr.mxu0 %v225
  %3468 = vmatpush1.msra.mxu0 %v224
  %3469 = vmatprep.subr.mxu0 %v227
  %3470 = vmatpush1.msra.mxu0 %v226
  %3471 = vmatprep.subr.mxu0 %v229
  %3472 = vmatpush1.msra.mxu0 %v228
  %3473 = vmatprep.subr.mxu0 %v231
  %3474 = vmatpush1.msra.mxu0 %v230
  %3475 = vmatprep.subr.mxu0 %v233
  %3476 = vmatpush1.msra.mxu0 %v232
  %3477 = vmatprep.subr.mxu0 %v235
  %3478 = vmatpush1.msra.mxu0 %v234
  %3479 = vmatprep.subr.mxu0 %v237
  %3480 = vmatpush1.msra.mxu0 %v236
  %3481 = vmatprep.subr.mxu0 %v239
  %3482 = vmatpush1.msra.mxu0 %v238
  %3483 = vmatprep.subr.mxu0 %v241
  %3484 = vmatpush1.msra.mxu0 %v240
  %3485 = vmatprep.subr.mxu0 %v243
  %3486 = vmatpush1.msra.mxu0 %v242
  %3487 = vmatprep.subr.mxu0 %v245
  %3488 = vmatpush1.msra.mxu0 %v244
  %3489 = vmatprep.subr.mxu0 %v247
  %3490 = vmatpush1.msra.mxu0 %v246
  %3491 = vmatprep.subr.mxu0 %v1084
  %3492 = vmatpush1.msra.mxu0 %v1081
  %3493 = vmatprep.subr.mxu0 0.0
  %3494 = vmatpush1.msra.mxu0 0.0
  %3495 = vmatprep.subr.mxu0 0.0
  %3496 = vmatpush1.msra.mxu0 0.0
  %3497 = vmatprep.subr.mxu0 0.0
  %3498 = vmatpush1.msra.mxu0 0.0
  %3499 = vmatprep.subr.mxu0 0.0
  %3500 = vmatpush1.msra.mxu0 0.0
  %3501 = vmatprep.subr.mxu0 0.0
  %3502 = vmatpush1.msra.mxu0 0.0
  %3503 = vmatprep.subr.mxu0 0.0
  %3504 = vmatpush1.msra.mxu0 0.0
  %3505 = vmatprep.subr.mxu0 0.0
  %3506 = vmatpush1.msra.mxu0 0.0
  %3507 = vmatprep.subr.mxu0 0.0
  %3508 = vmatpush1.msra.mxu0 0.0
  %3509 = vmatprep.subr.mxu0 0.0
  %3510 = vmatpush1.msra.mxu0 0.0
  %3511 = vmatprep.subr.mxu0 0.0
  %3512 = vmatpush1.msra.mxu0 0.0
  %3513 = vmatprep.subr.mxu0 0.0
  %3514 = vmatpush1.msra.mxu0 0.0
  %3515 = vmatprep.subr.mxu0 0.0
  %3516 = vmatpush1.msra.mxu0 0.0
  %3517 = vmatprep.subr.mxu0 0.0
  %3518 = vmatpush1.msra.mxu0 0.0
  %3519 = vmatprep.mubr.f32.mxu0 %v3453
  %3520 = vmatmul.mubr.f32.gmra.mrb[0].mxu0 %v3450
  %v3521 = vpop.f32.mrb[0].mxu0
  %v3522 = vadd.f32 %v3451, %v3521
  %v3523 = vpop.f32.mrb[0].mxu0
  %v3524 = vadd.f32 %v3452, %v3523
  %3525 = vdwg.mxu0
  %3526 = vmatprep.subr.mxu0 %v252
  %3527 = vmatpush1.msra.mxu0 %v251
  %3528 = vmatprep.subr.mxu0 %v254
  %3529 = vmatpush1.msra.mxu0 %v253
  %3530 = vmatprep.subr.mxu0 %v256
  %3531 = vmatpush1.msra.mxu0 %v255
  %3532 = vmatprep.subr.mxu0 %v258
  %3533 = vmatpush1.msra.mxu0 %v257
  %3534 = vmatprep.subr.mxu0 %v260
  %3535 = vmatpush1.msra.mxu0 %v259
  %3536 = vmatprep.subr.mxu0 %v262
  %3537 = vmatpush1.msra.mxu0 %v261
  %3538 = vmatprep.subr.mxu0 %v264
  %3539 = vmatpush1.msra.mxu0 %v263
  %3540 = vmatprep.subr.mxu0 %v266
  %3541 = vmatpush1.msra.mxu0 %v265
  %3542 = vmatprep.subr.mxu0 %v268
  %3543 = vmatpush1.msra.mxu0 %v267
  %3544 = vmatprep.subr.mxu0 %v270
  %3545 = vmatpush1.msra.mxu0 %v269
  %3546 = vmatprep.subr.mxu0 %v272
  %3547 = vmatpush1.msra.mxu0 %v271
  %3548 = vmatprep.subr.mxu0 %v274
  %3549 = vmatpush1.msra.mxu0 %v273
  %3550 = vmatprep.subr.mxu0 %v276
  %3551 = vmatpush1.msra.mxu0 %v275
  %3552 = vmatprep.subr.mxu0 %v278
  %3553 = vmatpush1.msra.mxu0 %v277
  %3554 = vmatprep.subr.mxu0 %v280
  %3555 = vmatpush1.msra.mxu0 %v279
  %3556 = vmatprep.subr.mxu0 %v282
  %3557 = vmatpush1.msra.mxu0 %v281
  %3558 = vmatprep.subr.mxu0 %v284
  %3559 = vmatpush1.msra.mxu0 %v283
  %3560 = vmatprep.subr.mxu0 %v286
  %3561 = vmatpush1.msra.mxu0 %v285
  %3562 = vmatprep.subr.mxu0 %v1164
  %3563 = vmatpush1.msra.mxu0 %v1161
  %3564 = vmatprep.subr.mxu0 0.0
  %3565 = vmatpush1.msra.mxu0 0.0
  %3566 = vmatprep.subr.mxu0 0.0
  %3567 = vmatpush1.msra.mxu0 0.0
  %3568 = vmatprep.subr.mxu0 0.0
  %3569 = vmatpush1.msra.mxu0 0.0
  %3570 = vmatprep.subr.mxu0 0.0
  %3571 = vmatpush1.msra.mxu0 0.0
  %3572 = vmatprep.subr.mxu0 0.0
  %3573 = vmatpush1.msra.mxu0 0.0
  %3574 = vmatprep.subr.mxu0 0.0
  %3575 = vmatpush1.msra.mxu0 0.0
  %3576 = vmatprep.subr.mxu0 0.0
  %3577 = vmatpush1.msra.mxu0 0.0
  %3578 = vmatprep.subr.mxu0 0.0
  %3579 = vmatpush1.msra.mxu0 0.0
  %3580 = vmatprep.subr.mxu0 0.0
  %3581 = vmatpush1.msra.mxu0 0.0
  %3582 = vmatprep.subr.mxu0 0.0
  %3583 = vmatpush1.msra.mxu0 0.0
  %3584 = vmatprep.subr.mxu0 0.0
  %3585 = vmatpush1.msra.mxu0 0.0
  %3586 = vmatprep.subr.mxu0 0.0
  %3587 = vmatpush1.msra.mxu0 0.0
  %3588 = vmatprep.subr.mxu0 0.0
  %3589 = vmatpush1.msra.mxu0 0.0
  %3590 = vmatprep.mubr.f32.mxu0 %v2820
  %3591 = vmatmul.mubr.f32.gmra.mrb[0].mxu0 %v2817
  %v3592 = vpop.f32.mrb[0].mxu0
  %v3593 = vadd.f32 0.0, %v3592
  %v3594 = vpop.f32.mrb[0].mxu0
  %v3595 = vadd.f32 0.0, %v3594
  %3596 = vdwg.mxu0
  %v3597 = vadd.f32 %v3522, %v3593
  %v3598 = vadd.f32 %v3524, %v3595
  %v3599 = vadd.f32 %v3597, %v348
  %v3600 = vadd.f32 %v3598, %v352
  %v3601 = vmax.f32 %v3599, 0.0
  %v3602 = vmax.f32 %v3600, 0.0
  %v3603 = vtanh.pop %v3601
  %v3604 = vtanh.pop %v3602
  %v3606 = vsel %vm1075, %v3604, 0
  %3608 = vmatprep.subr.mxu0 0.0
  %3609 = vmatpush1.msra.mxu0 %v289
  %3610 = vmatprep.subr.mxu0 0.0
  %3611 = vmatpush1.msra.mxu0 %v290
  %3612 = vmatprep.subr.mxu0 0.0
  %3613 = vmatpush1.msra.mxu0 %v291
  %3614 = vmatprep.subr.mxu0 0.0
  %3615 = vmatpush1.msra.mxu0 %v292
  %3616 = vmatprep.subr.mxu0 0.0
  %3617 = vmatpush1.msra.mxu0 %v293
  %3618 = vmatprep.subr.mxu0 0.0
  %3619 = vmatpush1.msra.mxu0 %v294
  %3620 = vmatprep.subr.mxu0 0.0
  %3621 = vmatpush1.msra.mxu0 %v295
  %3622 = vmatprep.subr.mxu0 0.0
  %3623 = vmatpush1.msra.mxu0 %v296
  %3624 = vmatprep.subr.mxu0 0.0
  %3625 = vmatpush1.msra.mxu0 %v297
  %3626 = vmatprep.subr.mxu0 0.0
  %3627 = vmatpush1.msra.mxu0 %v298
  %3628 = vmatprep.subr.mxu0 0.0
  %3629 = vmatpush1.msra.mxu0 %v299
  %3630 = vmatprep.subr.mxu0 0.0
  %3631 = vmatpush1.msra.mxu0 %v300
  %3632 = vmatprep.subr.mxu0 0.0
  %3633 = vmatpush1.msra.mxu0 %v301
  %3634 = vmatprep.subr.mxu0 0.0
  %3635 = vmatpush1.msra.mxu0 %v302
  %3636 = vmatprep.subr.mxu0 0.0
  %3637 = vmatpush1.msra.mxu0 %v303
  %3638 = vmatprep.subr.mxu0 0.0
  %3639 = vmatpush1.msra.mxu0 %v304
  %3640 = vmatprep.subr.mxu0 0.0
  %3641 = vmatpush1.msra.mxu0 %v305
  %3642 = vmatprep.subr.mxu0 0.0
  %3643 = vmatpush1.msra.mxu0 %v306
  %3644 = vmatprep.subr.mxu0 0.0
  %3645 = vmatpush1.msra.mxu0 %v1249
  %3646 = vmatprep.subr.mxu0 0.0
  %3647 = vmatpush1.msra.mxu0 0.0
  %3648 = vmatprep.subr.mxu0 0.0
  %3649 = vmatpush1.msra.mxu0 0.0
  %3650 = vmatprep.subr.mxu0 0.0
  %3651 = vmatpush1.msra.mxu0 0.0
  %3652 = vmatprep.subr.mxu0 0.0
  %3653 = vmatpush1.msra.mxu0 0.0
  %3654 = vmatprep.subr.mxu0 0.0
  %3655 = vmatpush1.msra.mxu0 0.0
  %3656 = vmatprep.subr.mxu0 0.0
  %3657 = vmatpush1.msra.mxu0 0.0
  %3658 = vmatprep.subr.mxu0 0.0
  %3659 = vmatpush1.msra.mxu0 0.0
  %3660 = vmatprep.subr.mxu0 0.0
  %3661 = vmatpush1.msra.mxu0 0.0
  %3662 = vmatprep.subr.mxu0 0.0
  %3663 = vmatpush1.msra.mxu0 0.0
  %3664 = vmatprep.subr.mxu0 0.0
  %3665 = vmatpush1.msra.mxu0 0.0
  %3666 = vmatprep.subr.mxu0 0.0
  %3667 = vmatpush1.msra.mxu0 0.0
  %3668 = vmatprep.subr.mxu0 0.0
  %3669 = vmatpush1.msra.mxu0 0.0
  %3670 = vmatprep.subr.mxu0 0.0
  %3671 = vmatpush1.msra.mxu0 0.0
  %3672 = vmatprep.mubr.f32.mxu0 %v3606
  %3673 = vmatmul.mubr.f32.gmra.mrb[0].mxu0 %v3603
  %v3674 = vpop.f32.mrb[0].mxu0
  %v3675 = vadd.f32 %v360, %v3674
  %v3676 = vpop.f32.mrb[0].mxu0
  %3677 = vdwg.mxu0
  %s3678 = scalar_lea.vmem %s61, 24
  %3679 = vst.msk [vmem:[%s3678] sm:$0xff] %vm377, %v3675
  %s3680 = scalar_lea.vmem %s1, 32
  %v3681 = vld [vmem:[%s3680] sm:$0xff]
  %s3682 = scalar_lea.vmem %s3, 32
  %v3683 = vld [vmem:[%s3682] sm:$0xff]
  %3685 = vrot.lane.b32.xlu0 %v3675, 15
  %v3686 = vpop.permute.xlu0 %3685
  %v3688 = vsel %vm460, %v3681, %v3686
  %3690 = vset.pattern.permute.xlu0 0
  %3691 = vperm.xlu0 %3690, %v3683
  %v3692 = vpop.permute.xlu0 %3691
  %v3694 = vmul.f32 %v3692, %v471
  %v3696 = vsel %vm474, %v3688, 0
  %3698 = vmatprep.subr.mxu0 0.0
  %3699 = vmatpush1.msra.mxu0 %v126
  %3700 = vmatprep.subr.mxu0 0.0
  %3701 = vmatpush1.msra.mxu0 %v127
  %3702 = vmatprep.subr.mxu0 0.0
  %3703 = vmatpush1.msra.mxu0 %v128
  %3704 = vmatprep.subr.mxu0 0.0
  %3705 = vmatpush1.msra.mxu0 %v129
  %3706 = vmatprep.subr.mxu0 0.0
  %3707 = vmatpush1.msra.mxu0 %v130
  %3708 = vmatprep.subr.mxu0 0.0
  %3709 = vmatpush1.msra.mxu0 %v131
  %3710 = vmatprep.subr.mxu0 0.0
  %3711 = vmatpush1.msra.mxu0 %v132
  %3712 = vmatprep.subr.mxu0 0.0
  %3713 = vmatpush1.msra.mxu0 %v133
  %3714 = vmatprep.subr.mxu0 0.0
  %3715 = vmatpush1.msra.mxu0 %v480
  %3716 = vmatprep.subr.mxu0 0.0
  %3717 = vmatpush1.msra.mxu0 0.0
  %3718 = vmatprep.subr.mxu0 0.0
  %3719 = vmatpush1.msra.mxu0 0.0
  %3720 = vmatprep.subr.mxu0 0.0
  %3721 = vmatpush1.msra.mxu0 0.0
  %3722 = vmatprep.subr.mxu0 0.0
  %3723 = vmatpush1.msra.mxu0 0.0
  %3724 = vmatprep.subr.mxu0 0.0
  %3725 = vmatpush1.msra.mxu0 0.0
  %3726 = vmatprep.subr.mxu0 0.0
  %3727 = vmatpush1.msra.mxu0 0.0
  %3728 = vmatprep.subr.mxu0 0.0
  %3729 = vmatpush1.msra.mxu0 0.0
  %3730 = vmatprep.subr.mxu0 0.0
  %3731 = vmatpush1.msra.mxu0 0.0
  %3732 = vmatprep.subr.mxu0 0.0
  %3733 = vmatpush1.msra.mxu0 0.0
  %3734 = vmatprep.subr.mxu0 0.0
  %3735 = vmatpush1.msra.mxu0 0.0
  %3736 = vmatprep.subr.mxu0 0.0
  %3737 = vmatpush1.msra.mxu0 0.0
  %3738 = vmatprep.subr.mxu0 0.0
  %3739 = vmatpush1.msra.mxu0 0.0
  %3740 = vmatprep.subr.mxu0 0.0
  %3741 = vmatpush1.msra.mxu0 0.0
  %3742 = vmatprep.subr.mxu0 0.0
  %3743 = vmatpush1.msra.mxu0 0.0
  %3744 = vmatprep.subr.mxu0 0.0
  %3745 = vmatpush1.msra.mxu0 0.0
  %3746 = vmatprep.subr.mxu0 0.0
  %3747 = vmatpush1.msra.mxu0 0.0
  %3748 = vmatprep.subr.mxu0 0.0
  %3749 = vmatpush1.msra.mxu0 0.0
  %3750 = vmatprep.subr.mxu0 0.0
  %3751 = vmatpush1.msra.mxu0 0.0
  %3752 = vmatprep.subr.mxu0 0.0
  %3753 = vmatpush1.msra.mxu0 0.0
  %3754 = vmatprep.subr.mxu0 0.0
  %3755 = vmatpush1.msra.mxu0 0.0
  %3756 = vmatprep.subr.mxu0 0.0
  %3757 = vmatpush1.msra.mxu0 0.0
  %3758 = vmatprep.subr.mxu0 0.0
  %3759 = vmatpush1.msra.mxu0 0.0
  %3760 = vmatprep.subr.mxu0 0.0
  %3761 = vmatpush1.msra.mxu0 0.0
  %3762 = vmatprep.mubr.f32.mxu0 0.0
  %3763 = vmatmul.mubr.f32.gmra.mrb[0].mxu0 %v3696
  %v3764 = vpop.f32.mrb[0].mxu0
  %v3765 = vadd.f32 %v3694, %v3764
  %v3766 = vpop.f32.mrb[0].mxu0
  %3767 = vdwg.mxu0
  %3768 = vmatprep.subr.mxu0 0.0
  %3769 = vmatpush1.msra.mxu0 %v136
  %3770 = vmatprep.subr.mxu0 0.0
  %3771 = vmatpush1.msra.mxu0 %v137
  %3772 = vmatprep.subr.mxu0 0.0
  %3773 = vmatpush1.msra.mxu0 %v138
  %3774 = vmatprep.subr.mxu0 0.0
  %3775 = vmatpush1.msra.mxu0 %v139
  %3776 = vmatprep.subr.mxu0 0.0
  %3777 = vmatpush1.msra.mxu0 %v140
  %3778 = vmatprep.subr.mxu0 0.0
  %3779 = vmatpush1.msra.mxu0 %v141
  %3780 = vmatprep.subr.mxu0 0.0
  %3781 = vmatpush1.msra.mxu0 %v142
  %3782 = vmatprep.subr.mxu0 0.0
  %3783 = vmatpush1.msra.mxu0 %v143
  %3784 = vmatprep.subr.mxu0 0.0
  %3785 = vmatpush1.msra.mxu0 %v144
  %3786 = vmatprep.subr.mxu0 0.0
  %3787 = vmatpush1.msra.mxu0 %v145
  %3788 = vmatprep.subr.mxu0 0.0
  %3789 = vmatpush1.msra.mxu0 %v146
  %3790 = vmatprep.subr.mxu0 0.0
  %3791 = vmatpush1.msra.mxu0 %v147
  %3792 = vmatprep.subr.mxu0 0.0
  %3793 = vmatpush1.msra.mxu0 %v558
  %3794 = vmatprep.subr.mxu0 0.0
  %3795 = vmatpush1.msra.mxu0 0.0
  %3796 = vmatprep.subr.mxu0 0.0
  %3797 = vmatpush1.msra.mxu0 0.0
  %3798 = vmatprep.subr.mxu0 0.0
  %3799 = vmatpush1.msra.mxu0 0.0
  %3800 = vmatprep.subr.mxu0 0.0
  %3801 = vmatpush1.msra.mxu0 0.0
  %3802 = vmatprep.subr.mxu0 0.0
  %3803 = vmatpush1.msra.mxu0 0.0
  %3804 = vmatprep.subr.mxu0 0.0
  %3805 = vmatpush1.msra.mxu0 0.0
  %3806 = vmatprep.subr.mxu0 0.0
  %3807 = vmatpush1.msra.mxu0 0.0
  %3808 = vmatprep.subr.mxu0 0.0
  %3809 = vmatpush1.msra.mxu0 0.0
  %3810 = vmatprep.subr.mxu0 0.0
  %3811 = vmatpush1.msra.mxu0 0.0
  %3812 = vmatprep.subr.mxu0 0.0
  %3813 = vmatpush1.msra.mxu0 0.0
  %3814 = vmatprep.subr.mxu0 0.0
  %3815 = vmatpush1.msra.mxu0 0.0
  %3816 = vmatprep.subr.mxu0 0.0
  %3817 = vmatpush1.msra.mxu0 0.0
  %3818 = vmatprep.subr.mxu0 0.0
  %3819 = vmatpush1.msra.mxu0 0.0
  %3820 = vmatprep.subr.mxu0 0.0
  %3821 = vmatpush1.msra.mxu0 0.0
  %3822 = vmatprep.subr.mxu0 0.0
  %3823 = vmatpush1.msra.mxu0 0.0
  %3824 = vmatprep.subr.mxu0 0.0
  %3825 = vmatpush1.msra.mxu0 0.0
  %3826 = vmatprep.subr.mxu0 0.0
  %3827 = vmatpush1.msra.mxu0 0.0
  %3828 = vmatprep.subr.mxu0 0.0
  %3829 = vmatpush1.msra.mxu0 0.0
  %3830 = vmatprep.subr.mxu0 0.0
  %3831 = vmatpush1.msra.mxu0 0.0
  %3832 = vmatprep.mubr.f32.mxu0 0.0
  %3833 = vmatmul.mubr.f32.gmra.mrb[0].mxu0 %v3057
  %v3834 = vpop.f32.mrb[0].mxu0
  %v3835 = vadd.f32 0.0, %v3834
  %v3836 = vpop.f32.mrb[0].mxu0
  %3837 = vdwg.mxu0
  %v3838 = vadd.f32 %v3765, %v3835
  %v3839 = vadd.f32 %v3838, %v313
  %v3840 = vmax.f32 %v3839, 0.0
  %v3841 = vtanh.pop %v3840
  %v3843 = vsel %vm552, %v3841, 0
  %3845 = vmatprep.subr.mxu0 0.0
  %3846 = vmatpush1.msra.mxu0 %v149
  %3847 = vmatprep.subr.mxu0 0.0
  %3848 = vmatpush1.msra.mxu0 %v150
  %3849 = vmatprep.subr.mxu0 0.0
  %3850 = vmatpush1.msra.mxu0 %v151
  %3851 = vmatprep.subr.mxu0 0.0
  %3852 = vmatpush1.msra.mxu0 %v152
  %3853 = vmatprep.subr.mxu0 0.0
  %3854 = vmatpush1.msra.mxu0 %v153
  %3855 = vmatprep.subr.mxu0 0.0
  %3856 = vmatpush1.msra.mxu0 %v154
  %3857 = vmatprep.subr.mxu0 0.0
  %3858 = vmatpush1.msra.mxu0 %v155
  %3859 = vmatprep.subr.mxu0 0.0
  %3860 = vmatpush1.msra.mxu0 %v156
  %3861 = vmatprep.subr.mxu0 0.0
  %3862 = vmatpush1.msra.mxu0 %v157
  %3863 = vmatprep.subr.mxu0 0.0
  %3864 = vmatpush1.msra.mxu0 %v158
  %3865 = vmatprep.subr.mxu0 0.0
  %3866 = vmatpush1.msra.mxu0 %v159
  %3867 = vmatprep.subr.mxu0 0.0
  %3868 = vmatpush1.msra.mxu0 %v160
  %3869 = vmatprep.subr.mxu0 0.0
  %3870 = vmatpush1.msra.mxu0 %v638
  %3871 = vmatprep.subr.mxu0 0.0
  %3872 = vmatpush1.msra.mxu0 0.0
  %3873 = vmatprep.subr.mxu0 0.0
  %3874 = vmatpush1.msra.mxu0 0.0
  %3875 = vmatprep.subr.mxu0 0.0
  %3876 = vmatpush1.msra.mxu0 0.0
  %3877 = vmatprep.subr.mxu0 0.0
  %3878 = vmatpush1.msra.mxu0 0.0
  %3879 = vmatprep.subr.mxu0 0.0
  %3880 = vmatpush1.msra.mxu0 0.0
  %3881 = vmatprep.subr.mxu0 0.0
  %3882 = vmatpush1.msra.mxu0 0.0
  %3883 = vmatprep.subr.mxu0 0.0
  %3884 = vmatpush1.msra.mxu0 0.0
  %3885 = vmatprep.subr.mxu0 0.0
  %3886 = vmatpush1.msra.mxu0 0.0
  %3887 = vmatprep.subr.mxu0 0.0
  %3888 = vmatpush1.msra.mxu0 0.0
  %3889 = vmatprep.subr.mxu0 0.0
  %3890 = vmatpush1.msra.mxu0 0.0
  %3891 = vmatprep.subr.mxu0 0.0
  %3892 = vmatpush1.msra.mxu0 0.0
  %3893 = vmatprep.subr.mxu0 0.0
  %3894 = vmatpush1.msra.mxu0 0.0
  %3895 = vmatprep.subr.mxu0 0.0
  %3896 = vmatpush1.msra.mxu0 0.0
  %3897 = vmatprep.subr.mxu0 0.0
  %3898 = vmatpush1.msra.mxu0 0.0
  %3899 = vmatprep.subr.mxu0 0.0
  %3900 = vmatpush1.msra.mxu0 0.0
  %3901 = vmatprep.subr.mxu0 0.0
  %3902 = vmatpush1.msra.mxu0 0.0
  %3903 = vmatprep.subr.mxu0 0.0
  %3904 = vmatpush1.msra.mxu0 0.0
  %3905 = vmatprep.subr.mxu0 0.0
  %3906 = vmatpush1.msra.mxu0 0.0
  %3907 = vmatprep.subr.mxu0 0.0
  %3908 = vmatpush1.msra.mxu0 0.0
  %3909 = vmatprep.mubr.f32.mxu0 0.0
  %3910 = vmatmul.mubr.f32.gmra.mrb[0].mxu0 %v3843
  %v3911 = vpop.f32.mrb[0].mxu0
  %v3912 = vadd.f32 %v320, %v3911
  %v3913 = vpop.f32.mrb[0].mxu0
  %3914 = vdwg.mxu0
  %v3915 = vmax.f32 %v3912, 0.0
  %v3916 = vtanh.pop %v3915
  %v3917 = vmul.f32 %v3692, %v716
  %v3919 = vsel %vm552, %v3916, 0
  %3921 = vmatprep.subr.mxu0 0.0
  %3922 = vmatpush1.msra.mxu0 %v162
  %3923 = vmatprep.subr.mxu0 0.0
  %3924 = vmatpush1.msra.mxu0 %v163
  %3925 = vmatprep.subr.mxu0 0.0
  %3926 = vmatpush1.msra.mxu0 %v164
  %3927 = vmatprep.subr.mxu0 0.0
  %3928 = vmatpush1.msra.mxu0 %v165
  %3929 = vmatprep.subr.mxu0 0.0
  %3930 = vmatpush1.msra.mxu0 %v166
  %3931 = vmatprep.subr.mxu0 0.0
  %3932 = vmatpush1.msra.mxu0 %v167
  %3933 = vmatprep.subr.mxu0 0.0
  %3934 = vmatpush1.msra.mxu0 %v168
  %3935 = vmatprep.subr.mxu0 0.0
  %3936 = vmatpush1.msra.mxu0 %v169
  %3937 = vmatprep.subr.mxu0 0.0
  %3938 = vmatpush1.msra.mxu0 %v170
  %3939 = vmatprep.subr.mxu0 0.0
  %3940 = vmatpush1.msra.mxu0 %v171
  %3941 = vmatprep.subr.mxu0 0.0
  %3942 = vmatpush1.msra.mxu0 %v172
  %3943 = vmatprep.subr.mxu0 0.0
  %3944 = vmatpush1.msra.mxu0 %v173
  %3945 = vmatprep.subr.mxu0 0.0
  %3946 = vmatpush1.msra.mxu0 %v723
  %3947 = vmatprep.subr.mxu0 0.0
  %3948 = vmatpush1.msra.mxu0 0.0
  %3949 = vmatprep.subr.mxu0 0.0
  %3950 = vmatpush1.msra.mxu0 0.0
  %3951 = vmatprep.subr.mxu0 0.0
  %3952 = vmatpush1.msra.mxu0 0.0
  %3953 = vmatprep.subr.mxu0 0.0
  %3954 = vmatpush1.msra.mxu0 0.0
  %3955 = vmatprep.subr.mxu0 0.0
  %3956 = vmatpush1.msra.mxu0 0.0
  %3957 = vmatprep.subr.mxu0 0.0
  %3958 = vmatpush1.msra.mxu0 0.0
  %3959 = vmatprep.subr.mxu0 0.0
  %3960 = vmatpush1.msra.mxu0 0.0
  %3961 = vmatprep.subr.mxu0 0.0
  %3962 = vmatpush1.msra.mxu0 0.0
  %3963 = vmatprep.subr.mxu0 0.0
  %3964 = vmatpush1.msra.mxu0 0.0
  %3965 = vmatprep.subr.mxu0 0.0
  %3966 = vmatpush1.msra.mxu0 0.0
  %3967 = vmatprep.subr.mxu0 0.0
  %3968 = vmatpush1.msra.mxu0 0.0
  %3969 = vmatprep.subr.mxu0 0.0
  %3970 = vmatpush1.msra.mxu0 0.0
  %3971 = vmatprep.subr.mxu0 0.0
  %3972 = vmatpush1.msra.mxu0 0.0
  %3973 = vmatprep.subr.mxu0 0.0
  %3974 = vmatpush1.msra.mxu0 0.0
  %3975 = vmatprep.subr.mxu0 0.0
  %3976 = vmatpush1.msra.mxu0 0.0
  %3977 = vmatprep.subr.mxu0 0.0
  %3978 = vmatpush1.msra.mxu0 0.0
  %3979 = vmatprep.subr.mxu0 0.0
  %3980 = vmatpush1.msra.mxu0 0.0
  %3981 = vmatprep.subr.mxu0 0.0
  %3982 = vmatpush1.msra.mxu0 0.0
  %3983 = vmatprep.subr.mxu0 0.0
  %3984 = vmatpush1.msra.mxu0 0.0
  %3985 = vmatprep.mubr.f32.mxu0 0.0
  %3986 = vmatmul.mubr.f32.gmra.mrb[0].mxu0 %v3919
  %v3987 = vpop.f32.mrb[0].mxu0
  %v3988 = vadd.f32 %v3917, %v3987
  %v3989 = vpop.f32.mrb[0].mxu0
  %3990 = vdwg.mxu0
  %v3991 = vadd.f32 %v3988, %v452
  %v3992 = vmax.f32 %v3991, 0.0
  %v3993 = vtanh.pop %v3992
  %v3994 = vmul.f32 %v3692, %v802
  %v3996 = vsel %vm377, %v3993, 0
  %3998 = vmatprep.subr.mxu0 0.0
  %3999 = vmatpush1.msra.mxu0 %v176
  %4000 = vmatprep.subr.mxu0 0.0
  %4001 = vmatpush1.msra.mxu0 %v177
  %4002 = vmatprep.subr.mxu0 0.0
  %4003 = vmatpush1.msra.mxu0 %v178
  %4004 = vmatprep.subr.mxu0 0.0
  %4005 = vmatpush1.msra.mxu0 %v179
  %4006 = vmatprep.subr.mxu0 0.0
  %4007 = vmatpush1.msra.mxu0 %v180
  %4008 = vmatprep.subr.mxu0 0.0
  %4009 = vmatpush1.msra.mxu0 %v181
  %4010 = vmatprep.subr.mxu0 0.0
  %4011 = vmatpush1.msra.mxu0 %v809
  %4012 = vmatprep.subr.mxu0 0.0
  %4013 = vmatpush1.msra.mxu0 0.0
  %4014 = vmatprep.subr.mxu0 0.0
  %4015 = vmatpush1.msra.mxu0 0.0
  %4016 = vmatprep.subr.mxu0 0.0
  %4017 = vmatpush1.msra.mxu0 0.0
  %4018 = vmatprep.subr.mxu0 0.0
  %4019 = vmatpush1.msra.mxu0 0.0
  %4020 = vmatprep.subr.mxu0 0.0
  %4021 = vmatpush1.msra.mxu0 0.0
  %4022 = vmatprep.subr.mxu0 0.0
  %4023 = vmatpush1.msra.mxu0 0.0
  %4024 = vmatprep.subr.mxu0 0.0
  %4025 = vmatpush1.msra.mxu0 0.0
  %4026 = vmatprep.subr.mxu0 0.0
  %4027 = vmatpush1.msra.mxu0 0.0
  %4028 = vmatprep.subr.mxu0 0.0
  %4029 = vmatpush1.msra.mxu0 0.0
  %4030 = vmatprep.subr.mxu0 0.0
  %4031 = vmatpush1.msra.mxu0 0.0
  %4032 = vmatprep.subr.mxu0 0.0
  %4033 = vmatpush1.msra.mxu0 0.0
  %4034 = vmatprep.subr.mxu0 0.0
  %4035 = vmatpush1.msra.mxu0 0.0
  %4036 = vmatprep.subr.mxu0 0.0
  %4037 = vmatpush1.msra.mxu0 0.0
  %4038 = vmatprep.subr.mxu0 0.0
  %4039 = vmatpush1.msra.mxu0 0.0
  %4040 = vmatprep.subr.mxu0 0.0
  %4041 = vmatpush1.msra.mxu0 0.0
  %4042 = vmatprep.subr.mxu0 0.0
  %4043 = vmatpush1.msra.mxu0 0.0
  %4044 = vmatprep.subr.mxu0 0.0
  %4045 = vmatpush1.msra.mxu0 0.0
  %4046 = vmatprep.subr.mxu0 0.0
  %4047 = vmatpush1.msra.mxu0 0.0
  %4048 = vmatprep.subr.mxu0 0.0
  %4049 = vmatpush1.msra.mxu0 0.0
  %4050 = vmatprep.subr.mxu0 0.0
  %4051 = vmatpush1.msra.mxu0 0.0
  %4052 = vmatprep.subr.mxu0 0.0
  %4053 = vmatpush1.msra.mxu0 0.0
  %4054 = vmatprep.subr.mxu0 0.0
  %4055 = vmatpush1.msra.mxu0 0.0
  %4056 = vmatprep.subr.mxu0 0.0
  %4057 = vmatpush1.msra.mxu0 0.0
  %4058 = vmatprep.subr.mxu0 0.0
  %4059 = vmatpush1.msra.mxu0 0.0
  %4060 = vmatprep.subr.mxu0 0.0
  %4061 = vmatpush1.msra.mxu0 0.0
  %4062 = vmatprep.mubr.f32.mxu0 0.0
  %4063 = vmatmul.mubr.f32.gmra.mrb[0].mxu0 %v3996
  %v4064 = vpop.f32.mrb[0].mxu0
  %v4065 = vadd.f32 %v3994, %v4064
  %v4066 = vpop.f32.mrb[0].mxu0
  %4067 = vdwg.mxu0
  %v4068 = vadd.f32 %v4065, %v327
  %v4069 = vmax.f32 %v4068, 0.0
  %v4070 = vtanh.pop %v4069
  %4071 = vrot.lane.b32.xlu0 %v3993, 50
  %v4072 = vpop.permute.xlu0 %4071
  %v4074 = vsel %vm377, %v4070, %v4072
  %v4075 = vmul.f32 %v3692, %v892
  %v4077 = vsel %vm552, %v4074, 0
  %4079 = vmatprep.subr.mxu0 0.0
  %4080 = vmatpush1.msra.mxu0 %v184
  %4081 = vmatprep.subr.mxu0 0.0
  %4082 = vmatpush1.msra.mxu0 %v185
  %4083 = vmatprep.subr.mxu0 0.0
  %4084 = vmatpush1.msra.mxu0 %v186
  %4085 = vmatprep.subr.mxu0 0.0
  %4086 = vmatpush1.msra.mxu0 %v187
  %4087 = vmatprep.subr.mxu0 0.0
  %4088 = vmatpush1.msra.mxu0 %v188
  %4089 = vmatprep.subr.mxu0 0.0
  %4090 = vmatpush1.msra.mxu0 %v189
  %4091 = vmatprep.subr.mxu0 0.0
  %4092 = vmatpush1.msra.mxu0 %v190
  %4093 = vmatprep.subr.mxu0 0.0
  %4094 = vmatpush1.msra.mxu0 %v191
  %4095 = vmatprep.subr.mxu0 0.0
  %4096 = vmatpush1.msra.mxu0 %v192
  %4097 = vmatprep.subr.mxu0 0.0
  %4098 = vmatpush1.msra.mxu0 %v193
  %4099 = vmatprep.subr.mxu0 0.0
  %4100 = vmatpush1.msra.mxu0 %v194
  %4101 = vmatprep.subr.mxu0 0.0
  %4102 = vmatpush1.msra.mxu0 %v195
  %4103 = vmatprep.subr.mxu0 0.0
  %4104 = vmatpush1.msra.mxu0 %v899
  %4105 = vmatprep.subr.mxu0 0.0
  %4106 = vmatpush1.msra.mxu0 0.0
  %4107 = vmatprep.subr.mxu0 0.0
  %4108 = vmatpush1.msra.mxu0 0.0
  %4109 = vmatprep.subr.mxu0 0.0
  %4110 = vmatpush1.msra.mxu0 0.0
  %4111 = vmatprep.subr.mxu0 0.0
  %4112 = vmatpush1.msra.mxu0 0.0
  %4113 = vmatprep.subr.mxu0 0.0
  %4114 = vmatpush1.msra.mxu0 0.0
  %4115 = vmatprep.subr.mxu0 0.0
  %4116 = vmatpush1.msra.mxu0 0.0
  %4117 = vmatprep.subr.mxu0 0.0
  %4118 = vmatpush1.msra.mxu0 0.0
  %4119 = vmatprep.subr.mxu0 0.0
  %4120 = vmatpush1.msra.mxu0 0.0
  %4121 = vmatprep.subr.mxu0 0.0
  %4122 = vmatpush1.msra.mxu0 0.0
  %4123 = vmatprep.subr.mxu0 0.0
  %4124 = vmatpush1.msra.mxu0 0.0
  %4125 = vmatprep.subr.mxu0 0.0
  %4126 = vmatpush1.msra.mxu0 0.0
  %4127 = vmatprep.subr.mxu0 0.0
  %4128 = vmatpush1.msra.mxu0 0.0
  %4129 = vmatprep.subr.mxu0 0.0
  %4130 = vmatpush1.msra.mxu0 0.0
  %4131 = vmatprep.subr.mxu0 0.0
  %4132 = vmatpush1.msra.mxu0 0.0
  %4133 = vmatprep.subr.mxu0 0.0
  %4134 = vmatpush1.msra.mxu0 0.0
  %4135 = vmatprep.subr.mxu0 0.0
  %4136 = vmatpush1.msra.mxu0 0.0
  %4137 = vmatprep.subr.mxu0 0.0
  %4138 = vmatpush1.msra.mxu0 0.0
  %4139 = vmatprep.subr.mxu0 0.0
  %4140 = vmatpush1.msra.mxu0 0.0
  %4141 = vmatprep.subr.mxu0 0.0
  %4142 = vmatpush1.msra.mxu0 0.0
  %4143 = vmatprep.mubr.f32.mxu0 0.0
  %4144 = vmatmul.mubr.f32.gmra.mrb[0].mxu0 %v4077
  %v4145 = vpop.f32.mrb[0].mxu0
  %v4146 = vadd.f32 %v4075, %v4145
  %v4147 = vpop.f32.mrb[0].mxu0
  %4148 = vdwg.mxu0
  %v4149 = vadd.f32 %v4146, %v334
  %v4150 = vmax.f32 %v4149, 0.0
  %v4151 = vtanh.pop %v4150
  %4152 = vrot.lane.b32.xlu0 %v3675, 50
  %v4153 = vpop.permute.xlu0 %4152
  %v4155 = vsel %vm377, %v4151, %v4153
  %v4156 = vmul.f32 %v3692, %v979
  %v4158 = vsel %vm552, %v4155, 0
  %4160 = vmatprep.subr.mxu0 0.0
  %4161 = vmatpush1.msra.mxu0 %v198
  %4162 = vmatprep.subr.mxu0 0.0
  %4163 = vmatpush1.msra.mxu0 %v199
  %4164 = vmatprep.subr.mxu0 0.0
  %4165 = vmatpush1.msra.mxu0 %v200
  %4166 = vmatprep.subr.mxu0 0.0
  %4167 = vmatpush1.msra.mxu0 %v201
  %4168 = vmatprep.subr.mxu0 0.0
  %4169 = vmatpush1.msra.mxu0 %v202
  %4170 = vmatprep.subr.mxu0 0.0
  %4171 = vmatpush1.msra.mxu0 %v203
  %4172 = vmatprep.subr.mxu0 0.0
  %4173 = vmatpush1.msra.mxu0 %v204
  %4174 = vmatprep.subr.mxu0 0.0
  %4175 = vmatpush1.msra.mxu0 %v205
  %4176 = vmatprep.subr.mxu0 0.0
  %4177 = vmatpush1.msra.mxu0 %v206
  %4178 = vmatprep.subr.mxu0 0.0
  %4179 = vmatpush1.msra.mxu0 %v207
  %4180 = vmatprep.subr.mxu0 0.0
  %4181 = vmatpush1.msra.mxu0 %v208
  %4182 = vmatprep.subr.mxu0 0.0
  %4183 = vmatpush1.msra.mxu0 %v209
  %4184 = vmatprep.subr.mxu0 0.0
  %4185 = vmatpush1.msra.mxu0 %v986
  %4186 = vmatprep.subr.mxu0 0.0
  %4187 = vmatpush1.msra.mxu0 0.0
  %4188 = vmatprep.subr.mxu0 0.0
  %4189 = vmatpush1.msra.mxu0 0.0
  %4190 = vmatprep.subr.mxu0 0.0
  %4191 = vmatpush1.msra.mxu0 0.0
  %4192 = vmatprep.subr.mxu0 0.0
  %4193 = vmatpush1.msra.mxu0 0.0
  %4194 = vmatprep.subr.mxu0 0.0
  %4195 = vmatpush1.msra.mxu0 0.0
  %4196 = vmatprep.subr.mxu0 0.0
  %4197 = vmatpush1.msra.mxu0 0.0
  %4198 = vmatprep.subr.mxu0 0.0
  %4199 = vmatpush1.msra.mxu0 0.0
  %4200 = vmatprep.subr.mxu0 0.0
  %4201 = vmatpush1.msra.mxu0 0.0
  %4202 = vmatprep.subr.mxu0 0.0
  %4203 = vmatpush1.msra.mxu0 0.0
  %4204 = vmatprep.subr.mxu0 0.0
  %4205 = vmatpush1.msra.mxu0 0.0
  %4206 = vmatprep.subr.mxu0 0.0
  %4207 = vmatpush1.msra.mxu0 0.0
  %4208 = vmatprep.subr.mxu0 0.0
  %4209 = vmatpush1.msra.mxu0 0.0
  %4210 = vmatprep.subr.mxu0 0.0
  %4211 = vmatpush1.msra.mxu0 0.0
  %4212 = vmatprep.subr.mxu0 0.0
  %4213 = vmatpush1.msra.mxu0 0.0
  %4214 = vmatprep.subr.mxu0 0.0
  %4215 = vmatpush1.msra.mxu0 0.0
  %4216 = vmatprep.subr.mxu0 0.0
  %4217 = vmatpush1.msra.mxu0 0.0
  %4218 = vmatprep.subr.mxu0 0.0
  %4219 = vmatpush1.msra.mxu0 0.0
  %4220 = vmatprep.subr.mxu0 0.0
  %4221 = vmatpush1.msra.mxu0 0.0
  %4222 = vmatprep.subr.mxu0 0.0
  %4223 = vmatpush1.msra.mxu0 0.0
  %4224 = vmatprep.mubr.f32.mxu0 0.0
  %4225 = vmatmul.mubr.f32.gmra.mrb[0].mxu0 %v4158
  %v4226 = vpop.f32.mrb[0].mxu0
  %v4227 = vadd.f32 %v4156, %v4226
  %v4228 = vpop.f32.mrb[0].mxu0
  %4229 = vdwg.mxu0
  %v4230 = vadd.f32 %v4227, %v341
  %v4231 = vmax.f32 %v4230, 0.0
  %v4232 = vtanh.pop %v4231
  %4233 = vrot.lane.b32.xlu0 %v3130, 50
  %v4234 = vpop.permute.xlu0 %4233
  %v4236 = vsel %vm377, %v4232, %v4234
  %v4237 = vmul.f32 %v3692, %v1066
  %v4238 = vmul.f32 %v3692, %v1070
  %v4239 = vsel %vm1075, %v4234, 0
  %4241 = vmatprep.subr.mxu0 %v213
  %4242 = vmatpush1.msra.mxu0 %v212
  %4243 = vmatprep.subr.mxu0 %v215
  %4244 = vmatpush1.msra.mxu0 %v214
  %4245 = vmatprep.subr.mxu0 %v217
  %4246 = vmatpush1.msra.mxu0 %v216
  %4247 = vmatprep.subr.mxu0 %v219
  %4248 = vmatpush1.msra.mxu0 %v218
  %4249 = vmatprep.subr.mxu0 %v221
  %4250 = vmatpush1.msra.mxu0 %v220
  %4251 = vmatprep.subr.mxu0 %v223
  %4252 = vmatpush1.msra.mxu0 %v222
  %4253 = vmatprep.subr.mxu0 %v225
  %4254 = vmatpush1.msra.mxu0 %v224
  %4255 = vmatprep.subr.mxu0 %v227
  %4256 = vmatpush1.msra.mxu0 %v226
  %4257 = vmatprep.subr.mxu0 %v229
  %4258 = vmatpush1.msra.mxu0 %v228
  %4259 = vmatprep.subr.mxu0 %v231
  %4260 = vmatpush1.msra.mxu0 %v230
  %4261 = vmatprep.subr.mxu0 %v233
  %4262 = vmatpush1.msra.mxu0 %v232
  %4263 = vmatprep.subr.mxu0 %v235
  %4264 = vmatpush1.msra.mxu0 %v234
  %4265 = vmatprep.subr.mxu0 %v237
  %4266 = vmatpush1.msra.mxu0 %v236
  %4267 = vmatprep.subr.mxu0 %v239
  %4268 = vmatpush1.msra.mxu0 %v238
  %4269 = vmatprep.subr.mxu0 %v241
  %4270 = vmatpush1.msra.mxu0 %v240
  %4271 = vmatprep.subr.mxu0 %v243
  %4272 = vmatpush1.msra.mxu0 %v242
  %4273 = vmatprep.subr.mxu0 %v245
  %4274 = vmatpush1.msra.mxu0 %v244
  %4275 = vmatprep.subr.mxu0 %v247
  %4276 = vmatpush1.msra.mxu0 %v246
  %4277 = vmatprep.subr.mxu0 %v1084
  %4278 = vmatpush1.msra.mxu0 %v1081
  %4279 = vmatprep.subr.mxu0 0.0
  %4280 = vmatpush1.msra.mxu0 0.0
  %4281 = vmatprep.subr.mxu0 0.0
  %4282 = vmatpush1.msra.mxu0 0.0
  %4283 = vmatprep.subr.mxu0 0.0
  %4284 = vmatpush1.msra.mxu0 0.0
  %4285 = vmatprep.subr.mxu0 0.0
  %4286 = vmatpush1.msra.mxu0 0.0
  %4287 = vmatprep.subr.mxu0 0.0
  %4288 = vmatpush1.msra.mxu0 0.0
  %4289 = vmatprep.subr.mxu0 0.0
  %4290 = vmatpush1.msra.mxu0 0.0
  %4291 = vmatprep.subr.mxu0 0.0
  %4292 = vmatpush1.msra.mxu0 0.0
  %4293 = vmatprep.subr.mxu0 0.0
  %4294 = vmatpush1.msra.mxu0 0.0
  %4295 = vmatprep.subr.mxu0 0.0
  %4296 = vmatpush1.msra.mxu0 0.0
  %4297 = vmatprep.subr.mxu0 0.0
  %4298 = vmatpush1.msra.mxu0 0.0
  %4299 = vmatprep.subr.mxu0 0.0
  %4300 = vmatpush1.msra.mxu0 0.0
  %4301 = vmatprep.subr.mxu0 0.0
  %4302 = vmatpush1.msra.mxu0 0.0
  %4303 = vmatprep.subr.mxu0 0.0
  %4304 = vmatpush1.msra.mxu0 0.0
  %4305 = vmatprep.mubr.f32.mxu0 %v4239
  %4306 = vmatmul.mubr.f32.gmra.mrb[0].mxu0 %v4236
  %v4307 = vpop.f32.mrb[0].mxu0
  %v4308 = vadd.f32 %v4237, %v4307
  %v4309 = vpop.f32.mrb[0].mxu0
  %v4310 = vadd.f32 %v4238, %v4309
  %4311 = vdwg.mxu0
  %4312 = vmatprep.subr.mxu0 %v252
  %4313 = vmatpush1.msra.mxu0 %v251
  %4314 = vmatprep.subr.mxu0 %v254
  %4315 = vmatpush1.msra.mxu0 %v253
  %4316 = vmatprep.subr.mxu0 %v256
  %4317 = vmatpush1.msra.mxu0 %v255
  %4318 = vmatprep.subr.mxu0 %v258
  %4319 = vmatpush1.msra.mxu0 %v257
  %4320 = vmatprep.subr.mxu0 %v260
  %4321 = vmatpush1.msra.mxu0 %v259
  %4322 = vmatprep.subr.mxu0 %v262
  %4323 = vmatpush1.msra.mxu0 %v261
  %4324 = vmatprep.subr.mxu0 %v264
  %4325 = vmatpush1.msra.mxu0 %v263
  %4326 = vmatprep.subr.mxu0 %v266
  %4327 = vmatpush1.msra.mxu0 %v265
  %4328 = vmatprep.subr.mxu0 %v268
  %4329 = vmatpush1.msra.mxu0 %v267
  %4330 = vmatprep.subr.mxu0 %v270
  %4331 = vmatpush1.msra.mxu0 %v269
  %4332 = vmatprep.subr.mxu0 %v272
  %4333 = vmatpush1.msra.mxu0 %v271
  %4334 = vmatprep.subr.mxu0 %v274
  %4335 = vmatpush1.msra.mxu0 %v273
  %4336 = vmatprep.subr.mxu0 %v276
  %4337 = vmatpush1.msra.mxu0 %v275
  %4338 = vmatprep.subr.mxu0 %v278
  %4339 = vmatpush1.msra.mxu0 %v277
  %4340 = vmatprep.subr.mxu0 %v280
  %4341 = vmatpush1.msra.mxu0 %v279
  %4342 = vmatprep.subr.mxu0 %v282
  %4343 = vmatpush1.msra.mxu0 %v281
  %4344 = vmatprep.subr.mxu0 %v284
  %4345 = vmatpush1.msra.mxu0 %v283
  %4346 = vmatprep.subr.mxu0 %v286
  %4347 = vmatpush1.msra.mxu0 %v285
  %4348 = vmatprep.subr.mxu0 %v1164
  %4349 = vmatpush1.msra.mxu0 %v1161
  %4350 = vmatprep.subr.mxu0 0.0
  %4351 = vmatpush1.msra.mxu0 0.0
  %4352 = vmatprep.subr.mxu0 0.0
  %4353 = vmatpush1.msra.mxu0 0.0
  %4354 = vmatprep.subr.mxu0 0.0
  %4355 = vmatpush1.msra.mxu0 0.0
  %4356 = vmatprep.subr.mxu0 0.0
  %4357 = vmatpush1.msra.mxu0 0.0
  %4358 = vmatprep.subr.mxu0 0.0
  %4359 = vmatpush1.msra.mxu0 0.0
  %4360 = vmatprep.subr.mxu0 0.0
  %4361 = vmatpush1.msra.mxu0 0.0
  %4362 = vmatprep.subr.mxu0 0.0
  %4363 = vmatpush1.msra.mxu0 0.0
  %4364 = vmatprep.subr.mxu0 0.0
  %4365 = vmatpush1.msra.mxu0 0.0
  %4366 = vmatprep.subr.mxu0 0.0
  %4367 = vmatpush1.msra.mxu0 0.0
  %4368 = vmatprep.subr.mxu0 0.0
  %4369 = vmatpush1.msra.mxu0 0.0
  %4370 = vmatprep.subr.mxu0 0.0
  %4371 = vmatpush1.msra.mxu0 0.0
  %4372 = vmatprep.subr.mxu0 0.0
  %4373 = vmatpush1.msra.mxu0 0.0
  %4374 = vmatprep.subr.mxu0 0.0
  %4375 = vmatpush1.msra.mxu0 0.0
  %4376 = vmatprep.mubr.f32.mxu0 %v3606
  %4377 = vmatmul.mubr.f32.gmra.mrb[0].mxu0 %v3603
  %v4378 = vpop.f32.mrb[0].mxu0
  %v4379 = vadd.f32 0.0, %v4378
  %v4380 = vpop.f32.mrb[0].mxu0
  %v4381 = vadd.f32 0.0, %v4380
  %4382 = vdwg.mxu0
  %v4383 = vadd.f32 %v4308, %v4379
  %v4384 = vadd.f32 %v4310, %v4381
  %v4385 = vadd.f32 %v4383, %v348
  %v4386 = vadd.f32 %v4384, %v352
  %v4387 = vmax.f32 %v4385, 0.0
  %v4388 = vmax.f32 %v4386, 0.0
  %v4389 = vtanh.pop %v4387
  %v4390 = vtanh.pop %v4388
  %v4392 = vsel %vm1075, %v4390, 0
  %4394 = vmatprep.subr.mxu0 0.0
  %4395 = vmatpush1.msra.mxu0 %v289
  %4396 = vmatprep.subr.mxu0 0.0
  %4397 = vmatpush1.msra.mxu0 %v290
  %4398 = vmatprep.subr.mxu0 0.0
  %4399 = vmatpush1.msra.mxu0 %v291
  %4400 = vmatprep.subr.mxu0 0.0
  %4401 = vmatpush1.msra.mxu0 %v292
  %4402 = vmatprep.subr.mxu0 0.0
  %4403 = vmatpush1.msra.mxu0 %v293
  %4404 = vmatprep.subr.mxu0 0.0
  %4405 = vmatpush1.msra.mxu0 %v294
  %4406 = vmatprep.subr.mxu0 0.0
  %4407 = vmatpush1.msra.mxu0 %v295
  %4408 = vmatprep.subr.mxu0 0.0
  %4409 = vmatpush1.msra.mxu0 %v296
  %4410 = vmatprep.subr.mxu0 0.0
  %4411 = vmatpush1.msra.mxu0 %v297
  %4412 = vmatprep.subr.mxu0 0.0
  %4413 = vmatpush1.msra.mxu0 %v298
  %4414 = vmatprep.subr.mxu0 0.0
  %4415 = vmatpush1.msra.mxu0 %v299
  %4416 = vmatprep.subr.mxu0 0.0
  %4417 = vmatpush1.msra.mxu0 %v300
  %4418 = vmatprep.subr.mxu0 0.0
  %4419 = vmatpush1.msra.mxu0 %v301
  %4420 = vmatprep.subr.mxu0 0.0
  %4421 = vmatpush1.msra.mxu0 %v302
  %4422 = vmatprep.subr.mxu0 0.0
  %4423 = vmatpush1.msra.mxu0 %v303
  %4424 = vmatprep.subr.mxu0 0.0
  %4425 = vmatpush1.msra.mxu0 %v304
  %4426 = vmatprep.subr.mxu0 0.0
  %4427 = vmatpush1.msra.mxu0 %v305
  %4428 = vmatprep.subr.mxu0 0.0
  %4429 = vmatpush1.msra.mxu0 %v306
  %4430 = vmatprep.subr.mxu0 0.0
  %4431 = vmatpush1.msra.mxu0 %v1249
  %4432 = vmatprep.subr.mxu0 0.0
  %4433 = vmatpush1.msra.mxu0 0.0
  %4434 = vmatprep.subr.mxu0 0.0
  %4435 = vmatpush1.msra.mxu0 0.0
  %4436 = vmatprep.subr.mxu0 0.0
  %4437 = vmatpush1.msra.mxu0 0.0
  %4438 = vmatprep.subr.mxu0 0.0
  %4439 = vmatpush1.msra.mxu0 0.0
  %4440 = vmatprep.subr.mxu0 0.0
  %4441 = vmatpush1.msra.mxu0 0.0
  %4442 = vmatprep.subr.mxu0 0.0
  %4443 = vmatpush1.msra.mxu0 0.0
  %4444 = vmatprep.subr.mxu0 0.0
  %4445 = vmatpush1.msra.mxu0 0.0
  %4446 = vmatprep.subr.mxu0 0.0
  %4447 = vmatpush1.msra.mxu0 0.0
  %4448 = vmatprep.subr.mxu0 0.0
  %4449 = vmatpush1.msra.mxu0 0.0
  %4450 = vmatprep.subr.mxu0 0.0
  %4451 = vmatpush1.msra.mxu0 0.0
  %4452 = vmatprep.subr.mxu0 0.0
  %4453 = vmatpush1.msra.mxu0 0.0
  %4454 = vmatprep.subr.mxu0 0.0
  %4455 = vmatpush1.msra.mxu0 0.0
  %4456 = vmatprep.subr.mxu0 0.0
  %4457 = vmatpush1.msra.mxu0 0.0
  %4458 = vmatprep.mubr.f32.mxu0 %v4392
  %4459 = vmatmul.mubr.f32.gmra.mrb[0].mxu0 %v4389
  %v4460 = vpop.f32.mrb[0].mxu0
  %v4461 = vadd.f32 %v360, %v4460
  %v4462 = vpop.f32.mrb[0].mxu0
  %4463 = vdwg.mxu0
  %s4464 = scalar_lea.vmem %s61, 32
  %4465 = vst.msk [vmem:[%s4464] sm:$0xff] %vm377, %v4461
  %s4466 = scalar_lea.vmem %s1, 40
  %v4467 = vld [vmem:[%s4466] sm:$0xff]
  %s4468 = scalar_lea.vmem %s3, 40
  %v4469 = vld [vmem:[%s4468] sm:$0xff]
  %4471 = vrot.lane.b32.xlu0 %v4461, 15
  %v4472 = vpop.permute.xlu0 %4471
  %v4474 = vsel %vm460, %v4467, %v4472
  %4476 = vset.pattern.permute.xlu0 0
  %4477 = vperm.xlu0 %4476, %v4469
  %v4478 = vpop.permute.xlu0 %4477
  %v4480 = vmul.f32 %v4478, %v471
  %v4482 = vsel %vm474, %v4474, 0
  %4484 = vmatprep.subr.mxu0 0.0
  %4485 = vmatpush1.msra.mxu0 %v126
  %4486 = vmatprep.subr.mxu0 0.0
  %4487 = vmatpush1.msra.mxu0 %v127
  %4488 = vmatprep.subr.mxu0 0.0
  %4489 = vmatpush1.msra.mxu0 %v128
  %4490 = vmatprep.subr.mxu0 0.0
  %4491 = vmatpush1.msra.mxu0 %v129
  %4492 = vmatprep.subr.mxu0 0.0
  %4493 = vmatpush1.msra.mxu0 %v130
  %4494 = vmatprep.subr.mxu0 0.0
  %4495 = vmatpush1.msra.mxu0 %v131
  %4496 = vmatprep.subr.mxu0 0.0
  %4497 = vmatpush1.msra.mxu0 %v132
  %4498 = vmatprep.subr.mxu0 0.0
  %4499 = vmatpush1.msra.mxu0 %v133
  %4500 = vmatprep.subr.mxu0 0.0
  %4501 = vmatpush1.msra.mxu0 %v480
  %4502 = vmatprep.subr.mxu0 0.0
  %4503 = vmatpush1.msra.mxu0 0.0
  %4504 = vmatprep.subr.mxu0 0.0
  %4505 = vmatpush1.msra.mxu0 0.0
  %4506 = vmatprep.subr.mxu0 0.0
  %4507 = vmatpush1.msra.mxu0 0.0
  %4508 = vmatprep.subr.mxu0 0.0
  %4509 = vmatpush1.msra.mxu0 0.0
  %4510 = vmatprep.subr.mxu0 0.0
  %4511 = vmatpush1.msra.mxu0 0.0
  %4512 = vmatprep.subr.mxu0 0.0
  %4513 = vmatpush1.msra.mxu0 0.0
  %4514 = vmatprep.subr.mxu0 0.0
  %4515 = vmatpush1.msra.mxu0 0.0
  %4516 = vmatprep.subr.mxu0 0.0
  %4517 = vmatpush1.msra.mxu0 0.0
  %4518 = vmatprep.subr.mxu0 0.0
  %4519 = vmatpush1.msra.mxu0 0.0
  %4520 = vmatprep.subr.mxu0 0.0
  %4521 = vmatpush1.msra.mxu0 0.0
  %4522 = vmatprep.subr.mxu0 0.0
  %4523 = vmatpush1.msra.mxu0 0.0
  %4524 = vmatprep.subr.mxu0 0.0
  %4525 = vmatpush1.msra.mxu0 0.0
  %4526 = vmatprep.subr.mxu0 0.0
  %4527 = vmatpush1.msra.mxu0 0.0
  %4528 = vmatprep.subr.mxu0 0.0
  %4529 = vmatpush1.msra.mxu0 0.0
  %4530 = vmatprep.subr.mxu0 0.0
  %4531 = vmatpush1.msra.mxu0 0.0
  %4532 = vmatprep.subr.mxu0 0.0
  %4533 = vmatpush1.msra.mxu0 0.0
  %4534 = vmatprep.subr.mxu0 0.0
  %4535 = vmatpush1.msra.mxu0 0.0
  %4536 = vmatprep.subr.mxu0 0.0
  %4537 = vmatpush1.msra.mxu0 0.0
  %4538 = vmatprep.subr.mxu0 0.0
  %4539 = vmatpush1.msra.mxu0 0.0
  %4540 = vmatprep.subr.mxu0 0.0
  %4541 = vmatpush1.msra.mxu0 0.0
  %4542 = vmatprep.subr.mxu0 0.0
  %4543 = vmatpush1.msra.mxu0 0.0
  %4544 = vmatprep.subr.mxu0 0.0
  %4545 = vmatpush1.msra.mxu0 0.0
  %4546 = vmatprep.subr.mxu0 0.0
  %4547 = vmatpush1.msra.mxu0 0.0
  %4548 = vmatprep.mubr.f32.mxu0 0.0
  %4549 = vmatmul.mubr.f32.gmra.mrb[0].mxu0 %v4482
  %v4550 = vpop.f32.mrb[0].mxu0
  %v4551 = vadd.f32 %v4480, %v4550
  %v4552 = vpop.f32.mrb[0].mxu0
  %4553 = vdwg.mxu0
  %4554 = vmatprep.subr.mxu0 0.0
  %4555 = vmatpush1.msra.mxu0 %v136
  %4556 = vmatprep.subr.mxu0 0.0
  %4557 = vmatpush1.msra.mxu0 %v137
  %4558 = vmatprep.subr.mxu0 0.0
  %4559 = vmatpush1.msra.mxu0 %v138
  %4560 = vmatprep.subr.mxu0 0.0
  %4561 = vmatpush1.msra.mxu0 %v139
  %4562 = vmatprep.subr.mxu0 0.0
  %4563 = vmatpush1.msra.mxu0 %v140
  %4564 = vmatprep.subr.mxu0 0.0
  %4565 = vmatpush1.msra.mxu0 %v141
  %4566 = vmatprep.subr.mxu0 0.0
  %4567 = vmatpush1.msra.mxu0 %v142
  %4568 = vmatprep.subr.mxu0 0.0
  %4569 = vmatpush1.msra.mxu0 %v143
  %4570 = vmatprep.subr.mxu0 0.0
  %4571 = vmatpush1.msra.mxu0 %v144
  %4572 = vmatprep.subr.mxu0 0.0
  %4573 = vmatpush1.msra.mxu0 %v145
  %4574 = vmatprep.subr.mxu0 0.0
  %4575 = vmatpush1.msra.mxu0 %v146
  %4576 = vmatprep.subr.mxu0 0.0
  %4577 = vmatpush1.msra.mxu0 %v147
  %4578 = vmatprep.subr.mxu0 0.0
  %4579 = vmatpush1.msra.mxu0 %v558
  %4580 = vmatprep.subr.mxu0 0.0
  %4581 = vmatpush1.msra.mxu0 0.0
  %4582 = vmatprep.subr.mxu0 0.0
  %4583 = vmatpush1.msra.mxu0 0.0
  %4584 = vmatprep.subr.mxu0 0.0
  %4585 = vmatpush1.msra.mxu0 0.0
  %4586 = vmatprep.subr.mxu0 0.0
  %4587 = vmatpush1.msra.mxu0 0.0
  %4588 = vmatprep.subr.mxu0 0.0
  %4589 = vmatpush1.msra.mxu0 0.0
  %4590 = vmatprep.subr.mxu0 0.0
  %4591 = vmatpush1.msra.mxu0 0.0
  %4592 = vmatprep.subr.mxu0 0.0
  %4593 = vmatpush1.msra.mxu0 0.0
  %4594 = vmatprep.subr.mxu0 0.0
  %4595 = vmatpush1.msra.mxu0 0.0
  %4596 = vmatprep.subr.mxu0 0.0
  %4597 = vmatpush1.msra.mxu0 0.0
  %4598 = vmatprep.subr.mxu0 0.0
  %4599 = vmatpush1.msra.mxu0 0.0
  %4600 = vmatprep.subr.mxu0 0.0
  %4601 = vmatpush1.msra.mxu0 0.0
  %4602 = vmatprep.subr.mxu0 0.0
  %4603 = vmatpush1.msra.mxu0 0.0
  %4604 = vmatprep.subr.mxu0 0.0
  %4605 = vmatpush1.msra.mxu0 0.0
  %4606 = vmatprep.subr.mxu0 0.0
  %4607 = vmatpush1.msra.mxu0 0.0
  %4608 = vmatprep.subr.mxu0 0.0
  %4609 = vmatpush1.msra.mxu0 0.0
  %4610 = vmatprep.subr.mxu0 0.0
  %4611 = vmatpush1.msra.mxu0 0.0
  %4612 = vmatprep.subr.mxu0 0.0
  %4613 = vmatpush1.msra.mxu0 0.0
  %4614 = vmatprep.subr.mxu0 0.0
  %4615 = vmatpush1.msra.mxu0 0.0
  %4616 = vmatprep.subr.mxu0 0.0
  %4617 = vmatpush1.msra.mxu0 0.0
  %4618 = vmatprep.mubr.f32.mxu0 0.0
  %4619 = vmatmul.mubr.f32.gmra.mrb[0].mxu0 %v3843
  %v4620 = vpop.f32.mrb[0].mxu0
  %v4621 = vadd.f32 0.0, %v4620
  %v4622 = vpop.f32.mrb[0].mxu0
  %4623 = vdwg.mxu0
  %v4624 = vadd.f32 %v4551, %v4621
  %v4625 = vadd.f32 %v4624, %v313
  %v4626 = vmax.f32 %v4625, 0.0
  %v4627 = vtanh.pop %v4626
  %v4629 = vsel %vm552, %v4627, 0
  %4631 = vmatprep.subr.mxu0 0.0
  %4632 = vmatpush1.msra.mxu0 %v149
  %4633 = vmatprep.subr.mxu0 0.0
  %4634 = vmatpush1.msra.mxu0 %v150
  %4635 = vmatprep.subr.mxu0 0.0
  %4636 = vmatpush1.msra.mxu0 %v151
  %4637 = vmatprep.subr.mxu0 0.0
  %4638 = vmatpush1.msra.mxu0 %v152
  %4639 = vmatprep.subr.mxu0 0.0
  %4640 = vmatpush1.msra.mxu0 %v153
  %4641 = vmatprep.subr.mxu0 0.0
  %4642 = vmatpush1.msra.mxu0 %v154
  %4643 = vmatprep.subr.mxu0 0.0
  %4644 = vmatpush1.msra.mxu0 %v155
  %4645 = vmatprep.subr.mxu0 0.0
  %4646 = vmatpush1.msra.mxu0 %v156
  %4647 = vmatprep.subr.mxu0 0.0
  %4648 = vmatpush1.msra.mxu0 %v157
  %4649 = vmatprep.subr.mxu0 0.0
  %4650 = vmatpush1.msra.mxu0 %v158
  %4651 = vmatprep.subr.mxu0 0.0
  %4652 = vmatpush1.msra.mxu0 %v159
  %4653 = vmatprep.subr.mxu0 0.0
  %4654 = vmatpush1.msra.mxu0 %v160
  %4655 = vmatprep.subr.mxu0 0.0
  %4656 = vmatpush1.msra.mxu0 %v638
  %4657 = vmatprep.subr.mxu0 0.0
  %4658 = vmatpush1.msra.mxu0 0.0
  %4659 = vmatprep.subr.mxu0 0.0
  %4660 = vmatpush1.msra.mxu0 0.0
  %4661 = vmatprep.subr.mxu0 0.0
  %4662 = vmatpush1.msra.mxu0 0.0
  %4663 = vmatprep.subr.mxu0 0.0
  %4664 = vmatpush1.msra.mxu0 0.0
  %4665 = vmatprep.subr.mxu0 0.0
  %4666 = vmatpush1.msra.mxu0 0.0
  %4667 = vmatprep.subr.mxu0 0.0
  %4668 = vmatpush1.msra.mxu0 0.0
  %4669 = vmatprep.subr.mxu0 0.0
  %4670 = vmatpush1.msra.mxu0 0.0
  %4671 = vmatprep.subr.mxu0 0.0
  %4672 = vmatpush1.msra.mxu0 0.0
  %4673 = vmatprep.subr.mxu0 0.0
  %4674 = vmatpush1.msra.mxu0 0.0
  %4675 = vmatprep.subr.mxu0 0.0
  %4676 = vmatpush1.msra.mxu0 0.0
  %4677 = vmatprep.subr.mxu0 0.0
  %4678 = vmatpush1.msra.mxu0 0.0
  %4679 = vmatprep.subr.mxu0 0.0
  %4680 = vmatpush1.msra.mxu0 0.0
  %4681 = vmatprep.subr.mxu0 0.0
  %4682 = vmatpush1.msra.mxu0 0.0
  %4683 = vmatprep.subr.mxu0 0.0
  %4684 = vmatpush1.msra.mxu0 0.0
  %4685 = vmatprep.subr.mxu0 0.0
  %4686 = vmatpush1.msra.mxu0 0.0
  %4687 = vmatprep.subr.mxu0 0.0
  %4688 = vmatpush1.msra.mxu0 0.0
  %4689 = vmatprep.subr.mxu0 0.0
  %4690 = vmatpush1.msra.mxu0 0.0
  %4691 = vmatprep.subr.mxu0 0.0
  %4692 = vmatpush1.msra.mxu0 0.0
  %4693 = vmatprep.subr.mxu0 0.0
  %4694 = vmatpush1.msra.mxu0 0.0
  %4695 = vmatprep.mubr.f32.mxu0 0.0
  %4696 = vmatmul.mubr.f32.gmra.mrb[0].mxu0 %v4629
  %v4697 = vpop.f32.mrb[0].mxu0
  %v4698 = vadd.f32 %v320, %v4697
  %v4699 = vpop.f32.mrb[0].mxu0
  %4700 = vdwg.mxu0
  %v4701 = vmax.f32 %v4698, 0.0
  %v4702 = vtanh.pop %v4701
  %v4703 = vmul.f32 %v4478, %v716
  %v4705 = vsel %vm552, %v4702, 0
  %4707 = vmatprep.subr.mxu0 0.0
  %4708 = vmatpush1.msra.mxu0 %v162
  %4709 = vmatprep.subr.mxu0 0.0
  %4710 = vmatpush1.msra.mxu0 %v163
  %4711 = vmatprep.subr.mxu0 0.0
  %4712 = vmatpush1.msra.mxu0 %v164
  %4713 = vmatprep.subr.mxu0 0.0
  %4714 = vmatpush1.msra.mxu0 %v165
  %4715 = vmatprep.subr.mxu0 0.0
  %4716 = vmatpush1.msra.mxu0 %v166
  %4717 = vmatprep.subr.mxu0 0.0
  %4718 = vmatpush1.msra.mxu0 %v167
  %4719 = vmatprep.subr.mxu0 0.0
  %4720 = vmatpush1.msra.mxu0 %v168
  %4721 = vmatprep.subr.mxu0 0.0
  %4722 = vmatpush1.msra.mxu0 %v169
  %4723 = vmatprep.subr.mxu0 0.0
  %4724 = vmatpush1.msra.mxu0 %v170
  %4725 = vmatprep.subr.mxu0 0.0
  %4726 = vmatpush1.msra.mxu0 %v171
  %4727 = vmatprep.subr.mxu0 0.0
  %4728 = vmatpush1.msra.mxu0 %v172
  %4729 = vmatprep.subr.mxu0 0.0
  %4730 = vmatpush1.msra.mxu0 %v173
  %4731 = vmatprep.subr.mxu0 0.0
  %4732 = vmatpush1.msra.mxu0 %v723
  %4733 = vmatprep.subr.mxu0 0.0
  %4734 = vmatpush1.msra.mxu0 0.0
  %4735 = vmatprep.subr.mxu0 0.0
  %4736 = vmatpush1.msra.mxu0 0.0
  %4737 = vmatprep.subr.mxu0 0.0
  %4738 = vmatpush1.msra.mxu0 0.0
  %4739 = vmatprep.subr.mxu0 0.0
  %4740 = vmatpush1.msra.mxu0 0.0
  %4741 = vmatprep.subr.mxu0 0.0
  %4742 = vmatpush1.msra.mxu0 0.0
  %4743 = vmatprep.subr.mxu0 0.0
  %4744 = vmatpush1.msra.mxu0 0.0
  %4745 = vmatprep.subr.mxu0 0.0
  %4746 = vmatpush1.msra.mxu0 0.0
  %4747 = vmatprep.subr.mxu0 0.0
  %4748 = vmatpush1.msra.mxu0 0.0
  %4749 = vmatprep.subr.mxu0 0.0
  %4750 = vmatpush1.msra.mxu0 0.0
  %4751 = vmatprep.subr.mxu0 0.0
  %4752 = vmatpush1.msra.mxu0 0.0
  %4753 = vmatprep.subr.mxu0 0.0
  %4754 = vmatpush1.msra.mxu0 0.0
  %4755 = vmatprep.subr.mxu0 0.0
  %4756 = vmatpush1.msra.mxu0 0.0
  %4757 = vmatprep.subr.mxu0 0.0
  %4758 = vmatpush1.msra.mxu0 0.0
  %4759 = vmatprep.subr.mxu0 0.0
  %4760 = vmatpush1.msra.mxu0 0.0
  %4761 = vmatprep.subr.mxu0 0.0
  %4762 = vmatpush1.msra.mxu0 0.0
  %4763 = vmatprep.subr.mxu0 0.0
  %4764 = vmatpush1.msra.mxu0 0.0
  %4765 = vmatprep.subr.mxu0 0.0
  %4766 = vmatpush1.msra.mxu0 0.0
  %4767 = vmatprep.subr.mxu0 0.0
  %4768 = vmatpush1.msra.mxu0 0.0
  %4769 = vmatprep.subr.mxu0 0.0
  %4770 = vmatpush1.msra.mxu0 0.0
  %4771 = vmatprep.mubr.f32.mxu0 0.0
  %4772 = vmatmul.mubr.f32.gmra.mrb[0].mxu0 %v4705
  %v4773 = vpop.f32.mrb[0].mxu0
  %v4774 = vadd.f32 %v4703, %v4773
  %v4775 = vpop.f32.mrb[0].mxu0
  %4776 = vdwg.mxu0
  %v4777 = vadd.f32 %v4774, %v452
  %v4778 = vmax.f32 %v4777, 0.0
  %v4779 = vtanh.pop %v4778
  %v4780 = vmul.f32 %v4478, %v802
  %v4782 = vsel %vm377, %v4779, 0
  %4784 = vmatprep.subr.mxu0 0.0
  %4785 = vmatpush1.msra.mxu0 %v176
  %4786 = vmatprep.subr.mxu0 0.0
  %4787 = vmatpush1.msra.mxu0 %v177
  %4788 = vmatprep.subr.mxu0 0.0
  %4789 = vmatpush1.msra.mxu0 %v178
  %4790 = vmatprep.subr.mxu0 0.0
  %4791 = vmatpush1.msra.mxu0 %v179
  %4792 = vmatprep.subr.mxu0 0.0
  %4793 = vmatpush1.msra.mxu0 %v180
  %4794 = vmatprep.subr.mxu0 0.0
  %4795 = vmatpush1.msra.mxu0 %v181
  %4796 = vmatprep.subr.mxu0 0.0
  %4797 = vmatpush1.msra.mxu0 %v809
  %4798 = vmatprep.subr.mxu0 0.0
  %4799 = vmatpush1.msra.mxu0 0.0
  %4800 = vmatprep.subr.mxu0 0.0
  %4801 = vmatpush1.msra.mxu0 0.0
  %4802 = vmatprep.subr.mxu0 0.0
  %4803 = vmatpush1.msra.mxu0 0.0
  %4804 = vmatprep.subr.mxu0 0.0
  %4805 = vmatpush1.msra.mxu0 0.0
  %4806 = vmatprep.subr.mxu0 0.0
  %4807 = vmatpush1.msra.mxu0 0.0
  %4808 = vmatprep.subr.mxu0 0.0
  %4809 = vmatpush1.msra.mxu0 0.0
  %4810 = vmatprep.subr.mxu0 0.0
  %4811 = vmatpush1.msra.mxu0 0.0
  %4812 = vmatprep.subr.mxu0 0.0
  %4813 = vmatpush1.msra.mxu0 0.0
  %4814 = vmatprep.subr.mxu0 0.0
  %4815 = vmatpush1.msra.mxu0 0.0
  %4816 = vmatprep.subr.mxu0 0.0
  %4817 = vmatpush1.msra.mxu0 0.0
  %4818 = vmatprep.subr.mxu0 0.0
  %4819 = vmatpush1.msra.mxu0 0.0
  %4820 = vmatprep.subr.mxu0 0.0
  %4821 = vmatpush1.msra.mxu0 0.0
  %4822 = vmatprep.subr.mxu0 0.0
  %4823 = vmatpush1.msra.mxu0 0.0
  %4824 = vmatprep.subr.mxu0 0.0
  %4825 = vmatpush1.msra.mxu0 0.0
  %4826 = vmatprep.subr.mxu0 0.0
  %4827 = vmatpush1.msra.mxu0 0.0
  %4828 = vmatprep.subr.mxu0 0.0
  %4829 = vmatpush1.msra.mxu0 0.0
  %4830 = vmatprep.subr.mxu0 0.0
  %4831 = vmatpush1.msra.mxu0 0.0
  %4832 = vmatprep.subr.mxu0 0.0
  %4833 = vmatpush1.msra.mxu0 0.0
  %4834 = vmatprep.subr.mxu0 0.0
  %4835 = vmatpush1.msra.mxu0 0.0
  %4836 = vmatprep.subr.mxu0 0.0
  %4837 = vmatpush1.msra.mxu0 0.0
  %4838 = vmatprep.subr.mxu0 0.0
  %4839 = vmatpush1.msra.mxu0 0.0
  %4840 = vmatprep.subr.mxu0 0.0
  %4841 = vmatpush1.msra.mxu0 0.0
  %4842 = vmatprep.subr.mxu0 0.0
  %4843 = vmatpush1.msra.mxu0 0.0
  %4844 = vmatprep.subr.mxu0 0.0
  %4845 = vmatpush1.msra.mxu0 0.0
  %4846 = vmatprep.subr.mxu0 0.0
  %4847 = vmatpush1.msra.mxu0 0.0
  %4848 = vmatprep.mubr.f32.mxu0 0.0
  %4849 = vmatmul.mubr.f32.gmra.mrb[0].mxu0 %v4782
  %v4850 = vpop.f32.mrb[0].mxu0
  %v4851 = vadd.f32 %v4780, %v4850
  %v4852 = vpop.f32.mrb[0].mxu0
  %4853 = vdwg.mxu0
  %v4854 = vadd.f32 %v4851, %v327
  %v4855 = vmax.f32 %v4854, 0.0
  %v4856 = vtanh.pop %v4855
  %4857 = vrot.lane.b32.xlu0 %v4779, 50
  %v4858 = vpop.permute.xlu0 %4857
  %v4860 = vsel %vm377, %v4856, %v4858
  %v4861 = vmul.f32 %v4478, %v892
  %v4863 = vsel %vm552, %v4860, 0
  %4865 = vmatprep.subr.mxu0 0.0
  %4866 = vmatpush1.msra.mxu0 %v184
  %4867 = vmatprep.subr.mxu0 0.0
  %4868 = vmatpush1.msra.mxu0 %v185
  %4869 = vmatprep.subr.mxu0 0.0
  %4870 = vmatpush1.msra.mxu0 %v186
  %4871 = vmatprep.subr.mxu0 0.0
  %4872 = vmatpush1.msra.mxu0 %v187
  %4873 = vmatprep.subr.mxu0 0.0
  %4874 = vmatpush1.msra.mxu0 %v188
  %4875 = vmatprep.subr.mxu0 0.0
  %4876 = vmatpush1.msra.mxu0 %v189
  %4877 = vmatprep.subr.mxu0 0.0
  %4878 = vmatpush1.msra.mxu0 %v190
  %4879 = vmatprep.subr.mxu0 0.0
  %4880 = vmatpush1.msra.mxu0 %v191
  %4881 = vmatprep.subr.mxu0 0.0
  %4882 = vmatpush1.msra.mxu0 %v192
  %4883 = vmatprep.subr.mxu0 0.0
  %4884 = vmatpush1.msra.mxu0 %v193
  %4885 = vmatprep.subr.mxu0 0.0
  %4886 = vmatpush1.msra.mxu0 %v194
  %4887 = vmatprep.subr.mxu0 0.0
  %4888 = vmatpush1.msra.mxu0 %v195
  %4889 = vmatprep.subr.mxu0 0.0
  %4890 = vmatpush1.msra.mxu0 %v899
  %4891 = vmatprep.subr.mxu0 0.0
  %4892 = vmatpush1.msra.mxu0 0.0
  %4893 = vmatprep.subr.mxu0 0.0
  %4894 = vmatpush1.msra.mxu0 0.0
  %4895 = vmatprep.subr.mxu0 0.0
  %4896 = vmatpush1.msra.mxu0 0.0
  %4897 = vmatprep.subr.mxu0 0.0
  %4898 = vmatpush1.msra.mxu0 0.0
  %4899 = vmatprep.subr.mxu0 0.0
  %4900 = vmatpush1.msra.mxu0 0.0
  %4901 = vmatprep.subr.mxu0 0.0
  %4902 = vmatpush1.msra.mxu0 0.0
  %4903 = vmatprep.subr.mxu0 0.0
  %4904 = vmatpush1.msra.mxu0 0.0
  %4905 = vmatprep.subr.mxu0 0.0
  %4906 = vmatpush1.msra.mxu0 0.0
  %4907 = vmatprep.subr.mxu0 0.0
  %4908 = vmatpush1.msra.mxu0 0.0
  %4909 = vmatprep.subr.mxu0 0.0
  %4910 = vmatpush1.msra.mxu0 0.0
  %4911 = vmatprep.subr.mxu0 0.0
  %4912 = vmatpush1.msra.mxu0 0.0
  %4913 = vmatprep.subr.mxu0 0.0
  %4914 = vmatpush1.msra.mxu0 0.0
  %4915 = vmatprep.subr.mxu0 0.0
  %4916 = vmatpush1.msra.mxu0 0.0
  %4917 = vmatprep.subr.mxu0 0.0
  %4918 = vmatpush1.msra.mxu0 0.0
  %4919 = vmatprep.subr.mxu0 0.0
  %4920 = vmatpush1.msra.mxu0 0.0
  %4921 = vmatprep.subr.mxu0 0.0
  %4922 = vmatpush1.msra.mxu0 0.0
  %4923 = vmatprep.subr.mxu0 0.0
  %4924 = vmatpush1.msra.mxu0 0.0
  %4925 = vmatprep.subr.mxu0 0.0
  %4926 = vmatpush1.msra.mxu0 0.0
  %4927 = vmatprep.subr.mxu0 0.0
  %4928 = vmatpush1.msra.mxu0 0.0
  %4929 = vmatprep.mubr.f32.mxu0 0.0
  %4930 = vmatmul.mubr.f32.gmra.mrb[0].mxu0 %v4863
  %v4931 = vpop.f32.mrb[0].mxu0
  %v4932 = vadd.f32 %v4861, %v4931
  %v4933 = vpop.f32.mrb[0].mxu0
  %4934 = vdwg.mxu0
  %v4935 = vadd.f32 %v4932, %v334
  %v4936 = vmax.f32 %v4935, 0.0
  %v4937 = vtanh.pop %v4936
  %4938 = vrot.lane.b32.xlu0 %v4461, 50
  %v4939 = vpop.permute.xlu0 %4938
  %v4941 = vsel %vm377, %v4937, %v4939
  %v4942 = vmul.f32 %v4478, %v979
  %v4944 = vsel %vm552, %v4941, 0
  %4946 = vmatprep.subr.mxu0 0.0
  %4947 = vmatpush1.msra.mxu0 %v198
  %4948 = vmatprep.subr.mxu0 0.0
  %4949 = vmatpush1.msra.mxu0 %v199
  %4950 = vmatprep.subr.mxu0 0.0
  %4951 = vmatpush1.msra.mxu0 %v200
  %4952 = vmatprep.subr.mxu0 0.0
  %4953 = vmatpush1.msra.mxu0 %v201
  %4954 = vmatprep.subr.mxu0 0.0
  %4955 = vmatpush1.msra.mxu0 %v202
  %4956 = vmatprep.subr.mxu0 0.0
  %4957 = vmatpush1.msra.mxu0 %v203
  %4958 = vmatprep.subr.mxu0 0.0
  %4959 = vmatpush1.msra.mxu0 %v204
  %4960 = vmatprep.subr.mxu0 0.0
  %4961 = vmatpush1.msra.mxu0 %v205
  %4962 = vmatprep.subr.mxu0 0.0
  %4963 = vmatpush1.msra.mxu0 %v206
  %4964 = vmatprep.subr.mxu0 0.0
  %4965 = vmatpush1.msra.mxu0 %v207
  %4966 = vmatprep.subr.mxu0 0.0
  %4967 = vmatpush1.msra.mxu0 %v208
  %4968 = vmatprep.subr.mxu0 0.0
  %4969 = vmatpush1.msra.mxu0 %v209
  %4970 = vmatprep.subr.mxu0 0.0
  %4971 = vmatpush1.msra.mxu0 %v986
  %4972 = vmatprep.subr.mxu0 0.0
  %4973 = vmatpush1.msra.mxu0 0.0
  %4974 = vmatprep.subr.mxu0 0.0
  %4975 = vmatpush1.msra.mxu0 0.0
  %4976 = vmatprep.subr.mxu0 0.0
  %4977 = vmatpush1.msra.mxu0 0.0
  %4978 = vmatprep.subr.mxu0 0.0
  %4979 = vmatpush1.msra.mxu0 0.0
  %4980 = vmatprep.subr.mxu0 0.0
  %4981 = vmatpush1.msra.mxu0 0.0
  %4982 = vmatprep.subr.mxu0 0.0
  %4983 = vmatpush1.msra.mxu0 0.0
  %4984 = vmatprep.subr.mxu0 0.0
  %4985 = vmatpush1.msra.mxu0 0.0
  %4986 = vmatprep.subr.mxu0 0.0
  %4987 = vmatpush1.msra.mxu0 0.0
  %4988 = vmatprep.subr.mxu0 0.0
  %4989 = vmatpush1.msra.mxu0 0.0
  %4990 = vmatprep.subr.mxu0 0.0
  %4991 = vmatpush1.msra.mxu0 0.0
  %4992 = vmatprep.subr.mxu0 0.0
  %4993 = vmatpush1.msra.mxu0 0.0
  %4994 = vmatprep.subr.mxu0 0.0
  %4995 = vmatpush1.msra.mxu0 0.0
  %4996 = vmatprep.subr.mxu0 0.0
  %4997 = vmatpush1.msra.mxu0 0.0
  %4998 = vmatprep.subr.mxu0 0.0
  %4999 = vmatpush1.msra.mxu0 0.0
  %5000 = vmatprep.subr.mxu0 0.0
  %5001 = vmatpush1.msra.mxu0 0.0
  %5002 = vmatprep.subr.mxu0 0.0
  %5003 = vmatpush1.msra.mxu0 0.0
  %5004 = vmatprep.subr.mxu0 0.0
  %5005 = vmatpush1.msra.mxu0 0.0
  %5006 = vmatprep.subr.mxu0 0.0
  %5007 = vmatpush1.msra.mxu0 0.0
  %5008 = vmatprep.subr.mxu0 0.0
  %5009 = vmatpush1.msra.mxu0 0.0
  %5010 = vmatprep.mubr.f32.mxu0 0.0
  %5011 = vmatmul.mubr.f32.gmra.mrb[0].mxu0 %v4944
  %v5012 = vpop.f32.mrb[0].mxu0
  %v5013 = vadd.f32 %v4942, %v5012
  %v5014 = vpop.f32.mrb[0].mxu0
  %5015 = vdwg.mxu0
  %v5016 = vadd.f32 %v5013, %v341
  %v5017 = vmax.f32 %v5016, 0.0
  %v5018 = vtanh.pop %v5017
  %5019 = vrot.lane.b32.xlu0 %v3916, 50
  %v5020 = vpop.permute.xlu0 %5019
  %v5022 = vsel %vm377, %v5018, %v5020
  %v5023 = vmul.f32 %v4478, %v1066
  %v5024 = vmul.f32 %v4478, %v1070
  %v5025 = vsel %vm1075, %v5020, 0
  %5027 = vmatprep.subr.mxu0 %v213
  %5028 = vmatpush1.msra.mxu0 %v212
  %5029 = vmatprep.subr.mxu0 %v215
  %5030 = vmatpush1.msra.mxu0 %v214
  %5031 = vmatprep.subr.mxu0 %v217
  %5032 = vmatpush1.msra.mxu0 %v216
  %5033 = vmatprep.subr.mxu0 %v219
  %5034 = vmatpush1.msra.mxu0 %v218
  %5035 = vmatprep.subr.mxu0 %v221
  %5036 = vmatpush1.msra.mxu0 %v220
  %5037 = vmatprep.subr.mxu0 %v223
  %5038 = vmatpush1.msra.mxu0 %v222
  %5039 = vmatprep.subr.mxu0 %v225
  %5040 = vmatpush1.msra.mxu0 %v224
  %5041 = vmatprep.subr.mxu0 %v227
  %5042 = vmatpush1.msra.mxu0 %v226
  %5043 = vmatprep.subr.mxu0 %v229
  %5044 = vmatpush1.msra.mxu0 %v228
  %5045 = vmatprep.subr.mxu0 %v231
  %5046 = vmatpush1.msra.mxu0 %v230
  %5047 = vmatprep.subr.mxu0 %v233
  %5048 = vmatpush1.msra.mxu0 %v232
  %5049 = vmatprep.subr.mxu0 %v235
  %5050 = vmatpush1.msra.mxu0 %v234
  %5051 = vmatprep.subr.mxu0 %v237
  %5052 = vmatpush1.msra.mxu0 %v236
  %5053 = vmatprep.subr.mxu0 %v239
  %5054 = vmatpush1.msra.mxu0 %v238
  %5055 = vmatprep.subr.mxu0 %v241
  %5056 = vmatpush1.msra.mxu0 %v240
  %5057 = vmatprep.subr.mxu0 %v243
  %5058 = vmatpush1.msra.mxu0 %v242
  %5059 = vmatprep.subr.mxu0 %v245
  %5060 = vmatpush1.msra.mxu0 %v244
  %5061 = vmatprep.subr.mxu0 %v247
  %5062 = vmatpush1.msra.mxu0 %v246
  %5063 = vmatprep.subr.mxu0 %v1084
  %5064 = vmatpush1.msra.mxu0 %v1081
  %5065 = vmatprep.subr.mxu0 0.0
  %5066 = vmatpush1.msra.mxu0 0.0
  %5067 = vmatprep.subr.mxu0 0.0
  %5068 = vmatpush1.msra.mxu0 0.0
  %5069 = vmatprep.subr.mxu0 0.0
  %5070 = vmatpush1.msra.mxu0 0.0
  %5071 = vmatprep.subr.mxu0 0.0
  %5072 = vmatpush1.msra.mxu0 0.0
  %5073 = vmatprep.subr.mxu0 0.0
  %5074 = vmatpush1.msra.mxu0 0.0
  %5075 = vmatprep.subr.mxu0 0.0
  %5076 = vmatpush1.msra.mxu0 0.0
  %5077 = vmatprep.subr.mxu0 0.0
  %5078 = vmatpush1.msra.mxu0 0.0
  %5079 = vmatprep.subr.mxu0 0.0
  %5080 = vmatpush1.msra.mxu0 0.0
  %5081 = vmatprep.subr.mxu0 0.0
  %5082 = vmatpush1.msra.mxu0 0.0
  %5083 = vmatprep.subr.mxu0 0.0
  %5084 = vmatpush1.msra.mxu0 0.0
  %5085 = vmatprep.subr.mxu0 0.0
  %5086 = vmatpush1.msra.mxu0 0.0
  %5087 = vmatprep.subr.mxu0 0.0
  %5088 = vmatpush1.msra.mxu0 0.0
  %5089 = vmatprep.subr.mxu0 0.0
  %5090 = vmatpush1.msra.mxu0 0.0
  %5091 = vmatprep.mubr.f32.mxu0 %v5025
  %5092 = vmatmul.mubr.f32.gmra.mrb[0].mxu0 %v5022
  %v5093 = vpop.f32.mrb[0].mxu0
  %v5094 = vadd.f32 %v5023, %v5093
  %v5095 = vpop.f32.mrb[0].mxu0
  %v5096 = vadd.f32 %v5024, %v5095
  %5097 = vdwg.mxu0
  %5098 = vmatprep.subr.mxu0 %v252
  %5099 = vmatpush1.msra.mxu0 %v251
  %5100 = vmatprep.subr.mxu0 %v254
  %5101 = vmatpush1.msra.mxu0 %v253
  %5102 = vmatprep.subr.mxu0 %v256
  %5103 = vmatpush1.msra.mxu0 %v255
  %5104 = vmatprep.subr.mxu0 %v258
  %5105 = vmatpush1.msra.mxu0 %v257
  %5106 = vmatprep.subr.mxu0 %v260
  %5107 = vmatpush1.msra.mxu0 %v259
  %5108 = vmatprep.subr.mxu0 %v262
  %5109 = vmatpush1.msra.mxu0 %v261
  %5110 = vmatprep.subr.mxu0 %v264
  %5111 = vmatpush1.msra.mxu0 %v263
  %5112 = vmatprep.subr.mxu0 %v266
  %5113 = vmatpush1.msra.mxu0 %v265
  %5114 = vmatprep.subr.mxu0 %v268
  %5115 = vmatpush1.msra.mxu0 %v267
  %5116 = vmatprep.subr.mxu0 %v270
  %5117 = vmatpush1.msra.mxu0 %v269
  %5118 = vmatprep.subr.mxu0 %v272
  %5119 = vmatpush1.msra.mxu0 %v271
  %5120 = vmatprep.subr.mxu0 %v274
  %5121 = vmatpush1.msra.mxu0 %v273
  %5122 = vmatprep.subr.mxu0 %v276
  %5123 = vmatpush1.msra.mxu0 %v275
  %5124 = vmatprep.subr.mxu0 %v278
  %5125 = vmatpush1.msra.mxu0 %v277
  %5126 = vmatprep.subr.mxu0 %v280
  %5127 = vmatpush1.msra.mxu0 %v279
  %5128 = vmatprep.subr.mxu0 %v282
  %5129 = vmatpush1.msra.mxu0 %v281
  %5130 = vmatprep.subr.mxu0 %v284
  %5131 = vmatpush1.msra.mxu0 %v283
  %5132 = vmatprep.subr.mxu0 %v286
  %5133 = vmatpush1.msra.mxu0 %v285
  %5134 = vmatprep.subr.mxu0 %v1164
  %5135 = vmatpush1.msra.mxu0 %v1161
  %5136 = vmatprep.subr.mxu0 0.0
  %5137 = vmatpush1.msra.mxu0 0.0
  %5138 = vmatprep.subr.mxu0 0.0
  %5139 = vmatpush1.msra.mxu0 0.0
  %5140 = vmatprep.subr.mxu0 0.0
  %5141 = vmatpush1.msra.mxu0 0.0
  %5142 = vmatprep.subr.mxu0 0.0
  %5143 = vmatpush1.msra.mxu0 0.0
  %5144 = vmatprep.subr.mxu0 0.0
  %5145 = vmatpush1.msra.mxu0 0.0
  %5146 = vmatprep.subr.mxu0 0.0
  %5147 = vmatpush1.msra.mxu0 0.0
  %5148 = vmatprep.subr.mxu0 0.0
  %5149 = vmatpush1.msra.mxu0 0.0
  %5150 = vmatprep.subr.mxu0 0.0
  %5151 = vmatpush1.msra.mxu0 0.0
  %5152 = vmatprep.subr.mxu0 0.0
  %5153 = vmatpush1.msra.mxu0 0.0
  %5154 = vmatprep.subr.mxu0 0.0
  %5155 = vmatpush1.msra.mxu0 0.0
  %5156 = vmatprep.subr.mxu0 0.0
  %5157 = vmatpush1.msra.mxu0 0.0
  %5158 = vmatprep.subr.mxu0 0.0
  %5159 = vmatpush1.msra.mxu0 0.0
  %5160 = vmatprep.subr.mxu0 0.0
  %5161 = vmatpush1.msra.mxu0 0.0
  %5162 = vmatprep.mubr.f32.mxu0 %v4392
  %5163 = vmatmul.mubr.f32.gmra.mrb[0].mxu0 %v4389
  %v5164 = vpop.f32.mrb[0].mxu0
  %v5165 = vadd.f32 0.0, %v5164
  %v5166 = vpop.f32.mrb[0].mxu0
  %v5167 = vadd.f32 0.0, %v5166
  %5168 = vdwg.mxu0
  %v5169 = vadd.f32 %v5094, %v5165
  %v5170 = vadd.f32 %v5096, %v5167
  %v5171 = vadd.f32 %v5169, %v348
  %v5172 = vadd.f32 %v5170, %v352
  %v5173 = vmax.f32 %v5171, 0.0
  %v5174 = vmax.f32 %v5172, 0.0
  %v5175 = vtanh.pop %v5173
  %v5176 = vtanh.pop %v5174
  %v5178 = vsel %vm1075, %v5176, 0
  %5180 = vmatprep.subr.mxu0 0.0
  %5181 = vmatpush1.msra.mxu0 %v289
  %5182 = vmatprep.subr.mxu0 0.0
  %5183 = vmatpush1.msra.mxu0 %v290
  %5184 = vmatprep.subr.mxu0 0.0
  %5185 = vmatpush1.msra.mxu0 %v291
  %5186 = vmatprep.subr.mxu0 0.0
  %5187 = vmatpush1.msra.mxu0 %v292
  %5188 = vmatprep.subr.mxu0 0.0
  %5189 = vmatpush1.msra.mxu0 %v293
  %5190 = vmatprep.subr.mxu0 0.0
  %5191 = vmatpush1.msra.mxu0 %v294
  %5192 = vmatprep.subr.mxu0 0.0
  %5193 = vmatpush1.msra.mxu0 %v295
  %5194 = vmatprep.subr.mxu0 0.0
  %5195 = vmatpush1.msra.mxu0 %v296
  %5196 = vmatprep.subr.mxu0 0.0
  %5197 = vmatpush1.msra.mxu0 %v297
  %5198 = vmatprep.subr.mxu0 0.0
  %5199 = vmatpush1.msra.mxu0 %v298
  %5200 = vmatprep.subr.mxu0 0.0
  %5201 = vmatpush1.msra.mxu0 %v299
  %5202 = vmatprep.subr.mxu0 0.0
  %5203 = vmatpush1.msra.mxu0 %v300
  %5204 = vmatprep.subr.mxu0 0.0
  %5205 = vmatpush1.msra.mxu0 %v301
  %5206 = vmatprep.subr.mxu0 0.0
  %5207 = vmatpush1.msra.mxu0 %v302
  %5208 = vmatprep.subr.mxu0 0.0
  %5209 = vmatpush1.msra.mxu0 %v303
  %5210 = vmatprep.subr.mxu0 0.0
  %5211 = vmatpush1.msra.mxu0 %v304
  %5212 = vmatprep.subr.mxu0 0.0
  %5213 = vmatpush1.msra.mxu0 %v305
  %5214 = vmatprep.subr.mxu0 0.0
  %5215 = vmatpush1.msra.mxu0 %v306
  %5216 = vmatprep.subr.mxu0 0.0
  %5217 = vmatpush1.msra.mxu0 %v1249
  %5218 = vmatprep.subr.mxu0 0.0
  %5219 = vmatpush1.msra.mxu0 0.0
  %5220 = vmatprep.subr.mxu0 0.0
  %5221 = vmatpush1.msra.mxu0 0.0
  %5222 = vmatprep.subr.mxu0 0.0
  %5223 = vmatpush1.msra.mxu0 0.0
  %5224 = vmatprep.subr.mxu0 0.0
  %5225 = vmatpush1.msra.mxu0 0.0
  %5226 = vmatprep.subr.mxu0 0.0
  %5227 = vmatpush1.msra.mxu0 0.0
  %5228 = vmatprep.subr.mxu0 0.0
  %5229 = vmatpush1.msra.mxu0 0.0
  %5230 = vmatprep.subr.mxu0 0.0
  %5231 = vmatpush1.msra.mxu0 0.0
  %5232 = vmatprep.subr.mxu0 0.0
  %5233 = vmatpush1.msra.mxu0 0.0
  %5234 = vmatprep.subr.mxu0 0.0
  %5235 = vmatpush1.msra.mxu0 0.0
  %5236 = vmatprep.subr.mxu0 0.0
  %5237 = vmatpush1.msra.mxu0 0.0
  %5238 = vmatprep.subr.mxu0 0.0
  %5239 = vmatpush1.msra.mxu0 0.0
  %5240 = vmatprep.subr.mxu0 0.0
  %5241 = vmatpush1.msra.mxu0 0.0
  %5242 = vmatprep.subr.mxu0 0.0
  %5243 = vmatpush1.msra.mxu0 0.0
  %5244 = vmatprep.mubr.f32.mxu0 %v5178
  %5245 = vmatmul.mubr.f32.gmra.mrb[0].mxu0 %v5175
  %v5246 = vpop.f32.mrb[0].mxu0
  %v5247 = vadd.f32 %v360, %v5246
  %v5248 = vpop.f32.mrb[0].mxu0
  %5249 = vdwg.mxu0
  %s5250 = scalar_lea.vmem %s61, 40
  %5251 = vst.msk [vmem:[%s5250] sm:$0xff] %vm377, %v5247
  %s5252 = scalar_lea.vmem %s1, 48
  %v5253 = vld [vmem:[%s5252] sm:$0xff]
  %s5254 = scalar_lea.vmem %s3, 48
  %v5255 = vld [vmem:[%s5254] sm:$0xff]
  %5257 = vrot.lane.b32.xlu0 %v5247, 15
  %v5258 = vpop.permute.xlu0 %5257
  %v5260 = vsel %vm460, %v5253, %v5258
  %5262 = vset.pattern.permute.xlu0 0
  %5263 = vperm.xlu0 %5262, %v5255
  %v5264 = vpop.permute.xlu0 %5263
  %v5266 = vmul.f32 %v5264, %v471
  %v5268 = vsel %vm474, %v5260, 0
  %5270 = vmatprep.subr.mxu0 0.0
  %5271 = vmatpush1.msra.mxu0 %v126
  %5272 = vmatprep.subr.mxu0 0.0
  %5273 = vmatpush1.msra.mxu0 %v127
  %5274 = vmatprep.subr.mxu0 0.0
  %5275 = vmatpush1.msra.mxu0 %v128
  %5276 = vmatprep.subr.mxu0 0.0
  %5277 = vmatpush1.msra.mxu0 %v129
  %5278 = vmatprep.subr.mxu0 0.0
  %5279 = vmatpush1.msra.mxu0 %v130
  %5280 = vmatprep.subr.mxu0 0.0
  %5281 = vmatpush1.msra.mxu0 %v131
  %5282 = vmatprep.subr.mxu0 0.0
  %5283 = vmatpush1.msra.mxu0 %v132
  %5284 = vmatprep.subr.mxu0 0.0
  %5285 = vmatpush1.msra.mxu0 %v133
  %5286 = vmatprep.subr.mxu0 0.0
  %5287 = vmatpush1.msra.mxu0 %v480
  %5288 = vmatprep.subr.mxu0 0.0
  %5289 = vmatpush1.msra.mxu0 0.0
  %5290 = vmatprep.subr.mxu0 0.0
  %5291 = vmatpush1.msra.mxu0 0.0
  %5292 = vmatprep.subr.mxu0 0.0
  %5293 = vmatpush1.msra.mxu0 0.0
  %5294 = vmatprep.subr.mxu0 0.0
  %5295 = vmatpush1.msra.mxu0 0.0
  %5296 = vmatprep.subr.mxu0 0.0
  %5297 = vmatpush1.msra.mxu0 0.0
  %5298 = vmatprep.subr.mxu0 0.0
  %5299 = vmatpush1.msra.mxu0 0.0
  %5300 = vmatprep.subr.mxu0 0.0
  %5301 = vmatpush1.msra.mxu0 0.0
  %5302 = vmatprep.subr.mxu0 0.0
  %5303 = vmatpush1.msra.mxu0 0.0
  %5304 = vmatprep.subr.mxu0 0.0
  %5305 = vmatpush1.msra.mxu0 0.0
  %5306 = vmatprep.subr.mxu0 0.0
  %5307 = vmatpush1.msra.mxu0 0.0
  %5308 = vmatprep.subr.mxu0 0.0
  %5309 = vmatpush1.msra.mxu0 0.0
  %5310 = vmatprep.subr.mxu0 0.0
  %5311 = vmatpush1.msra.mxu0 0.0
  %5312 = vmatprep.subr.mxu0 0.0
  %5313 = vmatpush1.msra.mxu0 0.0
  %5314 = vmatprep.subr.mxu0 0.0
  %5315 = vmatpush1.msra.mxu0 0.0
  %5316 = vmatprep.subr.mxu0 0.0
  %5317 = vmatpush1.msra.mxu0 0.0
  %5318 = vmatprep.subr.mxu0 0.0
  %5319 = vmatpush1.msra.mxu0 0.0
  %5320 = vmatprep.subr.mxu0 0.0
  %5321 = vmatpush1.msra.mxu0 0.0
  %5322 = vmatprep.subr.mxu0 0.0
  %5323 = vmatpush1.msra.mxu0 0.0
  %5324 = vmatprep.subr.mxu0 0.0
  %5325 = vmatpush1.msra.mxu0 0.0
  %5326 = vmatprep.subr.mxu0 0.0
  %5327 = vmatpush1.msra.mxu0 0.0
  %5328 = vmatprep.subr.mxu0 0.0
  %5329 = vmatpush1.msra.mxu0 0.0
  %5330 = vmatprep.subr.mxu0 0.0
  %5331 = vmatpush1.msra.mxu0 0.0
  %5332 = vmatprep.subr.mxu0 0.0
  %5333 = vmatpush1.msra.mxu0 0.0
  %5334 = vmatprep.mubr.f32.mxu0 0.0
  %5335 = vmatmul.mubr.f32.gmra.mrb[0].mxu0 %v5268
  %v5336 = vpop.f32.mrb[0].mxu0
  %v5337 = vadd.f32 %v5266, %v5336
  %v5338 = vpop.f32.mrb[0].mxu0
  %5339 = vdwg.mxu0
  %5340 = vmatprep.subr.mxu0 0.0
  %5341 = vmatpush1.msra.mxu0 %v136
  %5342 = vmatprep.subr.mxu0 0.0
  %5343 = vmatpush1.msra.mxu0 %v137
  %5344 = vmatprep.subr.mxu0 0.0
  %5345 = vmatpush1.msra.mxu0 %v138
  %5346 = vmatprep.subr.mxu0 0.0
  %5347 = vmatpush1.msra.mxu0 %v139
  %5348 = vmatprep.subr.mxu0 0.0
  %5349 = vmatpush1.msra.mxu0 %v140
  %5350 = vmatprep.subr.mxu0 0.0
  %5351 = vmatpush1.msra.mxu0 %v141
  %5352 = vmatprep.subr.mxu0 0.0
  %5353 = vmatpush1.msra.mxu0 %v142
  %5354 = vmatprep.subr.mxu0 0.0
  %5355 = vmatpush1.msra.mxu0 %v143
  %5356 = vmatprep.subr.mxu0 0.0
  %5357 = vmatpush1.msra.mxu0 %v144
  %5358 = vmatprep.subr.mxu0 0.0
  %5359 = vmatpush1.msra.mxu0 %v145
  %5360 = vmatprep.subr.mxu0 0.0
  %5361 = vmatpush1.msra.mxu0 %v146
  %5362 = vmatprep.subr.mxu0 0.0
  %5363 = vmatpush1.msra.mxu0 %v147
  %5364 = vmatprep.subr.mxu0 0.0
  %5365 = vmatpush1.msra.mxu0 %v558
  %5366 = vmatprep.subr.mxu0 0.0
  %5367 = vmatpush1.msra.mxu0 0.0
  %5368 = vmatprep.subr.mxu0 0.0
  %5369 = vmatpush1.msra.mxu0 0.0
  %5370 = vmatprep.subr.mxu0 0.0
  %5371 = vmatpush1.msra.mxu0 0.0
  %5372 = vmatprep.subr.mxu0 0.0
  %5373 = vmatpush1.msra.mxu0 0.0
  %5374 = vmatprep.subr.mxu0 0.0
  %5375 = vmatpush1.msra.mxu0 0.0
  %5376 = vmatprep.subr.mxu0 0.0
  %5377 = vmatpush1.msra.mxu0 0.0
  %5378 = vmatprep.subr.mxu0 0.0
  %5379 = vmatpush1.msra.mxu0 0.0
  %5380 = vmatprep.subr.mxu0 0.0
  %5381 = vmatpush1.msra.mxu0 0.0
  %5382 = vmatprep.subr.mxu0 0.0
  %5383 = vmatpush1.msra.mxu0 0.0
  %5384 = vmatprep.subr.mxu0 0.0
  %5385 = vmatpush1.msra.mxu0 0.0
  %5386 = vmatprep.subr.mxu0 0.0
  %5387 = vmatpush1.msra.mxu0 0.0
  %5388 = vmatprep.subr.mxu0 0.0
  %5389 = vmatpush1.msra.mxu0 0.0
  %5390 = vmatprep.subr.mxu0 0.0
  %5391 = vmatpush1.msra.mxu0 0.0
  %5392 = vmatprep.subr.mxu0 0.0
  %5393 = vmatpush1.msra.mxu0 0.0
  %5394 = vmatprep.subr.mxu0 0.0
  %5395 = vmatpush1.msra.mxu0 0.0
  %5396 = vmatprep.subr.mxu0 0.0
  %5397 = vmatpush1.msra.mxu0 0.0
  %5398 = vmatprep.subr.mxu0 0.0
  %5399 = vmatpush1.msra.mxu0 0.0
  %5400 = vmatprep.subr.mxu0 0.0
  %5401 = vmatpush1.msra.mxu0 0.0
  %5402 = vmatprep.subr.mxu0 0.0
  %5403 = vmatpush1.msra.mxu0 0.0
  %5404 = vmatprep.mubr.f32.mxu0 0.0
  %5405 = vmatmul.mubr.f32.gmra.mrb[0].mxu0 %v4629
  %v5406 = vpop.f32.mrb[0].mxu0
  %v5407 = vadd.f32 0.0, %v5406
  %v5408 = vpop.f32.mrb[0].mxu0
  %5409 = vdwg.mxu0
  %v5410 = vadd.f32 %v5337, %v5407
  %v5411 = vadd.f32 %v5410, %v313
  %v5412 = vmax.f32 %v5411, 0.0
  %v5413 = vtanh.pop %v5412
  %v5415 = vsel %vm552, %v5413, 0
  %5417 = vmatprep.subr.mxu0 0.0
  %5418 = vmatpush1.msra.mxu0 %v149
  %5419 = vmatprep.subr.mxu0 0.0
  %5420 = vmatpush1.msra.mxu0 %v150
  %5421 = vmatprep.subr.mxu0 0.0
  %5422 = vmatpush1.msra.mxu0 %v151
  %5423 = vmatprep.subr.mxu0 0.0
  %5424 = vmatpush1.msra.mxu0 %v152
  %5425 = vmatprep.subr.mxu0 0.0
  %5426 = vmatpush1.msra.mxu0 %v153
  %5427 = vmatprep.subr.mxu0 0.0
  %5428 = vmatpush1.msra.mxu0 %v154
  %5429 = vmatprep.subr.mxu0 0.0
  %5430 = vmatpush1.msra.mxu0 %v155
  %5431 = vmatprep.subr.mxu0 0.0
  %5432 = vmatpush1.msra.mxu0 %v156
  %5433 = vmatprep.subr.mxu0 0.0
  %5434 = vmatpush1.msra.mxu0 %v157
  %5435 = vmatprep.subr.mxu0 0.0
  %5436 = vmatpush1.msra.mxu0 %v158
  %5437 = vmatprep.subr.mxu0 0.0
  %5438 = vmatpush1.msra.mxu0 %v159
  %5439 = vmatprep.subr.mxu0 0.0
  %5440 = vmatpush1.msra.mxu0 %v160
  %5441 = vmatprep.subr.mxu0 0.0
  %5442 = vmatpush1.msra.mxu0 %v638
  %5443 = vmatprep.subr.mxu0 0.0
  %5444 = vmatpush1.msra.mxu0 0.0
  %5445 = vmatprep.subr.mxu0 0.0
  %5446 = vmatpush1.msra.mxu0 0.0
  %5447 = vmatprep.subr.mxu0 0.0
  %5448 = vmatpush1.msra.mxu0 0.0
  %5449 = vmatprep.subr.mxu0 0.0
  %5450 = vmatpush1.msra.mxu0 0.0
  %5451 = vmatprep.subr.mxu0 0.0
  %5452 = vmatpush1.msra.mxu0 0.0
  %5453 = vmatprep.subr.mxu0 0.0
  %5454 = vmatpush1.msra.mxu0 0.0
  %5455 = vmatprep.subr.mxu0 0.0
  %5456 = vmatpush1.msra.mxu0 0.0
  %5457 = vmatprep.subr.mxu0 0.0
  %5458 = vmatpush1.msra.mxu0 0.0
  %5459 = vmatprep.subr.mxu0 0.0
  %5460 = vmatpush1.msra.mxu0 0.0
  %5461 = vmatprep.subr.mxu0 0.0
  %5462 = vmatpush1.msra.mxu0 0.0
  %5463 = vmatprep.subr.mxu0 0.0
  %5464 = vmatpush1.msra.mxu0 0.0
  %5465 = vmatprep.subr.mxu0 0.0
  %5466 = vmatpush1.msra.mxu0 0.0
  %5467 = vmatprep.subr.mxu0 0.0
  %5468 = vmatpush1.msra.mxu0 0.0
  %5469 = vmatprep.subr.mxu0 0.0
  %5470 = vmatpush1.msra.mxu0 0.0
  %5471 = vmatprep.subr.mxu0 0.0
  %5472 = vmatpush1.msra.mxu0 0.0
  %5473 = vmatprep.subr.mxu0 0.0
  %5474 = vmatpush1.msra.mxu0 0.0
  %5475 = vmatprep.subr.mxu0 0.0
  %5476 = vmatpush1.msra.mxu0 0.0
  %5477 = vmatprep.subr.mxu0 0.0
  %5478 = vmatpush1.msra.mxu0 0.0
  %5479 = vmatprep.subr.mxu0 0.0
  %5480 = vmatpush1.msra.mxu0 0.0
  %5481 = vmatprep.mubr.f32.mxu0 0.0
  %5482 = vmatmul.mubr.f32.gmra.mrb[0].mxu0 %v5415
  %v5483 = vpop.f32.mrb[0].mxu0
  %v5484 = vadd.f32 %v320, %v5483
  %v5485 = vpop.f32.mrb[0].mxu0
  %5486 = vdwg.mxu0
  %v5487 = vmax.f32 %v5484, 0.0
  %v5488 = vtanh.pop %v5487
  %v5489 = vmul.f32 %v5264, %v716
  %v5491 = vsel %vm552, %v5488, 0
  %5493 = vmatprep.subr.mxu0 0.0
  %5494 = vmatpush1.msra.mxu0 %v162
  %5495 = vmatprep.subr.mxu0 0.0
  %5496 = vmatpush1.msra.mxu0 %v163
  %5497 = vmatprep.subr.mxu0 0.0
  %5498 = vmatpush1.msra.mxu0 %v164
  %5499 = vmatprep.subr.mxu0 0.0
  %5500 = vmatpush1.msra.mxu0 %v165
  %5501 = vmatprep.subr.mxu0 0.0
  %5502 = vmatpush1.msra.mxu0 %v166
  %5503 = vmatprep.subr.mxu0 0.0
  %5504 = vmatpush1.msra.mxu0 %v167
  %5505 = vmatprep.subr.mxu0 0.0
  %5506 = vmatpush1.msra.mxu0 %v168
  %5507 = vmatprep.subr.mxu0 0.0
  %5508 = vmatpush1.msra.mxu0 %v169
  %5509 = vmatprep.subr.mxu0 0.0
  %5510 = vmatpush1.msra.mxu0 %v170
  %5511 = vmatprep.subr.mxu0 0.0
  %5512 = vmatpush1.msra.mxu0 %v171
  %5513 = vmatprep.subr.mxu0 0.0
  %5514 = vmatpush1.msra.mxu0 %v172
  %5515 = vmatprep.subr.mxu0 0.0
  %5516 = vmatpush1.msra.mxu0 %v173
  %5517 = vmatprep.subr.mxu0 0.0
  %5518 = vmatpush1.msra.mxu0 %v723
  %5519 = vmatprep.subr.mxu0 0.0
  %5520 = vmatpush1.msra.mxu0 0.0
  %5521 = vmatprep.subr.mxu0 0.0
  %5522 = vmatpush1.msra.mxu0 0.0
  %5523 = vmatprep.subr.mxu0 0.0
  %5524 = vmatpush1.msra.mxu0 0.0
  %5525 = vmatprep.subr.mxu0 0.0
  %5526 = vmatpush1.msra.mxu0 0.0
  %5527 = vmatprep.subr.mxu0 0.0
  %5528 = vmatpush1.msra.mxu0 0.0
  %5529 = vmatprep.subr.mxu0 0.0
  %5530 = vmatpush1.msra.mxu0 0.0
  %5531 = vmatprep.subr.mxu0 0.0
  %5532 = vmatpush1.msra.mxu0 0.0
  %5533 = vmatprep.subr.mxu0 0.0
  %5534 = vmatpush1.msra.mxu0 0.0
  %5535 = vmatprep.subr.mxu0 0.0
  %5536 = vmatpush1.msra.mxu0 0.0
  %5537 = vmatprep.subr.mxu0 0.0
  %5538 = vmatpush1.msra.mxu0 0.0
  %5539 = vmatprep.subr.mxu0 0.0
  %5540 = vmatpush1.msra.mxu0 0.0
  %5541 = vmatprep.subr.mxu0 0.0
  %5542 = vmatpush1.msra.mxu0 0.0
  %5543 = vmatprep.subr.mxu0 0.0
  %5544 = vmatpush1.msra.mxu0 0.0
  %5545 = vmatprep.subr.mxu0 0.0
  %5546 = vmatpush1.msra.mxu0 0.0
  %5547 = vmatprep.subr.mxu0 0.0
  %5548 = vmatpush1.msra.mxu0 0.0
  %5549 = vmatprep.subr.mxu0 0.0
  %5550 = vmatpush1.msra.mxu0 0.0
  %5551 = vmatprep.subr.mxu0 0.0
  %5552 = vmatpush1.msra.mxu0 0.0
  %5553 = vmatprep.subr.mxu0 0.0
  %5554 = vmatpush1.msra.mxu0 0.0
  %5555 = vmatprep.subr.mxu0 0.0
  %5556 = vmatpush1.msra.mxu0 0.0
  %5557 = vmatprep.mubr.f32.mxu0 0.0
  %5558 = vmatmul.mubr.f32.gmra.mrb[0].mxu0 %v5491
  %v5559 = vpop.f32.mrb[0].mxu0
  %v5560 = vadd.f32 %v5489, %v5559
  %v5561 = vpop.f32.mrb[0].mxu0
  %5562 = vdwg.mxu0
  %v5563 = vadd.f32 %v5560, %v452
  %v5564 = vmax.f32 %v5563, 0.0
  %v5565 = vtanh.pop %v5564
  %v5566 = vmul.f32 %v5264, %v802
  %v5568 = vsel %vm377, %v5565, 0
  %5570 = vmatprep.subr.mxu0 0.0
  %5571 = vmatpush1.msra.mxu0 %v176
  %5572 = vmatprep.subr.mxu0 0.0
  %5573 = vmatpush1.msra.mxu0 %v177
  %5574 = vmatprep.subr.mxu0 0.0
  %5575 = vmatpush1.msra.mxu0 %v178
  %5576 = vmatprep.subr.mxu0 0.0
  %5577 = vmatpush1.msra.mxu0 %v179
  %5578 = vmatprep.subr.mxu0 0.0
  %5579 = vmatpush1.msra.mxu0 %v180
  %5580 = vmatprep.subr.mxu0 0.0
  %5581 = vmatpush1.msra.mxu0 %v181
  %5582 = vmatprep.subr.mxu0 0.0
  %5583 = vmatpush1.msra.mxu0 %v809
  %5584 = vmatprep.subr.mxu0 0.0
  %5585 = vmatpush1.msra.mxu0 0.0
  %5586 = vmatprep.subr.mxu0 0.0
  %5587 = vmatpush1.msra.mxu0 0.0
  %5588 = vmatprep.subr.mxu0 0.0
  %5589 = vmatpush1.msra.mxu0 0.0
  %5590 = vmatprep.subr.mxu0 0.0
  %5591 = vmatpush1.msra.mxu0 0.0
  %5592 = vmatprep.subr.mxu0 0.0
  %5593 = vmatpush1.msra.mxu0 0.0
  %5594 = vmatprep.subr.mxu0 0.0
  %5595 = vmatpush1.msra.mxu0 0.0
  %5596 = vmatprep.subr.mxu0 0.0
  %5597 = vmatpush1.msra.mxu0 0.0
  %5598 = vmatprep.subr.mxu0 0.0
  %5599 = vmatpush1.msra.mxu0 0.0
  %5600 = vmatprep.subr.mxu0 0.0
  %5601 = vmatpush1.msra.mxu0 0.0
  %5602 = vmatprep.subr.mxu0 0.0
  %5603 = vmatpush1.msra.mxu0 0.0
  %5604 = vmatprep.subr.mxu0 0.0
  %5605 = vmatpush1.msra.mxu0 0.0
  %5606 = vmatprep.subr.mxu0 0.0
  %5607 = vmatpush1.msra.mxu0 0.0
  %5608 = vmatprep.subr.mxu0 0.0
  %5609 = vmatpush1.msra.mxu0 0.0
  %5610 = vmatprep.subr.mxu0 0.0
  %5611 = vmatpush1.msra.mxu0 0.0
  %5612 = vmatprep.subr.mxu0 0.0
  %5613 = vmatpush1.msra.mxu0 0.0
  %5614 = vmatprep.subr.mxu0 0.0
  %5615 = vmatpush1.msra.mxu0 0.0
  %5616 = vmatprep.subr.mxu0 0.0
  %5617 = vmatpush1.msra.mxu0 0.0
  %5618 = vmatprep.subr.mxu0 0.0
  %5619 = vmatpush1.msra.mxu0 0.0
  %5620 = vmatprep.subr.mxu0 0.0
  %5621 = vmatpush1.msra.mxu0 0.0
  %5622 = vmatprep.subr.mxu0 0.0
  %5623 = vmatpush1.msra.mxu0 0.0
  %5624 = vmatprep.subr.mxu0 0.0
  %5625 = vmatpush1.msra.mxu0 0.0
  %5626 = vmatprep.subr.mxu0 0.0
  %5627 = vmatpush1.msra.mxu0 0.0
  %5628 = vmatprep.subr.mxu0 0.0
  %5629 = vmatpush1.msra.mxu0 0.0
  %5630 = vmatprep.subr.mxu0 0.0
  %5631 = vmatpush1.msra.mxu0 0.0
  %5632 = vmatprep.subr.mxu0 0.0
  %5633 = vmatpush1.msra.mxu0 0.0
  %5634 = vmatprep.mubr.f32.mxu0 0.0
  %5635 = vmatmul.mubr.f32.gmra.mrb[0].mxu0 %v5568
  %v5636 = vpop.f32.mrb[0].mxu0
  %v5637 = vadd.f32 %v5566, %v5636
  %v5638 = vpop.f32.mrb[0].mxu0
  %5639 = vdwg.mxu0
  %v5640 = vadd.f32 %v5637, %v327
  %v5641 = vmax.f32 %v5640, 0.0
  %v5642 = vtanh.pop %v5641
  %5643 = vrot.lane.b32.xlu0 %v5565, 50
  %v5644 = vpop.permute.xlu0 %5643
  %v5646 = vsel %vm377, %v5642, %v5644
  %v5647 = vmul.f32 %v5264, %v892
  %v5649 = vsel %vm552, %v5646, 0
  %5651 = vmatprep.subr.mxu0 0.0
  %5652 = vmatpush1.msra.mxu0 %v184
  %5653 = vmatprep.subr.mxu0 0.0
  %5654 = vmatpush1.msra.mxu0 %v185
  %5655 = vmatprep.subr.mxu0 0.0
  %5656 = vmatpush1.msra.mxu0 %v186
  %5657 = vmatprep.subr.mxu0 0.0
  %5658 = vmatpush1.msra.mxu0 %v187
  %5659 = vmatprep.subr.mxu0 0.0
  %5660 = vmatpush1.msra.mxu0 %v188
  %5661 = vmatprep.subr.mxu0 0.0
  %5662 = vmatpush1.msra.mxu0 %v189
  %5663 = vmatprep.subr.mxu0 0.0
  %5664 = vmatpush1.msra.mxu0 %v190
  %5665 = vmatprep.subr.mxu0 0.0
  %5666 = vmatpush1.msra.mxu0 %v191
  %5667 = vmatprep.subr.mxu0 0.0
  %5668 = vmatpush1.msra.mxu0 %v192
  %5669 = vmatprep.subr.mxu0 0.0
  %5670 = vmatpush1.msra.mxu0 %v193
  %5671 = vmatprep.subr.mxu0 0.0
  %5672 = vmatpush1.msra.mxu0 %v194
  %5673 = vmatprep.subr.mxu0 0.0
  %5674 = vmatpush1.msra.mxu0 %v195
  %5675 = vmatprep.subr.mxu0 0.0
  %5676 = vmatpush1.msra.mxu0 %v899
  %5677 = vmatprep.subr.mxu0 0.0
  %5678 = vmatpush1.msra.mxu0 0.0
  %5679 = vmatprep.subr.mxu0 0.0
  %5680 = vmatpush1.msra.mxu0 0.0
  %5681 = vmatprep.subr.mxu0 0.0
  %5682 = vmatpush1.msra.mxu0 0.0
  %5683 = vmatprep.subr.mxu0 0.0
  %5684 = vmatpush1.msra.mxu0 0.0
  %5685 = vmatprep.subr.mxu0 0.0
  %5686 = vmatpush1.msra.mxu0 0.0
  %5687 = vmatprep.subr.mxu0 0.0
  %5688 = vmatpush1.msra.mxu0 0.0
  %5689 = vmatprep.subr.mxu0 0.0
  %5690 = vmatpush1.msra.mxu0 0.0
  %5691 = vmatprep.subr.mxu0 0.0
  %5692 = vmatpush1.msra.mxu0 0.0
  %5693 = vmatprep.subr.mxu0 0.0
  %5694 = vmatpush1.msra.mxu0 0.0
  %5695 = vmatprep.subr.mxu0 0.0
  %5696 = vmatpush1.msra.mxu0 0.0
  %5697 = vmatprep.subr.mxu0 0.0
  %5698 = vmatpush1.msra.mxu0 0.0
  %5699 = vmatprep.subr.mxu0 0.0
  %5700 = vmatpush1.msra.mxu0 0.0
  %5701 = vmatprep.subr.mxu0 0.0
  %5702 = vmatpush1.msra.mxu0 0.0
  %5703 = vmatprep.subr.mxu0 0.0
  %5704 = vmatpush1.msra.mxu0 0.0
  %5705 = vmatprep.subr.mxu0 0.0
  %5706 = vmatpush1.msra.mxu0 0.0
  %5707 = vmatprep.subr.mxu0 0.0
  %5708 = vmatpush1.msra.mxu0 0.0
  %5709 = vmatprep.subr.mxu0 0.0
  %5710 = vmatpush1.msra.mxu0 0.0
  %5711 = vmatprep.subr.mxu0 0.0
  %5712 = vmatpush1.msra.mxu0 0.0
  %5713 = vmatprep.subr.mxu0 0.0
  %5714 = vmatpush1.msra.mxu0 0.0
  %5715 = vmatprep.mubr.f32.mxu0 0.0
  %5716 = vmatmul.mubr.f32.gmra.mrb[0].mxu0 %v5649
  %v5717 = vpop.f32.mrb[0].mxu0
  %v5718 = vadd.f32 %v5647, %v5717
  %v5719 = vpop.f32.mrb[0].mxu0
  %5720 = vdwg.mxu0
  %v5721 = vadd.f32 %v5718, %v334
  %v5722 = vmax.f32 %v5721, 0.0
  %v5723 = vtanh.pop %v5722
  %5724 = vrot.lane.b32.xlu0 %v5247, 50
  %v5725 = vpop.permute.xlu0 %5724
  %v5727 = vsel %vm377, %v5723, %v5725
  %v5728 = vmul.f32 %v5264, %v979
  %v5730 = vsel %vm552, %v5727, 0
  %5732 = vmatprep.subr.mxu0 0.0
  %5733 = vmatpush1.msra.mxu0 %v198
  %5734 = vmatprep.subr.mxu0 0.0
  %5735 = vmatpush1.msra.mxu0 %v199
  %5736 = vmatprep.subr.mxu0 0.0
  %5737 = vmatpush1.msra.mxu0 %v200
  %5738 = vmatprep.subr.mxu0 0.0
  %5739 = vmatpush1.msra.mxu0 %v201
  %5740 = vmatprep.subr.mxu0 0.0
  %5741 = vmatpush1.msra.mxu0 %v202
  %5742 = vmatprep.subr.mxu0 0.0
  %5743 = vmatpush1.msra.mxu0 %v203
  %5744 = vmatprep.subr.mxu0 0.0
  %5745 = vmatpush1.msra.mxu0 %v204
  %5746 = vmatprep.subr.mxu0 0.0
  %5747 = vmatpush1.msra.mxu0 %v205
  %5748 = vmatprep.subr.mxu0 0.0
  %5749 = vmatpush1.msra.mxu0 %v206
  %5750 = vmatprep.subr.mxu0 0.0
  %5751 = vmatpush1.msra.mxu0 %v207
  %5752 = vmatprep.subr.mxu0 0.0
  %5753 = vmatpush1.msra.mxu0 %v208
  %5754 = vmatprep.subr.mxu0 0.0
  %5755 = vmatpush1.msra.mxu0 %v209
  %5756 = vmatprep.subr.mxu0 0.0
  %5757 = vmatpush1.msra.mxu0 %v986
  %5758 = vmatprep.subr.mxu0 0.0
  %5759 = vmatpush1.msra.mxu0 0.0
  %5760 = vmatprep.subr.mxu0 0.0
  %5761 = vmatpush1.msra.mxu0 0.0
  %5762 = vmatprep.subr.mxu0 0.0
  %5763 = vmatpush1.msra.mxu0 0.0
  %5764 = vmatprep.subr.mxu0 0.0
  %5765 = vmatpush1.msra.mxu0 0.0
  %5766 = vmatprep.subr.mxu0 0.0
  %5767 = vmatpush1.msra.mxu0 0.0
  %5768 = vmatprep.subr.mxu0 0.0
  %5769 = vmatpush1.msra.mxu0 0.0
  %5770 = vmatprep.subr.mxu0 0.0
  %5771 = vmatpush1.msra.mxu0 0.0
  %5772 = vmatprep.subr.mxu0 0.0
  %5773 = vmatpush1.msra.mxu0 0.0
  %5774 = vmatprep.subr.mxu0 0.0
  %5775 = vmatpush1.msra.mxu0 0.0
  %5776 = vmatprep.subr.mxu0 0.0
  %5777 = vmatpush1.msra.mxu0 0.0
  %5778 = vmatprep.subr.mxu0 0.0
  %5779 = vmatpush1.msra.mxu0 0.0
  %5780 = vmatprep.subr.mxu0 0.0
  %5781 = vmatpush1.msra.mxu0 0.0
  %5782 = vmatprep.subr.mxu0 0.0
  %5783 = vmatpush1.msra.mxu0 0.0
  %5784 = vmatprep.subr.mxu0 0.0
  %5785 = vmatpush1.msra.mxu0 0.0
  %5786 = vmatprep.subr.mxu0 0.0
  %5787 = vmatpush1.msra.mxu0 0.0
  %5788 = vmatprep.subr.mxu0 0.0
  %5789 = vmatpush1.msra.mxu0 0.0
  %5790 = vmatprep.subr.mxu0 0.0
  %5791 = vmatpush1.msra.mxu0 0.0
  %5792 = vmatprep.subr.mxu0 0.0
  %5793 = vmatpush1.msra.mxu0 0.0
  %5794 = vmatprep.subr.mxu0 0.0
  %5795 = vmatpush1.msra.mxu0 0.0
  %5796 = vmatprep.mubr.f32.mxu0 0.0
  %5797 = vmatmul.mubr.f32.gmra.mrb[0].mxu0 %v5730
  %v5798 = vpop.f32.mrb[0].mxu0
  %v5799 = vadd.f32 %v5728, %v5798
  %v5800 = vpop.f32.mrb[0].mxu0
  %5801 = vdwg.mxu0
  %v5802 = vadd.f32 %v5799, %v341
  %v5803 = vmax.f32 %v5802, 0.0
  %v5804 = vtanh.pop %v5803
  %5805 = vrot.lane.b32.xlu0 %v4702, 50
  %v5806 = vpop.permute.xlu0 %5805
  %v5808 = vsel %vm377, %v5804, %v5806
  %v5809 = vmul.f32 %v5264, %v1066
  %v5810 = vmul.f32 %v5264, %v1070
  %v5811 = vsel %vm1075, %v5806, 0
  %5813 = vmatprep.subr.mxu0 %v213
  %5814 = vmatpush1.msra.mxu0 %v212
  %5815 = vmatprep.subr.mxu0 %v215
  %5816 = vmatpush1.msra.mxu0 %v214
  %5817 = vmatprep.subr.mxu0 %v217
  %5818 = vmatpush1.msra.mxu0 %v216
  %5819 = vmatprep.subr.mxu0 %v219
  %5820 = vmatpush1.msra.mxu0 %v218
  %5821 = vmatprep.subr.mxu0 %v221
  %5822 = vmatpush1.msra.mxu0 %v220
  %5823 = vmatprep.subr.mxu0 %v223
  %5824 = vmatpush1.msra.mxu0 %v222
  %5825 = vmatprep.subr.mxu0 %v225
  %5826 = vmatpush1.msra.mxu0 %v224
  %5827 = vmatprep.subr.mxu0 %v227
  %5828 = vmatpush1.msra.mxu0 %v226
  %5829 = vmatprep.subr.mxu0 %v229
  %5830 = vmatpush1.msra.mxu0 %v228
  %5831 = vmatprep.subr.mxu0 %v231
  %5832 = vmatpush1.msra.mxu0 %v230
  %5833 = vmatprep.subr.mxu0 %v233
  %5834 = vmatpush1.msra.mxu0 %v232
  %5835 = vmatprep.subr.mxu0 %v235
  %5836 = vmatpush1.msra.mxu0 %v234
  %5837 = vmatprep.subr.mxu0 %v237
  %5838 = vmatpush1.msra.mxu0 %v236
  %5839 = vmatprep.subr.mxu0 %v239
  %5840 = vmatpush1.msra.mxu0 %v238
  %5841 = vmatprep.subr.mxu0 %v241
  %5842 = vmatpush1.msra.mxu0 %v240
  %5843 = vmatprep.subr.mxu0 %v243
  %5844 = vmatpush1.msra.mxu0 %v242
  %5845 = vmatprep.subr.mxu0 %v245
  %5846 = vmatpush1.msra.mxu0 %v244
  %5847 = vmatprep.subr.mxu0 %v247
  %5848 = vmatpush1.msra.mxu0 %v246
  %5849 = vmatprep.subr.mxu0 %v1084
  %5850 = vmatpush1.msra.mxu0 %v1081
  %5851 = vmatprep.subr.mxu0 0.0
  %5852 = vmatpush1.msra.mxu0 0.0
  %5853 = vmatprep.subr.mxu0 0.0
  %5854 = vmatpush1.msra.mxu0 0.0
  %5855 = vmatprep.subr.mxu0 0.0
  %5856 = vmatpush1.msra.mxu0 0.0
  %5857 = vmatprep.subr.mxu0 0.0
  %5858 = vmatpush1.msra.mxu0 0.0
  %5859 = vmatprep.subr.mxu0 0.0
  %5860 = vmatpush1.msra.mxu0 0.0
  %5861 = vmatprep.subr.mxu0 0.0
  %5862 = vmatpush1.msra.mxu0 0.0
  %5863 = vmatprep.subr.mxu0 0.0
  %5864 = vmatpush1.msra.mxu0 0.0
  %5865 = vmatprep.subr.mxu0 0.0
  %5866 = vmatpush1.msra.mxu0 0.0
  %5867 = vmatprep.subr.mxu0 0.0
  %5868 = vmatpush1.msra.mxu0 0.0
  %5869 = vmatprep.subr.mxu0 0.0
  %5870 = vmatpush1.msra.mxu0 0.0
  %5871 = vmatprep.subr.mxu0 0.0
  %5872 = vmatpush1.msra.mxu0 0.0
  %5873 = vmatprep.subr.mxu0 0.0
  %5874 = vmatpush1.msra.mxu0 0.0
  %5875 = vmatprep.subr.mxu0 0.0
  %5876 = vmatpush1.msra.mxu0 0.0
  %5877 = vmatprep.mubr.f32.mxu0 %v5811
  %5878 = vmatmul.mubr.f32.gmra.mrb[0].mxu0 %v5808
  %v5879 = vpop.f32.mrb[0].mxu0
  %v5880 = vadd.f32 %v5809, %v5879
  %v5881 = vpop.f32.mrb[0].mxu0
  %v5882 = vadd.f32 %v5810, %v5881
  %5883 = vdwg.mxu0
  %5884 = vmatprep.subr.mxu0 %v252
  %5885 = vmatpush1.msra.mxu0 %v251
  %5886 = vmatprep.subr.mxu0 %v254
  %5887 = vmatpush1.msra.mxu0 %v253
  %5888 = vmatprep.subr.mxu0 %v256
  %5889 = vmatpush1.msra.mxu0 %v255
  %5890 = vmatprep.subr.mxu0 %v258
  %5891 = vmatpush1.msra.mxu0 %v257
  %5892 = vmatprep.subr.mxu0 %v260
  %5893 = vmatpush1.msra.mxu0 %v259
  %5894 = vmatprep.subr.mxu0 %v262
  %5895 = vmatpush1.msra.mxu0 %v261
  %5896 = vmatprep.subr.mxu0 %v264
  %5897 = vmatpush1.msra.mxu0 %v263
  %5898 = vmatprep.subr.mxu0 %v266
  %5899 = vmatpush1.msra.mxu0 %v265
  %5900 = vmatprep.subr.mxu0 %v268
  %5901 = vmatpush1.msra.mxu0 %v267
  %5902 = vmatprep.subr.mxu0 %v270
  %5903 = vmatpush1.msra.mxu0 %v269
  %5904 = vmatprep.subr.mxu0 %v272
  %5905 = vmatpush1.msra.mxu0 %v271
  %5906 = vmatprep.subr.mxu0 %v274
  %5907 = vmatpush1.msra.mxu0 %v273
  %5908 = vmatprep.subr.mxu0 %v276
  %5909 = vmatpush1.msra.mxu0 %v275
  %5910 = vmatprep.subr.mxu0 %v278
  %5911 = vmatpush1.msra.mxu0 %v277
  %5912 = vmatprep.subr.mxu0 %v280
  %5913 = vmatpush1.msra.mxu0 %v279
  %5914 = vmatprep.subr.mxu0 %v282
  %5915 = vmatpush1.msra.mxu0 %v281
  %5916 = vmatprep.subr.mxu0 %v284
  %5917 = vmatpush1.msra.mxu0 %v283
  %5918 = vmatprep.subr.mxu0 %v286
  %5919 = vmatpush1.msra.mxu0 %v285
  %5920 = vmatprep.subr.mxu0 %v1164
  %5921 = vmatpush1.msra.mxu0 %v1161
  %5922 = vmatprep.subr.mxu0 0.0
  %5923 = vmatpush1.msra.mxu0 0.0
  %5924 = vmatprep.subr.mxu0 0.0
  %5925 = vmatpush1.msra.mxu0 0.0
  %5926 = vmatprep.subr.mxu0 0.0
  %5927 = vmatpush1.msra.mxu0 0.0
  %5928 = vmatprep.subr.mxu0 0.0
  %5929 = vmatpush1.msra.mxu0 0.0
  %5930 = vmatprep.subr.mxu0 0.0
  %5931 = vmatpush1.msra.mxu0 0.0
  %5932 = vmatprep.subr.mxu0 0.0
  %5933 = vmatpush1.msra.mxu0 0.0
  %5934 = vmatprep.subr.mxu0 0.0
  %5935 = vmatpush1.msra.mxu0 0.0
  %5936 = vmatprep.subr.mxu0 0.0
  %5937 = vmatpush1.msra.mxu0 0.0
  %5938 = vmatprep.subr.mxu0 0.0
  %5939 = vmatpush1.msra.mxu0 0.0
  %5940 = vmatprep.subr.mxu0 0.0
  %5941 = vmatpush1.msra.mxu0 0.0
  %5942 = vmatprep.subr.mxu0 0.0
  %5943 = vmatpush1.msra.mxu0 0.0
  %5944 = vmatprep.subr.mxu0 0.0
  %5945 = vmatpush1.msra.mxu0 0.0
  %5946 = vmatprep.subr.mxu0 0.0
  %5947 = vmatpush1.msra.mxu0 0.0
  %5948 = vmatprep.mubr.f32.mxu0 %v5178
  %5949 = vmatmul.mubr.f32.gmra.mrb[0].mxu0 %v5175
  %v5950 = vpop.f32.mrb[0].mxu0
  %v5951 = vadd.f32 0.0, %v5950
  %v5952 = vpop.f32.mrb[0].mxu0
  %v5953 = vadd.f32 0.0, %v5952
  %5954 = vdwg.mxu0
  %v5955 = vadd.f32 %v5880, %v5951
  %v5956 = vadd.f32 %v5882, %v5953
  %v5957 = vadd.f32 %v5955, %v348
  %v5958 = vadd.f32 %v5956, %v352
  %v5959 = vmax.f32 %v5957, 0.0
  %v5960 = vmax.f32 %v5958, 0.0
  %v5961 = vtanh.pop %v5959
  %v5962 = vtanh.pop %v5960
  %v5964 = vsel %vm1075, %v5962, 0
  %5966 = vmatprep.subr.mxu0 0.0
  %5967 = vmatpush1.msra.mxu0 %v289
  %5968 = vmatprep.subr.mxu0 0.0
  %5969 = vmatpush1.msra.mxu0 %v290
  %5970 = vmatprep.subr.mxu0 0.0
  %5971 = vmatpush1.msra.mxu0 %v291
  %5972 = vmatprep.subr.mxu0 0.0
  %5973 = vmatpush1.msra.mxu0 %v292
  %5974 = vmatprep.subr.mxu0 0.0
  %5975 = vmatpush1.msra.mxu0 %v293
  %5976 = vmatprep.subr.mxu0 0.0
  %5977 = vmatpush1.msra.mxu0 %v294
  %5978 = vmatprep.subr.mxu0 0.0
  %5979 = vmatpush1.msra.mxu0 %v295
  %5980 = vmatprep.subr.mxu0 0.0
  %5981 = vmatpush1.msra.mxu0 %v296
  %5982 = vmatprep.subr.mxu0 0.0
  %5983 = vmatpush1.msra.mxu0 %v297
  %5984 = vmatprep.subr.mxu0 0.0
  %5985 = vmatpush1.msra.mxu0 %v298
  %5986 = vmatprep.subr.mxu0 0.0
  %5987 = vmatpush1.msra.mxu0 %v299
  %5988 = vmatprep.subr.mxu0 0.0
  %5989 = vmatpush1.msra.mxu0 %v300
  %5990 = vmatprep.subr.mxu0 0.0
  %5991 = vmatpush1.msra.mxu0 %v301
  %5992 = vmatprep.subr.mxu0 0.0
  %5993 = vmatpush1.msra.mxu0 %v302
  %5994 = vmatprep.subr.mxu0 0.0
  %5995 = vmatpush1.msra.mxu0 %v303
  %5996 = vmatprep.subr.mxu0 0.0
  %5997 = vmatpush1.msra.mxu0 %v304
  %5998 = vmatprep.subr.mxu0 0.0
  %5999 = vmatpush1.msra.mxu0 %v305
  %6000 = vmatprep.subr.mxu0 0.0
  %6001 = vmatpush1.msra.mxu0 %v306
  %6002 = vmatprep.subr.mxu0 0.0
  %6003 = vmatpush1.msra.mxu0 %v1249
  %6004 = vmatprep.subr.mxu0 0.0
  %6005 = vmatpush1.msra.mxu0 0.0
  %6006 = vmatprep.subr.mxu0 0.0
  %6007 = vmatpush1.msra.mxu0 0.0
  %6008 = vmatprep.subr.mxu0 0.0
  %6009 = vmatpush1.msra.mxu0 0.0
  %6010 = vmatprep.subr.mxu0 0.0
  %6011 = vmatpush1.msra.mxu0 0.0
  %6012 = vmatprep.subr.mxu0 0.0
  %6013 = vmatpush1.msra.mxu0 0.0
  %6014 = vmatprep.subr.mxu0 0.0
  %6015 = vmatpush1.msra.mxu0 0.0
  %6016 = vmatprep.subr.mxu0 0.0
  %6017 = vmatpush1.msra.mxu0 0.0
  %6018 = vmatprep.subr.mxu0 0.0
  %6019 = vmatpush1.msra.mxu0 0.0
  %6020 = vmatprep.subr.mxu0 0.0
  %6021 = vmatpush1.msra.mxu0 0.0
  %6022 = vmatprep.subr.mxu0 0.0
  %6023 = vmatpush1.msra.mxu0 0.0
  %6024 = vmatprep.subr.mxu0 0.0
  %6025 = vmatpush1.msra.mxu0 0.0
  %6026 = vmatprep.subr.mxu0 0.0
  %6027 = vmatpush1.msra.mxu0 0.0
  %6028 = vmatprep.subr.mxu0 0.0
  %6029 = vmatpush1.msra.mxu0 0.0
  %6030 = vmatprep.mubr.f32.mxu0 %v5964
  %6031 = vmatmul.mubr.f32.gmra.mrb[0].mxu0 %v5961
  %v6032 = vpop.f32.mrb[0].mxu0
  %v6033 = vadd.f32 %v360, %v6032
  %v6034 = vpop.f32.mrb[0].mxu0
  %6035 = vdwg.mxu0
  %s6036 = scalar_lea.vmem %s61, 48
  %6037 = vst.msk [vmem:[%s6036] sm:$0xff] %vm377, %v6033
  %s6038 = scalar_lea.vmem %s1, 56
  %v6039 = vld [vmem:[%s6038] sm:$0xff]
  %s6040 = scalar_lea.vmem %s3, 56
  %v6041 = vld [vmem:[%s6040] sm:$0xff]
  %6043 = vrot.lane.b32.xlu0 %v6033, 15
  %v6044 = vpop.permute.xlu0 %6043
  %v6046 = vsel %vm460, %v6039, %v6044
  %6048 = vset.pattern.permute.xlu0 0
  %6049 = vperm.xlu0 %6048, %v6041
  %v6050 = vpop.permute.xlu0 %6049
  %v6052 = vmul.f32 %v6050, %v471
  %v6054 = vsel %vm474, %v6046, 0
  %6056 = vmatprep.subr.mxu0 0.0
  %6057 = vmatpush1.msra.mxu0 %v126
  %6058 = vmatprep.subr.mxu0 0.0
  %6059 = vmatpush1.msra.mxu0 %v127
  %6060 = vmatprep.subr.mxu0 0.0
  %6061 = vmatpush1.msra.mxu0 %v128
  %6062 = vmatprep.subr.mxu0 0.0
  %6063 = vmatpush1.msra.mxu0 %v129
  %6064 = vmatprep.subr.mxu0 0.0
  %6065 = vmatpush1.msra.mxu0 %v130
  %6066 = vmatprep.subr.mxu0 0.0
  %6067 = vmatpush1.msra.mxu0 %v131
  %6068 = vmatprep.subr.mxu0 0.0
  %6069 = vmatpush1.msra.mxu0 %v132
  %6070 = vmatprep.subr.mxu0 0.0
  %6071 = vmatpush1.msra.mxu0 %v133
  %6072 = vmatprep.subr.mxu0 0.0
  %6073 = vmatpush1.msra.mxu0 %v480
  %6074 = vmatprep.subr.mxu0 0.0
  %6075 = vmatpush1.msra.mxu0 0.0
  %6076 = vmatprep.subr.mxu0 0.0
  %6077 = vmatpush1.msra.mxu0 0.0
  %6078 = vmatprep.subr.mxu0 0.0
  %6079 = vmatpush1.msra.mxu0 0.0
  %6080 = vmatprep.subr.mxu0 0.0
  %6081 = vmatpush1.msra.mxu0 0.0
  %6082 = vmatprep.subr.mxu0 0.0
  %6083 = vmatpush1.msra.mxu0 0.0
  %6084 = vmatprep.subr.mxu0 0.0
  %6085 = vmatpush1.msra.mxu0 0.0
  %6086 = vmatprep.subr.mxu0 0.0
  %6087 = vmatpush1.msra.mxu0 0.0
  %6088 = vmatprep.subr.mxu0 0.0
  %6089 = vmatpush1.msra.mxu0 0.0
  %6090 = vmatprep.subr.mxu0 0.0
  %6091 = vmatpush1.msra.mxu0 0.0
  %6092 = vmatprep.subr.mxu0 0.0
  %6093 = vmatpush1.msra.mxu0 0.0
  %6094 = vmatprep.subr.mxu0 0.0
  %6095 = vmatpush1.msra.mxu0 0.0
  %6096 = vmatprep.subr.mxu0 0.0
  %6097 = vmatpush1.msra.mxu0 0.0
  %6098 = vmatprep.subr.mxu0 0.0
  %6099 = vmatpush1.msra.mxu0 0.0
  %6100 = vmatprep.subr.mxu0 0.0
  %6101 = vmatpush1.msra.mxu0 0.0
  %6102 = vmatprep.subr.mxu0 0.0
  %6103 = vmatpush1.msra.mxu0 0.0
  %6104 = vmatprep.subr.mxu0 0.0
  %6105 = vmatpush1.msra.mxu0 0.0
  %6106 = vmatprep.subr.mxu0 0.0
  %6107 = vmatpush1.msra.mxu0 0.0
  %6108 = vmatprep.subr.mxu0 0.0
  %6109 = vmatpush1.msra.mxu0 0.0
  %6110 = vmatprep.subr.mxu0 0.0
  %6111 = vmatpush1.msra.mxu0 0.0
  %6112 = vmatprep.subr.mxu0 0.0
  %6113 = vmatpush1.msra.mxu0 0.0
  %6114 = vmatprep.subr.mxu0 0.0
  %6115 = vmatpush1.msra.mxu0 0.0
  %6116 = vmatprep.subr.mxu0 0.0
  %6117 = vmatpush1.msra.mxu0 0.0
  %6118 = vmatprep.subr.mxu0 0.0
  %6119 = vmatpush1.msra.mxu0 0.0
  %6120 = vmatprep.mubr.f32.mxu0 0.0
  %6121 = vmatmul.mubr.f32.gmra.mrb[0].mxu0 %v6054
  %v6122 = vpop.f32.mrb[0].mxu0
  %v6123 = vadd.f32 %v6052, %v6122
  %v6124 = vpop.f32.mrb[0].mxu0
  %6125 = vdwg.mxu0
  %6126 = vmatprep.subr.mxu0 0.0
  %6127 = vmatpush1.msra.mxu0 %v136
  %6128 = vmatprep.subr.mxu0 0.0
  %6129 = vmatpush1.msra.mxu0 %v137
  %6130 = vmatprep.subr.mxu0 0.0
  %6131 = vmatpush1.msra.mxu0 %v138
  %6132 = vmatprep.subr.mxu0 0.0
  %6133 = vmatpush1.msra.mxu0 %v139
  %6134 = vmatprep.subr.mxu0 0.0
  %6135 = vmatpush1.msra.mxu0 %v140
  %6136 = vmatprep.subr.mxu0 0.0
  %6137 = vmatpush1.msra.mxu0 %v141
  %6138 = vmatprep.subr.mxu0 0.0
  %6139 = vmatpush1.msra.mxu0 %v142
  %6140 = vmatprep.subr.mxu0 0.0
  %6141 = vmatpush1.msra.mxu0 %v143
  %6142 = vmatprep.subr.mxu0 0.0
  %6143 = vmatpush1.msra.mxu0 %v144
  %6144 = vmatprep.subr.mxu0 0.0
  %6145 = vmatpush1.msra.mxu0 %v145
  %6146 = vmatprep.subr.mxu0 0.0
  %6147 = vmatpush1.msra.mxu0 %v146
  %6148 = vmatprep.subr.mxu0 0.0
  %6149 = vmatpush1.msra.mxu0 %v147
  %6150 = vmatprep.subr.mxu0 0.0
  %6151 = vmatpush1.msra.mxu0 %v558
  %6152 = vmatprep.subr.mxu0 0.0
  %6153 = vmatpush1.msra.mxu0 0.0
  %6154 = vmatprep.subr.mxu0 0.0
  %6155 = vmatpush1.msra.mxu0 0.0
  %6156 = vmatprep.subr.mxu0 0.0
  %6157 = vmatpush1.msra.mxu0 0.0
  %6158 = vmatprep.subr.mxu0 0.0
  %6159 = vmatpush1.msra.mxu0 0.0
  %6160 = vmatprep.subr.mxu0 0.0
  %6161 = vmatpush1.msra.mxu0 0.0
  %6162 = vmatprep.subr.mxu0 0.0
  %6163 = vmatpush1.msra.mxu0 0.0
  %6164 = vmatprep.subr.mxu0 0.0
  %6165 = vmatpush1.msra.mxu0 0.0
  %6166 = vmatprep.subr.mxu0 0.0
  %6167 = vmatpush1.msra.mxu0 0.0
  %6168 = vmatprep.subr.mxu0 0.0
  %6169 = vmatpush1.msra.mxu0 0.0
  %6170 = vmatprep.subr.mxu0 0.0
  %6171 = vmatpush1.msra.mxu0 0.0
  %6172 = vmatprep.subr.mxu0 0.0
  %6173 = vmatpush1.msra.mxu0 0.0
  %6174 = vmatprep.subr.mxu0 0.0
  %6175 = vmatpush1.msra.mxu0 0.0
  %6176 = vmatprep.subr.mxu0 0.0
  %6177 = vmatpush1.msra.mxu0 0.0
  %6178 = vmatprep.subr.mxu0 0.0
  %6179 = vmatpush1.msra.mxu0 0.0
  %6180 = vmatprep.subr.mxu0 0.0
  %6181 = vmatpush1.msra.mxu0 0.0
  %6182 = vmatprep.subr.mxu0 0.0
  %6183 = vmatpush1.msra.mxu0 0.0
  %6184 = vmatprep.subr.mxu0 0.0
  %6185 = vmatpush1.msra.mxu0 0.0
  %6186 = vmatprep.subr.mxu0 0.0
  %6187 = vmatpush1.msra.mxu0 0.0
  %6188 = vmatprep.subr.mxu0 0.0
  %6189 = vmatpush1.msra.mxu0 0.0
  %6190 = vmatprep.mubr.f32.mxu0 0.0
  %6191 = vmatmul.mubr.f32.gmra.mrb[0].mxu0 %v5415
  %v6192 = vpop.f32.mrb[0].mxu0
  %v6193 = vadd.f32 0.0, %v6192
  %v6194 = vpop.f32.mrb[0].mxu0
  %6195 = vdwg.mxu0
  %v6196 = vadd.f32 %v6123, %v6193
  %v6197 = vadd.f32 %v6196, %v313
  %v6198 = vmax.f32 %v6197, 0.0
  %v6199 = vtanh.pop %v6198
  %v6201 = vsel %vm552, %v6199, 0
  %6203 = vmatprep.subr.mxu0 0.0
  %6204 = vmatpush1.msra.mxu0 %v149
  %6205 = vmatprep.subr.mxu0 0.0
  %6206 = vmatpush1.msra.mxu0 %v150
  %6207 = vmatprep.subr.mxu0 0.0
  %6208 = vmatpush1.msra.mxu0 %v151
  %6209 = vmatprep.subr.mxu0 0.0
  %6210 = vmatpush1.msra.mxu0 %v152
  %6211 = vmatprep.subr.mxu0 0.0
  %6212 = vmatpush1.msra.mxu0 %v153
  %6213 = vmatprep.subr.mxu0 0.0
  %6214 = vmatpush1.msra.mxu0 %v154
  %6215 = vmatprep.subr.mxu0 0.0
  %6216 = vmatpush1.msra.mxu0 %v155
  %6217 = vmatprep.subr.mxu0 0.0
  %6218 = vmatpush1.msra.mxu0 %v156
  %6219 = vmatprep.subr.mxu0 0.0
  %6220 = vmatpush1.msra.mxu0 %v157
  %6221 = vmatprep.subr.mxu0 0.0
  %6222 = vmatpush1.msra.mxu0 %v158
  %6223 = vmatprep.subr.mxu0 0.0
  %6224 = vmatpush1.msra.mxu0 %v159
  %6225 = vmatprep.subr.mxu0 0.0
  %6226 = vmatpush1.msra.mxu0 %v160
  %6227 = vmatprep.subr.mxu0 0.0
  %6228 = vmatpush1.msra.mxu0 %v638
  %6229 = vmatprep.subr.mxu0 0.0
  %6230 = vmatpush1.msra.mxu0 0.0
  %6231 = vmatprep.subr.mxu0 0.0
  %6232 = vmatpush1.msra.mxu0 0.0
  %6233 = vmatprep.subr.mxu0 0.0
  %6234 = vmatpush1.msra.mxu0 0.0
  %6235 = vmatprep.subr.mxu0 0.0
  %6236 = vmatpush1.msra.mxu0 0.0
  %6237 = vmatprep.subr.mxu0 0.0
  %6238 = vmatpush1.msra.mxu0 0.0
  %6239 = vmatprep.subr.mxu0 0.0
  %6240 = vmatpush1.msra.mxu0 0.0
  %6241 = vmatprep.subr.mxu0 0.0
  %6242 = vmatpush1.msra.mxu0 0.0
  %6243 = vmatprep.subr.mxu0 0.0
  %6244 = vmatpush1.msra.mxu0 0.0
  %6245 = vmatprep.subr.mxu0 0.0
  %6246 = vmatpush1.msra.mxu0 0.0
  %6247 = vmatprep.subr.mxu0 0.0
  %6248 = vmatpush1.msra.mxu0 0.0
  %6249 = vmatprep.subr.mxu0 0.0
  %6250 = vmatpush1.msra.mxu0 0.0
  %6251 = vmatprep.subr.mxu0 0.0
  %6252 = vmatpush1.msra.mxu0 0.0
  %6253 = vmatprep.subr.mxu0 0.0
  %6254 = vmatpush1.msra.mxu0 0.0
  %6255 = vmatprep.subr.mxu0 0.0
  %6256 = vmatpush1.msra.mxu0 0.0
  %6257 = vmatprep.subr.mxu0 0.0
  %6258 = vmatpush1.msra.mxu0 0.0
  %6259 = vmatprep.subr.mxu0 0.0
  %6260 = vmatpush1.msra.mxu0 0.0
  %6261 = vmatprep.subr.mxu0 0.0
  %6262 = vmatpush1.msra.mxu0 0.0
  %6263 = vmatprep.subr.mxu0 0.0
  %6264 = vmatpush1.msra.mxu0 0.0
  %6265 = vmatprep.subr.mxu0 0.0
  %6266 = vmatpush1.msra.mxu0 0.0
  %6267 = vmatprep.mubr.f32.mxu0 0.0
  %6268 = vmatmul.mubr.f32.gmra.mrb[0].mxu0 %v6201
  %v6269 = vpop.f32.mrb[0].mxu0
  %v6270 = vadd.f32 %v320, %v6269
  %v6271 = vpop.f32.mrb[0].mxu0
  %6272 = vdwg.mxu0
  %v6273 = vmax.f32 %v6270, 0.0
  %v6274 = vtanh.pop %v6273
  %v6275 = vmul.f32 %v6050, %v716
  %v6277 = vsel %vm552, %v6274, 0
  %6279 = vmatprep.subr.mxu0 0.0
  %6280 = vmatpush1.msra.mxu0 %v162
  %6281 = vmatprep.subr.mxu0 0.0
  %6282 = vmatpush1.msra.mxu0 %v163
  %6283 = vmatprep.subr.mxu0 0.0
  %6284 = vmatpush1.msra.mxu0 %v164
  %6285 = vmatprep.subr.mxu0 0.0
  %6286 = vmatpush1.msra.mxu0 %v165
  %6287 = vmatprep.subr.mxu0 0.0
  %6288 = vmatpush1.msra.mxu0 %v166
  %6289 = vmatprep.subr.mxu0 0.0
  %6290 = vmatpush1.msra.mxu0 %v167
  %6291 = vmatprep.subr.mxu0 0.0
  %6292 = vmatpush1.msra.mxu0 %v168
  %6293 = vmatprep.subr.mxu0 0.0
  %6294 = vmatpush1.msra.mxu0 %v169
  %6295 = vmatprep.subr.mxu0 0.0
  %6296 = vmatpush1.msra.mxu0 %v170
  %6297 = vmatprep.subr.mxu0 0.0
  %6298 = vmatpush1.msra.mxu0 %v171
  %6299 = vmatprep.subr.mxu0 0.0
  %6300 = vmatpush1.msra.mxu0 %v172
  %6301 = vmatprep.subr.mxu0 0.0
  %6302 = vmatpush1.msra.mxu0 %v173
  %6303 = vmatprep.subr.mxu0 0.0
  %6304 = vmatpush1.msra.mxu0 %v723
  %6305 = vmatprep.subr.mxu0 0.0
  %6306 = vmatpush1.msra.mxu0 0.0
  %6307 = vmatprep.subr.mxu0 0.0
  %6308 = vmatpush1.msra.mxu0 0.0
  %6309 = vmatprep.subr.mxu0 0.0
  %6310 = vmatpush1.msra.mxu0 0.0
  %6311 = vmatprep.subr.mxu0 0.0
  %6312 = vmatpush1.msra.mxu0 0.0
  %6313 = vmatprep.subr.mxu0 0.0
  %6314 = vmatpush1.msra.mxu0 0.0
  %6315 = vmatprep.subr.mxu0 0.0
  %6316 = vmatpush1.msra.mxu0 0.0
  %6317 = vmatprep.subr.mxu0 0.0
  %6318 = vmatpush1.msra.mxu0 0.0
  %6319 = vmatprep.subr.mxu0 0.0
  %6320 = vmatpush1.msra.mxu0 0.0
  %6321 = vmatprep.subr.mxu0 0.0
  %6322 = vmatpush1.msra.mxu0 0.0
  %6323 = vmatprep.subr.mxu0 0.0
  %6324 = vmatpush1.msra.mxu0 0.0
  %6325 = vmatprep.subr.mxu0 0.0
  %6326 = vmatpush1.msra.mxu0 0.0
  %6327 = vmatprep.subr.mxu0 0.0
  %6328 = vmatpush1.msra.mxu0 0.0
  %6329 = vmatprep.subr.mxu0 0.0
  %6330 = vmatpush1.msra.mxu0 0.0
  %6331 = vmatprep.subr.mxu0 0.0
  %6332 = vmatpush1.msra.mxu0 0.0
  %6333 = vmatprep.subr.mxu0 0.0
  %6334 = vmatpush1.msra.mxu0 0.0
  %6335 = vmatprep.subr.mxu0 0.0
  %6336 = vmatpush1.msra.mxu0 0.0
  %6337 = vmatprep.subr.mxu0 0.0
  %6338 = vmatpush1.msra.mxu0 0.0
  %6339 = vmatprep.subr.mxu0 0.0
  %6340 = vmatpush1.msra.mxu0 0.0
  %6341 = vmatprep.subr.mxu0 0.0
  %6342 = vmatpush1.msra.mxu0 0.0
  %6343 = vmatprep.mubr.f32.mxu0 0.0
  %6344 = vmatmul.mubr.f32.gmra.mrb[0].mxu0 %v6277
  %v6345 = vpop.f32.mrb[0].mxu0
  %v6346 = vadd.f32 %v6275, %v6345
  %v6347 = vpop.f32.mrb[0].mxu0
  %6348 = vdwg.mxu0
  %v6349 = vadd.f32 %v6346, %v452
  %v6350 = vmax.f32 %v6349, 0.0
  %v6351 = vtanh.pop %v6350
  %v6352 = vmul.f32 %v6050, %v802
  %v6354 = vsel %vm377, %v6351, 0
  %6356 = vmatprep.subr.mxu0 0.0
  %6357 = vmatpush1.msra.mxu0 %v176
  %6358 = vmatprep.subr.mxu0 0.0
  %6359 = vmatpush1.msra.mxu0 %v177
  %6360 = vmatprep.subr.mxu0 0.0
  %6361 = vmatpush1.msra.mxu0 %v178
  %6362 = vmatprep.subr.mxu0 0.0
  %6363 = vmatpush1.msra.mxu0 %v179
  %6364 = vmatprep.subr.mxu0 0.0
  %6365 = vmatpush1.msra.mxu0 %v180
  %6366 = vmatprep.subr.mxu0 0.0
  %6367 = vmatpush1.msra.mxu0 %v181
  %6368 = vmatprep.subr.mxu0 0.0
  %6369 = vmatpush1.msra.mxu0 %v809
  %6370 = vmatprep.subr.mxu0 0.0
  %6371 = vmatpush1.msra.mxu0 0.0
  %6372 = vmatprep.subr.mxu0 0.0
  %6373 = vmatpush1.msra.mxu0 0.0
  %6374 = vmatprep.subr.mxu0 0.0
  %6375 = vmatpush1.msra.mxu0 0.0
  %6376 = vmatprep.subr.mxu0 0.0
  %6377 = vmatpush1.msra.mxu0 0.0
  %6378 = vmatprep.subr.mxu0 0.0
  %6379 = vmatpush1.msra.mxu0 0.0
  %6380 = vmatprep.subr.mxu0 0.0
  %6381 = vmatpush1.msra.mxu0 0.0
  %6382 = vmatprep.subr.mxu0 0.0
  %6383 = vmatpush1.msra.mxu0 0.0
  %6384 = vmatprep.subr.mxu0 0.0
  %6385 = vmatpush1.msra.mxu0 0.0
  %6386 = vmatprep.subr.mxu0 0.0
  %6387 = vmatpush1.msra.mxu0 0.0
  %6388 = vmatprep.subr.mxu0 0.0
  %6389 = vmatpush1.msra.mxu0 0.0
  %6390 = vmatprep.subr.mxu0 0.0
  %6391 = vmatpush1.msra.mxu0 0.0
  %6392 = vmatprep.subr.mxu0 0.0
  %6393 = vmatpush1.msra.mxu0 0.0
  %6394 = vmatprep.subr.mxu0 0.0
  %6395 = vmatpush1.msra.mxu0 0.0
  %6396 = vmatprep.subr.mxu0 0.0
  %6397 = vmatpush1.msra.mxu0 0.0
  %6398 = vmatprep.subr.mxu0 0.0
  %6399 = vmatpush1.msra.mxu0 0.0
  %6400 = vmatprep.subr.mxu0 0.0
  %6401 = vmatpush1.msra.mxu0 0.0
  %6402 = vmatprep.subr.mxu0 0.0
  %6403 = vmatpush1.msra.mxu0 0.0
  %6404 = vmatprep.subr.mxu0 0.0
  %6405 = vmatpush1.msra.mxu0 0.0
  %6406 = vmatprep.subr.mxu0 0.0
  %6407 = vmatpush1.msra.mxu0 0.0
  %6408 = vmatprep.subr.mxu0 0.0
  %6409 = vmatpush1.msra.mxu0 0.0
  %6410 = vmatprep.subr.mxu0 0.0
  %6411 = vmatpush1.msra.mxu0 0.0
  %6412 = vmatprep.subr.mxu0 0.0
  %6413 = vmatpush1.msra.mxu0 0.0
  %6414 = vmatprep.subr.mxu0 0.0
  %6415 = vmatpush1.msra.mxu0 0.0
  %6416 = vmatprep.subr.mxu0 0.0
  %6417 = vmatpush1.msra.mxu0 0.0
  %6418 = vmatprep.subr.mxu0 0.0
  %6419 = vmatpush1.msra.mxu0 0.0
  %6420 = vmatprep.mubr.f32.mxu0 0.0
  %6421 = vmatmul.mubr.f32.gmra.mrb[0].mxu0 %v6354
  %v6422 = vpop.f32.mrb[0].mxu0
  %v6423 = vadd.f32 %v6352, %v6422
  %v6424 = vpop.f32.mrb[0].mxu0
  %6425 = vdwg.mxu0
  %v6426 = vadd.f32 %v6423, %v327
  %v6427 = vmax.f32 %v6426, 0.0
  %v6428 = vtanh.pop %v6427
  %6429 = vrot.lane.b32.xlu0 %v6351, 50
  %v6430 = vpop.permute.xlu0 %6429
  %v6432 = vsel %vm377, %v6428, %v6430
  %v6433 = vmul.f32 %v6050, %v892
  %v6435 = vsel %vm552, %v6432, 0
  %6437 = vmatprep.subr.mxu0 0.0
  %6438 = vmatpush1.msra.mxu0 %v184
  %6439 = vmatprep.subr.mxu0 0.0
  %6440 = vmatpush1.msra.mxu0 %v185
  %6441 = vmatprep.subr.mxu0 0.0
  %6442 = vmatpush1.msra.mxu0 %v186
  %6443 = vmatprep.subr.mxu0 0.0
  %6444 = vmatpush1.msra.mxu0 %v187
  %6445 = vmatprep.subr.mxu0 0.0
  %6446 = vmatpush1.msra.mxu0 %v188
  %6447 = vmatprep.subr.mxu0 0.0
  %6448 = vmatpush1.msra.mxu0 %v189
  %6449 = vmatprep.subr.mxu0 0.0
  %6450 = vmatpush1.msra.mxu0 %v190
  %6451 = vmatprep.subr.mxu0 0.0
  %6452 = vmatpush1.msra.mxu0 %v191
  %6453 = vmatprep.subr.mxu0 0.0
  %6454 = vmatpush1.msra.mxu0 %v192
  %6455 = vmatprep.subr.mxu0 0.0
  %6456 = vmatpush1.msra.mxu0 %v193
  %6457 = vmatprep.subr.mxu0 0.0
  %6458 = vmatpush1.msra.mxu0 %v194
  %6459 = vmatprep.subr.mxu0 0.0
  %6460 = vmatpush1.msra.mxu0 %v195
  %6461 = vmatprep.subr.mxu0 0.0
  %6462 = vmatpush1.msra.mxu0 %v899
  %6463 = vmatprep.subr.mxu0 0.0
  %6464 = vmatpush1.msra.mxu0 0.0
  %6465 = vmatprep.subr.mxu0 0.0
  %6466 = vmatpush1.msra.mxu0 0.0
  %6467 = vmatprep.subr.mxu0 0.0
  %6468 = vmatpush1.msra.mxu0 0.0
  %6469 = vmatprep.subr.mxu0 0.0
  %6470 = vmatpush1.msra.mxu0 0.0
  %6471 = vmatprep.subr.mxu0 0.0
  %6472 = vmatpush1.msra.mxu0 0.0
  %6473 = vmatprep.subr.mxu0 0.0
  %6474 = vmatpush1.msra.mxu0 0.0
  %6475 = vmatprep.subr.mxu0 0.0
  %6476 = vmatpush1.msra.mxu0 0.0
  %6477 = vmatprep.subr.mxu0 0.0
  %6478 = vmatpush1.msra.mxu0 0.0
  %6479 = vmatprep.subr.mxu0 0.0
  %6480 = vmatpush1.msra.mxu0 0.0
  %6481 = vmatprep.subr.mxu0 0.0
  %6482 = vmatpush1.msra.mxu0 0.0
  %6483 = vmatprep.subr.mxu0 0.0
  %6484 = vmatpush1.msra.mxu0 0.0
  %6485 = vmatprep.subr.mxu0 0.0
  %6486 = vmatpush1.msra.mxu0 0.0
  %6487 = vmatprep.subr.mxu0 0.0
  %6488 = vmatpush1.msra.mxu0 0.0
  %6489 = vmatprep.subr.mxu0 0.0
  %6490 = vmatpush1.msra.mxu0 0.0
  %6491 = vmatprep.subr.mxu0 0.0
  %6492 = vmatpush1.msra.mxu0 0.0
  %6493 = vmatprep.subr.mxu0 0.0
  %6494 = vmatpush1.msra.mxu0 0.0
  %6495 = vmatprep.subr.mxu0 0.0
  %6496 = vmatpush1.msra.mxu0 0.0
  %6497 = vmatprep.subr.mxu0 0.0
  %6498 = vmatpush1.msra.mxu0 0.0
  %6499 = vmatprep.subr.mxu0 0.0
  %6500 = vmatpush1.msra.mxu0 0.0
  %6501 = vmatprep.mubr.f32.mxu0 0.0
  %6502 = vmatmul.mubr.f32.gmra.mrb[0].mxu0 %v6435
  %v6503 = vpop.f32.mrb[0].mxu0
  %v6504 = vadd.f32 %v6433, %v6503
  %v6505 = vpop.f32.mrb[0].mxu0
  %6506 = vdwg.mxu0
  %v6507 = vadd.f32 %v6504, %v334
  %v6508 = vmax.f32 %v6507, 0.0
  %v6509 = vtanh.pop %v6508
  %6510 = vrot.lane.b32.xlu0 %v6033, 50
  %v6511 = vpop.permute.xlu0 %6510
  %v6513 = vsel %vm377, %v6509, %v6511
  %v6514 = vmul.f32 %v6050, %v979
  %v6516 = vsel %vm552, %v6513, 0
  %6518 = vmatprep.subr.mxu0 0.0
  %6519 = vmatpush1.msra.mxu0 %v198
  %6520 = vmatprep.subr.mxu0 0.0
  %6521 = vmatpush1.msra.mxu0 %v199
  %6522 = vmatprep.subr.mxu0 0.0
  %6523 = vmatpush1.msra.mxu0 %v200
  %6524 = vmatprep.subr.mxu0 0.0
  %6525 = vmatpush1.msra.mxu0 %v201
  %6526 = vmatprep.subr.mxu0 0.0
  %6527 = vmatpush1.msra.mxu0 %v202
  %6528 = vmatprep.subr.mxu0 0.0
  %6529 = vmatpush1.msra.mxu0 %v203
  %6530 = vmatprep.subr.mxu0 0.0
  %6531 = vmatpush1.msra.mxu0 %v204
  %6532 = vmatprep.subr.mxu0 0.0
  %6533 = vmatpush1.msra.mxu0 %v205
  %6534 = vmatprep.subr.mxu0 0.0
  %6535 = vmatpush1.msra.mxu0 %v206
  %6536 = vmatprep.subr.mxu0 0.0
  %6537 = vmatpush1.msra.mxu0 %v207
  %6538 = vmatprep.subr.mxu0 0.0
  %6539 = vmatpush1.msra.mxu0 %v208
  %6540 = vmatprep.subr.mxu0 0.0
  %6541 = vmatpush1.msra.mxu0 %v209
  %6542 = vmatprep.subr.mxu0 0.0
  %6543 = vmatpush1.msra.mxu0 %v986
  %6544 = vmatprep.subr.mxu0 0.0
  %6545 = vmatpush1.msra.mxu0 0.0
  %6546 = vmatprep.subr.mxu0 0.0
  %6547 = vmatpush1.msra.mxu0 0.0
  %6548 = vmatprep.subr.mxu0 0.0
  %6549 = vmatpush1.msra.mxu0 0.0
  %6550 = vmatprep.subr.mxu0 0.0
  %6551 = vmatpush1.msra.mxu0 0.0
  %6552 = vmatprep.subr.mxu0 0.0
  %6553 = vmatpush1.msra.mxu0 0.0
  %6554 = vmatprep.subr.mxu0 0.0
  %6555 = vmatpush1.msra.mxu0 0.0
  %6556 = vmatprep.subr.mxu0 0.0
  %6557 = vmatpush1.msra.mxu0 0.0
  %6558 = vmatprep.subr.mxu0 0.0
  %6559 = vmatpush1.msra.mxu0 0.0
  %6560 = vmatprep.subr.mxu0 0.0
  %6561 = vmatpush1.msra.mxu0 0.0
  %6562 = vmatprep.subr.mxu0 0.0
  %6563 = vmatpush1.msra.mxu0 0.0
  %6564 = vmatprep.subr.mxu0 0.0
  %6565 = vmatpush1.msra.mxu0 0.0
  %6566 = vmatprep.subr.mxu0 0.0
  %6567 = vmatpush1.msra.mxu0 0.0
  %6568 = vmatprep.subr.mxu0 0.0
  %6569 = vmatpush1.msra.mxu0 0.0
  %6570 = vmatprep.subr.mxu0 0.0
  %6571 = vmatpush1.msra.mxu0 0.0
  %6572 = vmatprep.subr.mxu0 0.0
  %6573 = vmatpush1.msra.mxu0 0.0
  %6574 = vmatprep.subr.mxu0 0.0
  %6575 = vmatpush1.msra.mxu0 0.0
  %6576 = vmatprep.subr.mxu0 0.0
  %6577 = vmatpush1.msra.mxu0 0.0
  %6578 = vmatprep.subr.mxu0 0.0
  %6579 = vmatpush1.msra.mxu0 0.0
  %6580 = vmatprep.subr.mxu0 0.0
  %6581 = vmatpush1.msra.mxu0 0.0
  %6582 = vmatprep.mubr.f32.mxu0 0.0
  %6583 = vmatmul.mubr.f32.gmra.mrb[0].mxu0 %v6516
  %v6584 = vpop.f32.mrb[0].mxu0
  %v6585 = vadd.f32 %v6514, %v6584
  %v6586 = vpop.f32.mrb[0].mxu0
  %6587 = vdwg.mxu0
  %v6588 = vadd.f32 %v6585, %v341
  %v6589 = vmax.f32 %v6588, 0.0
  %v6590 = vtanh.pop %v6589
  %6591 = vrot.lane.b32.xlu0 %v5488, 50
  %v6592 = vpop.permute.xlu0 %6591
  %v6594 = vsel %vm377, %v6590, %v6592
  %v6595 = vmul.f32 %v6050, %v1066
  %v6596 = vmul.f32 %v6050, %v1070
  %v6597 = vsel %vm1075, %v6592, 0
  %6599 = vmatprep.subr.mxu0 %v213
  %6600 = vmatpush1.msra.mxu0 %v212
  %6601 = vmatprep.subr.mxu0 %v215
  %6602 = vmatpush1.msra.mxu0 %v214
  %6603 = vmatprep.subr.mxu0 %v217
  %6604 = vmatpush1.msra.mxu0 %v216
  %6605 = vmatprep.subr.mxu0 %v219
  %6606 = vmatpush1.msra.mxu0 %v218
  %6607 = vmatprep.subr.mxu0 %v221
  %6608 = vmatpush1.msra.mxu0 %v220
  %6609 = vmatprep.subr.mxu0 %v223
  %6610 = vmatpush1.msra.mxu0 %v222
  %6611 = vmatprep.subr.mxu0 %v225
  %6612 = vmatpush1.msra.mxu0 %v224
  %6613 = vmatprep.subr.mxu0 %v227
  %6614 = vmatpush1.msra.mxu0 %v226
  %6615 = vmatprep.subr.mxu0 %v229
  %6616 = vmatpush1.msra.mxu0 %v228
  %6617 = vmatprep.subr.mxu0 %v231
  %6618 = vmatpush1.msra.mxu0 %v230
  %6619 = vmatprep.subr.mxu0 %v233
  %6620 = vmatpush1.msra.mxu0 %v232
  %6621 = vmatprep.subr.mxu0 %v235
  %6622 = vmatpush1.msra.mxu0 %v234
  %6623 = vmatprep.subr.mxu0 %v237
  %6624 = vmatpush1.msra.mxu0 %v236
  %6625 = vmatprep.subr.mxu0 %v239
  %6626 = vmatpush1.msra.mxu0 %v238
  %6627 = vmatprep.subr.mxu0 %v241
  %6628 = vmatpush1.msra.mxu0 %v240
  %6629 = vmatprep.subr.mxu0 %v243
  %6630 = vmatpush1.msra.mxu0 %v242
  %6631 = vmatprep.subr.mxu0 %v245
  %6632 = vmatpush1.msra.mxu0 %v244
  %6633 = vmatprep.subr.mxu0 %v247
  %6634 = vmatpush1.msra.mxu0 %v246
  %6635 = vmatprep.subr.mxu0 %v1084
  %6636 = vmatpush1.msra.mxu0 %v1081
  %6637 = vmatprep.subr.mxu0 0.0
  %6638 = vmatpush1.msra.mxu0 0.0
  %6639 = vmatprep.subr.mxu0 0.0
  %6640 = vmatpush1.msra.mxu0 0.0
  %6641 = vmatprep.subr.mxu0 0.0
  %6642 = vmatpush1.msra.mxu0 0.0
  %6643 = vmatprep.subr.mxu0 0.0
  %6644 = vmatpush1.msra.mxu0 0.0
  %6645 = vmatprep.subr.mxu0 0.0
  %6646 = vmatpush1.msra.mxu0 0.0
  %6647 = vmatprep.subr.mxu0 0.0
  %6648 = vmatpush1.msra.mxu0 0.0
  %6649 = vmatprep.subr.mxu0 0.0
  %6650 = vmatpush1.msra.mxu0 0.0
  %6651 = vmatprep.subr.mxu0 0.0
  %6652 = vmatpush1.msra.mxu0 0.0
  %6653 = vmatprep.subr.mxu0 0.0
  %6654 = vmatpush1.msra.mxu0 0.0
  %6655 = vmatprep.subr.mxu0 0.0
  %6656 = vmatpush1.msra.mxu0 0.0
  %6657 = vmatprep.subr.mxu0 0.0
  %6658 = vmatpush1.msra.mxu0 0.0
  %6659 = vmatprep.subr.mxu0 0.0
  %6660 = vmatpush1.msra.mxu0 0.0
  %6661 = vmatprep.subr.mxu0 0.0
  %6662 = vmatpush1.msra.mxu0 0.0
  %6663 = vmatprep.mubr.f32.mxu0 %v6597
  %6664 = vmatmul.mubr.f32.gmra.mrb[0].mxu0 %v6594
  %v6665 = vpop.f32.mrb[0].mxu0
  %v6666 = vadd.f32 %v6595, %v6665
  %v6667 = vpop.f32.mrb[0].mxu0
  %v6668 = vadd.f32 %v6596, %v6667
  %6669 = vdwg.mxu0
  %6670 = vmatprep.subr.mxu0 %v252
  %6671 = vmatpush1.msra.mxu0 %v251
  %6672 = vmatprep.subr.mxu0 %v254
  %6673 = vmatpush1.msra.mxu0 %v253
  %6674 = vmatprep.subr.mxu0 %v256
  %6675 = vmatpush1.msra.mxu0 %v255
  %6676 = vmatprep.subr.mxu0 %v258
  %6677 = vmatpush1.msra.mxu0 %v257
  %6678 = vmatprep.subr.mxu0 %v260
  %6679 = vmatpush1.msra.mxu0 %v259
  %6680 = vmatprep.subr.mxu0 %v262
  %6681 = vmatpush1.msra.mxu0 %v261
  %6682 = vmatprep.subr.mxu0 %v264
  %6683 = vmatpush1.msra.mxu0 %v263
  %6684 = vmatprep.subr.mxu0 %v266
  %6685 = vmatpush1.msra.mxu0 %v265
  %6686 = vmatprep.subr.mxu0 %v268
  %6687 = vmatpush1.msra.mxu0 %v267
  %6688 = vmatprep.subr.mxu0 %v270
  %6689 = vmatpush1.msra.mxu0 %v269
  %6690 = vmatprep.subr.mxu0 %v272
  %6691 = vmatpush1.msra.mxu0 %v271
  %6692 = vmatprep.subr.mxu0 %v274
  %6693 = vmatpush1.msra.mxu0 %v273
  %6694 = vmatprep.subr.mxu0 %v276
  %6695 = vmatpush1.msra.mxu0 %v275
  %6696 = vmatprep.subr.mxu0 %v278
  %6697 = vmatpush1.msra.mxu0 %v277
  %6698 = vmatprep.subr.mxu0 %v280
  %6699 = vmatpush1.msra.mxu0 %v279
  %6700 = vmatprep.subr.mxu0 %v282
  %6701 = vmatpush1.msra.mxu0 %v281
  %6702 = vmatprep.subr.mxu0 %v284
  %6703 = vmatpush1.msra.mxu0 %v283
  %6704 = vmatprep.subr.mxu0 %v286
  %6705 = vmatpush1.msra.mxu0 %v285
  %6706 = vmatprep.subr.mxu0 %v1164
  %6707 = vmatpush1.msra.mxu0 %v1161
  %6708 = vmatprep.subr.mxu0 0.0
  %6709 = vmatpush1.msra.mxu0 0.0
  %6710 = vmatprep.subr.mxu0 0.0
  %6711 = vmatpush1.msra.mxu0 0.0
  %6712 = vmatprep.subr.mxu0 0.0
  %6713 = vmatpush1.msra.mxu0 0.0
  %6714 = vmatprep.subr.mxu0 0.0
  %6715 = vmatpush1.msra.mxu0 0.0
  %6716 = vmatprep.subr.mxu0 0.0
  %6717 = vmatpush1.msra.mxu0 0.0
  %6718 = vmatprep.subr.mxu0 0.0
  %6719 = vmatpush1.msra.mxu0 0.0
  %6720 = vmatprep.subr.mxu0 0.0
  %6721 = vmatpush1.msra.mxu0 0.0
  %6722 = vmatprep.subr.mxu0 0.0
  %6723 = vmatpush1.msra.mxu0 0.0
  %6724 = vmatprep.subr.mxu0 0.0
  %6725 = vmatpush1.msra.mxu0 0.0
  %6726 = vmatprep.subr.mxu0 0.0
  %6727 = vmatpush1.msra.mxu0 0.0
  %6728 = vmatprep.subr.mxu0 0.0
  %6729 = vmatpush1.msra.mxu0 0.0
  %6730 = vmatprep.subr.mxu0 0.0
  %6731 = vmatpush1.msra.mxu0 0.0
  %6732 = vmatprep.subr.mxu0 0.0
  %6733 = vmatpush1.msra.mxu0 0.0
  %6734 = vmatprep.mubr.f32.mxu0 %v5964
  %6735 = vmatmul.mubr.f32.gmra.mrb[0].mxu0 %v5961
  %v6736 = vpop.f32.mrb[0].mxu0
  %v6737 = vadd.f32 0.0, %v6736
  %v6738 = vpop.f32.mrb[0].mxu0
  %v6739 = vadd.f32 0.0, %v6738
  %6740 = vdwg.mxu0
  %v6741 = vadd.f32 %v6666, %v6737
  %v6742 = vadd.f32 %v6668, %v6739
  %v6743 = vadd.f32 %v6741, %v348
  %v6744 = vadd.f32 %v6742, %v352
  %v6745 = vmax.f32 %v6743, 0.0
  %v6746 = vmax.f32 %v6744, 0.0
  %v6747 = vtanh.pop %v6745
  %v6748 = vtanh.pop %v6746
  %v6750 = vsel %vm1075, %v6748, 0
  %6752 = vmatprep.subr.mxu0 0.0
  %6753 = vmatpush1.msra.mxu0 %v289
  %6754 = vmatprep.subr.mxu0 0.0
  %6755 = vmatpush1.msra.mxu0 %v290
  %6756 = vmatprep.subr.mxu0 0.0
  %6757 = vmatpush1.msra.mxu0 %v291
  %6758 = vmatprep.subr.mxu0 0.0
  %6759 = vmatpush1.msra.mxu0 %v292
  %6760 = vmatprep.subr.mxu0 0.0
  %6761 = vmatpush1.msra.mxu0 %v293
  %6762 = vmatprep.subr.mxu0 0.0
  %6763 = vmatpush1.msra.mxu0 %v294
  %6764 = vmatprep.subr.mxu0 0.0
  %6765 = vmatpush1.msra.mxu0 %v295
  %6766 = vmatprep.subr.mxu0 0.0
  %6767 = vmatpush1.msra.mxu0 %v296
  %6768 = vmatprep.subr.mxu0 0.0
  %6769 = vmatpush1.msra.mxu0 %v297
  %6770 = vmatprep.subr.mxu0 0.0
  %6771 = vmatpush1.msra.mxu0 %v298
  %6772 = vmatprep.subr.mxu0 0.0
  %6773 = vmatpush1.msra.mxu0 %v299
  %6774 = vmatprep.subr.mxu0 0.0
  %6775 = vmatpush1.msra.mxu0 %v300
  %6776 = vmatprep.subr.mxu0 0.0
  %6777 = vmatpush1.msra.mxu0 %v301
  %6778 = vmatprep.subr.mxu0 0.0
  %6779 = vmatpush1.msra.mxu0 %v302
  %6780 = vmatprep.subr.mxu0 0.0
  %6781 = vmatpush1.msra.mxu0 %v303
  %6782 = vmatprep.subr.mxu0 0.0
  %6783 = vmatpush1.msra.mxu0 %v304
  %6784 = vmatprep.subr.mxu0 0.0
  %6785 = vmatpush1.msra.mxu0 %v305
  %6786 = vmatprep.subr.mxu0 0.0
  %6787 = vmatpush1.msra.mxu0 %v306
  %6788 = vmatprep.subr.mxu0 0.0
  %6789 = vmatpush1.msra.mxu0 %v1249
  %6790 = vmatprep.subr.mxu0 0.0
  %6791 = vmatpush1.msra.mxu0 0.0
  %6792 = vmatprep.subr.mxu0 0.0
  %6793 = vmatpush1.msra.mxu0 0.0
  %6794 = vmatprep.subr.mxu0 0.0
  %6795 = vmatpush1.msra.mxu0 0.0
  %6796 = vmatprep.subr.mxu0 0.0
  %6797 = vmatpush1.msra.mxu0 0.0
  %6798 = vmatprep.subr.mxu0 0.0
  %6799 = vmatpush1.msra.mxu0 0.0
  %6800 = vmatprep.subr.mxu0 0.0
  %6801 = vmatpush1.msra.mxu0 0.0
  %6802 = vmatprep.subr.mxu0 0.0
  %6803 = vmatpush1.msra.mxu0 0.0
  %6804 = vmatprep.subr.mxu0 0.0
  %6805 = vmatpush1.msra.mxu0 0.0
  %6806 = vmatprep.subr.mxu0 0.0
  %6807 = vmatpush1.msra.mxu0 0.0
  %6808 = vmatprep.subr.mxu0 0.0
  %6809 = vmatpush1.msra.mxu0 0.0
  %6810 = vmatprep.subr.mxu0 0.0
  %6811 = vmatpush1.msra.mxu0 0.0
  %6812 = vmatprep.subr.mxu0 0.0
  %6813 = vmatpush1.msra.mxu0 0.0
  %6814 = vmatprep.subr.mxu0 0.0
  %6815 = vmatpush1.msra.mxu0 0.0
  %6816 = vmatprep.mubr.f32.mxu0 %v6750
  %6817 = vmatmul.mubr.f32.gmra.mrb[0].mxu0 %v6747
  %v6818 = vpop.f32.mrb[0].mxu0
  %v6819 = vadd.f32 %v360, %v6818
  %v6820 = vpop.f32.mrb[0].mxu0
  %6821 = vdwg.mxu0
  %s6822 = scalar_lea.vmem %s61, 56
  %6823 = vst.msk [vmem:[%s6822] sm:$0xff] %vm377, %v6819
  // Predicated region
  $region122: #{millies_rnn_forward.1} parent=0 // pred_check
    _
  $region123: #{millies_rnn_forward.1} parent=0 // pred_check_branch
    %6825 = sbr.rel (0) target = $region125
  $region124: #{millies_rnn_forward.1} parent=0 // pred_region
    _
  $region125: #{millies_rnn_forward.1} parent=0 // pred_fallthru
    _
  // Predicated region
  $region126: #{millies_rnn_forward.1} parent=0 // pred_check
    _
  $region127: #{millies_rnn_forward.1} parent=0 // pred_check_branch
    %6827 = sbr.rel (0) target = $region129
  $region128: #{millies_rnn_forward.1} parent=0 // pred_region
    _
  $region129: #{millies_rnn_forward.1} parent=0 // pred_fallthru
    _

</llo_original>
